<compile_context>
chip_gen: v7x
topology: tpu7x:2x2x1
jax: 0.10.0
libtpu: 0.0.40
codegen_flags: <defaults>
</compile_context>

<pallas_src>
import functools

import jax
import jax.numpy as jnp
from jax.experimental import pallas as pl
from jax.experimental.pallas import tpu as pltpu


# ---------------------------------------------------------------------------
# Helpers
# ---------------------------------------------------------------------------
def _ceil_to(x, m):
    return -(-x // m) * m


def _tap_index(dy, dx, ky, kx, Wp2):
    """Pool-phase (dy,dx) + conv tap (ky,kx) -> (phase plane, row offset)."""
    u, v = dy + ky, dx + kx
    ab = (u % 2) * 2 + (v % 2)
    off = (u // 2) * Wp2 + (v // 2)
    return ab, off


def _phase_split(x_nhwc, rows_p):
    """(B,H,W,C) -> (B, rows_p, 4*C) bf16.

    Zero-pad the image by 1, split into the four (row%2, col%2) phase planes,
    keep the phases along the lane axis (lane-dense for C=32), flatten each
    plane row-major (row = i*Wp2 + j) and zero-pad rows to rows_p so the
    in-kernel tap row-shifts stay in bounds.  Same byte count as the padded
    input -- no im2col blow-up in HBM.
    """
    B, H, W, C = x_nhwc.shape
    Hp2, Wp2 = (H + 2) // 2, (W + 2) // 2
    xp = jnp.pad(x_nhwc, ((0, 0), (1, 1), (1, 1), (0, 0)))
    ph = xp.reshape(B, Hp2, 2, Wp2, 2, C).transpose(0, 1, 3, 2, 4, 5)
    ph = ph.reshape(B, Hp2 * Wp2, 4 * C)
    ph = jnp.pad(ph, ((0, 0), (0, rows_p - Hp2 * Wp2), (0, 0)))
    return ph.astype(jnp.bfloat16)


# ---------------------------------------------------------------------------
# Conv kernels: 3x3 / stride 1 / pad 1 conv + bias + ReLU + 2x2 max-pool,
# G images per grid step.
# ---------------------------------------------------------------------------
def _conv1_kernel(im_ref, w_ref, b_ref, o_ref, *, G):
    """First layer (Ci=1): wrapper-built per-phase im2col, pure MXU kernel.

    im_ref: (G, 4, M2, Kp) bf16 -- phase-major im2col, taps in lanes (K padded)
    w_ref : (Kp, Co)       bf16 -- rows ordered (ky, kx), zero rows >= 9
    b_ref : (1, Co)        f32
    o_ref : (G, M2, Co)    bf16 -- pooled output, row = h'*Wp2 + w'
    """
    w = w_ref[...]                     # hoisted weight load
    b = b_ref[...]
    for g in range(G):
        pooled = None
        for p in range(4):             # 2x2 pool-window members
            term = jnp.dot(im_ref[g, p, :, :], w,
                           preferred_element_type=jnp.float32)
            pooled = term if pooled is None else jnp.maximum(pooled, term)
        o_ref[g] = jnp.maximum(pooled + b, 0.0).astype(o_ref.dtype)


def _conv2_kernel(x_ref, w_ref, b_ref, o_ref, col_ref, *, G, M2, Wp2, Ci):
    """Deeper layer: phase-split input, per-phase K=9*Ci im2col in VMEM scratch.

    x_ref  : (G, rows_p, 4*Ci) bf16 -- phase-split, zero-padded images
    w_ref  : (9*Ci, Co)        bf16 -- rows ordered (ky, kx, ci)
    b_ref  : (1, Co)           f32
    o_ref  : (G, M2, Co)       bf16 -- pooled output, row = h'*Wp2 + w'
    col_ref: (M2, 9*Ci)        bf16 VMEM scratch (per-phase im2col)
    """
    w = w_ref[...]                     # hoisted weight load
    b = b_ref[...]
    for g in range(G):
        pooled = None
        for dy in range(2):
            for dx in range(2):
                # Build the (M2, 9*Ci) im2col for this pool phase; the 9 copies
                # are contiguous 2-D slices of the phase-split block.
                for ky in range(3):
                    for kx in range(3):
                        ab, off = _tap_index(dy, dx, ky, kx, Wp2)
                        t = ky * 3 + kx
                        col_ref[:, t * Ci:(t + 1) * Ci] = (
                            x_ref[g, off:off + M2, ab * Ci:(ab + 1) * Ci])
                term = jnp.dot(col_ref[...], w,
                               preferred_element_type=jnp.float32)
                pooled = term if pooled is None else jnp.maximum(pooled, term)
        o_ref[g] = jnp.maximum(pooled + b, 0.0).astype(o_ref.dtype)


def conv3x3_relu_pool(x_nhwc, w_cat, b_1co, *, group=8):
    """Fused conv3x3(pad=1)+bias+ReLU+maxpool2x2.

    Returns (B, H//2, Wp2, Co) bf16; the last column (w' == Wp2-1) is junk and
    must be dropped / zero-weighted by the caller.
    """
    B, H, W, Ci = x_nhwc.shape
    Kp, Co = w_cat.shape
    Hp2, Wp2 = (H + 2) // 2, (W + 2) // 2
    rows_p = (Hp2 + 1) * Wp2          # room for the (ky,kx) row shifts
    M2 = (H // 2) * Wp2               # pooled rows incl. one junk column
    G = min(group, B)
    Bp = _ceil_to(B, G)
    params = pltpu.CompilerParams(dimension_semantics=("parallel",))

    if Ci == 1:
        # Build the per-phase im2col in the wrapper (lane-dense K=16): avoids
        # 1-lane patch copies in-kernel; blow-up of a 1-channel image is tiny.
        ph = _phase_split(x_nhwc, rows_p)                    # (B, rows_p, 4)
        cols = []
        for dy in range(2):
            for dx in range(2):
                taps = []
                for ky in range(3):
                    for kx in range(3):
                        ab, off = _tap_index(dy, dx, ky, kx, Wp2)
                        taps.append(ph[:, off:off + M2, ab])  # (B, M2)
                cols.append(jnp.stack(taps, axis=-1))         # (B, M2, 9)
        im = jnp.stack(cols, axis=1)                          # (B, 4, M2, 9)
        im = jnp.pad(im, ((0, 0), (0, 0), (0, 0), (0, Kp - 9)))
        if Bp != B:
            im = jnp.pad(im, ((0, Bp - B), (0, 0), (0, 0), (0, 0)))
        out = pl.pallas_call(
            functools.partial(_conv1_kernel, G=G),
            out_shape=jax.ShapeDtypeStruct((Bp, M2, Co), jnp.bfloat16),
            grid=(Bp // G,),
            in_specs=[
                pl.BlockSpec((G, 4, M2, Kp), lambda i: (i, 0, 0, 0)),
                pl.BlockSpec((Kp, Co), lambda i: (0, 0)),
                pl.BlockSpec((1, Co), lambda i: (0, 0)),
            ],
            out_specs=pl.BlockSpec((G, M2, Co), lambda i: (i, 0, 0)),
            compiler_params=params,
        )(im, w_cat, b_1co)
    else:
        ph = _phase_split(x_nhwc, rows_p)                    # (B, rows_p, 4*Ci)
        if Bp != B:
            ph = jnp.pad(ph, ((0, Bp - B), (0, 0), (0, 0)))
        out = pl.pallas_call(
            functools.partial(_conv2_kernel, G=G, M2=M2, Wp2=Wp2, Ci=Ci),
            out_shape=jax.ShapeDtypeStruct((Bp, M2, Co), jnp.bfloat16),
            grid=(Bp // G,),
            in_specs=[
                pl.BlockSpec((G, rows_p, 4 * Ci), lambda i: (i, 0, 0)),
                pl.BlockSpec((Kp, Co), lambda i: (0, 0)),
                pl.BlockSpec((1, Co), lambda i: (0, 0)),
            ],
            out_specs=pl.BlockSpec((G, M2, Co), lambda i: (i, 0, 0)),
            scratch_shapes=[pltpu.VMEM((M2, Kp), jnp.bfloat16)],
            compiler_params=params,
        )(ph, w_cat, b_1co)

    out = out[:B]
    return out.reshape(B, H // 2, Wp2, Co)


# ---------------------------------------------------------------------------
# Fused fc1 + ReLU + fc2, tiled over rows (batch).
# ---------------------------------------------------------------------------
def _mlp_kernel(x_ref, w1_ref, b1_ref, w2_ref, b2_ref, o_ref):
    h = jnp.dot(x_ref[...], w1_ref[...], preferred_element_type=jnp.float32)
    h = jnp.maximum(h + b1_ref[...], 0.0).astype(jnp.bfloat16)
    o = jnp.dot(h, w2_ref[...], preferred_element_type=jnp.float32)
    o_ref[...] = (o + b2_ref[...]).astype(o_ref.dtype)


def mlp(x, w1, b1, w2, b2, *, block_m=512):
    B, K1 = x.shape
    N1 = w1.shape[1]
    N2 = w2.shape[1]                   # padded to 128 -> lane-dense store
    tm = min(block_m, B)
    Bp = _ceil_to(B, tm)
    xb = x.astype(jnp.bfloat16)
    if Bp != B:
        xb = jnp.pad(xb, ((0, Bp - B), (0, 0)))
    out = pl.pallas_call(
        _mlp_kernel,
        out_shape=jax.ShapeDtypeStruct((Bp, N2), jnp.float32),
        grid=(Bp // tm,),
        in_specs=[
            pl.BlockSpec((tm, K1), lambda i: (i, 0)),
            pl.BlockSpec((K1, N1), lambda i: (0, 0)),
            pl.BlockSpec((1, N1), lambda i: (0, 0)),
            pl.BlockSpec((N1, N2), lambda i: (0, 0)),
            pl.BlockSpec((1, N2), lambda i: (0, 0)),
        ],
        out_specs=pl.BlockSpec((tm, N2), lambda i: (i, 0)),
        compiler_params=pltpu.CompilerParams(
            dimension_semantics=("parallel",)),
    )(xb, w1, b1, w2, b2)
    return out[:B]


# ---------------------------------------------------------------------------
# Parameter re-layout (done ONCE, outside the forward pass) and forward.
# ---------------------------------------------------------------------------
def prepare_params(p, *, fc2_pad=128):
    """Conv weights -> (9*Ci [K-padded], Co) bf16 in (ky,kx,ci) row order;
    fc1 weight columns permuted/zero-padded to accept conv2's pooled NHWC
    flatten WITH its junk column (kills the NCHW transpose and junk slice);
    fc2 pre-transposed and zero-padded to 128 output lanes; biases (1,N) f32."""
    def conv_cat_w(w, k_pad):          # (Co, Ci, kh, kw) -> (k_pad, Co)
        co, ci = w.shape[0], w.shape[1]
        wt = jnp.transpose(w, (2, 3, 1, 0)).reshape(9 * ci, co)
        wt = jnp.pad(wt, ((0, k_pad - 9 * ci), (0, 0)))
        return wt.astype(jnp.bfloat16)

    n_fc1 = p["w_fc1"].shape[0]
    w_fc1 = p["w_fc1"].reshape(n_fc1, 64, 7, 7)      # (out, c, h, w)
    w_fc1 = jnp.transpose(w_fc1, (2, 3, 1, 0))       # (h, w, c, out)
    w_fc1 = jnp.pad(w_fc1, ((0, 0), (0, 1), (0, 0), (0, 0)))  # junk col w'==7
    w_fc1 = w_fc1.reshape(7 * 8 * 64, n_fc1)         # rows = (h*8 + w)*64 + c

    n2 = p["w_fc2"].shape[0]
    w_fc2 = jnp.zeros((p["w_fc2"].shape[1], fc2_pad), jnp.float32)
    w_fc2 = w_fc2.at[:, :n2].set(p["w_fc2"].T)
    b_fc2 = jnp.zeros((1, fc2_pad), jnp.float32).at[:, :n2].set(
        p["b_fc2"][None, :])

    return {
        "w1": conv_cat_w(p["w1"], 16),                       # K 9 -> 16
        "b1": p["b1"].reshape(1, -1).astype(jnp.float32),
        "w2": conv_cat_w(p["w2"], 9 * 32),                   # K = 288
        "b2": p["b2"].reshape(1, -1).astype(jnp.float32),
        "w_fc1": w_fc1.astype(jnp.bfloat16),
        "b_fc1": p["b_fc1"].reshape(1, -1).astype(jnp.float32),
        "w_fc2": w_fc2.astype(jnp.bfloat16),
        "b_fc2": b_fc2,
    }


def cnn_forward(x_nchw, p, *, num_classes=10, conv_group=8, mlp_block_m=512):
    """Matches torch CNN.forward for a (B, 1, 28, 28) NCHW input."""
    B = x_nchw.shape[0]
    x = jnp.transpose(x_nchw, (0, 2, 3, 1))                    # NCHW -> NHWC
    x = conv3x3_relu_pool(x, p["w1"], p["b1"], group=conv_group)   # (B,14,15,32)
    x = x[:, :, :-1, :]                                        # drop junk col
    x = conv3x3_relu_pool(x, p["w2"], p["b2"], group=conv_group)   # (B,7,8,64)
    # NHWC-with-junk flatten is a free row-major reshape; w_fc1's rows were
    # permuted / zero-padded at prep time to match -> no transpose, no slice.
    x = x.reshape(B, -1)                                       # (B, 3584) bf16
    out = mlp(x, p["w_fc1"], p["b_fc1"], p["w_fc2"], p["b_fc2"],
              block_m=mlp_block_m)                             # (B, 128) f32
    return out[:, :num_classes]                                # (B, 10)


def init_params(key):
    ks = jax.random.split(key, 8)
    s = 0.05
    return {
        # PyTorch layouts: conv (Co, Ci, kh, kw), linear (out, in).
        "w1": jax.random.normal(ks[0], (32, 1, 3, 3), jnp.float32) * s,
        "b1": jax.random.normal(ks[1], (32,), jnp.float32) * s,
        "w2": jax.random.normal(ks[2], (64, 32, 3, 3), jnp.float32) * s,
        "b2": jax.random.normal(ks[3], (64,), jnp.float32) * s,
        "w_fc1": jax.random.normal(ks[4], (128, 64 * 7 * 7), jnp.float32) * s,
        "b_fc1": jax.random.normal(ks[5], (128,), jnp.float32) * s,
        "w_fc2": jax.random.normal(ks[6], (10, 128), jnp.float32) * s,
        "b_fc2": jax.random.normal(ks[7], (10,), jnp.float32) * s,
    }


def reference_forward(x_nchw, p):
    """Plain-JAX f32 reference of the PyTorch module (sanity check)."""
    def conv(x, w, b):
        y = jax.lax.conv_general_dilated(
            x, w, window_strides=(1, 1), padding=((1, 1), (1, 1)),
            dimension_numbers=("NCHW", "OIHW", "NCHW"))
        return jax.nn.relu(y + b[None, :, None, None])
    def pool(x):
        return jax.lax.reduce_window(x, -jnp.inf, jax.lax.max,
                                     (1, 1, 2, 2), (1, 1, 2, 2), "VALID")
    x = pool(conv(x_nchw, p["w1"], p["b1"]))
    x = pool(conv(x, p["w2"], p["b2"]))
    x = x.reshape(x.shape[0], -1)
    x = jax.nn.relu(x @ p["w_fc1"].T + p["b_fc1"])
    return x @ p["w_fc2"].T + p["b_fc2"]


if __name__ == "__main__":
    key = jax.random.PRNGKey(0)
    k_param, k_x = jax.random.split(key)
    params = init_params(k_param)
    prep = prepare_params(params)
    # Spatial size 28 is dictated by fc1's 64*7*7 input after two 2x2 pools.
    x = jax.random.normal(k_x, (2, 1, 28, 28), jnp.float32)

    out = jax.block_until_ready(jax.jit(cnn_forward)(x, prep))
    assert out.shape == (2, 10) and out.dtype == jnp.float32

    ref = reference_forward(x, params)
    err = float(jnp.max(jnp.abs(out - ref)))
    tol = 3e-2 + 3e-2 * float(jnp.max(jnp.abs(ref)))   # bf16-operand tolerance
    assert err < tol, f"mismatch vs f32 reference: {err} (tol {tol})"
    print("KERNEL_OK")
</pallas_src>

<mosaic_0001>
module attributes {stable_mosaic.version = 11 : i64} {
  func.func @_conv1_kernel(%arg0: i32, %arg1: memref<2x4x210x16xbf16, #tpu.memory_space<vmem>>, %arg2: memref<16x32xbf16, #tpu.memory_space<vmem>>, %arg3: memref<1x32xf32, #tpu.memory_space<vmem>>, %arg4: memref<2x210x32xbf16, #tpu.memory_space<vmem>>) attributes {dimension_semantics = [#tpu.dimension_semantics<parallel>], iteration_bounds = array<i64: 1>, scalar_prefetch = 0 : i64, scratch_operands = 0 : i64, tpu.core_type = #tpu.core_type<tc>, window_params = [{transform_indices = @transform_0, window_bounds = array<i64: 2, 4, 210, 16>}, {pipeline_mode = #tpu.pipeline_mode<synchronous>, transform_indices = @transform_1, window_bounds = array<i64: 16, 32>}, {pipeline_mode = #tpu.pipeline_mode<synchronous>, transform_indices = @transform_2, window_bounds = array<i64: 1, 32>}, {transform_indices = @transform_3, window_bounds = array<i64: 2, 210, 32>}]} {
    %c0 = arith.constant 0 : index
    %c0_0 = arith.constant 0 : index
    %0 = vector.load %arg2[%c0, %c0_0] : memref<16x32xbf16, #tpu.memory_space<vmem>>, vector<16x32xbf16>
    %c0_1 = arith.constant 0 : index
    %c0_2 = arith.constant 0 : index
    %1 = vector.load %arg3[%c0_1, %c0_2] : memref<1x32xf32, #tpu.memory_space<vmem>>, vector<1x32xf32>
    %c0_3 = arith.constant 0 : index
    %c0_4 = arith.constant 0 : index
    %c0_5 = arith.constant 0 : index
    %c0_6 = arith.constant 0 : index
    %2 = vector.load %arg1[%c0_3, %c0_4, %c0_5, %c0_6] : memref<2x4x210x16xbf16, #tpu.memory_space<vmem>>, vector<1x1x210x16xbf16>
    %3 = vector.shape_cast %2 : vector<1x1x210x16xbf16> to vector<210x16xbf16>
    %cst = arith.constant dense<0.000000e+00> : vector<210x32xf32>
    %4 = tpu.matmul %3, %0, %cst {dimension_numbers = #tpu.dot_dimension_numbers<[1], [0], [0], [1], [0, 0, 1, 1], [], []>} : vector<210x16xbf16>, vector<16x32xbf16>, vector<210x32xf32> -> vector<210x32xf32>
    %c0_7 = arith.constant 0 : index
    %c1 = arith.constant 1 : index
    %c0_8 = arith.constant 0 : index
    %c0_9 = arith.constant 0 : index
    %5 = vector.load %arg1[%c0_7, %c1, %c0_8, %c0_9] : memref<2x4x210x16xbf16, #tpu.memory_space<vmem>>, vector<1x1x210x16xbf16>
    %6 = vector.shape_cast %5 : vector<1x1x210x16xbf16> to vector<210x16xbf16>
    %cst_10 = arith.constant dense<0.000000e+00> : vector<210x32xf32>
    %7 = tpu.matmul %6, %0, %cst_10 {dimension_numbers = #tpu.dot_dimension_numbers<[1], [0], [0], [1], [0, 0, 1, 1], [], []>} : vector<210x16xbf16>, vector<16x32xbf16>, vector<210x32xf32> -> vector<210x32xf32>
    %8 = arith.maximumf %4, %7 : vector<210x32xf32>
    %c0_11 = arith.constant 0 : index
    %c2 = arith.constant 2 : index
    %c0_12 = arith.constant 0 : index
    %c0_13 = arith.constant 0 : index
    %9 = vector.load %arg1[%c0_11, %c2, %c0_12, %c0_13] : memref<2x4x210x16xbf16, #tpu.memory_space<vmem>>, vector<1x1x210x16xbf16>
    %10 = vector.shape_cast %9 : vector<1x1x210x16xbf16> to vector<210x16xbf16>
    %cst_14 = arith.constant dense<0.000000e+00> : vector<210x32xf32>
    %11 = tpu.matmul %10, %0, %cst_14 {dimension_numbers = #tpu.dot_dimension_numbers<[1], [0], [0], [1], [0, 0, 1, 1], [], []>} : vector<210x16xbf16>, vector<16x32xbf16>, vector<210x32xf32> -> vector<210x32xf32>
    %12 = arith.maximumf %8, %11 : vector<210x32xf32>
    %c0_15 = arith.constant 0 : index
    %c3 = arith.constant 3 : index
    %c0_16 = arith.constant 0 : index
    %c0_17 = arith.constant 0 : index
    %13 = vector.load %arg1[%c0_15, %c3, %c0_16, %c0_17] : memref<2x4x210x16xbf16, #tpu.memory_space<vmem>>, vector<1x1x210x16xbf16>
    %14 = vector.shape_cast %13 : vector<1x1x210x16xbf16> to vector<210x16xbf16>
    %cst_18 = arith.constant dense<0.000000e+00> : vector<210x32xf32>
    %15 = tpu.matmul %14, %0, %cst_18 {dimension_numbers = #tpu.dot_dimension_numbers<[1], [0], [0], [1], [0, 0, 1, 1], [], []>} : vector<210x16xbf16>, vector<16x32xbf16>, vector<210x32xf32> -> vector<210x32xf32>
    %16 = arith.maximumf %12, %15 : vector<210x32xf32>
    %17 = vector.broadcast %1 : vector<1x32xf32> to vector<210x32xf32>
    %18 = arith.addf %16, %17 : vector<210x32xf32>
    %cst_19 = arith.constant 0.000000e+00 : f32
    %19 = vector.broadcast %cst_19 : f32 to vector<210x32xf32>
    %20 = arith.maximumf %18, %19 : vector<210x32xf32>
    %21 = arith.truncf %20 : vector<210x32xf32> to vector<210x32xbf16>
    %c0_20 = arith.constant 0 : index
    %c0_21 = arith.constant 0 : index
    %c0_22 = arith.constant 0 : index
    %22 = vector.load %arg4[%c0_20, %c0_21, %c0_22] : memref<2x210x32xbf16, #tpu.memory_space<vmem>>, vector<1x210x32xbf16>
    %23 = vector.shape_cast %22 : vector<1x210x32xbf16> to vector<210x32xbf16>
    %24 = vector.shape_cast %21 : vector<210x32xbf16> to vector<1x210x32xbf16>
    tpu.vector_store %arg4[%c0_20, %c0_21, %c0_22], %24 {strides = array<i32>} : memref<2x210x32xbf16, #tpu.memory_space<vmem>>, vector<1x210x32xbf16>,
    %c1_23 = arith.constant 1 : index
    %c0_24 = arith.constant 0 : index
    %c0_25 = arith.constant 0 : index
    %c0_26 = arith.constant 0 : index
    %25 = vector.load %arg1[%c1_23, %c0_24, %c0_25, %c0_26] : memref<2x4x210x16xbf16, #tpu.memory_space<vmem>>, vector<1x1x210x16xbf16>
    %26 = vector.shape_cast %25 : vector<1x1x210x16xbf16> to vector<210x16xbf16>
    %cst_27 = arith.constant dense<0.000000e+00> : vector<210x32xf32>
    %27 = tpu.matmul %26, %0, %cst_27 {dimension_numbers = #tpu.dot_dimension_numbers<[1], [0], [0], [1], [0, 0, 1, 1], [], []>} : vector<210x16xbf16>, vector<16x32xbf16>, vector<210x32xf32> -> vector<210x32xf32>
    %c1_28 = arith.constant 1 : index
    %c1_29 = arith.constant 1 : index
    %c0_30 = arith.constant 0 : index
    %c0_31 = arith.constant 0 : index
    %28 = vector.load %arg1[%c1_28, %c1_29, %c0_30, %c0_31] : memref<2x4x210x16xbf16, #tpu.memory_space<vmem>>, vector<1x1x210x16xbf16>
    %29 = vector.shape_cast %28 : vector<1x1x210x16xbf16> to vector<210x16xbf16>
    %cst_32 = arith.constant dense<0.000000e+00> : vector<210x32xf32>
    %30 = tpu.matmul %29, %0, %cst_32 {dimension_numbers = #tpu.dot_dimension_numbers<[1], [0], [0], [1], [0, 0, 1, 1], [], []>} : vector<210x16xbf16>, vector<16x32xbf16>, vector<210x32xf32> -> vector<210x32xf32>
    %31 = arith.maximumf %27, %30 : vector<210x32xf32>
    %c1_33 = arith.constant 1 : index
    %c2_34 = arith.constant 2 : index
    %c0_35 = arith.constant 0 : index
    %c0_36 = arith.constant 0 : index
    %32 = vector.load %arg1[%c1_33, %c2_34, %c0_35, %c0_36] : memref<2x4x210x16xbf16, #tpu.memory_space<vmem>>, vector<1x1x210x16xbf16>
    %33 = vector.shape_cast %32 : vector<1x1x210x16xbf16> to vector<210x16xbf16>
    %cst_37 = arith.constant dense<0.000000e+00> : vector<210x32xf32>
    %34 = tpu.matmul %33, %0, %cst_37 {dimension_numbers = #tpu.dot_dimension_numbers<[1], [0], [0], [1], [0, 0, 1, 1], [], []>} : vector<210x16xbf16>, vector<16x32xbf16>, vector<210x32xf32> -> vector<210x32xf32>
    %35 = arith.maximumf %31, %34 : vector<210x32xf32>
    %c1_38 = arith.constant 1 : index
    %c3_39 = arith.constant 3 : index
    %c0_40 = arith.constant 0 : index
    %c0_41 = arith.constant 0 : index
    %36 = vector.load %arg1[%c1_38, %c3_39, %c0_40, %c0_41] : memref<2x4x210x16xbf16, #tpu.memory_space<vmem>>, vector<1x1x210x16xbf16>
    %37 = vector.shape_cast %36 : vector<1x1x210x16xbf16> to vector<210x16xbf16>
    %cst_42 = arith.constant dense<0.000000e+00> : vector<210x32xf32>
    %38 = tpu.matmul %37, %0, %cst_42 {dimension_numbers = #tpu.dot_dimension_numbers<[1], [0], [0], [1], [0, 0, 1, 1], [], []>} : vector<210x16xbf16>, vector<16x32xbf16>, vector<210x32xf32> -> vector<210x32xf32>
    %39 = arith.maximumf %35, %38 : vector<210x32xf32>
    %40 = vector.broadcast %1 : vector<1x32xf32> to vector<210x32xf32>
    %41 = arith.addf %39, %40 : vector<210x32xf32>
    %cst_43 = arith.constant 0.000000e+00 : f32
    %42 = vector.broadcast %cst_43 : f32 to vector<210x32xf32>
    %43 = arith.maximumf %41, %42 : vector<210x32xf32>
    %44 = arith.truncf %43 : vector<210x32xf32> to vector<210x32xbf16>
    %c1_44 = arith.constant 1 : index
    %c0_45 = arith.constant 0 : index
    %c0_46 = arith.constant 0 : index
    %45 = vector.load %arg4[%c1_44, %c0_45, %c0_46] : memref<2x210x32xbf16, #tpu.memory_space<vmem>>, vector<1x210x32xbf16>
    %46 = vector.shape_cast %45 : vector<1x210x32xbf16> to vector<210x32xbf16>
    %47 = vector.shape_cast %44 : vector<210x32xbf16> to vector<1x210x32xbf16>
    tpu.vector_store %arg4[%c1_44, %c0_45, %c0_46], %47 {strides = array<i32>} : memref<2x210x32xbf16, #tpu.memory_space<vmem>>, vector<1x210x32xbf16>,
    return
  }
  func.func @transform_0(%arg0: i32) -> (i32, i32, i32, i32) {
    %c0_i32 = arith.constant 0 : i32
    %c0_i32_0 = arith.constant 0 : i32
    %c0_i32_1 = arith.constant 0 : i32
    %c0_i32_2 = arith.constant 0 : i32
    return %arg0, %c0_i32, %c0_i32_0, %c0_i32_1 : i32, i32, i32, i32
  }
  func.func @transform_1(%arg0: i32) -> (i32, i32) {
    %c0_i32 = arith.constant 0 : i32
    %c0_i32_0 = arith.constant 0 : i32
    %c0_i32_1 = arith.constant 0 : i32
    return %c0_i32, %c0_i32_0 : i32, i32
  }
  func.func @transform_2(%arg0: i32) -> (i32, i32) {
    %c0_i32 = arith.constant 0 : i32
    %c0_i32_0 = arith.constant 0 : i32
    %c0_i32_1 = arith.constant 0 : i32
    return %c0_i32, %c0_i32_0 : i32, i32
  }
  func.func @transform_3(%arg0: i32) -> (i32, i32, i32) {
    %c0_i32 = arith.constant 0 : i32
    %c0_i32_0 = arith.constant 0 : i32
    %c0_i32_1 = arith.constant 0 : i32
    return %arg0, %c0_i32, %c0_i32_0 : i32, i32, i32
  }
}

module attributes {stable_mosaic.version = 11 : i64} {
  func.func @_conv2_kernel(%arg0: i32, %arg1: memref<2x72x128xbf16, #tpu.memory_space<vmem>>, %arg2: memref<288x64xbf16, #tpu.memory_space<vmem>>, %arg3: memref<1x64xf32, #tpu.memory_space<vmem>>, %arg4: memref<2x56x64xbf16, #tpu.memory_space<vmem>>, %arg5: memref<56x288xbf16, #tpu.memory_space<vmem>>) attributes {dimension_semantics = [#tpu.dimension_semantics<parallel>], iteration_bounds = array<i64: 1>, scalar_prefetch = 0 : i64, scratch_operands = 1 : i64, tpu.core_type = #tpu.core_type<tc>, window_params = [{transform_indices = @transform_0, window_bounds = array<i64: 2, 72, 128>}, {pipeline_mode = #tpu.pipeline_mode<synchronous>, transform_indices = @transform_1, window_bounds = array<i64: 288, 64>}, {pipeline_mode = #tpu.pipeline_mode<synchronous>, transform_indices = @transform_2, window_bounds = array<i64: 1, 64>}, {transform_indices = @transform_3, window_bounds = array<i64: 2, 56, 64>}]} {
    %c0 = arith.constant 0 : index
    %c0_0 = arith.constant 0 : index
    %0 = vector.load %arg2[%c0, %c0_0] : memref<288x64xbf16, #tpu.memory_space<vmem>>, vector<288x64xbf16>
    %c0_1 = arith.constant 0 : index
    %c0_2 = arith.constant 0 : index
    %1 = vector.load %arg3[%c0_1, %c0_2] : memref<1x64xf32, #tpu.memory_space<vmem>>, vector<1x64xf32>
    %c0_3 = arith.constant 0 : index
    %c0_4 = arith.constant 0 : index
    %c0_5 = arith.constant 0 : index
    %2 = vector.load %arg1[%c0_3, %c0_4, %c0_5] : memref<2x72x128xbf16, #tpu.memory_space<vmem>>, vector<1x56x32xbf16>
    %3 = vector.shape_cast %2 : vector<1x56x32xbf16> to vector<56x32xbf16>
    %c0_6 = arith.constant 0 : index
    %c0_7 = arith.constant 0 : index
    %4 = vector.load %arg5[%c0_6, %c0_7] : memref<56x288xbf16, #tpu.memory_space<vmem>>, vector<56x32xbf16>
    tpu.vector_store %arg5[%c0_6, %c0_7], %3 {strides = array<i32>} : memref<56x288xbf16, #tpu.memory_space<vmem>>, vector<56x32xbf16>,
    %c0_8 = arith.constant 0 : index
    %c0_9 = arith.constant 0 : index
    %c32 = arith.constant 32 : index
    %5 = vector.load %arg1[%c0_8, %c0_9, %c32] : memref<2x72x128xbf16, #tpu.memory_space<vmem>>, vector<1x56x32xbf16>
    %6 = vector.shape_cast %5 : vector<1x56x32xbf16> to vector<56x32xbf16>
    %c0_10 = arith.constant 0 : index
    %c32_11 = arith.constant 32 : index
    %7 = vector.load %arg5[%c0_10, %c32_11] : memref<56x288xbf16, #tpu.memory_space<vmem>>, vector<56x32xbf16>
    tpu.vector_store %arg5[%c0_10, %c32_11], %6 {strides = array<i32>} : memref<56x288xbf16, #tpu.memory_space<vmem>>, vector<56x32xbf16>,
    %c0_12 = arith.constant 0 : index
    %c1 = arith.constant 1 : index
    %c0_13 = arith.constant 0 : index
    %8 = vector.load %arg1[%c0_12, %c1, %c0_13] : memref<2x72x128xbf16, #tpu.memory_space<vmem>>, vector<1x56x32xbf16>
    %9 = vector.shape_cast %8 : vector<1x56x32xbf16> to vector<56x32xbf16>
    %c0_14 = arith.constant 0 : index
    %c64 = arith.constant 64 : index
    %10 = vector.load %arg5[%c0_14, %c64] : memref<56x288xbf16, #tpu.memory_space<vmem>>, vector<56x32xbf16>
    tpu.vector_store %arg5[%c0_14, %c64], %9 {strides = array<i32>} : memref<56x288xbf16, #tpu.memory_space<vmem>>, vector<56x32xbf16>,
    %c0_15 = arith.constant 0 : index
    %c0_16 = arith.constant 0 : index
    %c64_17 = arith.constant 64 : index
    %11 = vector.load %arg1[%c0_15, %c0_16, %c64_17] : memref<2x72x128xbf16, #tpu.memory_space<vmem>>, vector<1x56x32xbf16>
    %12 = vector.shape_cast %11 : vector<1x56x32xbf16> to vector<56x32xbf16>
    %c0_18 = arith.constant 0 : index
    %c96 = arith.constant 96 : index
    %13 = vector.load %arg5[%c0_18, %c96] : memref<56x288xbf16, #tpu.memory_space<vmem>>, vector<56x32xbf16>
    tpu.vector_store %arg5[%c0_18, %c96], %12 {strides = array<i32>} : memref<56x288xbf16, #tpu.memory_space<vmem>>, vector<56x32xbf16>,
    %c0_19 = arith.constant 0 : index
    %c0_20 = arith.constant 0 : index
    %c96_21 = arith.constant 96 : index
    %14 = vector.load %arg1[%c0_19, %c0_20, %c96_21] : memref<2x72x128xbf16, #tpu.memory_space<vmem>>, vector<1x56x32xbf16>
    %15 = vector.shape_cast %14 : vector<1x56x32xbf16> to vector<56x32xbf16>
    %c0_22 = arith.constant 0 : index
    %c128 = arith.constant 128 : index
    %16 = vector.load %arg5[%c0_22, %c128] : memref<56x288xbf16, #tpu.memory_space<vmem>>, vector<56x32xbf16>
    tpu.vector_store %arg5[%c0_22, %c128], %15 {strides = array<i32>} : memref<56x288xbf16, #tpu.memory_space<vmem>>, vector<56x32xbf16>,
    %c0_23 = arith.constant 0 : index
    %c1_24 = arith.constant 1 : index
    %c64_25 = arith.constant 64 : index
    %17 = vector.load %arg1[%c0_23, %c1_24, %c64_25] : memref<2x72x128xbf16, #tpu.memory_space<vmem>>, vector<1x56x32xbf16>
    %18 = vector.shape_cast %17 : vector<1x56x32xbf16> to vector<56x32xbf16>
    %c0_26 = arith.constant 0 : index
    %c160 = arith.constant 160 : index
    %19 = vector.load %arg5[%c0_26, %c160] : memref<56x288xbf16, #tpu.memory_space<vmem>>, vector<56x32xbf16>
    tpu.vector_store %arg5[%c0_26, %c160], %18 {strides = array<i32>} : memref<56x288xbf16, #tpu.memory_space<vmem>>, vector<56x32xbf16>,
    %c0_27 = arith.constant 0 : index
    %c8 = arith.constant 8 : index
    %c0_28 = arith.constant 0 : index
    %20 = vector.load %arg1[%c0_27, %c8, %c0_28] : memref<2x72x128xbf16, #tpu.memory_space<vmem>>, vector<1x56x32xbf16>
    %21 = vector.shape_cast %20 : vector<1x56x32xbf16> to vector<56x32xbf16>
    %c0_29 = arith.constant 0 : index
    %c192 = arith.constant 192 : index
    %22 = vector.load %arg5[%c0_29, %c192] : memref<56x288xbf16, #tpu.memory_space<vmem>>, vector<56x32xbf16>
    tpu.vector_store %arg5[%c0_29, %c192], %21 {strides = array<i32>} : memref<56x288xbf16, #tpu.memory_space<vmem>>, vector<56x32xbf16>,
    %c0_30 = arith.constant 0 : index
    %c8_31 = arith.constant 8 : index
    %c32_32 = arith.constant 32 : index
    %23 = vector.load %arg1[%c0_30, %c8_31, %c32_32] : memref<2x72x128xbf16, #tpu.memory_space<vmem>>, vector<1x56x32xbf16>
    %24 = vector.shape_cast %23 : vector<1x56x32xbf16> to vector<56x32xbf16>
    %c0_33 = arith.constant 0 : index
    %c224 = arith.constant 224 : index
    %25 = vector.load %arg5[%c0_33, %c224] : memref<56x288xbf16, #tpu.memory_space<vmem>>, vector<56x32xbf16>
    tpu.vector_store %arg5[%c0_33, %c224], %24 {strides = array<i32>} : memref<56x288xbf16, #tpu.memory_space<vmem>>, vector<56x32xbf16>,
    %c0_34 = arith.constant 0 : index
    %c9 = arith.constant 9 : index
    %c0_35 = arith.constant 0 : index
    %26 = vector.load %arg1[%c0_34, %c9, %c0_35] : memref<2x72x128xbf16, #tpu.memory_space<vmem>>, vector<1x56x32xbf16>
    %27 = vector.shape_cast %26 : vector<1x56x32xbf16> to vector<56x32xbf16>
    %c0_36 = arith.constant 0 : index
    %c256 = arith.constant 256 : index
    %28 = vector.load %arg5[%c0_36, %c256] : memref<56x288xbf16, #tpu.memory_space<vmem>>, vector<56x32xbf16>
    tpu.vector_store %arg5[%c0_36, %c256], %27 {strides = array<i32>} : memref<56x288xbf16, #tpu.memory_space<vmem>>, vector<56x32xbf16>,
    %c0_37 = arith.constant 0 : index
    %c0_38 = arith.constant 0 : index
    %29 = vector.load %arg5[%c0_37, %c0_38] : memref<56x288xbf16, #tpu.memory_space<vmem>>, vector<56x288xbf16>
    %cst = arith.constant dense<0.000000e+00> : vector<56x64xf32>
    %30 = tpu.matmul %29, %0, %cst {dimension_numbers = #tpu.dot_dimension_numbers<[1], [0], [0], [1], [0, 0, 1, 1], [], []>} : vector<56x288xbf16>, vector<288x64xbf16>, vector<56x64xf32> -> vector<56x64xf32>
    %c0_39 = arith.constant 0 : index
    %c0_40 = arith.constant 0 : index
    %c32_41 = arith.constant 32 : index
    %31 = vector.load %arg1[%c0_39, %c0_40, %c32_41] : memref<2x72x128xbf16, #tpu.memory_space<vmem>>, vector<1x56x32xbf16>
    %32 = vector.shape_cast %31 : vector<1x56x32xbf16> to vector<56x32xbf16>
    %c0_42 = arith.constant 0 : index
    %c0_43 = arith.constant 0 : index
    %33 = vector.load %arg5[%c0_42, %c0_43] : memref<56x288xbf16, #tpu.memory_space<vmem>>, vector<56x32xbf16>
    tpu.vector_store %arg5[%c0_42, %c0_43], %32 {strides = array<i32>} : memref<56x288xbf16, #tpu.memory_space<vmem>>, vector<56x32xbf16>,
    %c0_44 = arith.constant 0 : index
    %c1_45 = arith.constant 1 : index
    %c0_46 = arith.constant 0 : index
    %34 = vector.load %arg1[%c0_44, %c1_45, %c0_46] : memref<2x72x128xbf16, #tpu.memory_space<vmem>>, vector<1x56x32xbf16>
    %35 = vector.shape_cast %34 : vector<1x56x32xbf16> to vector<56x32xbf16>
    %c0_47 = arith.constant 0 : index
    %c32_48 = arith.constant 32 : index
    %36 = vector.load %arg5[%c0_47, %c32_48] : memref<56x288xbf16, #tpu.memory_space<vmem>>, vector<56x32xbf16>
    tpu.vector_store %arg5[%c0_47, %c32_48], %35 {strides = array<i32>} : memref<56x288xbf16, #tpu.memory_space<vmem>>, vector<56x32xbf16>,
    %c0_49 = arith.constant 0 : index
    %c1_50 = arith.constant 1 : index
    %c32_51 = arith.constant 32 : index
    %37 = vector.load %arg1[%c0_49, %c1_50, %c32_51] : memref<2x72x128xbf16, #tpu.memory_space<vmem>>, vector<1x56x32xbf16>
    %38 = vector.shape_cast %37 : vector<1x56x32xbf16> to vector<56x32xbf16>
    %c0_52 = arith.constant 0 : index
    %c64_53 = arith.constant 64 : index
    %39 = vector.load %arg5[%c0_52, %c64_53] : memref<56x288xbf16, #tpu.memory_space<vmem>>, vector<56x32xbf16>
    tpu.vector_store %arg5[%c0_52, %c64_53], %38 {strides = array<i32>} : memref<56x288xbf16, #tpu.memory_space<vmem>>, vector<56x32xbf16>,
    %c0_54 = arith.constant 0 : index
    %c0_55 = arith.constant 0 : index
    %c96_56 = arith.constant 96 : index
    %40 = vector.load %arg1[%c0_54, %c0_55, %c96_56] : memref<2x72x128xbf16, #tpu.memory_space<vmem>>, vector<1x56x32xbf16>
    %41 = vector.shape_cast %40 : vector<1x56x32xbf16> to vector<56x32xbf16>
    %c0_57 = arith.constant 0 : index
    %c96_58 = arith.constant 96 : index
    %42 = vector.load %arg5[%c0_57, %c96_58] : memref<56x288xbf16, #tpu.memory_space<vmem>>, vector<56x32xbf16>
    tpu.vector_store %arg5[%c0_57, %c96_58], %41 {strides = array<i32>} : memref<56x288xbf16, #tpu.memory_space<vmem>>, vector<56x32xbf16>,
    %c0_59 = arith.constant 0 : index
    %c1_60 = arith.constant 1 : index
    %c64_61 = arith.constant 64 : index
    %43 = vector.load %arg1[%c0_59, %c1_60, %c64_61] : memref<2x72x128xbf16, #tpu.memory_space<vmem>>, vector<1x56x32xbf16>
    %44 = vector.shape_cast %43 : vector<1x56x32xbf16> to vector<56x32xbf16>
    %c0_62 = arith.constant 0 : index
    %c128_63 = arith.constant 128 : index
    %45 = vector.load %arg5[%c0_62, %c128_63] : memref<56x288xbf16, #tpu.memory_space<vmem>>, vector<56x32xbf16>
    tpu.vector_store %arg5[%c0_62, %c128_63], %44 {strides = array<i32>} : memref<56x288xbf16, #tpu.memory_space<vmem>>, vector<56x32xbf16>,
    %c0_64 = arith.constant 0 : index
    %c1_65 = arith.constant 1 : index
    %c96_66 = arith.constant 96 : index
    %46 = vector.load %arg1[%c0_64, %c1_65, %c96_66] : memref<2x72x128xbf16, #tpu.memory_space<vmem>>, vector<1x56x32xbf16>
    %47 = vector.shape_cast %46 : vector<1x56x32xbf16> to vector<56x32xbf16>
    %c0_67 = arith.constant 0 : index
    %c160_68 = arith.constant 160 : index
    %48 = vector.load %arg5[%c0_67, %c160_68] : memref<56x288xbf16, #tpu.memory_space<vmem>>, vector<56x32xbf16>
    tpu.vector_store %arg5[%c0_67, %c160_68], %47 {strides = array<i32>} : memref<56x288xbf16, #tpu.memory_space<vmem>>, vector<56x32xbf16>,
    %c0_69 = arith.constant 0 : index
    %c8_70 = arith.constant 8 : index
    %c32_71 = arith.constant 32 : index
    %49 = vector.load %arg1[%c0_69, %c8_70, %c32_71] : memref<2x72x128xbf16, #tpu.memory_space<vmem>>, vector<1x56x32xbf16>
    %50 = vector.shape_cast %49 : vector<1x56x32xbf16> to vector<56x32xbf16>
    %c0_72 = arith.constant 0 : index
    %c192_73 = arith.constant 192 : index
    %51 = vector.load %arg5[%c0_72, %c192_73] : memref<56x288xbf16, #tpu.memory_space<vmem>>, vector<56x32xbf16>
    tpu.vector_store %arg5[%c0_72, %c192_73], %50 {strides = array<i32>} : memref<56x288xbf16, #tpu.memory_space<vmem>>, vector<56x32xbf16>,
    %c0_74 = arith.constant 0 : index
    %c9_75 = arith.constant 9 : index
    %c0_76 = arith.constant 0 : index
    %52 = vector.load %arg1[%c0_74, %c9_75, %c0_76] : memref<2x72x128xbf16, #tpu.memory_space<vmem>>, vector<1x56x32xbf16>
    %53 = vector.shape_cast %52 : vector<1x56x32xbf16> to vector<56x32xbf16>
    %c0_77 = arith.constant 0 : index
    %c224_78 = arith.constant 224 : index
    %54 = vector.load %arg5[%c0_77, %c224_78] : memref<56x288xbf16, #tpu.memory_space<vmem>>, vector<56x32xbf16>
    tpu.vector_store %arg5[%c0_77, %c224_78], %53 {strides = array<i32>} : memref<56x288xbf16, #tpu.memory_space<vmem>>, vector<56x32xbf16>,
    %c0_79 = arith.constant 0 : index
    %c9_80 = arith.constant 9 : index
    %c32_81 = arith.constant 32 : index
    %55 = vector.load %arg1[%c0_79, %c9_80, %c32_81] : memref<2x72x128xbf16, #tpu.memory_space<vmem>>, vector<1x56x32xbf16>
    %56 = vector.shape_cast %55 : vector<1x56x32xbf16> to vector<56x32xbf16>
    %c0_82 = arith.constant 0 : index
    %c256_83 = arith.constant 256 : index
    %57 = vector.load %arg5[%c0_82, %c256_83] : memref<56x288xbf16, #tpu.memory_space<vmem>>, vector<56x32xbf16>
    tpu.vector_store %arg5[%c0_82, %c256_83], %56 {strides = array<i32>} : memref<56x288xbf16, #tpu.memory_space<vmem>>, vector<56x32xbf16>,
    %c0_84 = arith.constant 0 : index
    %c0_85 = arith.constant 0 : index
    %58 = vector.load %arg5[%c0_84, %c0_85] : memref<56x288xbf16, #tpu.memory_space<vmem>>, vector<56x288xbf16>
    %cst_86 = arith.constant dense<0.000000e+00> : vector<56x64xf32>
    %59 = tpu.matmul %58, %0, %cst_86 {dimension_numbers = #tpu.dot_dimension_numbers<[1], [0], [0], [1], [0, 0, 1, 1], [], []>} : vector<56x288xbf16>, vector<288x64xbf16>, vector<56x64xf32> -> vector<56x64xf32>
    %60 = arith.maximumf %30, %59 : vector<56x64xf32>
    %c0_87 = arith.constant 0 : index
    %c0_88 = arith.constant 0 : index
    %c64_89 = arith.constant 64 : index
    %61 = vector.load %arg1[%c0_87, %c0_88, %c64_89] : memref<2x72x128xbf16, #tpu.memory_space<vmem>>, vector<1x56x32xbf16>
    %62 = vector.shape_cast %61 : vector<1x56x32xbf16> to vector<56x32xbf16>
    %c0_90 = arith.constant 0 : index
    %c0_91 = arith.constant 0 : index
    %63 = vector.load %arg5[%c0_90, %c0_91] : memref<56x288xbf16, #tpu.memory_space<vmem>>, vector<56x32xbf16>
    tpu.vector_store %arg5[%c0_90, %c0_91], %62 {strides = array<i32>} : memref<56x288xbf16, #tpu.memory_space<vmem>>, vector<56x32xbf16>,
    %c0_92 = arith.constant 0 : index
    %c0_93 = arith.constant 0 : index
    %c96_94 = arith.constant 96 : index
    %64 = vector.load %arg1[%c0_92, %c0_93, %c96_94] : memref<2x72x128xbf16, #tpu.memory_space<vmem>>, vector<1x56x32xbf16>
    %65 = vector.shape_cast %64 : vector<1x56x32xbf16> to vector<56x32xbf16>
    %c0_95 = arith.constant 0 : index
    %c32_96 = arith.constant 32 : index
    %66 = vector.load %arg5[%c0_95, %c32_96] : memref<56x288xbf16, #tpu.memory_space<vmem>>, vector<56x32xbf16>
    tpu.vector_store %arg5[%c0_95, %c32_96], %65 {strides = array<i32>} : memref<56x288xbf16, #tpu.memory_space<vmem>>, vector<56x32xbf16>,
    %c0_97 = arith.constant 0 : index
    %c1_98 = arith.constant 1 : index
    %c64_99 = arith.constant 64 : index
    %67 = vector.load %arg1[%c0_97, %c1_98, %c64_99] : memref<2x72x128xbf16, #tpu.memory_space<vmem>>, vector<1x56x32xbf16>
    %68 = vector.shape_cast %67 : vector<1x56x32xbf16> to vector<56x32xbf16>
    %c0_100 = arith.constant 0 : index
    %c64_101 = arith.constant 64 : index
    %69 = vector.load %arg5[%c0_100, %c64_101] : memref<56x288xbf16, #tpu.memory_space<vmem>>, vector<56x32xbf16>
    tpu.vector_store %arg5[%c0_100, %c64_101], %68 {strides = array<i32>} : memref<56x288xbf16, #tpu.memory_space<vmem>>, vector<56x32xbf16>,
    %c0_102 = arith.constant 0 : index
    %c8_103 = arith.constant 8 : index
    %c0_104 = arith.constant 0 : index
    %70 = vector.load %arg1[%c0_102, %c8_103, %c0_104] : memref<2x72x128xbf16, #tpu.memory_space<vmem>>, vector<1x56x32xbf16>
    %71 = vector.shape_cast %70 : vector<1x56x32xbf16> to vector<56x32xbf16>
    %c0_105 = arith.constant 0 : index
    %c96_106 = arith.constant 96 : index
    %72 = vector.load %arg5[%c0_105, %c96_106] : memref<56x288xbf16, #tpu.memory_space<vmem>>, vector<56x32xbf16>
    tpu.vector_store %arg5[%c0_105, %c96_106], %71 {strides = array<i32>} : memref<56x288xbf16, #tpu.memory_space<vmem>>, vector<56x32xbf16>,
    %c0_107 = arith.constant 0 : index
    %c8_108 = arith.constant 8 : index
    %c32_109 = arith.constant 32 : index
    %73 = vector.load %arg1[%c0_107, %c8_108, %c32_109] : memref<2x72x128xbf16, #tpu.memory_space<vmem>>, vector<1x56x32xbf16>
    %74 = vector.shape_cast %73 : vector<1x56x32xbf16> to vector<56x32xbf16>
    %c0_110 = arith.constant 0 : index
    %c128_111 = arith.constant 128 : index
    %75 = vector.load %arg5[%c0_110, %c128_111] : memref<56x288xbf16, #tpu.memory_space<vmem>>, vector<56x32xbf16>
    tpu.vector_store %arg5[%c0_110, %c128_111], %74 {strides = array<i32>} : memref<56x288xbf16, #tpu.memory_space<vmem>>, vector<56x32xbf16>,
    %c0_112 = arith.constant 0 : index
    %c9_113 = arith.constant 9 : index
    %c0_114 = arith.constant 0 : index
    %76 = vector.load %arg1[%c0_112, %c9_113, %c0_114] : memref<2x72x128xbf16, #tpu.memory_space<vmem>>, vector<1x56x32xbf16>
    %77 = vector.shape_cast %76 : vector<1x56x32xbf16> to vector<56x32xbf16>
    %c0_115 = arith.constant 0 : index
    %c160_116 = arith.constant 160 : index
    %78 = vector.load %arg5[%c0_115, %c160_116] : memref<56x288xbf16, #tpu.memory_space<vmem>>, vector<56x32xbf16>
    tpu.vector_store %arg5[%c0_115, %c160_116], %77 {strides = array<i32>} : memref<56x288xbf16, #tpu.memory_space<vmem>>, vector<56x32xbf16>,
    %c0_117 = arith.constant 0 : index
    %c8_118 = arith.constant 8 : index
    %c64_119 = arith.constant 64 : index
    %79 = vector.load %arg1[%c0_117, %c8_118, %c64_119] : memref<2x72x128xbf16, #tpu.memory_space<vmem>>, vector<1x56x32xbf16>
    %80 = vector.shape_cast %79 : vector<1x56x32xbf16> to vector<56x32xbf16>
    %c0_120 = arith.constant 0 : index
    %c192_121 = arith.constant 192 : index
    %81 = vector.load %arg5[%c0_120, %c192_121] : memref<56x288xbf16, #tpu.memory_space<vmem>>, vector<56x32xbf16>
    tpu.vector_store %arg5[%c0_120, %c192_121], %80 {strides = array<i32>} : memref<56x288xbf16, #tpu.memory_space<vmem>>, vector<56x32xbf16>,
    %c0_122 = arith.constant 0 : index
    %c8_123 = arith.constant 8 : index
    %c96_124 = arith.constant 96 : index
    %82 = vector.load %arg1[%c0_122, %c8_123, %c96_124] : memref<2x72x128xbf16, #tpu.memory_space<vmem>>, vector<1x56x32xbf16>
    %83 = vector.shape_cast %82 : vector<1x56x32xbf16> to vector<56x32xbf16>
    %c0_125 = arith.constant 0 : index
    %c224_126 = arith.constant 224 : index
    %84 = vector.load %arg5[%c0_125, %c224_126] : memref<56x288xbf16, #tpu.memory_space<vmem>>, vector<56x32xbf16>
    tpu.vector_store %arg5[%c0_125, %c224_126], %83 {strides = array<i32>} : memref<56x288xbf16, #tpu.memory_space<vmem>>, vector<56x32xbf16>,
    %c0_127 = arith.constant 0 : index
    %c9_128 = arith.constant 9 : index
    %c64_129 = arith.constant 64 : index
    %85 = vector.load %arg1[%c0_127, %c9_128, %c64_129] : memref<2x72x128xbf16, #tpu.memory_space<vmem>>, vector<1x56x32xbf16>
    %86 = vector.shape_cast %85 : vector<1x56x32xbf16> to vector<56x32xbf16>
    %c0_130 = arith.constant 0 : index
    %c256_131 = arith.constant 256 : index
    %87 = vector.load %arg5[%c0_130, %c256_131] : memref<56x288xbf16, #tpu.memory_space<vmem>>, vector<56x32xbf16>
    tpu.vector_store %arg5[%c0_130, %c256_131], %86 {strides = array<i32>} : memref<56x288xbf16, #tpu.memory_space<vmem>>, vector<56x32xbf16>,
    %c0_132 = arith.constant 0 : index
    %c0_133 = arith.constant 0 : index
    %88 = vector.load %arg5[%c0_132, %c0_133] : memref<56x288xbf16, #tpu.memory_space<vmem>>, vector<56x288xbf16>
    %cst_134 = arith.constant dense<0.000000e+00> : vector<56x64xf32>
    %89 = tpu.matmul %88, %0, %cst_134 {dimension_numbers = #tpu.dot_dimension_numbers<[1], [0], [0], [1], [0, 0, 1, 1], [], []>} : vector<56x288xbf16>, vector<288x64xbf16>, vector<56x64xf32> -> vector<56x64xf32>
    %90 = arith.maximumf %60, %89 : vector<56x64xf32>
    %c0_135 = arith.constant 0 : index
    %c0_136 = arith.constant 0 : index
    %c96_137 = arith.constant 96 : index
    %91 = vector.load %arg1[%c0_135, %c0_136, %c96_137] : memref<2x72x128xbf16, #tpu.memory_space<vmem>>, vector<1x56x32xbf16>
    %92 = vector.shape_cast %91 : vector<1x56x32xbf16> to vector<56x32xbf16>
    %c0_138 = arith.constant 0 : index
    %c0_139 = arith.constant 0 : index
    %93 = vector.load %arg5[%c0_138, %c0_139] : memref<56x288xbf16, #tpu.memory_space<vmem>>, vector<56x32xbf16>
    tpu.vector_store %arg5[%c0_138, %c0_139], %92 {strides = array<i32>} : memref<56x288xbf16, #tpu.memory_space<vmem>>, vector<56x32xbf16>,
    %c0_140 = arith.constant 0 : index
    %c1_141 = arith.constant 1 : index
    %c64_142 = arith.constant 64 : index
    %94 = vector.load %arg1[%c0_140, %c1_141, %c64_142] : memref<2x72x128xbf16, #tpu.memory_space<vmem>>, vector<1x56x32xbf16>
    %95 = vector.shape_cast %94 : vector<1x56x32xbf16> to vector<56x32xbf16>
    %c0_143 = arith.constant 0 : index
    %c32_144 = arith.constant 32 : index
    %96 = vector.load %arg5[%c0_143, %c32_144] : memref<56x288xbf16, #tpu.memory_space<vmem>>, vector<56x32xbf16>
    tpu.vector_store %arg5[%c0_143, %c32_144], %95 {strides = array<i32>} : memref<56x288xbf16, #tpu.memory_space<vmem>>, vector<56x32xbf16>,
    %c0_145 = arith.constant 0 : index
    %c1_146 = arith.constant 1 : index
    %c96_147 = arith.constant 96 : index
    %97 = vector.load %arg1[%c0_145, %c1_146, %c96_147] : memref<2x72x128xbf16, #tpu.memory_space<vmem>>, vector<1x56x32xbf16>
    %98 = vector.shape_cast %97 : vector<1x56x32xbf16> to vector<56x32xbf16>
    %c0_148 = arith.constant 0 : index
    %c64_149 = arith.constant 64 : index
    %99 = vector.load %arg5[%c0_148, %c64_149] : memref<56x288xbf16, #tpu.memory_space<vmem>>, vector<56x32xbf16>
    tpu.vector_store %arg5[%c0_148, %c64_149], %98 {strides = array<i32>} : memref<56x288xbf16, #tpu.memory_space<vmem>>, vector<56x32xbf16>,
    %c0_150 = arith.constant 0 : index
    %c8_151 = arith.constant 8 : index
    %c32_152 = arith.constant 32 : index
    %100 = vector.load %arg1[%c0_150, %c8_151, %c32_152] : memref<2x72x128xbf16, #tpu.memory_space<vmem>>, vector<1x56x32xbf16>
    %101 = vector.shape_cast %100 : vector<1x56x32xbf16> to vector<56x32xbf16>
    %c0_153 = arith.constant 0 : index
    %c96_154 = arith.constant 96 : index
    %102 = vector.load %arg5[%c0_153, %c96_154] : memref<56x288xbf16, #tpu.memory_space<vmem>>, vector<56x32xbf16>
    tpu.vector_store %arg5[%c0_153, %c96_154], %101 {strides = array<i32>} : memref<56x288xbf16, #tpu.memory_space<vmem>>, vector<56x32xbf16>,
    %c0_155 = arith.constant 0 : index
    %c9_156 = arith.constant 9 : index
    %c0_157 = arith.constant 0 : index
    %103 = vector.load %arg1[%c0_155, %c9_156, %c0_157] : memref<2x72x128xbf16, #tpu.memory_space<vmem>>, vector<1x56x32xbf16>
    %104 = vector.shape_cast %103 : vector<1x56x32xbf16> to vector<56x32xbf16>
    %c0_158 = arith.constant 0 : index
    %c128_159 = arith.constant 128 : index
    %105 = vector.load %arg5[%c0_158, %c128_159] : memref<56x288xbf16, #tpu.memory_space<vmem>>, vector<56x32xbf16>
    tpu.vector_store %arg5[%c0_158, %c128_159], %104 {strides = array<i32>} : memref<56x288xbf16, #tpu.memory_space<vmem>>, vector<56x32xbf16>,
    %c0_160 = arith.constant 0 : index
    %c9_161 = arith.constant 9 : index
    %c32_162 = arith.constant 32 : index
    %106 = vector.load %arg1[%c0_160, %c9_161, %c32_162] : memref<2x72x128xbf16, #tpu.memory_space<vmem>>, vector<1x56x32xbf16>
    %107 = vector.shape_cast %106 : vector<1x56x32xbf16> to vector<56x32xbf16>
    %c0_163 = arith.constant 0 : index
    %c160_164 = arith.constant 160 : index
    %108 = vector.load %arg5[%c0_163, %c160_164] : memref<56x288xbf16, #tpu.memory_space<vmem>>, vector<56x32xbf16>
    tpu.vector_store %arg5[%c0_163, %c160_164], %107 {strides = array<i32>} : memref<56x288xbf16, #tpu.memory_space<vmem>>, vector<56x32xbf16>,
    %c0_165 = arith.constant 0 : index
    %c8_166 = arith.constant 8 : index
    %c96_167 = arith.constant 96 : index
    %109 = vector.load %arg1[%c0_165, %c8_166, %c96_167] : memref<2x72x128xbf16, #tpu.memory_space<vmem>>, vector<1x56x32xbf16>
    %110 = vector.shape_cast %109 : vector<1x56x32xbf16> to vector<56x32xbf16>
    %c0_168 = arith.constant 0 : index
    %c192_169 = arith.constant 192 : index
    %111 = vector.load %arg5[%c0_168, %c192_169] : memref<56x288xbf16, #tpu.memory_space<vmem>>, vector<56x32xbf16>
    tpu.vector_store %arg5[%c0_168, %c192_169], %110 {strides = array<i32>} : memref<56x288xbf16, #tpu.memory_space<vmem>>, vector<56x32xbf16>,
    %c0_170 = arith.constant 0 : index
    %c9_171 = arith.constant 9 : index
    %c64_172 = arith.constant 64 : index
    %112 = vector.load %arg1[%c0_170, %c9_171, %c64_172] : memref<2x72x128xbf16, #tpu.memory_space<vmem>>, vector<1x56x32xbf16>
    %113 = vector.shape_cast %112 : vector<1x56x32xbf16> to vector<56x32xbf16>
    %c0_173 = arith.constant 0 : index
    %c224_174 = arith.constant 224 : index
    %114 = vector.load %arg5[%c0_173, %c224_174] : memref<56x288xbf16, #tpu.memory_space<vmem>>, vector<56x32xbf16>
    tpu.vector_store %arg5[%c0_173, %c224_174], %113 {strides = array<i32>} : memref<56x288xbf16, #tpu.memory_space<vmem>>, vector<56x32xbf16>,
    %c0_175 = arith.constant 0 : index
    %c9_176 = arith.constant 9 : index
    %c96_177 = arith.constant 96 : index
    %115 = vector.load %arg1[%c0_175, %c9_176, %c96_177] : memref<2x72x128xbf16, #tpu.memory_space<vmem>>, vector<1x56x32xbf16>
    %116 = vector.shape_cast %115 : vector<1x56x32xbf16> to vector<56x32xbf16>
    %c0_178 = arith.constant 0 : index
    %c256_179 = arith.constant 256 : index
    %117 = vector.load %arg5[%c0_178, %c256_179] : memref<56x288xbf16, #tpu.memory_space<vmem>>, vector<56x32xbf16>
    tpu.vector_store %arg5[%c0_178, %c256_179], %116 {strides = array<i32>} : memref<56x288xbf16, #tpu.memory_space<vmem>>, vector<56x32xbf16>,
    %c0_180 = arith.constant 0 : index
    %c0_181 = arith.constant 0 : index
    %118 = vector.load %arg5[%c0_180, %c0_181] : memref<56x288xbf16, #tpu.memory_space<vmem>>, vector<56x288xbf16>
    %cst_182 = arith.constant dense<0.000000e+00> : vector<56x64xf32>
    %119 = tpu.matmul %118, %0, %cst_182 {dimension_numbers = #tpu.dot_dimension_numbers<[1], [0], [0], [1], [0, 0, 1, 1], [], []>} : vector<56x288xbf16>, vector<288x64xbf16>, vector<56x64xf32> -> vector<56x64xf32>
    %120 = arith.maximumf %90, %119 : vector<56x64xf32>
    %121 = vector.broadcast %1 : vector<1x64xf32> to vector<56x64xf32>
    %122 = arith.addf %120, %121 : vector<56x64xf32>
    %cst_183 = arith.constant 0.000000e+00 : f32
    %123 = vector.broadcast %cst_183 : f32 to vector<56x64xf32>
    %124 = arith.maximumf %122, %123 : vector<56x64xf32>
    %125 = arith.truncf %124 : vector<56x64xf32> to vector<56x64xbf16>
    %c0_184 = arith.constant 0 : index
    %c0_185 = arith.constant 0 : index
    %c0_186 = arith.constant 0 : index
    %126 = vector.load %arg4[%c0_184, %c0_185, %c0_186] : memref<2x56x64xbf16, #tpu.memory_space<vmem>>, vector<1x56x64xbf16>
    %127 = vector.shape_cast %126 : vector<1x56x64xbf16> to vector<56x64xbf16>
    %128 = vector.shape_cast %125 : vector<56x64xbf16> to vector<1x56x64xbf16>
    tpu.vector_store %arg4[%c0_184, %c0_185, %c0_186], %128 {strides = array<i32>} : memref<2x56x64xbf16, #tpu.memory_space<vmem>>, vector<1x56x64xbf16>,
    %c1_187 = arith.constant 1 : index
    %c0_188 = arith.constant 0 : index
    %c0_189 = arith.constant 0 : index
    %129 = vector.load %arg1[%c1_187, %c0_188, %c0_189] : memref<2x72x128xbf16, #tpu.memory_space<vmem>>, vector<1x56x32xbf16>
    %130 = vector.shape_cast %129 : vector<1x56x32xbf16> to vector<56x32xbf16>
    %c0_190 = arith.constant 0 : index
    %c0_191 = arith.constant 0 : index
    %131 = vector.load %arg5[%c0_190, %c0_191] : memref<56x288xbf16, #tpu.memory_space<vmem>>, vector<56x32xbf16>
    tpu.vector_store %arg5[%c0_190, %c0_191], %130 {strides = array<i32>} : memref<56x288xbf16, #tpu.memory_space<vmem>>, vector<56x32xbf16>,
    %c1_192 = arith.constant 1 : index
    %c0_193 = arith.constant 0 : index
    %c32_194 = arith.constant 32 : index
    %132 = vector.load %arg1[%c1_192, %c0_193, %c32_194] : memref<2x72x128xbf16, #tpu.memory_space<vmem>>, vector<1x56x32xbf16>
    %133 = vector.shape_cast %132 : vector<1x56x32xbf16> to vector<56x32xbf16>
    %c0_195 = arith.constant 0 : index
    %c32_196 = arith.constant 32 : index
    %134 = vector.load %arg5[%c0_195, %c32_196] : memref<56x288xbf16, #tpu.memory_space<vmem>>, vector<56x32xbf16>
    tpu.vector_store %arg5[%c0_195, %c32_196], %133 {strides = array<i32>} : memref<56x288xbf16, #tpu.memory_space<vmem>>, vector<56x32xbf16>,
    %c1_197 = arith.constant 1 : index
    %c1_198 = arith.constant 1 : index
    %c0_199 = arith.constant 0 : index
    %135 = vector.load %arg1[%c1_197, %c1_198, %c0_199] : memref<2x72x128xbf16, #tpu.memory_space<vmem>>, vector<1x56x32xbf16>
    %136 = vector.shape_cast %135 : vector<1x56x32xbf16> to vector<56x32xbf16>
    %c0_200 = arith.constant 0 : index
    %c64_201 = arith.constant 64 : index
    %137 = vector.load %arg5[%c0_200, %c64_201] : memref<56x288xbf16, #tpu.memory_space<vmem>>, vector<56x32xbf16>
    tpu.vector_store %arg5[%c0_200, %c64_201], %136 {strides = array<i32>} : memref<56x288xbf16, #tpu.memory_space<vmem>>, vector<56x32xbf16>,
    %c1_202 = arith.constant 1 : index
    %c0_203 = arith.constant 0 : index
    %c64_204 = arith.constant 64 : index
    %138 = vector.load %arg1[%c1_202, %c0_203, %c64_204] : memref<2x72x128xbf16, #tpu.memory_space<vmem>>, vector<1x56x32xbf16>
    %139 = vector.shape_cast %138 : vector<1x56x32xbf16> to vector<56x32xbf16>
    %c0_205 = arith.constant 0 : index
    %c96_206 = arith.constant 96 : index
    %140 = vector.load %arg5[%c0_205, %c96_206] : memref<56x288xbf16, #tpu.memory_space<vmem>>, vector<56x32xbf16>
    tpu.vector_store %arg5[%c0_205, %c96_206], %139 {strides = array<i32>} : memref<56x288xbf16, #tpu.memory_space<vmem>>, vector<56x32xbf16>,
    %c1_207 = arith.constant 1 : index
    %c0_208 = arith.constant 0 : index
    %c96_209 = arith.constant 96 : index
    %141 = vector.load %arg1[%c1_207, %c0_208, %c96_209] : memref<2x72x128xbf16, #tpu.memory_space<vmem>>, vector<1x56x32xbf16>
    %142 = vector.shape_cast %141 : vector<1x56x32xbf16> to vector<56x32xbf16>
    %c0_210 = arith.constant 0 : index
    %c128_211 = arith.constant 128 : index
    %143 = vector.load %arg5[%c0_210, %c128_211] : memref<56x288xbf16, #tpu.memory_space<vmem>>, vector<56x32xbf16>
    tpu.vector_store %arg5[%c0_210, %c128_211], %142 {strides = array<i32>} : memref<56x288xbf16, #tpu.memory_space<vmem>>, vector<56x32xbf16>,
    %c1_212 = arith.constant 1 : index
    %c1_213 = arith.constant 1 : index
    %c64_214 = arith.constant 64 : index
    %144 = vector.load %arg1[%c1_212, %c1_213, %c64_214] : memref<2x72x128xbf16, #tpu.memory_space<vmem>>, vector<1x56x32xbf16>
    %145 = vector.shape_cast %144 : vector<1x56x32xbf16> to vector<56x32xbf16>
    %c0_215 = arith.constant 0 : index
    %c160_216 = arith.constant 160 : index
    %146 = vector.load %arg5[%c0_215, %c160_216] : memref<56x288xbf16, #tpu.memory_space<vmem>>, vector<56x32xbf16>
    tpu.vector_store %arg5[%c0_215, %c160_216], %145 {strides = array<i32>} : memref<56x288xbf16, #tpu.memory_space<vmem>>, vector<56x32xbf16>,
    %c1_217 = arith.constant 1 : index
    %c8_218 = arith.constant 8 : index
    %c0_219 = arith.constant 0 : index
    %147 = vector.load %arg1[%c1_217, %c8_218, %c0_219] : memref<2x72x128xbf16, #tpu.memory_space<vmem>>, vector<1x56x32xbf16>
    %148 = vector.shape_cast %147 : vector<1x56x32xbf16> to vector<56x32xbf16>
    %c0_220 = arith.constant 0 : index
    %c192_221 = arith.constant 192 : index
    %149 = vector.load %arg5[%c0_220, %c192_221] : memref<56x288xbf16, #tpu.memory_space<vmem>>, vector<56x32xbf16>
    tpu.vector_store %arg5[%c0_220, %c192_221], %148 {strides = array<i32>} : memref<56x288xbf16, #tpu.memory_space<vmem>>, vector<56x32xbf16>,
    %c1_222 = arith.constant 1 : index
    %c8_223 = arith.constant 8 : index
    %c32_224 = arith.constant 32 : index
    %150 = vector.load %arg1[%c1_222, %c8_223, %c32_224] : memref<2x72x128xbf16, #tpu.memory_space<vmem>>, vector<1x56x32xbf16>
    %151 = vector.shape_cast %150 : vector<1x56x32xbf16> to vector<56x32xbf16>
    %c0_225 = arith.constant 0 : index
    %c224_226 = arith.constant 224 : index
    %152 = vector.load %arg5[%c0_225, %c224_226] : memref<56x288xbf16, #tpu.memory_space<vmem>>, vector<56x32xbf16>
    tpu.vector_store %arg5[%c0_225, %c224_226], %151 {strides = array<i32>} : memref<56x288xbf16, #tpu.memory_space<vmem>>, vector<56x32xbf16>,
    %c1_227 = arith.constant 1 : index
    %c9_228 = arith.constant 9 : index
    %c0_229 = arith.constant 0 : index
    %153 = vector.load %arg1[%c1_227, %c9_228, %c0_229] : memref<2x72x128xbf16, #tpu.memory_space<vmem>>, vector<1x56x32xbf16>
    %154 = vector.shape_cast %153 : vector<1x56x32xbf16> to vector<56x32xbf16>
    %c0_230 = arith.constant 0 : index
    %c256_231 = arith.constant 256 : index
    %155 = vector.load %arg5[%c0_230, %c256_231] : memref<56x288xbf16, #tpu.memory_space<vmem>>, vector<56x32xbf16>
    tpu.vector_store %arg5[%c0_230, %c256_231], %154 {strides = array<i32>} : memref<56x288xbf16, #tpu.memory_space<vmem>>, vector<56x32xbf16>,
    %c0_232 = arith.constant 0 : index
    %c0_233 = arith.constant 0 : index
    %156 = vector.load %arg5[%c0_232, %c0_233] : memref<56x288xbf16, #tpu.memory_space<vmem>>, vector<56x288xbf16>
    %cst_234 = arith.constant dense<0.000000e+00> : vector<56x64xf32>
    %157 = tpu.matmul %156, %0, %cst_234 {dimension_numbers = #tpu.dot_dimension_numbers<[1], [0], [0], [1], [0, 0, 1, 1], [], []>} : vector<56x288xbf16>, vector<288x64xbf16>, vector<56x64xf32> -> vector<56x64xf32>
    %c1_235 = arith.constant 1 : index
    %c0_236 = arith.constant 0 : index
    %c32_237 = arith.constant 32 : index
    %158 = vector.load %arg1[%c1_235, %c0_236, %c32_237] : memref<2x72x128xbf16, #tpu.memory_space<vmem>>, vector<1x56x32xbf16>
    %159 = vector.shape_cast %158 : vector<1x56x32xbf16> to vector<56x32xbf16>
    %c0_238 = arith.constant 0 : index
    %c0_239 = arith.constant 0 : index
    %160 = vector.load %arg5[%c0_238, %c0_239] : memref<56x288xbf16, #tpu.memory_space<vmem>>, vector<56x32xbf16>
    tpu.vector_store %arg5[%c0_238, %c0_239], %159 {strides = array<i32>} : memref<56x288xbf16, #tpu.memory_space<vmem>>, vector<56x32xbf16>,
    %c1_240 = arith.constant 1 : index
    %c1_241 = arith.constant 1 : index
    %c0_242 = arith.constant 0 : index
    %161 = vector.load %arg1[%c1_240, %c1_241, %c0_242] : memref<2x72x128xbf16, #tpu.memory_space<vmem>>, vector<1x56x32xbf16>
    %162 = vector.shape_cast %161 : vector<1x56x32xbf16> to vector<56x32xbf16>
    %c0_243 = arith.constant 0 : index
    %c32_244 = arith.constant 32 : index
    %163 = vector.load %arg5[%c0_243, %c32_244] : memref<56x288xbf16, #tpu.memory_space<vmem>>, vector<56x32xbf16>
    tpu.vector_store %arg5[%c0_243, %c32_244], %162 {strides = array<i32>} : memref<56x288xbf16, #tpu.memory_space<vmem>>, vector<56x32xbf16>,
    %c1_245 = arith.constant 1 : index
    %c1_246 = arith.constant 1 : index
    %c32_247 = arith.constant 32 : index
    %164 = vector.load %arg1[%c1_245, %c1_246, %c32_247] : memref<2x72x128xbf16, #tpu.memory_space<vmem>>, vector<1x56x32xbf16>
    %165 = vector.shape_cast %164 : vector<1x56x32xbf16> to vector<56x32xbf16>
    %c0_248 = arith.constant 0 : index
    %c64_249 = arith.constant 64 : index
    %166 = vector.load %arg5[%c0_248, %c64_249] : memref<56x288xbf16, #tpu.memory_space<vmem>>, vector<56x32xbf16>
    tpu.vector_store %arg5[%c0_248, %c64_249], %165 {strides = array<i32>} : memref<56x288xbf16, #tpu.memory_space<vmem>>, vector<56x32xbf16>,
    %c1_250 = arith.constant 1 : index
    %c0_251 = arith.constant 0 : index
    %c96_252 = arith.constant 96 : index
    %167 = vector.load %arg1[%c1_250, %c0_251, %c96_252] : memref<2x72x128xbf16, #tpu.memory_space<vmem>>, vector<1x56x32xbf16>
    %168 = vector.shape_cast %167 : vector<1x56x32xbf16> to vector<56x32xbf16>
    %c0_253 = arith.constant 0 : index
    %c96_254 = arith.constant 96 : index
    %169 = vector.load %arg5[%c0_253, %c96_254] : memref<56x288xbf16, #tpu.memory_space<vmem>>, vector<56x32xbf16>
    tpu.vector_store %arg5[%c0_253, %c96_254], %168 {strides = array<i32>} : memref<56x288xbf16, #tpu.memory_space<vmem>>, vector<56x32xbf16>,
    %c1_255 = arith.constant 1 : index
    %c1_256 = arith.constant 1 : index
    %c64_257 = arith.constant 64 : index
    %170 = vector.load %arg1[%c1_255, %c1_256, %c64_257] : memref<2x72x128xbf16, #tpu.memory_space<vmem>>, vector<1x56x32xbf16>
    %171 = vector.shape_cast %170 : vector<1x56x32xbf16> to vector<56x32xbf16>
    %c0_258 = arith.constant 0 : index
    %c128_259 = arith.constant 128 : index
    %172 = vector.load %arg5[%c0_258, %c128_259] : memref<56x288xbf16, #tpu.memory_space<vmem>>, vector<56x32xbf16>
    tpu.vector_store %arg5[%c0_258, %c128_259], %171 {strides = array<i32>} : memref<56x288xbf16, #tpu.memory_space<vmem>>, vector<56x32xbf16>,
    %c1_260 = arith.constant 1 : index
    %c1_261 = arith.constant 1 : index
    %c96_262 = arith.constant 96 : index
    %173 = vector.load %arg1[%c1_260, %c1_261, %c96_262] : memref<2x72x128xbf16, #tpu.memory_space<vmem>>, vector<1x56x32xbf16>
    %174 = vector.shape_cast %173 : vector<1x56x32xbf16> to vector<56x32xbf16>
    %c0_263 = arith.constant 0 : index
    %c160_264 = arith.constant 160 : index
    %175 = vector.load %arg5[%c0_263, %c160_264] : memref<56x288xbf16, #tpu.memory_space<vmem>>, vector<56x32xbf16>
    tpu.vector_store %arg5[%c0_263, %c160_264], %174 {strides = array<i32>} : memref<56x288xbf16, #tpu.memory_space<vmem>>, vector<56x32xbf16>,
    %c1_265 = arith.constant 1 : index
    %c8_266 = arith.constant 8 : index
    %c32_267 = arith.constant 32 : index
    %176 = vector.load %arg1[%c1_265, %c8_266, %c32_267] : memref<2x72x128xbf16, #tpu.memory_space<vmem>>, vector<1x56x32xbf16>
    %177 = vector.shape_cast %176 : vector<1x56x32xbf16> to vector<56x32xbf16>
    %c0_268 = arith.constant 0 : index
    %c192_269 = arith.constant 192 : index
    %178 = vector.load %arg5[%c0_268, %c192_269] : memref<56x288xbf16, #tpu.memory_space<vmem>>, vector<56x32xbf16>
    tpu.vector_store %arg5[%c0_268, %c192_269], %177 {strides = array<i32>} : memref<56x288xbf16, #tpu.memory_space<vmem>>, vector<56x32xbf16>,
    %c1_270 = arith.constant 1 : index
    %c9_271 = arith.constant 9 : index
    %c0_272 = arith.constant 0 : index
    %179 = vector.load %arg1[%c1_270, %c9_271, %c0_272] : memref<2x72x128xbf16, #tpu.memory_space<vmem>>, vector<1x56x32xbf16>
    %180 = vector.shape_cast %179 : vector<1x56x32xbf16> to vector<56x32xbf16>
    %c0_273 = arith.constant 0 : index
    %c224_274 = arith.constant 224 : index
    %181 = vector.load %arg5[%c0_273, %c224_274] : memref<56x288xbf16, #tpu.memory_space<vmem>>, vector<56x32xbf16>
    tpu.vector_store %arg5[%c0_273, %c224_274], %180 {strides = array<i32>} : memref<56x288xbf16, #tpu.memory_space<vmem>>, vector<56x32xbf16>,
    %c1_275 = arith.constant 1 : index
    %c9_276 = arith.constant 9 : index
    %c32_277 = arith.constant 32 : index
    %182 = vector.load %arg1[%c1_275, %c9_276, %c32_277] : memref<2x72x128xbf16, #tpu.memory_space<vmem>>, vector<1x56x32xbf16>
    %183 = vector.shape_cast %182 : vector<1x56x32xbf16> to vector<56x32xbf16>
    %c0_278 = arith.constant 0 : index
    %c256_279 = arith.constant 256 : index
    %184 = vector.load %arg5[%c0_278, %c256_279] : memref<56x288xbf16, #tpu.memory_space<vmem>>, vector<56x32xbf16>
    tpu.vector_store %arg5[%c0_278, %c256_279], %183 {strides = array<i32>} : memref<56x288xbf16, #tpu.memory_space<vmem>>, vector<56x32xbf16>,
    %c0_280 = arith.constant 0 : index
    %c0_281 = arith.constant 0 : index
    %185 = vector.load %arg5[%c0_280, %c0_281] : memref<56x288xbf16, #tpu.memory_space<vmem>>, vector<56x288xbf16>
    %cst_282 = arith.constant dense<0.000000e+00> : vector<56x64xf32>
    %186 = tpu.matmul %185, %0, %cst_282 {dimension_numbers = #tpu.dot_dimension_numbers<[1], [0], [0], [1], [0, 0, 1, 1], [], []>} : vector<56x288xbf16>, vector<288x64xbf16>, vector<56x64xf32> -> vector<56x64xf32>
    %187 = arith.maximumf %157, %186 : vector<56x64xf32>
    %c1_283 = arith.constant 1 : index
    %c0_284 = arith.constant 0 : index
    %c64_285 = arith.constant 64 : index
    %188 = vector.load %arg1[%c1_283, %c0_284, %c64_285] : memref<2x72x128xbf16, #tpu.memory_space<vmem>>, vector<1x56x32xbf16>
    %189 = vector.shape_cast %188 : vector<1x56x32xbf16> to vector<56x32xbf16>
    %c0_286 = arith.constant 0 : index
    %c0_287 = arith.constant 0 : index
    %190 = vector.load %arg5[%c0_286, %c0_287] : memref<56x288xbf16, #tpu.memory_space<vmem>>, vector<56x32xbf16>
    tpu.vector_store %arg5[%c0_286, %c0_287], %189 {strides = array<i32>} : memref<56x288xbf16, #tpu.memory_space<vmem>>, vector<56x32xbf16>,
    %c1_288 = arith.constant 1 : index
    %c0_289 = arith.constant 0 : index
    %c96_290 = arith.constant 96 : index
    %191 = vector.load %arg1[%c1_288, %c0_289, %c96_290] : memref<2x72x128xbf16, #tpu.memory_space<vmem>>, vector<1x56x32xbf16>
    %192 = vector.shape_cast %191 : vector<1x56x32xbf16> to vector<56x32xbf16>
    %c0_291 = arith.constant 0 : index
    %c32_292 = arith.constant 32 : index
    %193 = vector.load %arg5[%c0_291, %c32_292] : memref<56x288xbf16, #tpu.memory_space<vmem>>, vector<56x32xbf16>
    tpu.vector_store %arg5[%c0_291, %c32_292], %192 {strides = array<i32>} : memref<56x288xbf16, #tpu.memory_space<vmem>>, vector<56x32xbf16>,
    %c1_293 = arith.constant 1 : index
    %c1_294 = arith.constant 1 : index
    %c64_295 = arith.constant 64 : index
    %194 = vector.load %arg1[%c1_293, %c1_294, %c64_295] : memref<2x72x128xbf16, #tpu.memory_space<vmem>>, vector<1x56x32xbf16>
    %195 = vector.shape_cast %194 : vector<1x56x32xbf16> to vector<56x32xbf16>
    %c0_296 = arith.constant 0 : index
    %c64_297 = arith.constant 64 : index
    %196 = vector.load %arg5[%c0_296, %c64_297] : memref<56x288xbf16, #tpu.memory_space<vmem>>, vector<56x32xbf16>
    tpu.vector_store %arg5[%c0_296, %c64_297], %195 {strides = array<i32>} : memref<56x288xbf16, #tpu.memory_space<vmem>>, vector<56x32xbf16>,
    %c1_298 = arith.constant 1 : index
    %c8_299 = arith.constant 8 : index
    %c0_300 = arith.constant 0 : index
    %197 = vector.load %arg1[%c1_298, %c8_299, %c0_300] : memref<2x72x128xbf16, #tpu.memory_space<vmem>>, vector<1x56x32xbf16>
    %198 = vector.shape_cast %197 : vector<1x56x32xbf16> to vector<56x32xbf16>
    %c0_301 = arith.constant 0 : index
    %c96_302 = arith.constant 96 : index
    %199 = vector.load %arg5[%c0_301, %c96_302] : memref<56x288xbf16, #tpu.memory_space<vmem>>, vector<56x32xbf16>
    tpu.vector_store %arg5[%c0_301, %c96_302], %198 {strides = array<i32>} : memref<56x288xbf16, #tpu.memory_space<vmem>>, vector<56x32xbf16>,
    %c1_303 = arith.constant 1 : index
    %c8_304 = arith.constant 8 : index
    %c32_305 = arith.constant 32 : index
    %200 = vector.load %arg1[%c1_303, %c8_304, %c32_305] : memref<2x72x128xbf16, #tpu.memory_space<vmem>>, vector<1x56x32xbf16>
    %201 = vector.shape_cast %200 : vector<1x56x32xbf16> to vector<56x32xbf16>
    %c0_306 = arith.constant 0 : index
    %c128_307 = arith.constant 128 : index
    %202 = vector.load %arg5[%c0_306, %c128_307] : memref<56x288xbf16, #tpu.memory_space<vmem>>, vector<56x32xbf16>
    tpu.vector_store %arg5[%c0_306, %c128_307], %201 {strides = array<i32>} : memref<56x288xbf16, #tpu.memory_space<vmem>>, vector<56x32xbf16>,
    %c1_308 = arith.constant 1 : index
    %c9_309 = arith.constant 9 : index
    %c0_310 = arith.constant 0 : index
    %203 = vector.load %arg1[%c1_308, %c9_309, %c0_310] : memref<2x72x128xbf16, #tpu.memory_space<vmem>>, vector<1x56x32xbf16>
    %204 = vector.shape_cast %203 : vector<1x56x32xbf16> to vector<56x32xbf16>
    %c0_311 = arith.constant 0 : index
    %c160_312 = arith.constant 160 : index
    %205 = vector.load %arg5[%c0_311, %c160_312] : memref<56x288xbf16, #tpu.memory_space<vmem>>, vector<56x32xbf16>
    tpu.vector_store %arg5[%c0_311, %c160_312], %204 {strides = array<i32>} : memref<56x288xbf16, #tpu.memory_space<vmem>>, vector<56x32xbf16>,
    %c1_313 = arith.constant 1 : index
    %c8_314 = arith.constant 8 : index
    %c64_315 = arith.constant 64 : index
    %206 = vector.load %arg1[%c1_313, %c8_314, %c64_315] : memref<2x72x128xbf16, #tpu.memory_space<vmem>>, vector<1x56x32xbf16>
    %207 = vector.shape_cast %206 : vector<1x56x32xbf16> to vector<56x32xbf16>
    %c0_316 = arith.constant 0 : index
    %c192_317 = arith.constant 192 : index
    %208 = vector.load %arg5[%c0_316, %c192_317] : memref<56x288xbf16, #tpu.memory_space<vmem>>, vector<56x32xbf16>
    tpu.vector_store %arg5[%c0_316, %c192_317], %207 {strides = array<i32>} : memref<56x288xbf16, #tpu.memory_space<vmem>>, vector<56x32xbf16>,
    %c1_318 = arith.constant 1 : index
    %c8_319 = arith.constant 8 : index
    %c96_320 = arith.constant 96 : index
    %209 = vector.load %arg1[%c1_318, %c8_319, %c96_320] : memref<2x72x128xbf16, #tpu.memory_space<vmem>>, vector<1x56x32xbf16>
    %210 = vector.shape_cast %209 : vector<1x56x32xbf16> to vector<56x32xbf16>
    %c0_321 = arith.constant 0 : index
    %c224_322 = arith.constant 224 : index
    %211 = vector.load %arg5[%c0_321, %c224_322] : memref<56x288xbf16, #tpu.memory_space<vmem>>, vector<56x32xbf16>
    tpu.vector_store %arg5[%c0_321, %c224_322], %210 {strides = array<i32>} : memref<56x288xbf16, #tpu.memory_space<vmem>>, vector<56x32xbf16>,
    %c1_323 = arith.constant 1 : index
    %c9_324 = arith.constant 9 : index
    %c64_325 = arith.constant 64 : index
    %212 = vector.load %arg1[%c1_323, %c9_324, %c64_325] : memref<2x72x128xbf16, #tpu.memory_space<vmem>>, vector<1x56x32xbf16>
    %213 = vector.shape_cast %212 : vector<1x56x32xbf16> to vector<56x32xbf16>
    %c0_326 = arith.constant 0 : index
    %c256_327 = arith.constant 256 : index
    %214 = vector.load %arg5[%c0_326, %c256_327] : memref<56x288xbf16, #tpu.memory_space<vmem>>, vector<56x32xbf16>
    tpu.vector_store %arg5[%c0_326, %c256_327], %213 {strides = array<i32>} : memref<56x288xbf16, #tpu.memory_space<vmem>>, vector<56x32xbf16>,
    %c0_328 = arith.constant 0 : index
    %c0_329 = arith.constant 0 : index
    %215 = vector.load %arg5[%c0_328, %c0_329] : memref<56x288xbf16, #tpu.memory_space<vmem>>, vector<56x288xbf16>
    %cst_330 = arith.constant dense<0.000000e+00> : vector<56x64xf32>
    %216 = tpu.matmul %215, %0, %cst_330 {dimension_numbers = #tpu.dot_dimension_numbers<[1], [0], [0], [1], [0, 0, 1, 1], [], []>} : vector<56x288xbf16>, vector<288x64xbf16>, vector<56x64xf32> -> vector<56x64xf32>
    %217 = arith.maximumf %187, %216 : vector<56x64xf32>
    %c1_331 = arith.constant 1 : index
    %c0_332 = arith.constant 0 : index
    %c96_333 = arith.constant 96 : index
    %218 = vector.load %arg1[%c1_331, %c0_332, %c96_333] : memref<2x72x128xbf16, #tpu.memory_space<vmem>>, vector<1x56x32xbf16>
    %219 = vector.shape_cast %218 : vector<1x56x32xbf16> to vector<56x32xbf16>
    %c0_334 = arith.constant 0 : index
    %c0_335 = arith.constant 0 : index
    %220 = vector.load %arg5[%c0_334, %c0_335] : memref<56x288xbf16, #tpu.memory_space<vmem>>, vector<56x32xbf16>
    tpu.vector_store %arg5[%c0_334, %c0_335], %219 {strides = array<i32>} : memref<56x288xbf16, #tpu.memory_space<vmem>>, vector<56x32xbf16>,
    %c1_336 = arith.constant 1 : index
    %c1_337 = arith.constant 1 : index
    %c64_338 = arith.constant 64 : index
    %221 = vector.load %arg1[%c1_336, %c1_337, %c64_338] : memref<2x72x128xbf16, #tpu.memory_space<vmem>>, vector<1x56x32xbf16>
    %222 = vector.shape_cast %221 : vector<1x56x32xbf16> to vector<56x32xbf16>
    %c0_339 = arith.constant 0 : index
    %c32_340 = arith.constant 32 : index
    %223 = vector.load %arg5[%c0_339, %c32_340] : memref<56x288xbf16, #tpu.memory_space<vmem>>, vector<56x32xbf16>
    tpu.vector_store %arg5[%c0_339, %c32_340], %222 {strides = array<i32>} : memref<56x288xbf16, #tpu.memory_space<vmem>>, vector<56x32xbf16>,
    %c1_341 = arith.constant 1 : index
    %c1_342 = arith.constant 1 : index
    %c96_343 = arith.constant 96 : index
    %224 = vector.load %arg1[%c1_341, %c1_342, %c96_343] : memref<2x72x128xbf16, #tpu.memory_space<vmem>>, vector<1x56x32xbf16>
    %225 = vector.shape_cast %224 : vector<1x56x32xbf16> to vector<56x32xbf16>
    %c0_344 = arith.constant 0 : index
    %c64_345 = arith.constant 64 : index
    %226 = vector.load %arg5[%c0_344, %c64_345] : memref<56x288xbf16, #tpu.memory_space<vmem>>, vector<56x32xbf16>
    tpu.vector_store %arg5[%c0_344, %c64_345], %225 {strides = array<i32>} : memref<56x288xbf16, #tpu.memory_space<vmem>>, vector<56x32xbf16>,
    %c1_346 = arith.constant 1 : index
    %c8_347 = arith.constant 8 : index
    %c32_348 = arith.constant 32 : index
    %227 = vector.load %arg1[%c1_346, %c8_347, %c32_348] : memref<2x72x128xbf16, #tpu.memory_space<vmem>>, vector<1x56x32xbf16>
    %228 = vector.shape_cast %227 : vector<1x56x32xbf16> to vector<56x32xbf16>
    %c0_349 = arith.constant 0 : index
    %c96_350 = arith.constant 96 : index
    %229 = vector.load %arg5[%c0_349, %c96_350] : memref<56x288xbf16, #tpu.memory_space<vmem>>, vector<56x32xbf16>
    tpu.vector_store %arg5[%c0_349, %c96_350], %228 {strides = array<i32>} : memref<56x288xbf16, #tpu.memory_space<vmem>>, vector<56x32xbf16>,
    %c1_351 = arith.constant 1 : index
    %c9_352 = arith.constant 9 : index
    %c0_353 = arith.constant 0 : index
    %230 = vector.load %arg1[%c1_351, %c9_352, %c0_353] : memref<2x72x128xbf16, #tpu.memory_space<vmem>>, vector<1x56x32xbf16>
    %231 = vector.shape_cast %230 : vector<1x56x32xbf16> to vector<56x32xbf16>
    %c0_354 = arith.constant 0 : index
    %c128_355 = arith.constant 128 : index
    %232 = vector.load %arg5[%c0_354, %c128_355] : memref<56x288xbf16, #tpu.memory_space<vmem>>, vector<56x32xbf16>
    tpu.vector_store %arg5[%c0_354, %c128_355], %231 {strides = array<i32>} : memref<56x288xbf16, #tpu.memory_space<vmem>>, vector<56x32xbf16>,
    %c1_356 = arith.constant 1 : index
    %c9_357 = arith.constant 9 : index
    %c32_358 = arith.constant 32 : index
    %233 = vector.load %arg1[%c1_356, %c9_357, %c32_358] : memref<2x72x128xbf16, #tpu.memory_space<vmem>>, vector<1x56x32xbf16>
    %234 = vector.shape_cast %233 : vector<1x56x32xbf16> to vector<56x32xbf16>
    %c0_359 = arith.constant 0 : index
    %c160_360 = arith.constant 160 : index
    %235 = vector.load %arg5[%c0_359, %c160_360] : memref<56x288xbf16, #tpu.memory_space<vmem>>, vector<56x32xbf16>
    tpu.vector_store %arg5[%c0_359, %c160_360], %234 {strides = array<i32>} : memref<56x288xbf16, #tpu.memory_space<vmem>>, vector<56x32xbf16>,
    %c1_361 = arith.constant 1 : index
    %c8_362 = arith.constant 8 : index
    %c96_363 = arith.constant 96 : index
    %236 = vector.load %arg1[%c1_361, %c8_362, %c96_363] : memref<2x72x128xbf16, #tpu.memory_space<vmem>>, vector<1x56x32xbf16>
    %237 = vector.shape_cast %236 : vector<1x56x32xbf16> to vector<56x32xbf16>
    %c0_364 = arith.constant 0 : index
    %c192_365 = arith.constant 192 : index
    %238 = vector.load %arg5[%c0_364, %c192_365] : memref<56x288xbf16, #tpu.memory_space<vmem>>, vector<56x32xbf16>
    tpu.vector_store %arg5[%c0_364, %c192_365], %237 {strides = array<i32>} : memref<56x288xbf16, #tpu.memory_space<vmem>>, vector<56x32xbf16>,
    %c1_366 = arith.constant 1 : index
    %c9_367 = arith.constant 9 : index
    %c64_368 = arith.constant 64 : index
    %239 = vector.load %arg1[%c1_366, %c9_367, %c64_368] : memref<2x72x128xbf16, #tpu.memory_space<vmem>>, vector<1x56x32xbf16>
    %240 = vector.shape_cast %239 : vector<1x56x32xbf16> to vector<56x32xbf16>
    %c0_369 = arith.constant 0 : index
    %c224_370 = arith.constant 224 : index
    %241 = vector.load %arg5[%c0_369, %c224_370] : memref<56x288xbf16, #tpu.memory_space<vmem>>, vector<56x32xbf16>
    tpu.vector_store %arg5[%c0_369, %c224_370], %240 {strides = array<i32>} : memref<56x288xbf16, #tpu.memory_space<vmem>>, vector<56x32xbf16>,
    %c1_371 = arith.constant 1 : index
    %c9_372 = arith.constant 9 : index
    %c96_373 = arith.constant 96 : index
    %242 = vector.load %arg1[%c1_371, %c9_372, %c96_373] : memref<2x72x128xbf16, #tpu.memory_space<vmem>>, vector<1x56x32xbf16>
    %243 = vector.shape_cast %242 : vector<1x56x32xbf16> to vector<56x32xbf16>
    %c0_374 = arith.constant 0 : index
    %c256_375 = arith.constant 256 : index
    %244 = vector.load %arg5[%c0_374, %c256_375] : memref<56x288xbf16, #tpu.memory_space<vmem>>, vector<56x32xbf16>
    tpu.vector_store %arg5[%c0_374, %c256_375], %243 {strides = array<i32>} : memref<56x288xbf16, #tpu.memory_space<vmem>>, vector<56x32xbf16>,
    %c0_376 = arith.constant 0 : index
    %c0_377 = arith.constant 0 : index
    %245 = vector.load %arg5[%c0_376, %c0_377] : memref<56x288xbf16, #tpu.memory_space<vmem>>, vector<56x288xbf16>
    %cst_378 = arith.constant dense<0.000000e+00> : vector<56x64xf32>
    %246 = tpu.matmul %245, %0, %cst_378 {dimension_numbers = #tpu.dot_dimension_numbers<[1], [0], [0], [1], [0, 0, 1, 1], [], []>} : vector<56x288xbf16>, vector<288x64xbf16>, vector<56x64xf32> -> vector<56x64xf32>
    %247 = arith.maximumf %217, %246 : vector<56x64xf32>
    %248 = vector.broadcast %1 : vector<1x64xf32> to vector<56x64xf32>
    %249 = arith.addf %247, %248 : vector<56x64xf32>
    %cst_379 = arith.constant 0.000000e+00 : f32
    %250 = vector.broadcast %cst_379 : f32 to vector<56x64xf32>
    %251 = arith.maximumf %249, %250 : vector<56x64xf32>
    %252 = arith.truncf %251 : vector<56x64xf32> to vector<56x64xbf16>
    %c1_380 = arith.constant 1 : index
    %c0_381 = arith.constant 0 : index
    %c0_382 = arith.constant 0 : index
    %253 = vector.load %arg4[%c1_380, %c0_381, %c0_382] : memref<2x56x64xbf16, #tpu.memory_space<vmem>>, vector<1x56x64xbf16>
    %254 = vector.shape_cast %253 : vector<1x56x64xbf16> to vector<56x64xbf16>
    %255 = vector.shape_cast %252 : vector<56x64xbf16> to vector<1x56x64xbf16>
    tpu.vector_store %arg4[%c1_380, %c0_381, %c0_382], %255 {strides = array<i32>} : memref<2x56x64xbf16, #tpu.memory_space<vmem>>, vector<1x56x64xbf16>,
    return
  }
  func.func @transform_0(%arg0: i32) -> (i32, i32, i32) {
    %c0_i32 = arith.constant 0 : i32
    %c0_i32_0 = arith.constant 0 : i32
    %c0_i32_1 = arith.constant 0 : i32
    return %arg0, %c0_i32, %c0_i32_0 : i32, i32, i32
  }
  func.func @transform_1(%arg0: i32) -> (i32, i32) {
    %c0_i32 = arith.constant 0 : i32
    %c0_i32_0 = arith.constant 0 : i32
    %c0_i32_1 = arith.constant 0 : i32
    return %c0_i32, %c0_i32_0 : i32, i32
  }
  func.func @transform_2(%arg0: i32) -> (i32, i32) {
    %c0_i32 = arith.constant 0 : i32
    %c0_i32_0 = arith.constant 0 : i32
    %c0_i32_1 = arith.constant 0 : i32
    return %c0_i32, %c0_i32_0 : i32, i32
  }
  func.func @transform_3(%arg0: i32) -> (i32, i32, i32) {
    %c0_i32 = arith.constant 0 : i32
    %c0_i32_0 = arith.constant 0 : i32
    %c0_i32_1 = arith.constant 0 : i32
    return %arg0, %c0_i32, %c0_i32_0 : i32, i32, i32
  }
}

module attributes {stable_mosaic.version = 11 : i64} {
  func.func @_mlp_kernel(%arg0: i32, %arg1: memref<2x3584xbf16, #tpu.memory_space<vmem>>, %arg2: memref<3584x128xbf16, #tpu.memory_space<vmem>>, %arg3: memref<1x128xf32, #tpu.memory_space<vmem>>, %arg4: memref<128x128xbf16, #tpu.memory_space<vmem>>, %arg5: memref<1x128xf32, #tpu.memory_space<vmem>>, %arg6: memref<2x128xf32, #tpu.memory_space<vmem>>) attributes {dimension_semantics = [#tpu.dimension_semantics<parallel>], iteration_bounds = array<i64: 1>, scalar_prefetch = 0 : i64, scratch_operands = 0 : i64, tpu.core_type = #tpu.core_type<tc>, window_params = [{transform_indices = @transform_0, window_bounds = array<i64: 2, 3584>}, {pipeline_mode = #tpu.pipeline_mode<synchronous>, transform_indices = @transform_1, window_bounds = array<i64: 3584, 128>}, {pipeline_mode = #tpu.pipeline_mode<synchronous>, transform_indices = @transform_2, window_bounds = array<i64: 1, 128>}, {pipeline_mode = #tpu.pipeline_mode<synchronous>, transform_indices = @transform_3, window_bounds = array<i64: 128, 128>}, {pipeline_mode = #tpu.pipeline_mode<synchronous>, transform_indices = @transform_4, window_bounds = array<i64: 1, 128>}, {transform_indices = @transform_5, window_bounds = array<i64: 2, 128>}]} {
    %c0 = arith.constant 0 : index
    %c0_0 = arith.constant 0 : index
    %0 = vector.load %arg1[%c0, %c0_0] : memref<2x3584xbf16, #tpu.memory_space<vmem>>, vector<2x3584xbf16>
    %c0_1 = arith.constant 0 : index
    %c0_2 = arith.constant 0 : index
    %1 = vector.load %arg2[%c0_1, %c0_2] : memref<3584x128xbf16, #tpu.memory_space<vmem>>, vector<3584x128xbf16>
    %cst = arith.constant dense<0.000000e+00> : vector<2x128xf32>
    %2 = tpu.matmul %0, %1, %cst {dimension_numbers = #tpu.dot_dimension_numbers<[1], [0], [0], [1], [0, 0, 1, 1], [], []>} : vector<2x3584xbf16>, vector<3584x128xbf16>, vector<2x128xf32> -> vector<2x128xf32>
    %c0_3 = arith.constant 0 : index
    %c0_4 = arith.constant 0 : index
    %3 = vector.load %arg3[%c0_3, %c0_4] : memref<1x128xf32, #tpu.memory_space<vmem>>, vector<1x128xf32>
    %4 = vector.broadcast %3 : vector<1x128xf32> to vector<2x128xf32>
    %5 = arith.addf %2, %4 : vector<2x128xf32>
    %cst_5 = arith.constant 0.000000e+00 : f32
    %6 = vector.broadcast %cst_5 : f32 to vector<2x128xf32>
    %7 = arith.maximumf %5, %6 : vector<2x128xf32>
    %8 = arith.truncf %7 : vector<2x128xf32> to vector<2x128xbf16>
    %c0_6 = arith.constant 0 : index
    %c0_7 = arith.constant 0 : index
    %9 = vector.load %arg4[%c0_6, %c0_7] : memref<128x128xbf16, #tpu.memory_space<vmem>>, vector<128x128xbf16>
    %cst_8 = arith.constant dense<0.000000e+00> : vector<2x128xf32>
    %10 = tpu.matmul %8, %9, %cst_8 {dimension_numbers = #tpu.dot_dimension_numbers<[1], [0], [0], [1], [0, 0, 1, 1], [], []>} : vector<2x128xbf16>, vector<128x128xbf16>, vector<2x128xf32> -> vector<2x128xf32>
    %c0_9 = arith.constant 0 : index
    %c0_10 = arith.constant 0 : index
    %11 = vector.load %arg5[%c0_9, %c0_10] : memref<1x128xf32, #tpu.memory_space<vmem>>, vector<1x128xf32>
    %12 = vector.broadcast %11 : vector<1x128xf32> to vector<2x128xf32>
    %13 = arith.addf %10, %12 : vector<2x128xf32>
    %c0_11 = arith.constant 0 : index
    %c0_12 = arith.constant 0 : index
    %14 = vector.load %arg6[%c0_11, %c0_12] : memref<2x128xf32, #tpu.memory_space<vmem>>, vector<2x128xf32>
    tpu.vector_store %arg6[%c0_11, %c0_12], %13 {strides = array<i32>} : memref<2x128xf32, #tpu.memory_space<vmem>>, vector<2x128xf32>,
    return
  }
  func.func @transform_0(%arg0: i32) -> (i32, i32) {
    %c0_i32 = arith.constant 0 : i32
    %c0_i32_0 = arith.constant 0 : i32
    return %arg0, %c0_i32 : i32, i32
  }
  func.func @transform_1(%arg0: i32) -> (i32, i32) {
    %c0_i32 = arith.constant 0 : i32
    %c0_i32_0 = arith.constant 0 : i32
    %c0_i32_1 = arith.constant 0 : i32
    return %c0_i32, %c0_i32_0 : i32, i32
  }
  func.func @transform_2(%arg0: i32) -> (i32, i32) {
    %c0_i32 = arith.constant 0 : i32
    %c0_i32_0 = arith.constant 0 : i32
    %c0_i32_1 = arith.constant 0 : i32
    return %c0_i32, %c0_i32_0 : i32, i32
  }
  func.func @transform_3(%arg0: i32) -> (i32, i32) {
    %c0_i32 = arith.constant 0 : i32
    %c0_i32_0 = arith.constant 0 : i32
    %c0_i32_1 = arith.constant 0 : i32
    return %c0_i32, %c0_i32_0 : i32, i32
  }
  func.func @transform_4(%arg0: i32) -> (i32, i32) {
    %c0_i32 = arith.constant 0 : i32
    %c0_i32_0 = arith.constant 0 : i32
    %c0_i32_1 = arith.constant 0 : i32
    return %c0_i32, %c0_i32_0 : i32, i32
  }
  func.func @transform_5(%arg0: i32) -> (i32, i32) {
    %c0_i32 = arith.constant 0 : i32
    %c0_i32_0 = arith.constant 0 : i32
    return %arg0, %c0_i32 : i32, i32
  }
}

</mosaic_0001>

<llo_original>
// kernel: cnn_forward.3
$region0: #{cnn_forward.3}
  #allocation0 [shape = 'u32[]', space=smem, size = 0x4, offset = 0x4, fixed_abs, tag = 'smem constant byte address 0x4 - core index']
  #allocation1 [shape = 'u32[144,128]{1,0:T(1,128)}', space=vmem, size = 0x12000, scoped, tag = 'internal scratch']
  %s0 = inlined_call_operand.vmem [shape: bf16[2,4,210,16], index: 0, kind: input, shape index: {}]
  %s1 = inlined_call_operand.vmem [shape: bf16[16,32], index: 1, kind: input, shape index: {}]
  %s2 = inlined_call_operand.vmem [shape: f32[1,32], index: 2, kind: input, shape index: {}]
  %s3 = inlined_call_operand.vmem [shape: bf16[2,210,32], index: 3, kind: output, shape index: {}]
  %s4 = sld [smem:[#allocation0]]
  $region22: #{cnn_forward.3} parent=0
    _
  %s6 = ssub.s32 1, %s4
  %s7 = scalar_select 0, %s6, %s4
  // Predicated region
  $region2: #{cnn_forward.3} parent=0 // pred_check
    _
  $region3: #{cnn_forward.3} parent=0 // pred_check_branch
    %9 = sbr.rel (0) target = $region5
  $region4: #{cnn_forward.3} parent=0 // pred_region
    _
  $region5: #{cnn_forward.3} parent=0 // pred_fallthru
    _
  // Predicated region
  $region6: #{cnn_forward.3} parent=0 // pred_check
    _
  $region7: #{cnn_forward.3} parent=0 // pred_check_branch
    %11 = sbr.rel (0) target = $region9
  $region8: #{cnn_forward.3} parent=0 // pred_region
    _
  $region9: #{cnn_forward.3} parent=0 // pred_fallthru
    _
  // Predicated region
  $region10: #{cnn_forward.3} parent=0 // pred_check
    _
  $region11: #{cnn_forward.3} parent=0 // pred_check_branch
    %13 = sbr.rel (0) target = $region13
  $region12: #{cnn_forward.3} parent=0 // pred_region
    _
  $region13: #{cnn_forward.3} parent=0 // pred_fallthru
    _
  %v15 = vld [vmem:[%s1] sm:$0xf]
  %v16 = vld [vmem:[%s1 + $0x4] sm:$0xf]
  %v17 = vld [vmem:[%s2] sm:$0x1]
  %v18 = vld [vmem:[%s0] sm:$0xf]
  %v19 = vld [vmem:[%s0 + $0x4] sm:$0xf]
  %v20 = vld [vmem:[%s0 + $0x8] sm:$0xf]
  %v21 = vld [vmem:[%s0 + $0xc] sm:$0xf]
  %v22 = vld [vmem:[%s0 + $0x10] sm:$0xf]
  %v23 = vld [vmem:[%s0 + $0x14] sm:$0xf]
  %v24 = vld [vmem:[%s0 + $0x18] sm:$0xf]
  %v25 = vld [vmem:[%s0 + $0x1c] sm:$0xf]
  %v26 = vld [vmem:[%s0 + $0x20] sm:$0xf]
  %v27 = vld [vmem:[%s0 + $0x24] sm:$0xf]
  %v28 = vld [vmem:[%s0 + $0x28] sm:$0xf]
  %v29 = vld [vmem:[%s0 + $0x2c] sm:$0xf]
  %v30 = vld [vmem:[%s0 + $0x30] sm:$0xf]
  %v31 = vld [vmem:[%s0 + $0x34] sm:$0xf]
  %v32 = vld [vmem:[%s0 + $0x38] sm:$0xf]
  %v33 = vld [vmem:[%s0 + $0x3c] sm:$0xf]
  %v34 = vld [vmem:[%s0 + $0x40] sm:$0xf]
  %v35 = vld [vmem:[%s0 + $0x44] sm:$0xf]
  %v36 = vld [vmem:[%s0 + $0x48] sm:$0xf]
  %v37 = vld [vmem:[%s0 + $0x4c] sm:$0xf]
  %v38 = vld [vmem:[%s0 + $0x50] sm:$0xf]
  %v39 = vld [vmem:[%s0 + $0x54] sm:$0xf]
  %v40 = vld [vmem:[%s0 + $0x58] sm:$0xf]
  %v41 = vld [vmem:[%s0 + $0x5c] sm:$0xf]
  %v42 = vld [vmem:[%s0 + $0x60] sm:$0xf]
  %v43 = vld [vmem:[%s0 + $0x64] sm:$0xf]
  %v44 = vld [vmem:[%s0 + $0x68] sm:$0x1]
  %v72 = vunpack.c.l.b16 %v18
  %v73 = vunpack.c.l.b16 %v19
  %v74 = vunpack.c.l.b16 %v20
  %v75 = vunpack.c.l.b16 %v21
  %v76 = vunpack.c.l.b16 %v22
  %v77 = vunpack.c.l.b16 %v23
  %v78 = vunpack.c.l.b16 %v24
  %v79 = vunpack.c.l.b16 %v25
  %v80 = vunpack.c.l.b16 %v26
  %v81 = vunpack.c.l.b16 %v27
  %v82 = vunpack.c.l.b16 %v28
  %v83 = vunpack.c.l.b16 %v29
  %v84 = vunpack.c.l.b16 %v30
  %v85 = vunpack.c.l.b16 %v31
  %v86 = vunpack.c.l.b16 %v32
  %v87 = vunpack.c.l.b16 %v33
  %v88 = vunpack.c.l.b16 %v34
  %v89 = vunpack.c.l.b16 %v35
  %v90 = vunpack.c.l.b16 %v36
  %v91 = vunpack.c.l.b16 %v37
  %v92 = vunpack.c.l.b16 %v38
  %v93 = vunpack.c.l.b16 %v39
  %v94 = vunpack.c.l.b16 %v40
  %v95 = vunpack.c.l.b16 %v41
  %v96 = vunpack.c.l.b16 %v42
  %v97 = vunpack.c.l.b16 %v43
  %v98 = vunpack.c.l.b16 %v44
  %v99 = vpack.c.b16 %v73, %v72
  %v100 = vpack.c.b16 %v75, %v74
  %v101 = vpack.c.b16 %v77, %v76
  %v102 = vpack.c.b16 %v79, %v78
  %v103 = vpack.c.b16 %v81, %v80
  %v104 = vpack.c.b16 %v83, %v82
  %v105 = vpack.c.b16 %v85, %v84
  %v106 = vpack.c.b16 %v87, %v86
  %v107 = vpack.c.b16 %v89, %v88
  %v108 = vpack.c.b16 %v91, %v90
  %v109 = vpack.c.b16 %v93, %v92
  %v110 = vpack.c.b16 %v95, %v94
  %v111 = vpack.c.b16 %v97, %v96
  %v112 = vpack.c.b16 %v98, %v98
  %v115 = vunpack.c.l.b16 %v15
  %v116 = vunpack.c.l.b16 %v16
  %v117 = vpack.c.b16 %v116, %v115
  %vm119 = vcmask 130048
  %v121 = vsel %vm119, %v99, 0
  %v124 = vsel %vm119, %v100, 0
  %v127 = vsel %vm119, %v101, 0
  %v130 = vsel %vm119, %v102, 0
  %v133 = vsel %vm119, %v103, 0
  %v136 = vsel %vm119, %v104, 0
  %v139 = vsel %vm119, %v105, 0
  %v142 = vsel %vm119, %v106, 0
  %v145 = vsel %vm119, %v107, 0
  %v148 = vsel %vm119, %v108, 0
  %v151 = vsel %vm119, %v109, 0
  %v154 = vsel %vm119, %v110, 0
  %v157 = vsel %vm119, %v111, 0
  %v160 = vsel %vm119, %v112, 0
  %162 = vmatprep.subr.bf16.mxu0 0
  %163 = vmatpush1.bf16.msra.mxu0 %v117
  %164 = vmatprep.subr.bf16.mxu0 0
  %165 = vmatpush1.bf16.msra.mxu0 0
  %166 = vmatprep.subr.bf16.mxu0 0
  %167 = vmatpush1.bf16.msra.mxu0 0
  %168 = vmatprep.subr.bf16.mxu0 0
  %169 = vmatpush1.bf16.msra.mxu0 0
  %170 = vmatprep.subr.bf16.mxu0 0
  %171 = vmatpush1.bf16.msra.mxu0 0
  %172 = vmatprep.subr.bf16.mxu0 0
  %173 = vmatpush1.bf16.msra.mxu0 0
  %174 = vmatprep.subr.bf16.mxu0 0
  %175 = vmatpush1.bf16.msra.mxu0 0
  %176 = vmatprep.subr.bf16.mxu0 0
  %177 = vmatpush1.bf16.msra.mxu0 0
  %178 = vmatprep.subr.bf16.mxu0 0
  %179 = vmatpush1.bf16.msra.mxu0 0
  %180 = vmatprep.subr.bf16.mxu0 0
  %181 = vmatpush1.bf16.msra.mxu0 0
  %182 = vmatprep.subr.bf16.mxu0 0
  %183 = vmatpush1.bf16.msra.mxu0 0
  %184 = vmatprep.subr.bf16.mxu0 0
  %185 = vmatpush1.bf16.msra.mxu0 0
  %186 = vmatprep.subr.bf16.mxu0 0
  %187 = vmatpush1.bf16.msra.mxu0 0
  %188 = vmatprep.subr.bf16.mxu0 0
  %189 = vmatpush1.bf16.msra.mxu0 0
  %190 = vmatprep.subr.bf16.mxu0 0
  %191 = vmatpush1.bf16.msra.mxu0 0
  %192 = vmatprep.subr.bf16.mxu0 0
  %193 = vmatpush1.bf16.msra.mxu0 0
  %194 = vmatprep.mubr.bf16.mxu0 0
  %195 = vmatmul.mubr.bf16.gmra.mrb[0].mxu0 %v121
  %v196 = vpop.f32.mrb[0].mxu0
  %v197 = vadd.f32 0.0, %v196
  %v198 = vpop.f32.mrb[0].mxu0
  %v199 = vpop.f32.mrb[0].mxu0
  %v200 = vadd.f32 0.0, %v199
  %v201 = vpop.f32.mrb[0].mxu0
  %202 = vmatprep.mubr.bf16.mxu0 0
  %203 = vmatmul.mubr.bf16.gmra.mrb[0].mxu0 %v124
  %v204 = vpop.f32.mrb[0].mxu0
  %v205 = vadd.f32 0.0, %v204
  %v206 = vpop.f32.mrb[0].mxu0
  %v207 = vpop.f32.mrb[0].mxu0
  %v208 = vadd.f32 0.0, %v207
  %v209 = vpop.f32.mrb[0].mxu0
  %210 = vmatprep.mubr.bf16.mxu0 0
  %211 = vmatmul.mubr.bf16.gmra.mrb[0].mxu0 %v127
  %v212 = vpop.f32.mrb[0].mxu0
  %v213 = vadd.f32 0.0, %v212
  %v214 = vpop.f32.mrb[0].mxu0
  %v215 = vpop.f32.mrb[0].mxu0
  %v216 = vadd.f32 0.0, %v215
  %v217 = vpop.f32.mrb[0].mxu0
  %218 = vmatprep.mubr.bf16.mxu0 0
  %219 = vmatmul.mubr.bf16.gmra.mrb[0].mxu0 %v130
  %v220 = vpop.f32.mrb[0].mxu0
  %v221 = vadd.f32 0.0, %v220
  %v222 = vpop.f32.mrb[0].mxu0
  %v223 = vpop.f32.mrb[0].mxu0
  %v224 = vadd.f32 0.0, %v223
  %v225 = vpop.f32.mrb[0].mxu0
  %226 = vmatprep.mubr.bf16.mxu0 0
  %227 = vmatmul.mubr.bf16.gmra.mrb[0].mxu0 %v133
  %v228 = vpop.f32.mrb[0].mxu0
  %v229 = vadd.f32 0.0, %v228
  %v230 = vpop.f32.mrb[0].mxu0
  %v231 = vpop.f32.mrb[0].mxu0
  %v232 = vadd.f32 0.0, %v231
  %v233 = vpop.f32.mrb[0].mxu0
  %234 = vmatprep.mubr.bf16.mxu0 0
  %235 = vmatmul.mubr.bf16.gmra.mrb[0].mxu0 %v136
  %v236 = vpop.f32.mrb[0].mxu0
  %v237 = vadd.f32 0.0, %v236
  %v238 = vpop.f32.mrb[0].mxu0
  %v239 = vpop.f32.mrb[0].mxu0
  %v240 = vadd.f32 0.0, %v239
  %v241 = vpop.f32.mrb[0].mxu0
  %242 = vmatprep.mubr.bf16.mxu0 0
  %243 = vmatmul.mubr.bf16.gmra.mrb[0].mxu0 %v139
  %v244 = vpop.f32.mrb[0].mxu0
  %v245 = vadd.f32 0.0, %v244
  %v246 = vpop.f32.mrb[0].mxu0
  %v247 = vpop.f32.mrb[0].mxu0
  %v248 = vadd.f32 0.0, %v247
  %v249 = vpop.f32.mrb[0].mxu0
  %250 = vmatprep.mubr.bf16.mxu0 0
  %251 = vmatmul.mubr.bf16.gmra.mrb[0].mxu0 %v142
  %v252 = vpop.f32.mrb[0].mxu0
  %v253 = vadd.f32 0.0, %v252
  %v254 = vpop.f32.mrb[0].mxu0
  %v255 = vpop.f32.mrb[0].mxu0
  %v256 = vadd.f32 0.0, %v255
  %v257 = vpop.f32.mrb[0].mxu0
  %258 = vmatprep.mubr.bf16.mxu0 0
  %259 = vmatmul.mubr.bf16.gmra.mrb[0].mxu0 %v145
  %v260 = vpop.f32.mrb[0].mxu0
  %v261 = vadd.f32 0.0, %v260
  %v262 = vpop.f32.mrb[0].mxu0
  %v263 = vpop.f32.mrb[0].mxu0
  %v264 = vadd.f32 0.0, %v263
  %v265 = vpop.f32.mrb[0].mxu0
  %266 = vmatprep.mubr.bf16.mxu0 0
  %267 = vmatmul.mubr.bf16.gmra.mrb[0].mxu0 %v148
  %v268 = vpop.f32.mrb[0].mxu0
  %v269 = vadd.f32 0.0, %v268
  %v270 = vpop.f32.mrb[0].mxu0
  %v271 = vpop.f32.mrb[0].mxu0
  %v272 = vadd.f32 0.0, %v271
  %v273 = vpop.f32.mrb[0].mxu0
  %274 = vmatprep.mubr.bf16.mxu0 0
  %275 = vmatmul.mubr.bf16.gmra.mrb[0].mxu0 %v151
  %v276 = vpop.f32.mrb[0].mxu0
  %v277 = vadd.f32 0.0, %v276
  %v278 = vpop.f32.mrb[0].mxu0
  %v279 = vpop.f32.mrb[0].mxu0
  %v280 = vadd.f32 0.0, %v279
  %v281 = vpop.f32.mrb[0].mxu0
  %282 = vmatprep.mubr.bf16.mxu0 0
  %283 = vmatmul.mubr.bf16.gmra.mrb[0].mxu0 %v154
  %v284 = vpop.f32.mrb[0].mxu0
  %v285 = vadd.f32 0.0, %v284
  %v286 = vpop.f32.mrb[0].mxu0
  %v287 = vpop.f32.mrb[0].mxu0
  %v288 = vadd.f32 0.0, %v287
  %v289 = vpop.f32.mrb[0].mxu0
  %290 = vmatprep.mubr.bf16.mxu0 0
  %291 = vmatmul.mubr.bf16.gmra.mrb[0].mxu0 %v157
  %v292 = vpop.f32.mrb[0].mxu0
  %v293 = vadd.f32 0.0, %v292
  %v294 = vpop.f32.mrb[0].mxu0
  %v295 = vpop.f32.mrb[0].mxu0
  %v296 = vadd.f32 0.0, %v295
  %v297 = vpop.f32.mrb[0].mxu0
  %298 = vmatprep.mubr.bf16.mxu0 0
  %299 = vmatmul.mubr.bf16.gmra.mrb[0].mxu0 %v160
  %v300 = vpop.f32.mrb[0].mxu0
  %v301 = vadd.f32 0.0, %v300
  %v302 = vpop.f32.mrb[0].mxu0
  %v303 = vpop.f32.mrb[0].mxu0
  %v304 = vpop.f32.mrb[0].mxu0
  %305 = vdwg.mxu0
  %s306 = scalar_lea.vmem %s0, 108
  %v307 = vld [vmem:[%s306] sm:$0xf]
  %v308 = vld [vmem:[%s306 + $0x4] sm:$0xf]
  %v309 = vld [vmem:[%s306 + $0x8] sm:$0xf]
  %v310 = vld [vmem:[%s306 + $0xc] sm:$0xf]
  %v311 = vld [vmem:[%s306 + $0x10] sm:$0xf]
  %v312 = vld [vmem:[%s306 + $0x14] sm:$0xf]
  %v313 = vld [vmem:[%s306 + $0x18] sm:$0xf]
  %v314 = vld [vmem:[%s306 + $0x1c] sm:$0xf]
  %v315 = vld [vmem:[%s306 + $0x20] sm:$0xf]
  %v316 = vld [vmem:[%s306 + $0x24] sm:$0xf]
  %v317 = vld [vmem:[%s306 + $0x28] sm:$0xf]
  %v318 = vld [vmem:[%s306 + $0x2c] sm:$0xf]
  %v319 = vld [vmem:[%s306 + $0x30] sm:$0xf]
  %v320 = vld [vmem:[%s306 + $0x34] sm:$0xf]
  %v321 = vld [vmem:[%s306 + $0x38] sm:$0xf]
  %v322 = vld [vmem:[%s306 + $0x3c] sm:$0xf]
  %v323 = vld [vmem:[%s306 + $0x40] sm:$0xf]
  %v324 = vld [vmem:[%s306 + $0x44] sm:$0xf]
  %v325 = vld [vmem:[%s306 + $0x48] sm:$0xf]
  %v326 = vld [vmem:[%s306 + $0x4c] sm:$0xf]
  %v327 = vld [vmem:[%s306 + $0x50] sm:$0xf]
  %v328 = vld [vmem:[%s306 + $0x54] sm:$0xf]
  %v329 = vld [vmem:[%s306 + $0x58] sm:$0xf]
  %v330 = vld [vmem:[%s306 + $0x5c] sm:$0xf]
  %v331 = vld [vmem:[%s306 + $0x60] sm:$0xf]
  %v332 = vld [vmem:[%s306 + $0x64] sm:$0xf]
  %v333 = vld [vmem:[%s306 + $0x68] sm:$0x1]
  %v361 = vunpack.c.l.b16 %v307
  %v362 = vunpack.c.l.b16 %v308
  %v363 = vunpack.c.l.b16 %v309
  %v364 = vunpack.c.l.b16 %v310
  %v365 = vunpack.c.l.b16 %v311
  %v366 = vunpack.c.l.b16 %v312
  %v367 = vunpack.c.l.b16 %v313
  %v368 = vunpack.c.l.b16 %v314
  %v369 = vunpack.c.l.b16 %v315
  %v370 = vunpack.c.l.b16 %v316
  %v371 = vunpack.c.l.b16 %v317
  %v372 = vunpack.c.l.b16 %v318
  %v373 = vunpack.c.l.b16 %v319
  %v374 = vunpack.c.l.b16 %v320
  %v375 = vunpack.c.l.b16 %v321
  %v376 = vunpack.c.l.b16 %v322
  %v377 = vunpack.c.l.b16 %v323
  %v378 = vunpack.c.l.b16 %v324
  %v379 = vunpack.c.l.b16 %v325
  %v380 = vunpack.c.l.b16 %v326
  %v381 = vunpack.c.l.b16 %v327
  %v382 = vunpack.c.l.b16 %v328
  %v383 = vunpack.c.l.b16 %v329
  %v384 = vunpack.c.l.b16 %v330
  %v385 = vunpack.c.l.b16 %v331
  %v386 = vunpack.c.l.b16 %v332
  %v387 = vunpack.c.l.b16 %v333
  %v388 = vpack.c.b16 %v362, %v361
  %v389 = vpack.c.b16 %v364, %v363
  %v390 = vpack.c.b16 %v366, %v365
  %v391 = vpack.c.b16 %v368, %v367
  %v392 = vpack.c.b16 %v370, %v369
  %v393 = vpack.c.b16 %v372, %v371
  %v394 = vpack.c.b16 %v374, %v373
  %v395 = vpack.c.b16 %v376, %v375
  %v396 = vpack.c.b16 %v378, %v377
  %v397 = vpack.c.b16 %v380, %v379
  %v398 = vpack.c.b16 %v382, %v381
  %v399 = vpack.c.b16 %v384, %v383
  %v400 = vpack.c.b16 %v386, %v385
  %v401 = vpack.c.b16 %v387, %v387
  %v403 = vsel %vm119, %v388, 0
  %v406 = vsel %vm119, %v389, 0
  %v409 = vsel %vm119, %v390, 0
  %v412 = vsel %vm119, %v391, 0
  %v415 = vsel %vm119, %v392, 0
  %v418 = vsel %vm119, %v393, 0
  %v421 = vsel %vm119, %v394, 0
  %v424 = vsel %vm119, %v395, 0
  %v427 = vsel %vm119, %v396, 0
  %v430 = vsel %vm119, %v397, 0
  %v433 = vsel %vm119, %v398, 0
  %v436 = vsel %vm119, %v399, 0
  %v439 = vsel %vm119, %v400, 0
  %v442 = vsel %vm119, %v401, 0
  %444 = vmatprep.subr.bf16.mxu0 0
  %445 = vmatpush1.bf16.msra.mxu0 %v117
  %446 = vmatprep.subr.bf16.mxu0 0
  %447 = vmatpush1.bf16.msra.mxu0 0
  %448 = vmatprep.subr.bf16.mxu0 0
  %449 = vmatpush1.bf16.msra.mxu0 0
  %450 = vmatprep.subr.bf16.mxu0 0
  %451 = vmatpush1.bf16.msra.mxu0 0
  %452 = vmatprep.subr.bf16.mxu0 0
  %453 = vmatpush1.bf16.msra.mxu0 0
  %454 = vmatprep.subr.bf16.mxu0 0
  %455 = vmatpush1.bf16.msra.mxu0 0
  %456 = vmatprep.subr.bf16.mxu0 0
  %457 = vmatpush1.bf16.msra.mxu0 0
  %458 = vmatprep.subr.bf16.mxu0 0
  %459 = vmatpush1.bf16.msra.mxu0 0
  %460 = vmatprep.subr.bf16.mxu0 0
  %461 = vmatpush1.bf16.msra.mxu0 0
  %462 = vmatprep.subr.bf16.mxu0 0
  %463 = vmatpush1.bf16.msra.mxu0 0
  %464 = vmatprep.subr.bf16.mxu0 0
  %465 = vmatpush1.bf16.msra.mxu0 0
  %466 = vmatprep.subr.bf16.mxu0 0
  %467 = vmatpush1.bf16.msra.mxu0 0
  %468 = vmatprep.subr.bf16.mxu0 0
  %469 = vmatpush1.bf16.msra.mxu0 0
  %470 = vmatprep.subr.bf16.mxu0 0
  %471 = vmatpush1.bf16.msra.mxu0 0
  %472 = vmatprep.subr.bf16.mxu0 0
  %473 = vmatpush1.bf16.msra.mxu0 0
  %474 = vmatprep.subr.bf16.mxu0 0
  %475 = vmatpush1.bf16.msra.mxu0 0
  %476 = vmatprep.mubr.bf16.mxu0 0
  %477 = vmatmul.mubr.bf16.gmra.mrb[0].mxu0 %v403
  %v478 = vpop.f32.mrb[0].mxu0
  %v479 = vadd.f32 0.0, %v478
  %v480 = vpop.f32.mrb[0].mxu0
  %v481 = vpop.f32.mrb[0].mxu0
  %v482 = vadd.f32 0.0, %v481
  %v483 = vpop.f32.mrb[0].mxu0
  %484 = vmatprep.mubr.bf16.mxu0 0
  %485 = vmatmul.mubr.bf16.gmra.mrb[0].mxu0 %v406
  %v486 = vpop.f32.mrb[0].mxu0
  %v487 = vadd.f32 0.0, %v486
  %v488 = vpop.f32.mrb[0].mxu0
  %v489 = vpop.f32.mrb[0].mxu0
  %v490 = vadd.f32 0.0, %v489
  %v491 = vpop.f32.mrb[0].mxu0
  %492 = vmatprep.mubr.bf16.mxu0 0
  %493 = vmatmul.mubr.bf16.gmra.mrb[0].mxu0 %v409
  %v494 = vpop.f32.mrb[0].mxu0
  %v495 = vadd.f32 0.0, %v494
  %v496 = vpop.f32.mrb[0].mxu0
  %v497 = vpop.f32.mrb[0].mxu0
  %v498 = vadd.f32 0.0, %v497
  %v499 = vpop.f32.mrb[0].mxu0
  %500 = vmatprep.mubr.bf16.mxu0 0
  %501 = vmatmul.mubr.bf16.gmra.mrb[0].mxu0 %v412
  %v502 = vpop.f32.mrb[0].mxu0
  %v503 = vadd.f32 0.0, %v502
  %v504 = vpop.f32.mrb[0].mxu0
  %v505 = vpop.f32.mrb[0].mxu0
  %v506 = vadd.f32 0.0, %v505
  %v507 = vpop.f32.mrb[0].mxu0
  %508 = vmatprep.mubr.bf16.mxu0 0
  %509 = vmatmul.mubr.bf16.gmra.mrb[0].mxu0 %v415
  %v510 = vpop.f32.mrb[0].mxu0
  %v511 = vadd.f32 0.0, %v510
  %v512 = vpop.f32.mrb[0].mxu0
  %v513 = vpop.f32.mrb[0].mxu0
  %v514 = vadd.f32 0.0, %v513
  %v515 = vpop.f32.mrb[0].mxu0
  %516 = vmatprep.mubr.bf16.mxu0 0
  %517 = vmatmul.mubr.bf16.gmra.mrb[0].mxu0 %v418
  %v518 = vpop.f32.mrb[0].mxu0
  %v519 = vadd.f32 0.0, %v518
  %v520 = vpop.f32.mrb[0].mxu0
  %v521 = vpop.f32.mrb[0].mxu0
  %v522 = vadd.f32 0.0, %v521
  %v523 = vpop.f32.mrb[0].mxu0
  %524 = vmatprep.mubr.bf16.mxu0 0
  %525 = vmatmul.mubr.bf16.gmra.mrb[0].mxu0 %v421
  %v526 = vpop.f32.mrb[0].mxu0
  %v527 = vadd.f32 0.0, %v526
  %v528 = vpop.f32.mrb[0].mxu0
  %v529 = vpop.f32.mrb[0].mxu0
  %v530 = vadd.f32 0.0, %v529
  %v531 = vpop.f32.mrb[0].mxu0
  %532 = vmatprep.mubr.bf16.mxu0 0
  %533 = vmatmul.mubr.bf16.gmra.mrb[0].mxu0 %v424
  %v534 = vpop.f32.mrb[0].mxu0
  %v535 = vadd.f32 0.0, %v534
  %v536 = vpop.f32.mrb[0].mxu0
  %v537 = vpop.f32.mrb[0].mxu0
  %v538 = vadd.f32 0.0, %v537
  %v539 = vpop.f32.mrb[0].mxu0
  %540 = vmatprep.mubr.bf16.mxu0 0
  %541 = vmatmul.mubr.bf16.gmra.mrb[0].mxu0 %v427
  %v542 = vpop.f32.mrb[0].mxu0
  %v543 = vadd.f32 0.0, %v542
  %v544 = vpop.f32.mrb[0].mxu0
  %v545 = vpop.f32.mrb[0].mxu0
  %v546 = vadd.f32 0.0, %v545
  %v547 = vpop.f32.mrb[0].mxu0
  %548 = vmatprep.mubr.bf16.mxu0 0
  %549 = vmatmul.mubr.bf16.gmra.mrb[0].mxu0 %v430
  %v550 = vpop.f32.mrb[0].mxu0
  %v551 = vadd.f32 0.0, %v550
  %v552 = vpop.f32.mrb[0].mxu0
  %v553 = vpop.f32.mrb[0].mxu0
  %v554 = vadd.f32 0.0, %v553
  %v555 = vpop.f32.mrb[0].mxu0
  %556 = vmatprep.mubr.bf16.mxu0 0
  %557 = vmatmul.mubr.bf16.gmra.mrb[0].mxu0 %v433
  %v558 = vpop.f32.mrb[0].mxu0
  %v559 = vadd.f32 0.0, %v558
  %v560 = vpop.f32.mrb[0].mxu0
  %v561 = vpop.f32.mrb[0].mxu0
  %v562 = vadd.f32 0.0, %v561
  %v563 = vpop.f32.mrb[0].mxu0
  %564 = vmatprep.mubr.bf16.mxu0 0
  %565 = vmatmul.mubr.bf16.gmra.mrb[0].mxu0 %v436
  %v566 = vpop.f32.mrb[0].mxu0
  %v567 = vadd.f32 0.0, %v566
  %v568 = vpop.f32.mrb[0].mxu0
  %v569 = vpop.f32.mrb[0].mxu0
  %v570 = vadd.f32 0.0, %v569
  %v571 = vpop.f32.mrb[0].mxu0
  %572 = vmatprep.mubr.bf16.mxu0 0
  %573 = vmatmul.mubr.bf16.gmra.mrb[0].mxu0 %v439
  %v574 = vpop.f32.mrb[0].mxu0
  %v575 = vadd.f32 0.0, %v574
  %v576 = vpop.f32.mrb[0].mxu0
  %v577 = vpop.f32.mrb[0].mxu0
  %v578 = vadd.f32 0.0, %v577
  %v579 = vpop.f32.mrb[0].mxu0
  %580 = vmatprep.mubr.bf16.mxu0 0
  %581 = vmatmul.mubr.bf16.gmra.mrb[0].mxu0 %v442
  %v582 = vpop.f32.mrb[0].mxu0
  %v583 = vadd.f32 0.0, %v582
  %v584 = vpop.f32.mrb[0].mxu0
  %v585 = vpop.f32.mrb[0].mxu0
  %v586 = vpop.f32.mrb[0].mxu0
  %587 = vdwg.mxu0
  %v588 = vmax.f32 %v197, %v479
  %v589 = vmax.f32 %v200, %v482
  %v590 = vmax.f32 %v205, %v487
  %v591 = vmax.f32 %v208, %v490
  %v592 = vmax.f32 %v213, %v495
  %v593 = vmax.f32 %v216, %v498
  %v594 = vmax.f32 %v221, %v503
  %v595 = vmax.f32 %v224, %v506
  %v596 = vmax.f32 %v229, %v511
  %v597 = vmax.f32 %v232, %v514
  %v598 = vmax.f32 %v237, %v519
  %v599 = vmax.f32 %v240, %v522
  %v600 = vmax.f32 %v245, %v527
  %v601 = vmax.f32 %v248, %v530
  %v602 = vmax.f32 %v253, %v535
  %v603 = vmax.f32 %v256, %v538
  %v604 = vmax.f32 %v261, %v543
  %v605 = vmax.f32 %v264, %v546
  %v606 = vmax.f32 %v269, %v551
  %v607 = vmax.f32 %v272, %v554
  %v608 = vmax.f32 %v277, %v559
  %v609 = vmax.f32 %v280, %v562
  %v610 = vmax.f32 %v285, %v567
  %v611 = vmax.f32 %v288, %v570
  %v612 = vmax.f32 %v293, %v575
  %v613 = vmax.f32 %v296, %v578
  %v614 = vmax.f32 %v301, %v583
  %s615 = scalar_lea.vmem %s0, 216
  %v616 = vld [vmem:[%s615] sm:$0xf]
  %v617 = vld [vmem:[%s615 + $0x4] sm:$0xf]
  %v618 = vld [vmem:[%s615 + $0x8] sm:$0xf]
  %v619 = vld [vmem:[%s615 + $0xc] sm:$0xf]
  %v620 = vld [vmem:[%s615 + $0x10] sm:$0xf]
  %v621 = vld [vmem:[%s615 + $0x14] sm:$0xf]
  %v622 = vld [vmem:[%s615 + $0x18] sm:$0xf]
  %v623 = vld [vmem:[%s615 + $0x1c] sm:$0xf]
  %v624 = vld [vmem:[%s615 + $0x20] sm:$0xf]
  %v625 = vld [vmem:[%s615 + $0x24] sm:$0xf]
  %v626 = vld [vmem:[%s615 + $0x28] sm:$0xf]
  %v627 = vld [vmem:[%s615 + $0x2c] sm:$0xf]
  %v628 = vld [vmem:[%s615 + $0x30] sm:$0xf]
  %v629 = vld [vmem:[%s615 + $0x34] sm:$0xf]
  %v630 = vld [vmem:[%s615 + $0x38] sm:$0xf]
  %v631 = vld [vmem:[%s615 + $0x3c] sm:$0xf]
  %v632 = vld [vmem:[%s615 + $0x40] sm:$0xf]
  %v633 = vld [vmem:[%s615 + $0x44] sm:$0xf]
  %v634 = vld [vmem:[%s615 + $0x48] sm:$0xf]
  %v635 = vld [vmem:[%s615 + $0x4c] sm:$0xf]
  %v636 = vld [vmem:[%s615 + $0x50] sm:$0xf]
  %v637 = vld [vmem:[%s615 + $0x54] sm:$0xf]
  %v638 = vld [vmem:[%s615 + $0x58] sm:$0xf]
  %v639 = vld [vmem:[%s615 + $0x5c] sm:$0xf]
  %v640 = vld [vmem:[%s615 + $0x60] sm:$0xf]
  %v641 = vld [vmem:[%s615 + $0x64] sm:$0xf]
  %v642 = vld [vmem:[%s615 + $0x68] sm:$0x1]
  %v670 = vunpack.c.l.b16 %v616
  %v671 = vunpack.c.l.b16 %v617
  %v672 = vunpack.c.l.b16 %v618
  %v673 = vunpack.c.l.b16 %v619
  %v674 = vunpack.c.l.b16 %v620
  %v675 = vunpack.c.l.b16 %v621
  %v676 = vunpack.c.l.b16 %v622
  %v677 = vunpack.c.l.b16 %v623
  %v678 = vunpack.c.l.b16 %v624
  %v679 = vunpack.c.l.b16 %v625
  %v680 = vunpack.c.l.b16 %v626
  %v681 = vunpack.c.l.b16 %v627
  %v682 = vunpack.c.l.b16 %v628
  %v683 = vunpack.c.l.b16 %v629
  %v684 = vunpack.c.l.b16 %v630
  %v685 = vunpack.c.l.b16 %v631
  %v686 = vunpack.c.l.b16 %v632
  %v687 = vunpack.c.l.b16 %v633
  %v688 = vunpack.c.l.b16 %v634
  %v689 = vunpack.c.l.b16 %v635
  %v690 = vunpack.c.l.b16 %v636
  %v691 = vunpack.c.l.b16 %v637
  %v692 = vunpack.c.l.b16 %v638
  %v693 = vunpack.c.l.b16 %v639
  %v694 = vunpack.c.l.b16 %v640
  %v695 = vunpack.c.l.b16 %v641
  %v696 = vunpack.c.l.b16 %v642
  %v697 = vpack.c.b16 %v671, %v670
  %v698 = vpack.c.b16 %v673, %v672
  %v699 = vpack.c.b16 %v675, %v674
  %v700 = vpack.c.b16 %v677, %v676
  %v701 = vpack.c.b16 %v679, %v678
  %v702 = vpack.c.b16 %v681, %v680
  %v703 = vpack.c.b16 %v683, %v682
  %v704 = vpack.c.b16 %v685, %v684
  %v705 = vpack.c.b16 %v687, %v686
  %v706 = vpack.c.b16 %v689, %v688
  %v707 = vpack.c.b16 %v691, %v690
  %v708 = vpack.c.b16 %v693, %v692
  %v709 = vpack.c.b16 %v695, %v694
  %v710 = vpack.c.b16 %v696, %v696
  %v712 = vsel %vm119, %v697, 0
  %v715 = vsel %vm119, %v698, 0
  %v718 = vsel %vm119, %v699, 0
  %v721 = vsel %vm119, %v700, 0
  %v724 = vsel %vm119, %v701, 0
  %v727 = vsel %vm119, %v702, 0
  %v730 = vsel %vm119, %v703, 0
  %v733 = vsel %vm119, %v704, 0
  %v736 = vsel %vm119, %v705, 0
  %v739 = vsel %vm119, %v706, 0
  %v742 = vsel %vm119, %v707, 0
  %v745 = vsel %vm119, %v708, 0
  %v748 = vsel %vm119, %v709, 0
  %v751 = vsel %vm119, %v710, 0
  %753 = vmatprep.subr.bf16.mxu0 0
  %754 = vmatpush1.bf16.msra.mxu0 %v117
  %755 = vmatprep.subr.bf16.mxu0 0
  %756 = vmatpush1.bf16.msra.mxu0 0
  %757 = vmatprep.subr.bf16.mxu0 0
  %758 = vmatpush1.bf16.msra.mxu0 0
  %759 = vmatprep.subr.bf16.mxu0 0
  %760 = vmatpush1.bf16.msra.mxu0 0
  %761 = vmatprep.subr.bf16.mxu0 0
  %762 = vmatpush1.bf16.msra.mxu0 0
  %763 = vmatprep.subr.bf16.mxu0 0
  %764 = vmatpush1.bf16.msra.mxu0 0
  %765 = vmatprep.subr.bf16.mxu0 0
  %766 = vmatpush1.bf16.msra.mxu0 0
  %767 = vmatprep.subr.bf16.mxu0 0
  %768 = vmatpush1.bf16.msra.mxu0 0
  %769 = vmatprep.subr.bf16.mxu0 0
  %770 = vmatpush1.bf16.msra.mxu0 0
  %771 = vmatprep.subr.bf16.mxu0 0
  %772 = vmatpush1.bf16.msra.mxu0 0
  %773 = vmatprep.subr.bf16.mxu0 0
  %774 = vmatpush1.bf16.msra.mxu0 0
  %775 = vmatprep.subr.bf16.mxu0 0
  %776 = vmatpush1.bf16.msra.mxu0 0
  %777 = vmatprep.subr.bf16.mxu0 0
  %778 = vmatpush1.bf16.msra.mxu0 0
  %779 = vmatprep.subr.bf16.mxu0 0
  %780 = vmatpush1.bf16.msra.mxu0 0
  %781 = vmatprep.subr.bf16.mxu0 0
  %782 = vmatpush1.bf16.msra.mxu0 0
  %783 = vmatprep.subr.bf16.mxu0 0
  %784 = vmatpush1.bf16.msra.mxu0 0
  %785 = vmatprep.mubr.bf16.mxu0 0
  %786 = vmatmul.mubr.bf16.gmra.mrb[0].mxu0 %v712
  %v787 = vpop.f32.mrb[0].mxu0
  %v788 = vadd.f32 0.0, %v787
  %v789 = vpop.f32.mrb[0].mxu0
  %v790 = vpop.f32.mrb[0].mxu0
  %v791 = vadd.f32 0.0, %v790
  %v792 = vpop.f32.mrb[0].mxu0
  %793 = vmatprep.mubr.bf16.mxu0 0
  %794 = vmatmul.mubr.bf16.gmra.mrb[0].mxu0 %v715
  %v795 = vpop.f32.mrb[0].mxu0
  %v796 = vadd.f32 0.0, %v795
  %v797 = vpop.f32.mrb[0].mxu0
  %v798 = vpop.f32.mrb[0].mxu0
  %v799 = vadd.f32 0.0, %v798
  %v800 = vpop.f32.mrb[0].mxu0
  %801 = vmatprep.mubr.bf16.mxu0 0
  %802 = vmatmul.mubr.bf16.gmra.mrb[0].mxu0 %v718
  %v803 = vpop.f32.mrb[0].mxu0
  %v804 = vadd.f32 0.0, %v803
  %v805 = vpop.f32.mrb[0].mxu0
  %v806 = vpop.f32.mrb[0].mxu0
  %v807 = vadd.f32 0.0, %v806
  %v808 = vpop.f32.mrb[0].mxu0
  %809 = vmatprep.mubr.bf16.mxu0 0
  %810 = vmatmul.mubr.bf16.gmra.mrb[0].mxu0 %v721
  %v811 = vpop.f32.mrb[0].mxu0
  %v812 = vadd.f32 0.0, %v811
  %v813 = vpop.f32.mrb[0].mxu0
  %v814 = vpop.f32.mrb[0].mxu0
  %v815 = vadd.f32 0.0, %v814
  %v816 = vpop.f32.mrb[0].mxu0
  %817 = vmatprep.mubr.bf16.mxu0 0
  %818 = vmatmul.mubr.bf16.gmra.mrb[0].mxu0 %v724
  %v819 = vpop.f32.mrb[0].mxu0
  %v820 = vadd.f32 0.0, %v819
  %v821 = vpop.f32.mrb[0].mxu0
  %v822 = vpop.f32.mrb[0].mxu0
  %v823 = vadd.f32 0.0, %v822
  %v824 = vpop.f32.mrb[0].mxu0
  %825 = vmatprep.mubr.bf16.mxu0 0
  %826 = vmatmul.mubr.bf16.gmra.mrb[0].mxu0 %v727
  %v827 = vpop.f32.mrb[0].mxu0
  %v828 = vadd.f32 0.0, %v827
  %v829 = vpop.f32.mrb[0].mxu0
  %v830 = vpop.f32.mrb[0].mxu0
  %v831 = vadd.f32 0.0, %v830
  %v832 = vpop.f32.mrb[0].mxu0
  %833 = vmatprep.mubr.bf16.mxu0 0
  %834 = vmatmul.mubr.bf16.gmra.mrb[0].mxu0 %v730
  %v835 = vpop.f32.mrb[0].mxu0
  %v836 = vadd.f32 0.0, %v835
  %v837 = vpop.f32.mrb[0].mxu0
  %v838 = vpop.f32.mrb[0].mxu0
  %v839 = vadd.f32 0.0, %v838
  %v840 = vpop.f32.mrb[0].mxu0
  %841 = vmatprep.mubr.bf16.mxu0 0
  %842 = vmatmul.mubr.bf16.gmra.mrb[0].mxu0 %v733
  %v843 = vpop.f32.mrb[0].mxu0
  %v844 = vadd.f32 0.0, %v843
  %v845 = vpop.f32.mrb[0].mxu0
  %v846 = vpop.f32.mrb[0].mxu0
  %v847 = vadd.f32 0.0, %v846
  %v848 = vpop.f32.mrb[0].mxu0
  %849 = vmatprep.mubr.bf16.mxu0 0
  %850 = vmatmul.mubr.bf16.gmra.mrb[0].mxu0 %v736
  %v851 = vpop.f32.mrb[0].mxu0
  %v852 = vadd.f32 0.0, %v851
  %v853 = vpop.f32.mrb[0].mxu0
  %v854 = vpop.f32.mrb[0].mxu0
  %v855 = vadd.f32 0.0, %v854
  %v856 = vpop.f32.mrb[0].mxu0
  %857 = vmatprep.mubr.bf16.mxu0 0
  %858 = vmatmul.mubr.bf16.gmra.mrb[0].mxu0 %v739
  %v859 = vpop.f32.mrb[0].mxu0
  %v860 = vadd.f32 0.0, %v859
  %v861 = vpop.f32.mrb[0].mxu0
  %v862 = vpop.f32.mrb[0].mxu0
  %v863 = vadd.f32 0.0, %v862
  %v864 = vpop.f32.mrb[0].mxu0
  %865 = vmatprep.mubr.bf16.mxu0 0
  %866 = vmatmul.mubr.bf16.gmra.mrb[0].mxu0 %v742
  %v867 = vpop.f32.mrb[0].mxu0
  %v868 = vadd.f32 0.0, %v867
  %v869 = vpop.f32.mrb[0].mxu0
  %v870 = vpop.f32.mrb[0].mxu0
  %v871 = vadd.f32 0.0, %v870
  %v872 = vpop.f32.mrb[0].mxu0
  %873 = vmatprep.mubr.bf16.mxu0 0
  %874 = vmatmul.mubr.bf16.gmra.mrb[0].mxu0 %v745
  %v875 = vpop.f32.mrb[0].mxu0
  %v876 = vadd.f32 0.0, %v875
  %v877 = vpop.f32.mrb[0].mxu0
  %v878 = vpop.f32.mrb[0].mxu0
  %v879 = vadd.f32 0.0, %v878
  %v880 = vpop.f32.mrb[0].mxu0
  %881 = vmatprep.mubr.bf16.mxu0 0
  %882 = vmatmul.mubr.bf16.gmra.mrb[0].mxu0 %v748
  %v883 = vpop.f32.mrb[0].mxu0
  %v884 = vadd.f32 0.0, %v883
  %v885 = vpop.f32.mrb[0].mxu0
  %v886 = vpop.f32.mrb[0].mxu0
  %v887 = vadd.f32 0.0, %v886
  %v888 = vpop.f32.mrb[0].mxu0
  %889 = vmatprep.mubr.bf16.mxu0 0
  %890 = vmatmul.mubr.bf16.gmra.mrb[0].mxu0 %v751
  %v891 = vpop.f32.mrb[0].mxu0
  %v892 = vadd.f32 0.0, %v891
  %v893 = vpop.f32.mrb[0].mxu0
  %v894 = vpop.f32.mrb[0].mxu0
  %v895 = vpop.f32.mrb[0].mxu0
  %896 = vdwg.mxu0
  %v897 = vmax.f32 %v588, %v788
  %v898 = vmax.f32 %v589, %v791
  %v899 = vmax.f32 %v590, %v796
  %v900 = vmax.f32 %v591, %v799
  %v901 = vmax.f32 %v592, %v804
  %v902 = vmax.f32 %v593, %v807
  %v903 = vmax.f32 %v594, %v812
  %v904 = vmax.f32 %v595, %v815
  %v905 = vmax.f32 %v596, %v820
  %v906 = vmax.f32 %v597, %v823
  %v907 = vmax.f32 %v598, %v828
  %v908 = vmax.f32 %v599, %v831
  %v909 = vmax.f32 %v600, %v836
  %v910 = vmax.f32 %v601, %v839
  %v911 = vmax.f32 %v602, %v844
  %v912 = vmax.f32 %v603, %v847
  %v913 = vmax.f32 %v604, %v852
  %v914 = vmax.f32 %v605, %v855
  %v915 = vmax.f32 %v606, %v860
  %v916 = vmax.f32 %v607, %v863
  %v917 = vmax.f32 %v608, %v868
  %v918 = vmax.f32 %v609, %v871
  %v919 = vmax.f32 %v610, %v876
  %v920 = vmax.f32 %v611, %v879
  %v921 = vmax.f32 %v612, %v884
  %v922 = vmax.f32 %v613, %v887
  %v923 = vmax.f32 %v614, %v892
  %s924 = scalar_lea.vmem %s0, 324
  %v925 = vld [vmem:[%s924] sm:$0xf]
  %v926 = vld [vmem:[%s924 + $0x4] sm:$0xf]
  %v927 = vld [vmem:[%s924 + $0x8] sm:$0xf]
  %v928 = vld [vmem:[%s924 + $0xc] sm:$0xf]
  %v929 = vld [vmem:[%s924 + $0x10] sm:$0xf]
  %v930 = vld [vmem:[%s924 + $0x14] sm:$0xf]
  %v931 = vld [vmem:[%s924 + $0x18] sm:$0xf]
  %v932 = vld [vmem:[%s924 + $0x1c] sm:$0xf]
  %v933 = vld [vmem:[%s924 + $0x20] sm:$0xf]
  %v934 = vld [vmem:[%s924 + $0x24] sm:$0xf]
  %v935 = vld [vmem:[%s924 + $0x28] sm:$0xf]
  %v936 = vld [vmem:[%s924 + $0x2c] sm:$0xf]
  %v937 = vld [vmem:[%s924 + $0x30] sm:$0xf]
  %v938 = vld [vmem:[%s924 + $0x34] sm:$0xf]
  %v939 = vld [vmem:[%s924 + $0x38] sm:$0xf]
  %v940 = vld [vmem:[%s924 + $0x3c] sm:$0xf]
  %v941 = vld [vmem:[%s924 + $0x40] sm:$0xf]
  %v942 = vld [vmem:[%s924 + $0x44] sm:$0xf]
  %v943 = vld [vmem:[%s924 + $0x48] sm:$0xf]
  %v944 = vld [vmem:[%s924 + $0x4c] sm:$0xf]
  %v945 = vld [vmem:[%s924 + $0x50] sm:$0xf]
  %v946 = vld [vmem:[%s924 + $0x54] sm:$0xf]
  %v947 = vld [vmem:[%s924 + $0x58] sm:$0xf]
  %v948 = vld [vmem:[%s924 + $0x5c] sm:$0xf]
  %v949 = vld [vmem:[%s924 + $0x60] sm:$0xf]
  %v950 = vld [vmem:[%s924 + $0x64] sm:$0xf]
  %v951 = vld [vmem:[%s924 + $0x68] sm:$0x1]
  %v979 = vunpack.c.l.b16 %v925
  %v980 = vunpack.c.l.b16 %v926
  %v981 = vunpack.c.l.b16 %v927
  %v982 = vunpack.c.l.b16 %v928
  %v983 = vunpack.c.l.b16 %v929
  %v984 = vunpack.c.l.b16 %v930
  %v985 = vunpack.c.l.b16 %v931
  %v986 = vunpack.c.l.b16 %v932
  %v987 = vunpack.c.l.b16 %v933
  %v988 = vunpack.c.l.b16 %v934
  %v989 = vunpack.c.l.b16 %v935
  %v990 = vunpack.c.l.b16 %v936
  %v991 = vunpack.c.l.b16 %v937
  %v992 = vunpack.c.l.b16 %v938
  %v993 = vunpack.c.l.b16 %v939
  %v994 = vunpack.c.l.b16 %v940
  %v995 = vunpack.c.l.b16 %v941
  %v996 = vunpack.c.l.b16 %v942
  %v997 = vunpack.c.l.b16 %v943
  %v998 = vunpack.c.l.b16 %v944
  %v999 = vunpack.c.l.b16 %v945
  %v1000 = vunpack.c.l.b16 %v946
  %v1001 = vunpack.c.l.b16 %v947
  %v1002 = vunpack.c.l.b16 %v948
  %v1003 = vunpack.c.l.b16 %v949
  %v1004 = vunpack.c.l.b16 %v950
  %v1005 = vunpack.c.l.b16 %v951
  %v1006 = vpack.c.b16 %v980, %v979
  %v1007 = vpack.c.b16 %v982, %v981
  %v1008 = vpack.c.b16 %v984, %v983
  %v1009 = vpack.c.b16 %v986, %v985
  %v1010 = vpack.c.b16 %v988, %v987
  %v1011 = vpack.c.b16 %v990, %v989
  %v1012 = vpack.c.b16 %v992, %v991
  %v1013 = vpack.c.b16 %v994, %v993
  %v1014 = vpack.c.b16 %v996, %v995
  %v1015 = vpack.c.b16 %v998, %v997
  %v1016 = vpack.c.b16 %v1000, %v999
  %v1017 = vpack.c.b16 %v1002, %v1001
  %v1018 = vpack.c.b16 %v1004, %v1003
  %v1019 = vpack.c.b16 %v1005, %v1005
  %v1021 = vsel %vm119, %v1006, 0
  %v1024 = vsel %vm119, %v1007, 0
  %v1027 = vsel %vm119, %v1008, 0
  %v1030 = vsel %vm119, %v1009, 0
  %v1033 = vsel %vm119, %v1010, 0
  %v1036 = vsel %vm119, %v1011, 0
  %v1039 = vsel %vm119, %v1012, 0
  %v1042 = vsel %vm119, %v1013, 0
  %v1045 = vsel %vm119, %v1014, 0
  %v1048 = vsel %vm119, %v1015, 0
  %v1051 = vsel %vm119, %v1016, 0
  %v1054 = vsel %vm119, %v1017, 0
  %v1057 = vsel %vm119, %v1018, 0
  %v1060 = vsel %vm119, %v1019, 0
  %1062 = vmatprep.subr.bf16.mxu0 0
  %1063 = vmatpush1.bf16.msra.mxu0 %v117
  %1064 = vmatprep.subr.bf16.mxu0 0
  %1065 = vmatpush1.bf16.msra.mxu0 0
  %1066 = vmatprep.subr.bf16.mxu0 0
  %1067 = vmatpush1.bf16.msra.mxu0 0
  %1068 = vmatprep.subr.bf16.mxu0 0
  %1069 = vmatpush1.bf16.msra.mxu0 0
  %1070 = vmatprep.subr.bf16.mxu0 0
  %1071 = vmatpush1.bf16.msra.mxu0 0
  %1072 = vmatprep.subr.bf16.mxu0 0
  %1073 = vmatpush1.bf16.msra.mxu0 0
  %1074 = vmatprep.subr.bf16.mxu0 0
  %1075 = vmatpush1.bf16.msra.mxu0 0
  %1076 = vmatprep.subr.bf16.mxu0 0
  %1077 = vmatpush1.bf16.msra.mxu0 0
  %1078 = vmatprep.subr.bf16.mxu0 0
  %1079 = vmatpush1.bf16.msra.mxu0 0
  %1080 = vmatprep.subr.bf16.mxu0 0
  %1081 = vmatpush1.bf16.msra.mxu0 0
  %1082 = vmatprep.subr.bf16.mxu0 0
  %1083 = vmatpush1.bf16.msra.mxu0 0
  %1084 = vmatprep.subr.bf16.mxu0 0
  %1085 = vmatpush1.bf16.msra.mxu0 0
  %1086 = vmatprep.subr.bf16.mxu0 0
  %1087 = vmatpush1.bf16.msra.mxu0 0
  %1088 = vmatprep.subr.bf16.mxu0 0
  %1089 = vmatpush1.bf16.msra.mxu0 0
  %1090 = vmatprep.subr.bf16.mxu0 0
  %1091 = vmatpush1.bf16.msra.mxu0 0
  %1092 = vmatprep.subr.bf16.mxu0 0
  %1093 = vmatpush1.bf16.msra.mxu0 0
  %1094 = vmatprep.mubr.bf16.mxu0 0
  %1095 = vmatmul.mubr.bf16.gmra.mrb[0].mxu0 %v1021
  %v1096 = vpop.f32.mrb[0].mxu0
  %v1097 = vadd.f32 0.0, %v1096
  %v1098 = vpop.f32.mrb[0].mxu0
  %v1099 = vpop.f32.mrb[0].mxu0
  %v1100 = vadd.f32 0.0, %v1099
  %v1101 = vpop.f32.mrb[0].mxu0
  %1102 = vmatprep.mubr.bf16.mxu0 0
  %1103 = vmatmul.mubr.bf16.gmra.mrb[0].mxu0 %v1024
  %v1104 = vpop.f32.mrb[0].mxu0
  %v1105 = vadd.f32 0.0, %v1104
  %v1106 = vpop.f32.mrb[0].mxu0
  %v1107 = vpop.f32.mrb[0].mxu0
  %v1108 = vadd.f32 0.0, %v1107
  %v1109 = vpop.f32.mrb[0].mxu0
  %1110 = vmatprep.mubr.bf16.mxu0 0
  %1111 = vmatmul.mubr.bf16.gmra.mrb[0].mxu0 %v1027
  %v1112 = vpop.f32.mrb[0].mxu0
  %v1113 = vadd.f32 0.0, %v1112
  %v1114 = vpop.f32.mrb[0].mxu0
  %v1115 = vpop.f32.mrb[0].mxu0
  %v1116 = vadd.f32 0.0, %v1115
  %v1117 = vpop.f32.mrb[0].mxu0
  %1118 = vmatprep.mubr.bf16.mxu0 0
  %1119 = vmatmul.mubr.bf16.gmra.mrb[0].mxu0 %v1030
  %v1120 = vpop.f32.mrb[0].mxu0
  %v1121 = vadd.f32 0.0, %v1120
  %v1122 = vpop.f32.mrb[0].mxu0
  %v1123 = vpop.f32.mrb[0].mxu0
  %v1124 = vadd.f32 0.0, %v1123
  %v1125 = vpop.f32.mrb[0].mxu0
  %1126 = vmatprep.mubr.bf16.mxu0 0
  %1127 = vmatmul.mubr.bf16.gmra.mrb[0].mxu0 %v1033
  %v1128 = vpop.f32.mrb[0].mxu0
  %v1129 = vadd.f32 0.0, %v1128
  %v1130 = vpop.f32.mrb[0].mxu0
  %v1131 = vpop.f32.mrb[0].mxu0
  %v1132 = vadd.f32 0.0, %v1131
  %v1133 = vpop.f32.mrb[0].mxu0
  %1134 = vmatprep.mubr.bf16.mxu0 0
  %1135 = vmatmul.mubr.bf16.gmra.mrb[0].mxu0 %v1036
  %v1136 = vpop.f32.mrb[0].mxu0
  %v1137 = vadd.f32 0.0, %v1136
  %v1138 = vpop.f32.mrb[0].mxu0
  %v1139 = vpop.f32.mrb[0].mxu0
  %v1140 = vadd.f32 0.0, %v1139
  %v1141 = vpop.f32.mrb[0].mxu0
  %1142 = vmatprep.mubr.bf16.mxu0 0
  %1143 = vmatmul.mubr.bf16.gmra.mrb[0].mxu0 %v1039
  %v1144 = vpop.f32.mrb[0].mxu0
  %v1145 = vadd.f32 0.0, %v1144
  %v1146 = vpop.f32.mrb[0].mxu0
  %v1147 = vpop.f32.mrb[0].mxu0
  %v1148 = vadd.f32 0.0, %v1147
  %v1149 = vpop.f32.mrb[0].mxu0
  %1150 = vmatprep.mubr.bf16.mxu0 0
  %1151 = vmatmul.mubr.bf16.gmra.mrb[0].mxu0 %v1042
  %v1152 = vpop.f32.mrb[0].mxu0
  %v1153 = vadd.f32 0.0, %v1152
  %v1154 = vpop.f32.mrb[0].mxu0
  %v1155 = vpop.f32.mrb[0].mxu0
  %v1156 = vadd.f32 0.0, %v1155
  %v1157 = vpop.f32.mrb[0].mxu0
  %1158 = vmatprep.mubr.bf16.mxu0 0
  %1159 = vmatmul.mubr.bf16.gmra.mrb[0].mxu0 %v1045
  %v1160 = vpop.f32.mrb[0].mxu0
  %v1161 = vadd.f32 0.0, %v1160
  %v1162 = vpop.f32.mrb[0].mxu0
  %v1163 = vpop.f32.mrb[0].mxu0
  %v1164 = vadd.f32 0.0, %v1163
  %v1165 = vpop.f32.mrb[0].mxu0
  %1166 = vmatprep.mubr.bf16.mxu0 0
  %1167 = vmatmul.mubr.bf16.gmra.mrb[0].mxu0 %v1048
  %v1168 = vpop.f32.mrb[0].mxu0
  %v1169 = vadd.f32 0.0, %v1168
  %v1170 = vpop.f32.mrb[0].mxu0
  %v1171 = vpop.f32.mrb[0].mxu0
  %v1172 = vadd.f32 0.0, %v1171
  %v1173 = vpop.f32.mrb[0].mxu0
  %1174 = vmatprep.mubr.bf16.mxu0 0
  %1175 = vmatmul.mubr.bf16.gmra.mrb[0].mxu0 %v1051
  %v1176 = vpop.f32.mrb[0].mxu0
  %v1177 = vadd.f32 0.0, %v1176
  %v1178 = vpop.f32.mrb[0].mxu0
  %v1179 = vpop.f32.mrb[0].mxu0
  %v1180 = vadd.f32 0.0, %v1179
  %v1181 = vpop.f32.mrb[0].mxu0
  %1182 = vmatprep.mubr.bf16.mxu0 0
  %1183 = vmatmul.mubr.bf16.gmra.mrb[0].mxu0 %v1054
  %v1184 = vpop.f32.mrb[0].mxu0
  %v1185 = vadd.f32 0.0, %v1184
  %v1186 = vpop.f32.mrb[0].mxu0
  %v1187 = vpop.f32.mrb[0].mxu0
  %v1188 = vadd.f32 0.0, %v1187
  %v1189 = vpop.f32.mrb[0].mxu0
  %1190 = vmatprep.mubr.bf16.mxu0 0
  %1191 = vmatmul.mubr.bf16.gmra.mrb[0].mxu0 %v1057
  %v1192 = vpop.f32.mrb[0].mxu0
  %v1193 = vadd.f32 0.0, %v1192
  %v1194 = vpop.f32.mrb[0].mxu0
  %v1195 = vpop.f32.mrb[0].mxu0
  %v1196 = vadd.f32 0.0, %v1195
  %v1197 = vpop.f32.mrb[0].mxu0
  %1198 = vmatprep.mubr.bf16.mxu0 0
  %1199 = vmatmul.mubr.bf16.gmra.mrb[0].mxu0 %v1060
  %v1200 = vpop.f32.mrb[0].mxu0
  %v1201 = vadd.f32 0.0, %v1200
  %v1202 = vpop.f32.mrb[0].mxu0
  %v1203 = vpop.f32.mrb[0].mxu0
  %v1204 = vpop.f32.mrb[0].mxu0
  %1205 = vdwg.mxu0
  %v1206 = vmax.f32 %v897, %v1097
  %v1207 = vmax.f32 %v898, %v1100
  %v1208 = vmax.f32 %v899, %v1105
  %v1209 = vmax.f32 %v900, %v1108
  %v1210 = vmax.f32 %v901, %v1113
  %v1211 = vmax.f32 %v902, %v1116
  %v1212 = vmax.f32 %v903, %v1121
  %v1213 = vmax.f32 %v904, %v1124
  %v1214 = vmax.f32 %v905, %v1129
  %v1215 = vmax.f32 %v906, %v1132
  %v1216 = vmax.f32 %v907, %v1137
  %v1217 = vmax.f32 %v908, %v1140
  %v1218 = vmax.f32 %v909, %v1145
  %v1219 = vmax.f32 %v910, %v1148
  %v1220 = vmax.f32 %v911, %v1153
  %v1221 = vmax.f32 %v912, %v1156
  %v1222 = vmax.f32 %v913, %v1161
  %v1223 = vmax.f32 %v914, %v1164
  %v1224 = vmax.f32 %v915, %v1169
  %v1225 = vmax.f32 %v916, %v1172
  %v1226 = vmax.f32 %v917, %v1177
  %v1227 = vmax.f32 %v918, %v1180
  %v1228 = vmax.f32 %v919, %v1185
  %v1229 = vmax.f32 %v920, %v1188
  %v1230 = vmax.f32 %v921, %v1193
  %v1231 = vmax.f32 %v922, %v1196
  %v1232 = vmax.f32 %v923, %v1201
  %v1234 = vlaneseq
  %v1235 = vshrl.u32 %v1234, 7
  %v1236 = vsub.s32 0, %v1235
  %v1237 = vrot.slane %v17, %v1236
  %v1239 = vadd.f32 %v1206, %v1237
  %v1240 = vadd.f32 %v1207, %v1237
  %v1241 = vadd.f32 %v1208, %v1237
  %v1242 = vadd.f32 %v1209, %v1237
  %v1243 = vadd.f32 %v1210, %v1237
  %v1244 = vadd.f32 %v1211, %v1237
  %v1245 = vadd.f32 %v1212, %v1237
  %v1246 = vadd.f32 %v1213, %v1237
  %v1247 = vadd.f32 %v1214, %v1237
  %v1248 = vadd.f32 %v1215, %v1237
  %v1249 = vadd.f32 %v1216, %v1237
  %v1250 = vadd.f32 %v1217, %v1237
  %v1251 = vadd.f32 %v1218, %v1237
  %v1252 = vadd.f32 %v1219, %v1237
  %v1253 = vadd.f32 %v1220, %v1237
  %v1254 = vadd.f32 %v1221, %v1237
  %v1255 = vadd.f32 %v1222, %v1237
  %v1256 = vadd.f32 %v1223, %v1237
  %v1257 = vadd.f32 %v1224, %v1237
  %v1258 = vadd.f32 %v1225, %v1237
  %v1259 = vadd.f32 %v1226, %v1237
  %v1260 = vadd.f32 %v1227, %v1237
  %v1261 = vadd.f32 %v1228, %v1237
  %v1262 = vadd.f32 %v1229, %v1237
  %v1263 = vadd.f32 %v1230, %v1237
  %v1264 = vadd.f32 %v1231, %v1237
  %v1265 = vadd.f32 %v1232, %v1237
  %v1266 = vmax.f32 %v1239, 0.0
  %v1267 = vmax.f32 %v1240, 0.0
  %v1268 = vmax.f32 %v1241, 0.0
  %v1269 = vmax.f32 %v1242, 0.0
  %v1270 = vmax.f32 %v1243, 0.0
  %v1271 = vmax.f32 %v1244, 0.0
  %v1272 = vmax.f32 %v1245, 0.0
  %v1273 = vmax.f32 %v1246, 0.0
  %v1274 = vmax.f32 %v1247, 0.0
  %v1275 = vmax.f32 %v1248, 0.0
  %v1276 = vmax.f32 %v1249, 0.0
  %v1277 = vmax.f32 %v1250, 0.0
  %v1278 = vmax.f32 %v1251, 0.0
  %v1279 = vmax.f32 %v1252, 0.0
  %v1280 = vmax.f32 %v1253, 0.0
  %v1281 = vmax.f32 %v1254, 0.0
  %v1282 = vmax.f32 %v1255, 0.0
  %v1283 = vmax.f32 %v1256, 0.0
  %v1284 = vmax.f32 %v1257, 0.0
  %v1285 = vmax.f32 %v1258, 0.0
  %v1286 = vmax.f32 %v1259, 0.0
  %v1287 = vmax.f32 %v1260, 0.0
  %v1288 = vmax.f32 %v1261, 0.0
  %v1289 = vmax.f32 %v1262, 0.0
  %v1290 = vmax.f32 %v1263, 0.0
  %v1291 = vmax.f32 %v1264, 0.0
  %v1292 = vmax.f32 %v1265, 0.0
  %v1293 = vpack.c.bf16 %v1267, %v1266
  %v1294 = vpack.c.bf16 %v1269, %v1268
  %v1295 = vpack.c.bf16 %v1271, %v1270
  %v1296 = vpack.c.bf16 %v1273, %v1272
  %v1297 = vpack.c.bf16 %v1275, %v1274
  %v1298 = vpack.c.bf16 %v1277, %v1276
  %v1299 = vpack.c.bf16 %v1279, %v1278
  %v1300 = vpack.c.bf16 %v1281, %v1280
  %v1301 = vpack.c.bf16 %v1283, %v1282
  %v1302 = vpack.c.bf16 %v1285, %v1284
  %v1303 = vpack.c.bf16 %v1287, %v1286
  %v1304 = vpack.c.bf16 %v1289, %v1288
  %v1305 = vpack.c.bf16 %v1291, %v1290
  %v1306 = vpack.c.bf16 %v1292, %v1292
  %v1321 = vunpack.c.l.b16 %v1293
  %v1322 = vunpack.c.h.b16 %v1293
  %v1323 = vunpack.c.l.b16 %v1294
  %v1324 = vunpack.c.h.b16 %v1294
  %v1325 = vunpack.c.l.b16 %v1295
  %v1326 = vunpack.c.h.b16 %v1295
  %v1327 = vunpack.c.l.b16 %v1296
  %v1328 = vunpack.c.h.b16 %v1296
  %v1329 = vunpack.c.l.b16 %v1297
  %v1330 = vunpack.c.h.b16 %v1297
  %v1331 = vunpack.c.l.b16 %v1298
  %v1332 = vunpack.c.h.b16 %v1298
  %v1333 = vunpack.c.l.b16 %v1299
  %v1334 = vunpack.c.h.b16 %v1299
  %v1335 = vunpack.c.l.b16 %v1300
  %v1336 = vunpack.c.h.b16 %v1300
  %v1337 = vunpack.c.l.b16 %v1301
  %v1338 = vunpack.c.h.b16 %v1301
  %v1339 = vunpack.c.l.b16 %v1302
  %v1340 = vunpack.c.h.b16 %v1302
  %v1341 = vunpack.c.l.b16 %v1303
  %v1342 = vunpack.c.h.b16 %v1303
  %v1343 = vunpack.c.l.b16 %v1304
  %v1344 = vunpack.c.h.b16 %v1304
  %v1345 = vunpack.c.l.b16 %v1305
  %v1346 = vunpack.c.h.b16 %v1305
  %v1347 = vunpack.c.l.b16 %v1306
  %v1348 = vpack.c.b16 %v1321, %v1321
  %v1349 = vpack.c.b16 %v1322, %v1322
  %v1350 = vpack.c.b16 %v1323, %v1323
  %v1351 = vpack.c.b16 %v1324, %v1324
  %v1352 = vpack.c.b16 %v1325, %v1325
  %v1353 = vpack.c.b16 %v1326, %v1326
  %v1354 = vpack.c.b16 %v1327, %v1327
  %v1355 = vpack.c.b16 %v1328, %v1328
  %v1356 = vpack.c.b16 %v1329, %v1329
  %v1357 = vpack.c.b16 %v1330, %v1330
  %v1358 = vpack.c.b16 %v1331, %v1331
  %v1359 = vpack.c.b16 %v1332, %v1332
  %v1360 = vpack.c.b16 %v1333, %v1333
  %v1361 = vpack.c.b16 %v1334, %v1334
  %v1362 = vpack.c.b16 %v1335, %v1335
  %v1363 = vpack.c.b16 %v1336, %v1336
  %v1364 = vpack.c.b16 %v1337, %v1337
  %v1365 = vpack.c.b16 %v1338, %v1338
  %v1366 = vpack.c.b16 %v1339, %v1339
  %v1367 = vpack.c.b16 %v1340, %v1340
  %v1368 = vpack.c.b16 %v1341, %v1341
  %v1369 = vpack.c.b16 %v1342, %v1342
  %v1370 = vpack.c.b16 %v1343, %v1343
  %v1371 = vpack.c.b16 %v1344, %v1344
  %v1372 = vpack.c.b16 %v1345, %v1345
  %v1373 = vpack.c.b16 %v1346, %v1346
  %v1374 = vpack.c.b16 %v1347, %v1347
  %vm1402 = vcmask 257024
  %1403 = vst.msk [vmem:[%s3] sm:$0xf] %vm1402, %v1348
  %1404 = vst.msk [vmem:[%s3 + $0x4] sm:$0xf] %vm1402, %v1349
  %1405 = vst.msk [vmem:[%s3 + $0x8] sm:$0xf] %vm1402, %v1350
  %1406 = vst.msk [vmem:[%s3 + $0xc] sm:$0xf] %vm1402, %v1351
  %1407 = vst.msk [vmem:[%s3 + $0x10] sm:$0xf] %vm1402, %v1352
  %1408 = vst.msk [vmem:[%s3 + $0x14] sm:$0xf] %vm1402, %v1353
  %1409 = vst.msk [vmem:[%s3 + $0x18] sm:$0xf] %vm1402, %v1354
  %1410 = vst.msk [vmem:[%s3 + $0x1c] sm:$0xf] %vm1402, %v1355
  %1411 = vst.msk [vmem:[%s3 + $0x20] sm:$0xf] %vm1402, %v1356
  %1412 = vst.msk [vmem:[%s3 + $0x24] sm:$0xf] %vm1402, %v1357
  %1413 = vst.msk [vmem:[%s3 + $0x28] sm:$0xf] %vm1402, %v1358
  %1414 = vst.msk [vmem:[%s3 + $0x2c] sm:$0xf] %vm1402, %v1359
  %1415 = vst.msk [vmem:[%s3 + $0x30] sm:$0xf] %vm1402, %v1360
  %1416 = vst.msk [vmem:[%s3 + $0x34] sm:$0xf] %vm1402, %v1361
  %1417 = vst.msk [vmem:[%s3 + $0x38] sm:$0xf] %vm1402, %v1362
  %1418 = vst.msk [vmem:[%s3 + $0x3c] sm:$0xf] %vm1402, %v1363
  %1419 = vst.msk [vmem:[%s3 + $0x40] sm:$0xf] %vm1402, %v1364
  %1420 = vst.msk [vmem:[%s3 + $0x44] sm:$0xf] %vm1402, %v1365
  %1421 = vst.msk [vmem:[%s3 + $0x48] sm:$0xf] %vm1402, %v1366
  %1422 = vst.msk [vmem:[%s3 + $0x4c] sm:$0xf] %vm1402, %v1367
  %1423 = vst.msk [vmem:[%s3 + $0x50] sm:$0xf] %vm1402, %v1368
  %1424 = vst.msk [vmem:[%s3 + $0x54] sm:$0xf] %vm1402, %v1369
  %1425 = vst.msk [vmem:[%s3 + $0x58] sm:$0xf] %vm1402, %v1370
  %1426 = vst.msk [vmem:[%s3 + $0x5c] sm:$0xf] %vm1402, %v1371
  %1427 = vst.msk [vmem:[%s3 + $0x60] sm:$0xf] %vm1402, %v1372
  %1428 = vst.msk [vmem:[%s3 + $0x64] sm:$0xf] %vm1402, %v1373
  %vm1429 = vcmask 253952
  %1430 = vst.msk [vmem:[%s3 + $0x68] sm:$0x1] %vm1429, %v1374
  %s1431 = scalar_lea.vmem %s0, 432
  %v1432 = vld [vmem:[%s1431] sm:$0xf]
  %v1433 = vld [vmem:[%s1431 + $0x4] sm:$0xf]
  %v1434 = vld [vmem:[%s1431 + $0x8] sm:$0xf]
  %v1435 = vld [vmem:[%s1431 + $0xc] sm:$0xf]
  %v1436 = vld [vmem:[%s1431 + $0x10] sm:$0xf]
  %v1437 = vld [vmem:[%s1431 + $0x14] sm:$0xf]
  %v1438 = vld [vmem:[%s1431 + $0x18] sm:$0xf]
  %v1439 = vld [vmem:[%s1431 + $0x1c] sm:$0xf]
  %v1440 = vld [vmem:[%s1431 + $0x20] sm:$0xf]
  %v1441 = vld [vmem:[%s1431 + $0x24] sm:$0xf]
  %v1442 = vld [vmem:[%s1431 + $0x28] sm:$0xf]
  %v1443 = vld [vmem:[%s1431 + $0x2c] sm:$0xf]
  %v1444 = vld [vmem:[%s1431 + $0x30] sm:$0xf]
  %v1445 = vld [vmem:[%s1431 + $0x34] sm:$0xf]
  %v1446 = vld [vmem:[%s1431 + $0x38] sm:$0xf]
  %v1447 = vld [vmem:[%s1431 + $0x3c] sm:$0xf]
  %v1448 = vld [vmem:[%s1431 + $0x40] sm:$0xf]
  %v1449 = vld [vmem:[%s1431 + $0x44] sm:$0xf]
  %v1450 = vld [vmem:[%s1431 + $0x48] sm:$0xf]
  %v1451 = vld [vmem:[%s1431 + $0x4c] sm:$0xf]
  %v1452 = vld [vmem:[%s1431 + $0x50] sm:$0xf]
  %v1453 = vld [vmem:[%s1431 + $0x54] sm:$0xf]
  %v1454 = vld [vmem:[%s1431 + $0x58] sm:$0xf]
  %v1455 = vld [vmem:[%s1431 + $0x5c] sm:$0xf]
  %v1456 = vld [vmem:[%s1431 + $0x60] sm:$0xf]
  %v1457 = vld [vmem:[%s1431 + $0x64] sm:$0xf]
  %v1458 = vld [vmem:[%s1431 + $0x68] sm:$0x1]
  %v1486 = vunpack.c.l.b16 %v1432
  %v1487 = vunpack.c.l.b16 %v1433
  %v1488 = vunpack.c.l.b16 %v1434
  %v1489 = vunpack.c.l.b16 %v1435
  %v1490 = vunpack.c.l.b16 %v1436
  %v1491 = vunpack.c.l.b16 %v1437
  %v1492 = vunpack.c.l.b16 %v1438
  %v1493 = vunpack.c.l.b16 %v1439
  %v1494 = vunpack.c.l.b16 %v1440
  %v1495 = vunpack.c.l.b16 %v1441
  %v1496 = vunpack.c.l.b16 %v1442
  %v1497 = vunpack.c.l.b16 %v1443
  %v1498 = vunpack.c.l.b16 %v1444
  %v1499 = vunpack.c.l.b16 %v1445
  %v1500 = vunpack.c.l.b16 %v1446
  %v1501 = vunpack.c.l.b16 %v1447
  %v1502 = vunpack.c.l.b16 %v1448
  %v1503 = vunpack.c.l.b16 %v1449
  %v1504 = vunpack.c.l.b16 %v1450
  %v1505 = vunpack.c.l.b16 %v1451
  %v1506 = vunpack.c.l.b16 %v1452
  %v1507 = vunpack.c.l.b16 %v1453
  %v1508 = vunpack.c.l.b16 %v1454
  %v1509 = vunpack.c.l.b16 %v1455
  %v1510 = vunpack.c.l.b16 %v1456
  %v1511 = vunpack.c.l.b16 %v1457
  %v1512 = vunpack.c.l.b16 %v1458
  %v1513 = vpack.c.b16 %v1487, %v1486
  %v1514 = vpack.c.b16 %v1489, %v1488
  %v1515 = vpack.c.b16 %v1491, %v1490
  %v1516 = vpack.c.b16 %v1493, %v1492
  %v1517 = vpack.c.b16 %v1495, %v1494
  %v1518 = vpack.c.b16 %v1497, %v1496
  %v1519 = vpack.c.b16 %v1499, %v1498
  %v1520 = vpack.c.b16 %v1501, %v1500
  %v1521 = vpack.c.b16 %v1503, %v1502
  %v1522 = vpack.c.b16 %v1505, %v1504
  %v1523 = vpack.c.b16 %v1507, %v1506
  %v1524 = vpack.c.b16 %v1509, %v1508
  %v1525 = vpack.c.b16 %v1511, %v1510
  %v1526 = vpack.c.b16 %v1512, %v1512
  %v1528 = vsel %vm119, %v1513, 0
  %v1531 = vsel %vm119, %v1514, 0
  %v1534 = vsel %vm119, %v1515, 0
  %v1537 = vsel %vm119, %v1516, 0
  %v1540 = vsel %vm119, %v1517, 0
  %v1543 = vsel %vm119, %v1518, 0
  %v1546 = vsel %vm119, %v1519, 0
  %v1549 = vsel %vm119, %v1520, 0
  %v1552 = vsel %vm119, %v1521, 0
  %v1555 = vsel %vm119, %v1522, 0
  %v1558 = vsel %vm119, %v1523, 0
  %v1561 = vsel %vm119, %v1524, 0
  %v1564 = vsel %vm119, %v1525, 0
  %v1567 = vsel %vm119, %v1526, 0
  %1569 = vmatprep.subr.bf16.mxu0 0
  %1570 = vmatpush1.bf16.msra.mxu0 %v117
  %1571 = vmatprep.subr.bf16.mxu0 0
  %1572 = vmatpush1.bf16.msra.mxu0 0
  %1573 = vmatprep.subr.bf16.mxu0 0
  %1574 = vmatpush1.bf16.msra.mxu0 0
  %1575 = vmatprep.subr.bf16.mxu0 0
  %1576 = vmatpush1.bf16.msra.mxu0 0
  %1577 = vmatprep.subr.bf16.mxu0 0
  %1578 = vmatpush1.bf16.msra.mxu0 0
  %1579 = vmatprep.subr.bf16.mxu0 0
  %1580 = vmatpush1.bf16.msra.mxu0 0
  %1581 = vmatprep.subr.bf16.mxu0 0
  %1582 = vmatpush1.bf16.msra.mxu0 0
  %1583 = vmatprep.subr.bf16.mxu0 0
  %1584 = vmatpush1.bf16.msra.mxu0 0
  %1585 = vmatprep.subr.bf16.mxu0 0
  %1586 = vmatpush1.bf16.msra.mxu0 0
  %1587 = vmatprep.subr.bf16.mxu0 0
  %1588 = vmatpush1.bf16.msra.mxu0 0
  %1589 = vmatprep.subr.bf16.mxu0 0
  %1590 = vmatpush1.bf16.msra.mxu0 0
  %1591 = vmatprep.subr.bf16.mxu0 0
  %1592 = vmatpush1.bf16.msra.mxu0 0
  %1593 = vmatprep.subr.bf16.mxu0 0
  %1594 = vmatpush1.bf16.msra.mxu0 0
  %1595 = vmatprep.subr.bf16.mxu0 0
  %1596 = vmatpush1.bf16.msra.mxu0 0
  %1597 = vmatprep.subr.bf16.mxu0 0
  %1598 = vmatpush1.bf16.msra.mxu0 0
  %1599 = vmatprep.subr.bf16.mxu0 0
  %1600 = vmatpush1.bf16.msra.mxu0 0
  %1601 = vmatprep.mubr.bf16.mxu0 0
  %1602 = vmatmul.mubr.bf16.gmra.mrb[0].mxu0 %v1528
  %v1603 = vpop.f32.mrb[0].mxu0
  %v1604 = vadd.f32 0.0, %v1603
  %v1605 = vpop.f32.mrb[0].mxu0
  %v1606 = vpop.f32.mrb[0].mxu0
  %v1607 = vadd.f32 0.0, %v1606
  %v1608 = vpop.f32.mrb[0].mxu0
  %1609 = vmatprep.mubr.bf16.mxu0 0
  %1610 = vmatmul.mubr.bf16.gmra.mrb[0].mxu0 %v1531
  %v1611 = vpop.f32.mrb[0].mxu0
  %v1612 = vadd.f32 0.0, %v1611
  %v1613 = vpop.f32.mrb[0].mxu0
  %v1614 = vpop.f32.mrb[0].mxu0
  %v1615 = vadd.f32 0.0, %v1614
  %v1616 = vpop.f32.mrb[0].mxu0
  %1617 = vmatprep.mubr.bf16.mxu0 0
  %1618 = vmatmul.mubr.bf16.gmra.mrb[0].mxu0 %v1534
  %v1619 = vpop.f32.mrb[0].mxu0
  %v1620 = vadd.f32 0.0, %v1619
  %v1621 = vpop.f32.mrb[0].mxu0
  %v1622 = vpop.f32.mrb[0].mxu0
  %v1623 = vadd.f32 0.0, %v1622
  %v1624 = vpop.f32.mrb[0].mxu0
  %1625 = vmatprep.mubr.bf16.mxu0 0
  %1626 = vmatmul.mubr.bf16.gmra.mrb[0].mxu0 %v1537
  %v1627 = vpop.f32.mrb[0].mxu0
  %v1628 = vadd.f32 0.0, %v1627
  %v1629 = vpop.f32.mrb[0].mxu0
  %v1630 = vpop.f32.mrb[0].mxu0
  %v1631 = vadd.f32 0.0, %v1630
  %v1632 = vpop.f32.mrb[0].mxu0
  %1633 = vmatprep.mubr.bf16.mxu0 0
  %1634 = vmatmul.mubr.bf16.gmra.mrb[0].mxu0 %v1540
  %v1635 = vpop.f32.mrb[0].mxu0
  %v1636 = vadd.f32 0.0, %v1635
  %v1637 = vpop.f32.mrb[0].mxu0
  %v1638 = vpop.f32.mrb[0].mxu0
  %v1639 = vadd.f32 0.0, %v1638
  %v1640 = vpop.f32.mrb[0].mxu0
  %1641 = vmatprep.mubr.bf16.mxu0 0
  %1642 = vmatmul.mubr.bf16.gmra.mrb[0].mxu0 %v1543
  %v1643 = vpop.f32.mrb[0].mxu0
  %v1644 = vadd.f32 0.0, %v1643
  %v1645 = vpop.f32.mrb[0].mxu0
  %v1646 = vpop.f32.mrb[0].mxu0
  %v1647 = vadd.f32 0.0, %v1646
  %v1648 = vpop.f32.mrb[0].mxu0
  %1649 = vmatprep.mubr.bf16.mxu0 0
  %1650 = vmatmul.mubr.bf16.gmra.mrb[0].mxu0 %v1546
  %v1651 = vpop.f32.mrb[0].mxu0
  %v1652 = vadd.f32 0.0, %v1651
  %v1653 = vpop.f32.mrb[0].mxu0
  %v1654 = vpop.f32.mrb[0].mxu0
  %v1655 = vadd.f32 0.0, %v1654
  %v1656 = vpop.f32.mrb[0].mxu0
  %1657 = vmatprep.mubr.bf16.mxu0 0
  %1658 = vmatmul.mubr.bf16.gmra.mrb[0].mxu0 %v1549
  %v1659 = vpop.f32.mrb[0].mxu0
  %v1660 = vadd.f32 0.0, %v1659
  %v1661 = vpop.f32.mrb[0].mxu0
  %v1662 = vpop.f32.mrb[0].mxu0
  %v1663 = vadd.f32 0.0, %v1662
  %v1664 = vpop.f32.mrb[0].mxu0
  %1665 = vmatprep.mubr.bf16.mxu0 0
  %1666 = vmatmul.mubr.bf16.gmra.mrb[0].mxu0 %v1552
  %v1667 = vpop.f32.mrb[0].mxu0
  %v1668 = vadd.f32 0.0, %v1667
  %v1669 = vpop.f32.mrb[0].mxu0
  %v1670 = vpop.f32.mrb[0].mxu0
  %v1671 = vadd.f32 0.0, %v1670
  %v1672 = vpop.f32.mrb[0].mxu0
  %1673 = vmatprep.mubr.bf16.mxu0 0
  %1674 = vmatmul.mubr.bf16.gmra.mrb[0].mxu0 %v1555
  %v1675 = vpop.f32.mrb[0].mxu0
  %v1676 = vadd.f32 0.0, %v1675
  %v1677 = vpop.f32.mrb[0].mxu0
  %v1678 = vpop.f32.mrb[0].mxu0
  %v1679 = vadd.f32 0.0, %v1678
  %v1680 = vpop.f32.mrb[0].mxu0
  %1681 = vmatprep.mubr.bf16.mxu0 0
  %1682 = vmatmul.mubr.bf16.gmra.mrb[0].mxu0 %v1558
  %v1683 = vpop.f32.mrb[0].mxu0
  %v1684 = vadd.f32 0.0, %v1683
  %v1685 = vpop.f32.mrb[0].mxu0
  %v1686 = vpop.f32.mrb[0].mxu0
  %v1687 = vadd.f32 0.0, %v1686
  %v1688 = vpop.f32.mrb[0].mxu0
  %1689 = vmatprep.mubr.bf16.mxu0 0
  %1690 = vmatmul.mubr.bf16.gmra.mrb[0].mxu0 %v1561
  %v1691 = vpop.f32.mrb[0].mxu0
  %v1692 = vadd.f32 0.0, %v1691
  %v1693 = vpop.f32.mrb[0].mxu0
  %v1694 = vpop.f32.mrb[0].mxu0
  %v1695 = vadd.f32 0.0, %v1694
  %v1696 = vpop.f32.mrb[0].mxu0
  %1697 = vmatprep.mubr.bf16.mxu0 0
  %1698 = vmatmul.mubr.bf16.gmra.mrb[0].mxu0 %v1564
  %v1699 = vpop.f32.mrb[0].mxu0
  %v1700 = vadd.f32 0.0, %v1699
  %v1701 = vpop.f32.mrb[0].mxu0
  %v1702 = vpop.f32.mrb[0].mxu0
  %v1703 = vadd.f32 0.0, %v1702
  %v1704 = vpop.f32.mrb[0].mxu0
  %1705 = vmatprep.mubr.bf16.mxu0 0
  %1706 = vmatmul.mubr.bf16.gmra.mrb[0].mxu0 %v1567
  %v1707 = vpop.f32.mrb[0].mxu0
  %v1708 = vadd.f32 0.0, %v1707
  %v1709 = vpop.f32.mrb[0].mxu0
  %v1710 = vpop.f32.mrb[0].mxu0
  %v1711 = vpop.f32.mrb[0].mxu0
  %1712 = vdwg.mxu0
  %s1713 = scalar_lea.vmem %s0, 540
  %v1714 = vld [vmem:[%s1713] sm:$0xf]
  %v1715 = vld [vmem:[%s1713 + $0x4] sm:$0xf]
  %v1716 = vld [vmem:[%s1713 + $0x8] sm:$0xf]
  %v1717 = vld [vmem:[%s1713 + $0xc] sm:$0xf]
  %v1718 = vld [vmem:[%s1713 + $0x10] sm:$0xf]
  %v1719 = vld [vmem:[%s1713 + $0x14] sm:$0xf]
  %v1720 = vld [vmem:[%s1713 + $0x18] sm:$0xf]
  %v1721 = vld [vmem:[%s1713 + $0x1c] sm:$0xf]
  %v1722 = vld [vmem:[%s1713 + $0x20] sm:$0xf]
  %v1723 = vld [vmem:[%s1713 + $0x24] sm:$0xf]
  %v1724 = vld [vmem:[%s1713 + $0x28] sm:$0xf]
  %v1725 = vld [vmem:[%s1713 + $0x2c] sm:$0xf]
  %v1726 = vld [vmem:[%s1713 + $0x30] sm:$0xf]
  %v1727 = vld [vmem:[%s1713 + $0x34] sm:$0xf]
  %v1728 = vld [vmem:[%s1713 + $0x38] sm:$0xf]
  %v1729 = vld [vmem:[%s1713 + $0x3c] sm:$0xf]
  %v1730 = vld [vmem:[%s1713 + $0x40] sm:$0xf]
  %v1731 = vld [vmem:[%s1713 + $0x44] sm:$0xf]
  %v1732 = vld [vmem:[%s1713 + $0x48] sm:$0xf]
  %v1733 = vld [vmem:[%s1713 + $0x4c] sm:$0xf]
  %v1734 = vld [vmem:[%s1713 + $0x50] sm:$0xf]
  %v1735 = vld [vmem:[%s1713 + $0x54] sm:$0xf]
  %v1736 = vld [vmem:[%s1713 + $0x58] sm:$0xf]
  %v1737 = vld [vmem:[%s1713 + $0x5c] sm:$0xf]
  %v1738 = vld [vmem:[%s1713 + $0x60] sm:$0xf]
  %v1739 = vld [vmem:[%s1713 + $0x64] sm:$0xf]
  %v1740 = vld [vmem:[%s1713 + $0x68] sm:$0x1]
  %v1768 = vunpack.c.l.b16 %v1714
  %v1769 = vunpack.c.l.b16 %v1715
  %v1770 = vunpack.c.l.b16 %v1716
  %v1771 = vunpack.c.l.b16 %v1717
  %v1772 = vunpack.c.l.b16 %v1718
  %v1773 = vunpack.c.l.b16 %v1719
  %v1774 = vunpack.c.l.b16 %v1720
  %v1775 = vunpack.c.l.b16 %v1721
  %v1776 = vunpack.c.l.b16 %v1722
  %v1777 = vunpack.c.l.b16 %v1723
  %v1778 = vunpack.c.l.b16 %v1724
  %v1779 = vunpack.c.l.b16 %v1725
  %v1780 = vunpack.c.l.b16 %v1726
  %v1781 = vunpack.c.l.b16 %v1727
  %v1782 = vunpack.c.l.b16 %v1728
  %v1783 = vunpack.c.l.b16 %v1729
  %v1784 = vunpack.c.l.b16 %v1730
  %v1785 = vunpack.c.l.b16 %v1731
  %v1786 = vunpack.c.l.b16 %v1732
  %v1787 = vunpack.c.l.b16 %v1733
  %v1788 = vunpack.c.l.b16 %v1734
  %v1789 = vunpack.c.l.b16 %v1735
  %v1790 = vunpack.c.l.b16 %v1736
  %v1791 = vunpack.c.l.b16 %v1737
  %v1792 = vunpack.c.l.b16 %v1738
  %v1793 = vunpack.c.l.b16 %v1739
  %v1794 = vunpack.c.l.b16 %v1740
  %v1795 = vpack.c.b16 %v1769, %v1768
  %v1796 = vpack.c.b16 %v1771, %v1770
  %v1797 = vpack.c.b16 %v1773, %v1772
  %v1798 = vpack.c.b16 %v1775, %v1774
  %v1799 = vpack.c.b16 %v1777, %v1776
  %v1800 = vpack.c.b16 %v1779, %v1778
  %v1801 = vpack.c.b16 %v1781, %v1780
  %v1802 = vpack.c.b16 %v1783, %v1782
  %v1803 = vpack.c.b16 %v1785, %v1784
  %v1804 = vpack.c.b16 %v1787, %v1786
  %v1805 = vpack.c.b16 %v1789, %v1788
  %v1806 = vpack.c.b16 %v1791, %v1790
  %v1807 = vpack.c.b16 %v1793, %v1792
  %v1808 = vpack.c.b16 %v1794, %v1794
  %v1810 = vsel %vm119, %v1795, 0
  %v1813 = vsel %vm119, %v1796, 0
  %v1816 = vsel %vm119, %v1797, 0
  %v1819 = vsel %vm119, %v1798, 0
  %v1822 = vsel %vm119, %v1799, 0
  %v1825 = vsel %vm119, %v1800, 0
  %v1828 = vsel %vm119, %v1801, 0
  %v1831 = vsel %vm119, %v1802, 0
  %v1834 = vsel %vm119, %v1803, 0
  %v1837 = vsel %vm119, %v1804, 0
  %v1840 = vsel %vm119, %v1805, 0
  %v1843 = vsel %vm119, %v1806, 0
  %v1846 = vsel %vm119, %v1807, 0
  %v1849 = vsel %vm119, %v1808, 0
  %1851 = vmatprep.subr.bf16.mxu0 0
  %1852 = vmatpush1.bf16.msra.mxu0 %v117
  %1853 = vmatprep.subr.bf16.mxu0 0
  %1854 = vmatpush1.bf16.msra.mxu0 0
  %1855 = vmatprep.subr.bf16.mxu0 0
  %1856 = vmatpush1.bf16.msra.mxu0 0
  %1857 = vmatprep.subr.bf16.mxu0 0
  %1858 = vmatpush1.bf16.msra.mxu0 0
  %1859 = vmatprep.subr.bf16.mxu0 0
  %1860 = vmatpush1.bf16.msra.mxu0 0
  %1861 = vmatprep.subr.bf16.mxu0 0
  %1862 = vmatpush1.bf16.msra.mxu0 0
  %1863 = vmatprep.subr.bf16.mxu0 0
  %1864 = vmatpush1.bf16.msra.mxu0 0
  %1865 = vmatprep.subr.bf16.mxu0 0
  %1866 = vmatpush1.bf16.msra.mxu0 0
  %1867 = vmatprep.subr.bf16.mxu0 0
  %1868 = vmatpush1.bf16.msra.mxu0 0
  %1869 = vmatprep.subr.bf16.mxu0 0
  %1870 = vmatpush1.bf16.msra.mxu0 0
  %1871 = vmatprep.subr.bf16.mxu0 0
  %1872 = vmatpush1.bf16.msra.mxu0 0
  %1873 = vmatprep.subr.bf16.mxu0 0
  %1874 = vmatpush1.bf16.msra.mxu0 0
  %1875 = vmatprep.subr.bf16.mxu0 0
  %1876 = vmatpush1.bf16.msra.mxu0 0
  %1877 = vmatprep.subr.bf16.mxu0 0
  %1878 = vmatpush1.bf16.msra.mxu0 0
  %1879 = vmatprep.subr.bf16.mxu0 0
  %1880 = vmatpush1.bf16.msra.mxu0 0
  %1881 = vmatprep.subr.bf16.mxu0 0
  %1882 = vmatpush1.bf16.msra.mxu0 0
  %1883 = vmatprep.mubr.bf16.mxu0 0
  %1884 = vmatmul.mubr.bf16.gmra.mrb[0].mxu0 %v1810
  %v1885 = vpop.f32.mrb[0].mxu0
  %v1886 = vadd.f32 0.0, %v1885
  %v1887 = vpop.f32.mrb[0].mxu0
  %v1888 = vpop.f32.mrb[0].mxu0
  %v1889 = vadd.f32 0.0, %v1888
  %v1890 = vpop.f32.mrb[0].mxu0
  %1891 = vmatprep.mubr.bf16.mxu0 0
  %1892 = vmatmul.mubr.bf16.gmra.mrb[0].mxu0 %v1813
  %v1893 = vpop.f32.mrb[0].mxu0
  %v1894 = vadd.f32 0.0, %v1893
  %v1895 = vpop.f32.mrb[0].mxu0
  %v1896 = vpop.f32.mrb[0].mxu0
  %v1897 = vadd.f32 0.0, %v1896
  %v1898 = vpop.f32.mrb[0].mxu0
  %1899 = vmatprep.mubr.bf16.mxu0 0
  %1900 = vmatmul.mubr.bf16.gmra.mrb[0].mxu0 %v1816
  %v1901 = vpop.f32.mrb[0].mxu0
  %v1902 = vadd.f32 0.0, %v1901
  %v1903 = vpop.f32.mrb[0].mxu0
  %v1904 = vpop.f32.mrb[0].mxu0
  %v1905 = vadd.f32 0.0, %v1904
  %v1906 = vpop.f32.mrb[0].mxu0
  %1907 = vmatprep.mubr.bf16.mxu0 0
  %1908 = vmatmul.mubr.bf16.gmra.mrb[0].mxu0 %v1819
  %v1909 = vpop.f32.mrb[0].mxu0
  %v1910 = vadd.f32 0.0, %v1909
  %v1911 = vpop.f32.mrb[0].mxu0
  %v1912 = vpop.f32.mrb[0].mxu0
  %v1913 = vadd.f32 0.0, %v1912
  %v1914 = vpop.f32.mrb[0].mxu0
  %1915 = vmatprep.mubr.bf16.mxu0 0
  %1916 = vmatmul.mubr.bf16.gmra.mrb[0].mxu0 %v1822
  %v1917 = vpop.f32.mrb[0].mxu0
  %v1918 = vadd.f32 0.0, %v1917
  %v1919 = vpop.f32.mrb[0].mxu0
  %v1920 = vpop.f32.mrb[0].mxu0
  %v1921 = vadd.f32 0.0, %v1920
  %v1922 = vpop.f32.mrb[0].mxu0
  %1923 = vmatprep.mubr.bf16.mxu0 0
  %1924 = vmatmul.mubr.bf16.gmra.mrb[0].mxu0 %v1825
  %v1925 = vpop.f32.mrb[0].mxu0
  %v1926 = vadd.f32 0.0, %v1925
  %v1927 = vpop.f32.mrb[0].mxu0
  %v1928 = vpop.f32.mrb[0].mxu0
  %v1929 = vadd.f32 0.0, %v1928
  %v1930 = vpop.f32.mrb[0].mxu0
  %1931 = vmatprep.mubr.bf16.mxu0 0
  %1932 = vmatmul.mubr.bf16.gmra.mrb[0].mxu0 %v1828
  %v1933 = vpop.f32.mrb[0].mxu0
  %v1934 = vadd.f32 0.0, %v1933
  %v1935 = vpop.f32.mrb[0].mxu0
  %v1936 = vpop.f32.mrb[0].mxu0
  %v1937 = vadd.f32 0.0, %v1936
  %v1938 = vpop.f32.mrb[0].mxu0
  %1939 = vmatprep.mubr.bf16.mxu0 0
  %1940 = vmatmul.mubr.bf16.gmra.mrb[0].mxu0 %v1831
  %v1941 = vpop.f32.mrb[0].mxu0
  %v1942 = vadd.f32 0.0, %v1941
  %v1943 = vpop.f32.mrb[0].mxu0
  %v1944 = vpop.f32.mrb[0].mxu0
  %v1945 = vadd.f32 0.0, %v1944
  %v1946 = vpop.f32.mrb[0].mxu0
  %1947 = vmatprep.mubr.bf16.mxu0 0
  %1948 = vmatmul.mubr.bf16.gmra.mrb[0].mxu0 %v1834
  %v1949 = vpop.f32.mrb[0].mxu0
  %v1950 = vadd.f32 0.0, %v1949
  %v1951 = vpop.f32.mrb[0].mxu0
  %v1952 = vpop.f32.mrb[0].mxu0
  %v1953 = vadd.f32 0.0, %v1952
  %v1954 = vpop.f32.mrb[0].mxu0
  %1955 = vmatprep.mubr.bf16.mxu0 0
  %1956 = vmatmul.mubr.bf16.gmra.mrb[0].mxu0 %v1837
  %v1957 = vpop.f32.mrb[0].mxu0
  %v1958 = vadd.f32 0.0, %v1957
  %v1959 = vpop.f32.mrb[0].mxu0
  %v1960 = vpop.f32.mrb[0].mxu0
  %v1961 = vadd.f32 0.0, %v1960
  %v1962 = vpop.f32.mrb[0].mxu0
  %1963 = vmatprep.mubr.bf16.mxu0 0
  %1964 = vmatmul.mubr.bf16.gmra.mrb[0].mxu0 %v1840
  %v1965 = vpop.f32.mrb[0].mxu0
  %v1966 = vadd.f32 0.0, %v1965
  %v1967 = vpop.f32.mrb[0].mxu0
  %v1968 = vpop.f32.mrb[0].mxu0
  %v1969 = vadd.f32 0.0, %v1968
  %v1970 = vpop.f32.mrb[0].mxu0
  %1971 = vmatprep.mubr.bf16.mxu0 0
  %1972 = vmatmul.mubr.bf16.gmra.mrb[0].mxu0 %v1843
  %v1973 = vpop.f32.mrb[0].mxu0
  %v1974 = vadd.f32 0.0, %v1973
  %v1975 = vpop.f32.mrb[0].mxu0
  %v1976 = vpop.f32.mrb[0].mxu0
  %v1977 = vadd.f32 0.0, %v1976
  %v1978 = vpop.f32.mrb[0].mxu0
  %1979 = vmatprep.mubr.bf16.mxu0 0
  %1980 = vmatmul.mubr.bf16.gmra.mrb[0].mxu0 %v1846
  %v1981 = vpop.f32.mrb[0].mxu0
  %v1982 = vadd.f32 0.0, %v1981
  %v1983 = vpop.f32.mrb[0].mxu0
  %v1984 = vpop.f32.mrb[0].mxu0
  %v1985 = vadd.f32 0.0, %v1984
  %v1986 = vpop.f32.mrb[0].mxu0
  %1987 = vmatprep.mubr.bf16.mxu0 0
  %1988 = vmatmul.mubr.bf16.gmra.mrb[0].mxu0 %v1849
  %v1989 = vpop.f32.mrb[0].mxu0
  %v1990 = vadd.f32 0.0, %v1989
  %v1991 = vpop.f32.mrb[0].mxu0
  %v1992 = vpop.f32.mrb[0].mxu0
  %v1993 = vpop.f32.mrb[0].mxu0
  %1994 = vdwg.mxu0
  %v1995 = vmax.f32 %v1604, %v1886
  %v1996 = vmax.f32 %v1607, %v1889
  %v1997 = vmax.f32 %v1612, %v1894
  %v1998 = vmax.f32 %v1615, %v1897
  %v1999 = vmax.f32 %v1620, %v1902
  %v2000 = vmax.f32 %v1623, %v1905
  %v2001 = vmax.f32 %v1628, %v1910
  %v2002 = vmax.f32 %v1631, %v1913
  %v2003 = vmax.f32 %v1636, %v1918
  %v2004 = vmax.f32 %v1639, %v1921
  %v2005 = vmax.f32 %v1644, %v1926
  %v2006 = vmax.f32 %v1647, %v1929
  %v2007 = vmax.f32 %v1652, %v1934
  %v2008 = vmax.f32 %v1655, %v1937
  %v2009 = vmax.f32 %v1660, %v1942
  %v2010 = vmax.f32 %v1663, %v1945
  %v2011 = vmax.f32 %v1668, %v1950
  %v2012 = vmax.f32 %v1671, %v1953
  %v2013 = vmax.f32 %v1676, %v1958
  %v2014 = vmax.f32 %v1679, %v1961
  %v2015 = vmax.f32 %v1684, %v1966
  %v2016 = vmax.f32 %v1687, %v1969
  %v2017 = vmax.f32 %v1692, %v1974
  %v2018 = vmax.f32 %v1695, %v1977
  %v2019 = vmax.f32 %v1700, %v1982
  %v2020 = vmax.f32 %v1703, %v1985
  %v2021 = vmax.f32 %v1708, %v1990
  %s2022 = scalar_lea.vmem %s0, 648
  %v2023 = vld [vmem:[%s2022] sm:$0xf]
  %v2024 = vld [vmem:[%s2022 + $0x4] sm:$0xf]
  %v2025 = vld [vmem:[%s2022 + $0x8] sm:$0xf]
  %v2026 = vld [vmem:[%s2022 + $0xc] sm:$0xf]
  %v2027 = vld [vmem:[%s2022 + $0x10] sm:$0xf]
  %v2028 = vld [vmem:[%s2022 + $0x14] sm:$0xf]
  %v2029 = vld [vmem:[%s2022 + $0x18] sm:$0xf]
  %v2030 = vld [vmem:[%s2022 + $0x1c] sm:$0xf]
  %v2031 = vld [vmem:[%s2022 + $0x20] sm:$0xf]
  %v2032 = vld [vmem:[%s2022 + $0x24] sm:$0xf]
  %v2033 = vld [vmem:[%s2022 + $0x28] sm:$0xf]
  %v2034 = vld [vmem:[%s2022 + $0x2c] sm:$0xf]
  %v2035 = vld [vmem:[%s2022 + $0x30] sm:$0xf]
  %v2036 = vld [vmem:[%s2022 + $0x34] sm:$0xf]
  %v2037 = vld [vmem:[%s2022 + $0x38] sm:$0xf]
  %v2038 = vld [vmem:[%s2022 + $0x3c] sm:$0xf]
  %v2039 = vld [vmem:[%s2022 + $0x40] sm:$0xf]
  %v2040 = vld [vmem:[%s2022 + $0x44] sm:$0xf]
  %v2041 = vld [vmem:[%s2022 + $0x48] sm:$0xf]
  %v2042 = vld [vmem:[%s2022 + $0x4c] sm:$0xf]
  %v2043 = vld [vmem:[%s2022 + $0x50] sm:$0xf]
  %v2044 = vld [vmem:[%s2022 + $0x54] sm:$0xf]
  %v2045 = vld [vmem:[%s2022 + $0x58] sm:$0xf]
  %v2046 = vld [vmem:[%s2022 + $0x5c] sm:$0xf]
  %v2047 = vld [vmem:[%s2022 + $0x60] sm:$0xf]
  %v2048 = vld [vmem:[%s2022 + $0x64] sm:$0xf]
  %v2049 = vld [vmem:[%s2022 + $0x68] sm:$0x1]
  %v2077 = vunpack.c.l.b16 %v2023
  %v2078 = vunpack.c.l.b16 %v2024
  %v2079 = vunpack.c.l.b16 %v2025
  %v2080 = vunpack.c.l.b16 %v2026
  %v2081 = vunpack.c.l.b16 %v2027
  %v2082 = vunpack.c.l.b16 %v2028
  %v2083 = vunpack.c.l.b16 %v2029
  %v2084 = vunpack.c.l.b16 %v2030
  %v2085 = vunpack.c.l.b16 %v2031
  %v2086 = vunpack.c.l.b16 %v2032
  %v2087 = vunpack.c.l.b16 %v2033
  %v2088 = vunpack.c.l.b16 %v2034
  %v2089 = vunpack.c.l.b16 %v2035
  %v2090 = vunpack.c.l.b16 %v2036
  %v2091 = vunpack.c.l.b16 %v2037
  %v2092 = vunpack.c.l.b16 %v2038
  %v2093 = vunpack.c.l.b16 %v2039
  %v2094 = vunpack.c.l.b16 %v2040
  %v2095 = vunpack.c.l.b16 %v2041
  %v2096 = vunpack.c.l.b16 %v2042
  %v2097 = vunpack.c.l.b16 %v2043
  %v2098 = vunpack.c.l.b16 %v2044
  %v2099 = vunpack.c.l.b16 %v2045
  %v2100 = vunpack.c.l.b16 %v2046
  %v2101 = vunpack.c.l.b16 %v2047
  %v2102 = vunpack.c.l.b16 %v2048
  %v2103 = vunpack.c.l.b16 %v2049
  %v2104 = vpack.c.b16 %v2078, %v2077
  %v2105 = vpack.c.b16 %v2080, %v2079
  %v2106 = vpack.c.b16 %v2082, %v2081
  %v2107 = vpack.c.b16 %v2084, %v2083
  %v2108 = vpack.c.b16 %v2086, %v2085
  %v2109 = vpack.c.b16 %v2088, %v2087
  %v2110 = vpack.c.b16 %v2090, %v2089
  %v2111 = vpack.c.b16 %v2092, %v2091
  %v2112 = vpack.c.b16 %v2094, %v2093
  %v2113 = vpack.c.b16 %v2096, %v2095
  %v2114 = vpack.c.b16 %v2098, %v2097
  %v2115 = vpack.c.b16 %v2100, %v2099
  %v2116 = vpack.c.b16 %v2102, %v2101
  %v2117 = vpack.c.b16 %v2103, %v2103
  %v2119 = vsel %vm119, %v2104, 0
  %v2122 = vsel %vm119, %v2105, 0
  %v2125 = vsel %vm119, %v2106, 0
  %v2128 = vsel %vm119, %v2107, 0
  %v2131 = vsel %vm119, %v2108, 0
  %v2134 = vsel %vm119, %v2109, 0
  %v2137 = vsel %vm119, %v2110, 0
  %v2140 = vsel %vm119, %v2111, 0
  %v2143 = vsel %vm119, %v2112, 0
  %v2146 = vsel %vm119, %v2113, 0
  %v2149 = vsel %vm119, %v2114, 0
  %v2152 = vsel %vm119, %v2115, 0
  %v2155 = vsel %vm119, %v2116, 0
  %v2158 = vsel %vm119, %v2117, 0
  %2160 = vmatprep.subr.bf16.mxu0 0
  %2161 = vmatpush1.bf16.msra.mxu0 %v117
  %2162 = vmatprep.subr.bf16.mxu0 0
  %2163 = vmatpush1.bf16.msra.mxu0 0
  %2164 = vmatprep.subr.bf16.mxu0 0
  %2165 = vmatpush1.bf16.msra.mxu0 0
  %2166 = vmatprep.subr.bf16.mxu0 0
  %2167 = vmatpush1.bf16.msra.mxu0 0
  %2168 = vmatprep.subr.bf16.mxu0 0
  %2169 = vmatpush1.bf16.msra.mxu0 0
  %2170 = vmatprep.subr.bf16.mxu0 0
  %2171 = vmatpush1.bf16.msra.mxu0 0
  %2172 = vmatprep.subr.bf16.mxu0 0
  %2173 = vmatpush1.bf16.msra.mxu0 0
  %2174 = vmatprep.subr.bf16.mxu0 0
  %2175 = vmatpush1.bf16.msra.mxu0 0
  %2176 = vmatprep.subr.bf16.mxu0 0
  %2177 = vmatpush1.bf16.msra.mxu0 0
  %2178 = vmatprep.subr.bf16.mxu0 0
  %2179 = vmatpush1.bf16.msra.mxu0 0
  %2180 = vmatprep.subr.bf16.mxu0 0
  %2181 = vmatpush1.bf16.msra.mxu0 0
  %2182 = vmatprep.subr.bf16.mxu0 0
  %2183 = vmatpush1.bf16.msra.mxu0 0
  %2184 = vmatprep.subr.bf16.mxu0 0
  %2185 = vmatpush1.bf16.msra.mxu0 0
  %2186 = vmatprep.subr.bf16.mxu0 0
  %2187 = vmatpush1.bf16.msra.mxu0 0
  %2188 = vmatprep.subr.bf16.mxu0 0
  %2189 = vmatpush1.bf16.msra.mxu0 0
  %2190 = vmatprep.subr.bf16.mxu0 0
  %2191 = vmatpush1.bf16.msra.mxu0 0
  %2192 = vmatprep.mubr.bf16.mxu0 0
  %2193 = vmatmul.mubr.bf16.gmra.mrb[0].mxu0 %v2119
  %v2194 = vpop.f32.mrb[0].mxu0
  %v2195 = vadd.f32 0.0, %v2194
  %v2196 = vpop.f32.mrb[0].mxu0
  %v2197 = vpop.f32.mrb[0].mxu0
  %v2198 = vadd.f32 0.0, %v2197
  %v2199 = vpop.f32.mrb[0].mxu0
  %2200 = vmatprep.mubr.bf16.mxu0 0
  %2201 = vmatmul.mubr.bf16.gmra.mrb[0].mxu0 %v2122
  %v2202 = vpop.f32.mrb[0].mxu0
  %v2203 = vadd.f32 0.0, %v2202
  %v2204 = vpop.f32.mrb[0].mxu0
  %v2205 = vpop.f32.mrb[0].mxu0
  %v2206 = vadd.f32 0.0, %v2205
  %v2207 = vpop.f32.mrb[0].mxu0
  %2208 = vmatprep.mubr.bf16.mxu0 0
  %2209 = vmatmul.mubr.bf16.gmra.mrb[0].mxu0 %v2125
  %v2210 = vpop.f32.mrb[0].mxu0
  %v2211 = vadd.f32 0.0, %v2210
  %v2212 = vpop.f32.mrb[0].mxu0
  %v2213 = vpop.f32.mrb[0].mxu0
  %v2214 = vadd.f32 0.0, %v2213
  %v2215 = vpop.f32.mrb[0].mxu0
  %2216 = vmatprep.mubr.bf16.mxu0 0
  %2217 = vmatmul.mubr.bf16.gmra.mrb[0].mxu0 %v2128
  %v2218 = vpop.f32.mrb[0].mxu0
  %v2219 = vadd.f32 0.0, %v2218
  %v2220 = vpop.f32.mrb[0].mxu0
  %v2221 = vpop.f32.mrb[0].mxu0
  %v2222 = vadd.f32 0.0, %v2221
  %v2223 = vpop.f32.mrb[0].mxu0
  %2224 = vmatprep.mubr.bf16.mxu0 0
  %2225 = vmatmul.mubr.bf16.gmra.mrb[0].mxu0 %v2131
  %v2226 = vpop.f32.mrb[0].mxu0
  %v2227 = vadd.f32 0.0, %v2226
  %v2228 = vpop.f32.mrb[0].mxu0
  %v2229 = vpop.f32.mrb[0].mxu0
  %v2230 = vadd.f32 0.0, %v2229
  %v2231 = vpop.f32.mrb[0].mxu0
  %2232 = vmatprep.mubr.bf16.mxu0 0
  %2233 = vmatmul.mubr.bf16.gmra.mrb[0].mxu0 %v2134
  %v2234 = vpop.f32.mrb[0].mxu0
  %v2235 = vadd.f32 0.0, %v2234
  %v2236 = vpop.f32.mrb[0].mxu0
  %v2237 = vpop.f32.mrb[0].mxu0
  %v2238 = vadd.f32 0.0, %v2237
  %v2239 = vpop.f32.mrb[0].mxu0
  %2240 = vmatprep.mubr.bf16.mxu0 0
  %2241 = vmatmul.mubr.bf16.gmra.mrb[0].mxu0 %v2137
  %v2242 = vpop.f32.mrb[0].mxu0
  %v2243 = vadd.f32 0.0, %v2242
  %v2244 = vpop.f32.mrb[0].mxu0
  %v2245 = vpop.f32.mrb[0].mxu0
  %v2246 = vadd.f32 0.0, %v2245
  %v2247 = vpop.f32.mrb[0].mxu0
  %2248 = vmatprep.mubr.bf16.mxu0 0
  %2249 = vmatmul.mubr.bf16.gmra.mrb[0].mxu0 %v2140
  %v2250 = vpop.f32.mrb[0].mxu0
  %v2251 = vadd.f32 0.0, %v2250
  %v2252 = vpop.f32.mrb[0].mxu0
  %v2253 = vpop.f32.mrb[0].mxu0
  %v2254 = vadd.f32 0.0, %v2253
  %v2255 = vpop.f32.mrb[0].mxu0
  %2256 = vmatprep.mubr.bf16.mxu0 0
  %2257 = vmatmul.mubr.bf16.gmra.mrb[0].mxu0 %v2143
  %v2258 = vpop.f32.mrb[0].mxu0
  %v2259 = vadd.f32 0.0, %v2258
  %v2260 = vpop.f32.mrb[0].mxu0
  %v2261 = vpop.f32.mrb[0].mxu0
  %v2262 = vadd.f32 0.0, %v2261
  %v2263 = vpop.f32.mrb[0].mxu0
  %2264 = vmatprep.mubr.bf16.mxu0 0
  %2265 = vmatmul.mubr.bf16.gmra.mrb[0].mxu0 %v2146
  %v2266 = vpop.f32.mrb[0].mxu0
  %v2267 = vadd.f32 0.0, %v2266
  %v2268 = vpop.f32.mrb[0].mxu0
  %v2269 = vpop.f32.mrb[0].mxu0
  %v2270 = vadd.f32 0.0, %v2269
  %v2271 = vpop.f32.mrb[0].mxu0
  %2272 = vmatprep.mubr.bf16.mxu0 0
  %2273 = vmatmul.mubr.bf16.gmra.mrb[0].mxu0 %v2149
  %v2274 = vpop.f32.mrb[0].mxu0
  %v2275 = vadd.f32 0.0, %v2274
  %v2276 = vpop.f32.mrb[0].mxu0
  %v2277 = vpop.f32.mrb[0].mxu0
  %v2278 = vadd.f32 0.0, %v2277
  %v2279 = vpop.f32.mrb[0].mxu0
  %2280 = vmatprep.mubr.bf16.mxu0 0
  %2281 = vmatmul.mubr.bf16.gmra.mrb[0].mxu0 %v2152
  %v2282 = vpop.f32.mrb[0].mxu0
  %v2283 = vadd.f32 0.0, %v2282
  %v2284 = vpop.f32.mrb[0].mxu0
  %v2285 = vpop.f32.mrb[0].mxu0
  %v2286 = vadd.f32 0.0, %v2285
  %v2287 = vpop.f32.mrb[0].mxu0
  %2288 = vmatprep.mubr.bf16.mxu0 0
  %2289 = vmatmul.mubr.bf16.gmra.mrb[0].mxu0 %v2155
  %v2290 = vpop.f32.mrb[0].mxu0
  %v2291 = vadd.f32 0.0, %v2290
  %v2292 = vpop.f32.mrb[0].mxu0
  %v2293 = vpop.f32.mrb[0].mxu0
  %v2294 = vadd.f32 0.0, %v2293
  %v2295 = vpop.f32.mrb[0].mxu0
  %2296 = vmatprep.mubr.bf16.mxu0 0
  %2297 = vmatmul.mubr.bf16.gmra.mrb[0].mxu0 %v2158
  %v2298 = vpop.f32.mrb[0].mxu0
  %v2299 = vadd.f32 0.0, %v2298
  %v2300 = vpop.f32.mrb[0].mxu0
  %v2301 = vpop.f32.mrb[0].mxu0
  %v2302 = vpop.f32.mrb[0].mxu0
  %2303 = vdwg.mxu0
  %v2304 = vmax.f32 %v1995, %v2195
  %v2305 = vmax.f32 %v1996, %v2198
  %v2306 = vmax.f32 %v1997, %v2203
  %v2307 = vmax.f32 %v1998, %v2206
  %v2308 = vmax.f32 %v1999, %v2211
  %v2309 = vmax.f32 %v2000, %v2214
  %v2310 = vmax.f32 %v2001, %v2219
  %v2311 = vmax.f32 %v2002, %v2222
  %v2312 = vmax.f32 %v2003, %v2227
  %v2313 = vmax.f32 %v2004, %v2230
  %v2314 = vmax.f32 %v2005, %v2235
  %v2315 = vmax.f32 %v2006, %v2238
  %v2316 = vmax.f32 %v2007, %v2243
  %v2317 = vmax.f32 %v2008, %v2246
  %v2318 = vmax.f32 %v2009, %v2251
  %v2319 = vmax.f32 %v2010, %v2254
  %v2320 = vmax.f32 %v2011, %v2259
  %v2321 = vmax.f32 %v2012, %v2262
  %v2322 = vmax.f32 %v2013, %v2267
  %v2323 = vmax.f32 %v2014, %v2270
  %v2324 = vmax.f32 %v2015, %v2275
  %v2325 = vmax.f32 %v2016, %v2278
  %v2326 = vmax.f32 %v2017, %v2283
  %v2327 = vmax.f32 %v2018, %v2286
  %v2328 = vmax.f32 %v2019, %v2291
  %v2329 = vmax.f32 %v2020, %v2294
  %v2330 = vmax.f32 %v2021, %v2299
  %s2331 = scalar_lea.vmem %s0, 756
  %v2332 = vld [vmem:[%s2331] sm:$0xf]
  %v2333 = vld [vmem:[%s2331 + $0x4] sm:$0xf]
  %v2334 = vld [vmem:[%s2331 + $0x8] sm:$0xf]
  %v2335 = vld [vmem:[%s2331 + $0xc] sm:$0xf]
  %v2336 = vld [vmem:[%s2331 + $0x10] sm:$0xf]
  %v2337 = vld [vmem:[%s2331 + $0x14] sm:$0xf]
  %v2338 = vld [vmem:[%s2331 + $0x18] sm:$0xf]
  %v2339 = vld [vmem:[%s2331 + $0x1c] sm:$0xf]
  %v2340 = vld [vmem:[%s2331 + $0x20] sm:$0xf]
  %v2341 = vld [vmem:[%s2331 + $0x24] sm:$0xf]
  %v2342 = vld [vmem:[%s2331 + $0x28] sm:$0xf]
  %v2343 = vld [vmem:[%s2331 + $0x2c] sm:$0xf]
  %v2344 = vld [vmem:[%s2331 + $0x30] sm:$0xf]
  %v2345 = vld [vmem:[%s2331 + $0x34] sm:$0xf]
  %v2346 = vld [vmem:[%s2331 + $0x38] sm:$0xf]
  %v2347 = vld [vmem:[%s2331 + $0x3c] sm:$0xf]
  %v2348 = vld [vmem:[%s2331 + $0x40] sm:$0xf]
  %v2349 = vld [vmem:[%s2331 + $0x44] sm:$0xf]
  %v2350 = vld [vmem:[%s2331 + $0x48] sm:$0xf]
  %v2351 = vld [vmem:[%s2331 + $0x4c] sm:$0xf]
  %v2352 = vld [vmem:[%s2331 + $0x50] sm:$0xf]
  %v2353 = vld [vmem:[%s2331 + $0x54] sm:$0xf]
  %v2354 = vld [vmem:[%s2331 + $0x58] sm:$0xf]
  %v2355 = vld [vmem:[%s2331 + $0x5c] sm:$0xf]
  %v2356 = vld [vmem:[%s2331 + $0x60] sm:$0xf]
  %v2357 = vld [vmem:[%s2331 + $0x64] sm:$0xf]
  %v2358 = vld [vmem:[%s2331 + $0x68] sm:$0x1]
  %v2386 = vunpack.c.l.b16 %v2332
  %v2387 = vunpack.c.l.b16 %v2333
  %v2388 = vunpack.c.l.b16 %v2334
  %v2389 = vunpack.c.l.b16 %v2335
  %v2390 = vunpack.c.l.b16 %v2336
  %v2391 = vunpack.c.l.b16 %v2337
  %v2392 = vunpack.c.l.b16 %v2338
  %v2393 = vunpack.c.l.b16 %v2339
  %v2394 = vunpack.c.l.b16 %v2340
  %v2395 = vunpack.c.l.b16 %v2341
  %v2396 = vunpack.c.l.b16 %v2342
  %v2397 = vunpack.c.l.b16 %v2343
  %v2398 = vunpack.c.l.b16 %v2344
  %v2399 = vunpack.c.l.b16 %v2345
  %v2400 = vunpack.c.l.b16 %v2346
  %v2401 = vunpack.c.l.b16 %v2347
  %v2402 = vunpack.c.l.b16 %v2348
  %v2403 = vunpack.c.l.b16 %v2349
  %v2404 = vunpack.c.l.b16 %v2350
  %v2405 = vunpack.c.l.b16 %v2351
  %v2406 = vunpack.c.l.b16 %v2352
  %v2407 = vunpack.c.l.b16 %v2353
  %v2408 = vunpack.c.l.b16 %v2354
  %v2409 = vunpack.c.l.b16 %v2355
  %v2410 = vunpack.c.l.b16 %v2356
  %v2411 = vunpack.c.l.b16 %v2357
  %v2412 = vunpack.c.l.b16 %v2358
  %v2413 = vpack.c.b16 %v2387, %v2386
  %v2414 = vpack.c.b16 %v2389, %v2388
  %v2415 = vpack.c.b16 %v2391, %v2390
  %v2416 = vpack.c.b16 %v2393, %v2392
  %v2417 = vpack.c.b16 %v2395, %v2394
  %v2418 = vpack.c.b16 %v2397, %v2396
  %v2419 = vpack.c.b16 %v2399, %v2398
  %v2420 = vpack.c.b16 %v2401, %v2400
  %v2421 = vpack.c.b16 %v2403, %v2402
  %v2422 = vpack.c.b16 %v2405, %v2404
  %v2423 = vpack.c.b16 %v2407, %v2406
  %v2424 = vpack.c.b16 %v2409, %v2408
  %v2425 = vpack.c.b16 %v2411, %v2410
  %v2426 = vpack.c.b16 %v2412, %v2412
  %v2428 = vsel %vm119, %v2413, 0
  %v2431 = vsel %vm119, %v2414, 0
  %v2434 = vsel %vm119, %v2415, 0
  %v2437 = vsel %vm119, %v2416, 0
  %v2440 = vsel %vm119, %v2417, 0
  %v2443 = vsel %vm119, %v2418, 0
  %v2446 = vsel %vm119, %v2419, 0
  %v2449 = vsel %vm119, %v2420, 0
  %v2452 = vsel %vm119, %v2421, 0
  %v2455 = vsel %vm119, %v2422, 0
  %v2458 = vsel %vm119, %v2423, 0
  %v2461 = vsel %vm119, %v2424, 0
  %v2464 = vsel %vm119, %v2425, 0
  %v2467 = vsel %vm119, %v2426, 0
  %2469 = vmatprep.subr.bf16.mxu0 0
  %2470 = vmatpush1.bf16.msra.mxu0 %v117
  %2471 = vmatprep.subr.bf16.mxu0 0
  %2472 = vmatpush1.bf16.msra.mxu0 0
  %2473 = vmatprep.subr.bf16.mxu0 0
  %2474 = vmatpush1.bf16.msra.mxu0 0
  %2475 = vmatprep.subr.bf16.mxu0 0
  %2476 = vmatpush1.bf16.msra.mxu0 0
  %2477 = vmatprep.subr.bf16.mxu0 0
  %2478 = vmatpush1.bf16.msra.mxu0 0
  %2479 = vmatprep.subr.bf16.mxu0 0
  %2480 = vmatpush1.bf16.msra.mxu0 0
  %2481 = vmatprep.subr.bf16.mxu0 0
  %2482 = vmatpush1.bf16.msra.mxu0 0
  %2483 = vmatprep.subr.bf16.mxu0 0
  %2484 = vmatpush1.bf16.msra.mxu0 0
  %2485 = vmatprep.subr.bf16.mxu0 0
  %2486 = vmatpush1.bf16.msra.mxu0 0
  %2487 = vmatprep.subr.bf16.mxu0 0
  %2488 = vmatpush1.bf16.msra.mxu0 0
  %2489 = vmatprep.subr.bf16.mxu0 0
  %2490 = vmatpush1.bf16.msra.mxu0 0
  %2491 = vmatprep.subr.bf16.mxu0 0
  %2492 = vmatpush1.bf16.msra.mxu0 0
  %2493 = vmatprep.subr.bf16.mxu0 0
  %2494 = vmatpush1.bf16.msra.mxu0 0
  %2495 = vmatprep.subr.bf16.mxu0 0
  %2496 = vmatpush1.bf16.msra.mxu0 0
  %2497 = vmatprep.subr.bf16.mxu0 0
  %2498 = vmatpush1.bf16.msra.mxu0 0
  %2499 = vmatprep.subr.bf16.mxu0 0
  %2500 = vmatpush1.bf16.msra.mxu0 0
  %2501 = vmatprep.mubr.bf16.mxu0 0
  %2502 = vmatmul.mubr.bf16.gmra.mrb[0].mxu0 %v2428
  %v2503 = vpop.f32.mrb[0].mxu0
  %v2504 = vadd.f32 0.0, %v2503
  %v2505 = vpop.f32.mrb[0].mxu0
  %v2506 = vpop.f32.mrb[0].mxu0
  %v2507 = vadd.f32 0.0, %v2506
  %v2508 = vpop.f32.mrb[0].mxu0
  %2509 = vmatprep.mubr.bf16.mxu0 0
  %2510 = vmatmul.mubr.bf16.gmra.mrb[0].mxu0 %v2431
  %v2511 = vpop.f32.mrb[0].mxu0
  %v2512 = vadd.f32 0.0, %v2511
  %v2513 = vpop.f32.mrb[0].mxu0
  %v2514 = vpop.f32.mrb[0].mxu0
  %v2515 = vadd.f32 0.0, %v2514
  %v2516 = vpop.f32.mrb[0].mxu0
  %2517 = vmatprep.mubr.bf16.mxu0 0
  %2518 = vmatmul.mubr.bf16.gmra.mrb[0].mxu0 %v2434
  %v2519 = vpop.f32.mrb[0].mxu0
  %v2520 = vadd.f32 0.0, %v2519
  %v2521 = vpop.f32.mrb[0].mxu0
  %v2522 = vpop.f32.mrb[0].mxu0
  %v2523 = vadd.f32 0.0, %v2522
  %v2524 = vpop.f32.mrb[0].mxu0
  %2525 = vmatprep.mubr.bf16.mxu0 0
  %2526 = vmatmul.mubr.bf16.gmra.mrb[0].mxu0 %v2437
  %v2527 = vpop.f32.mrb[0].mxu0
  %v2528 = vadd.f32 0.0, %v2527
  %v2529 = vpop.f32.mrb[0].mxu0
  %v2530 = vpop.f32.mrb[0].mxu0
  %v2531 = vadd.f32 0.0, %v2530
  %v2532 = vpop.f32.mrb[0].mxu0
  %2533 = vmatprep.mubr.bf16.mxu0 0
  %2534 = vmatmul.mubr.bf16.gmra.mrb[0].mxu0 %v2440
  %v2535 = vpop.f32.mrb[0].mxu0
  %v2536 = vadd.f32 0.0, %v2535
  %v2537 = vpop.f32.mrb[0].mxu0
  %v2538 = vpop.f32.mrb[0].mxu0
  %v2539 = vadd.f32 0.0, %v2538
  %v2540 = vpop.f32.mrb[0].mxu0
  %2541 = vmatprep.mubr.bf16.mxu0 0
  %2542 = vmatmul.mubr.bf16.gmra.mrb[0].mxu0 %v2443
  %v2543 = vpop.f32.mrb[0].mxu0
  %v2544 = vadd.f32 0.0, %v2543
  %v2545 = vpop.f32.mrb[0].mxu0
  %v2546 = vpop.f32.mrb[0].mxu0
  %v2547 = vadd.f32 0.0, %v2546
  %v2548 = vpop.f32.mrb[0].mxu0
  %2549 = vmatprep.mubr.bf16.mxu0 0
  %2550 = vmatmul.mubr.bf16.gmra.mrb[0].mxu0 %v2446
  %v2551 = vpop.f32.mrb[0].mxu0
  %v2552 = vadd.f32 0.0, %v2551
  %v2553 = vpop.f32.mrb[0].mxu0
  %v2554 = vpop.f32.mrb[0].mxu0
  %v2555 = vadd.f32 0.0, %v2554
  %v2556 = vpop.f32.mrb[0].mxu0
  %2557 = vmatprep.mubr.bf16.mxu0 0
  %2558 = vmatmul.mubr.bf16.gmra.mrb[0].mxu0 %v2449
  %v2559 = vpop.f32.mrb[0].mxu0
  %v2560 = vadd.f32 0.0, %v2559
  %v2561 = vpop.f32.mrb[0].mxu0
  %v2562 = vpop.f32.mrb[0].mxu0
  %v2563 = vadd.f32 0.0, %v2562
  %v2564 = vpop.f32.mrb[0].mxu0
  %2565 = vmatprep.mubr.bf16.mxu0 0
  %2566 = vmatmul.mubr.bf16.gmra.mrb[0].mxu0 %v2452
  %v2567 = vpop.f32.mrb[0].mxu0
  %v2568 = vadd.f32 0.0, %v2567
  %v2569 = vpop.f32.mrb[0].mxu0
  %v2570 = vpop.f32.mrb[0].mxu0
  %v2571 = vadd.f32 0.0, %v2570
  %v2572 = vpop.f32.mrb[0].mxu0
  %2573 = vmatprep.mubr.bf16.mxu0 0
  %2574 = vmatmul.mubr.bf16.gmra.mrb[0].mxu0 %v2455
  %v2575 = vpop.f32.mrb[0].mxu0
  %v2576 = vadd.f32 0.0, %v2575
  %v2577 = vpop.f32.mrb[0].mxu0
  %v2578 = vpop.f32.mrb[0].mxu0
  %v2579 = vadd.f32 0.0, %v2578
  %v2580 = vpop.f32.mrb[0].mxu0
  %2581 = vmatprep.mubr.bf16.mxu0 0
  %2582 = vmatmul.mubr.bf16.gmra.mrb[0].mxu0 %v2458
  %v2583 = vpop.f32.mrb[0].mxu0
  %v2584 = vadd.f32 0.0, %v2583
  %v2585 = vpop.f32.mrb[0].mxu0
  %v2586 = vpop.f32.mrb[0].mxu0
  %v2587 = vadd.f32 0.0, %v2586
  %v2588 = vpop.f32.mrb[0].mxu0
  %2589 = vmatprep.mubr.bf16.mxu0 0
  %2590 = vmatmul.mubr.bf16.gmra.mrb[0].mxu0 %v2461
  %v2591 = vpop.f32.mrb[0].mxu0
  %v2592 = vadd.f32 0.0, %v2591
  %v2593 = vpop.f32.mrb[0].mxu0
  %v2594 = vpop.f32.mrb[0].mxu0
  %v2595 = vadd.f32 0.0, %v2594
  %v2596 = vpop.f32.mrb[0].mxu0
  %2597 = vmatprep.mubr.bf16.mxu0 0
  %2598 = vmatmul.mubr.bf16.gmra.mrb[0].mxu0 %v2464
  %v2599 = vpop.f32.mrb[0].mxu0
  %v2600 = vadd.f32 0.0, %v2599
  %v2601 = vpop.f32.mrb[0].mxu0
  %v2602 = vpop.f32.mrb[0].mxu0
  %v2603 = vadd.f32 0.0, %v2602
  %v2604 = vpop.f32.mrb[0].mxu0
  %2605 = vmatprep.mubr.bf16.mxu0 0
  %2606 = vmatmul.mubr.bf16.gmra.mrb[0].mxu0 %v2467
  %v2607 = vpop.f32.mrb[0].mxu0
  %v2608 = vadd.f32 0.0, %v2607
  %v2609 = vpop.f32.mrb[0].mxu0
  %v2610 = vpop.f32.mrb[0].mxu0
  %v2611 = vpop.f32.mrb[0].mxu0
  %2612 = vdwg.mxu0
  %v2613 = vmax.f32 %v2304, %v2504
  %v2614 = vmax.f32 %v2305, %v2507
  %v2615 = vmax.f32 %v2306, %v2512
  %v2616 = vmax.f32 %v2307, %v2515
  %v2617 = vmax.f32 %v2308, %v2520
  %v2618 = vmax.f32 %v2309, %v2523
  %v2619 = vmax.f32 %v2310, %v2528
  %v2620 = vmax.f32 %v2311, %v2531
  %v2621 = vmax.f32 %v2312, %v2536
  %v2622 = vmax.f32 %v2313, %v2539
  %v2623 = vmax.f32 %v2314, %v2544
  %v2624 = vmax.f32 %v2315, %v2547
  %v2625 = vmax.f32 %v2316, %v2552
  %v2626 = vmax.f32 %v2317, %v2555
  %v2627 = vmax.f32 %v2318, %v2560
  %v2628 = vmax.f32 %v2319, %v2563
  %v2629 = vmax.f32 %v2320, %v2568
  %v2630 = vmax.f32 %v2321, %v2571
  %v2631 = vmax.f32 %v2322, %v2576
  %v2632 = vmax.f32 %v2323, %v2579
  %v2633 = vmax.f32 %v2324, %v2584
  %v2634 = vmax.f32 %v2325, %v2587
  %v2635 = vmax.f32 %v2326, %v2592
  %v2636 = vmax.f32 %v2327, %v2595
  %v2637 = vmax.f32 %v2328, %v2600
  %v2638 = vmax.f32 %v2329, %v2603
  %v2639 = vmax.f32 %v2330, %v2608
  %v2640 = vadd.f32 %v2613, %v1237
  %v2641 = vadd.f32 %v2614, %v1237
  %v2642 = vadd.f32 %v2615, %v1237
  %v2643 = vadd.f32 %v2616, %v1237
  %v2644 = vadd.f32 %v2617, %v1237
  %v2645 = vadd.f32 %v2618, %v1237
  %v2646 = vadd.f32 %v2619, %v1237
  %v2647 = vadd.f32 %v2620, %v1237
  %v2648 = vadd.f32 %v2621, %v1237
  %v2649 = vadd.f32 %v2622, %v1237
  %v2650 = vadd.f32 %v2623, %v1237
  %v2651 = vadd.f32 %v2624, %v1237
  %v2652 = vadd.f32 %v2625, %v1237
  %v2653 = vadd.f32 %v2626, %v1237
  %v2654 = vadd.f32 %v2627, %v1237
  %v2655 = vadd.f32 %v2628, %v1237
  %v2656 = vadd.f32 %v2629, %v1237
  %v2657 = vadd.f32 %v2630, %v1237
  %v2658 = vadd.f32 %v2631, %v1237
  %v2659 = vadd.f32 %v2632, %v1237
  %v2660 = vadd.f32 %v2633, %v1237
  %v2661 = vadd.f32 %v2634, %v1237
  %v2662 = vadd.f32 %v2635, %v1237
  %v2663 = vadd.f32 %v2636, %v1237
  %v2664 = vadd.f32 %v2637, %v1237
  %v2665 = vadd.f32 %v2638, %v1237
  %v2666 = vadd.f32 %v2639, %v1237
  %v2667 = vmax.f32 %v2640, 0.0
  %v2668 = vmax.f32 %v2641, 0.0
  %v2669 = vmax.f32 %v2642, 0.0
  %v2670 = vmax.f32 %v2643, 0.0
  %v2671 = vmax.f32 %v2644, 0.0
  %v2672 = vmax.f32 %v2645, 0.0
  %v2673 = vmax.f32 %v2646, 0.0
  %v2674 = vmax.f32 %v2647, 0.0
  %v2675 = vmax.f32 %v2648, 0.0
  %v2676 = vmax.f32 %v2649, 0.0
  %v2677 = vmax.f32 %v2650, 0.0
  %v2678 = vmax.f32 %v2651, 0.0
  %v2679 = vmax.f32 %v2652, 0.0
  %v2680 = vmax.f32 %v2653, 0.0
  %v2681 = vmax.f32 %v2654, 0.0
  %v2682 = vmax.f32 %v2655, 0.0
  %v2683 = vmax.f32 %v2656, 0.0
  %v2684 = vmax.f32 %v2657, 0.0
  %v2685 = vmax.f32 %v2658, 0.0
  %v2686 = vmax.f32 %v2659, 0.0
  %v2687 = vmax.f32 %v2660, 0.0
  %v2688 = vmax.f32 %v2661, 0.0
  %v2689 = vmax.f32 %v2662, 0.0
  %v2690 = vmax.f32 %v2663, 0.0
  %v2691 = vmax.f32 %v2664, 0.0
  %v2692 = vmax.f32 %v2665, 0.0
  %v2693 = vmax.f32 %v2666, 0.0
  %v2694 = vpack.c.bf16 %v2668, %v2667
  %v2695 = vpack.c.bf16 %v2670, %v2669
  %v2696 = vpack.c.bf16 %v2672, %v2671
  %v2697 = vpack.c.bf16 %v2674, %v2673
  %v2698 = vpack.c.bf16 %v2676, %v2675
  %v2699 = vpack.c.bf16 %v2678, %v2677
  %v2700 = vpack.c.bf16 %v2680, %v2679
  %v2701 = vpack.c.bf16 %v2682, %v2681
  %v2702 = vpack.c.bf16 %v2684, %v2683
  %v2703 = vpack.c.bf16 %v2686, %v2685
  %v2704 = vpack.c.bf16 %v2688, %v2687
  %v2705 = vpack.c.bf16 %v2690, %v2689
  %v2706 = vpack.c.bf16 %v2692, %v2691
  %v2707 = vpack.c.bf16 %v2693, %v2693
  %v2722 = vunpack.c.l.b16 %v2694
  %v2723 = vunpack.c.h.b16 %v2694
  %v2724 = vunpack.c.l.b16 %v2695
  %v2725 = vunpack.c.h.b16 %v2695
  %v2726 = vunpack.c.l.b16 %v2696
  %v2727 = vunpack.c.h.b16 %v2696
  %v2728 = vunpack.c.l.b16 %v2697
  %v2729 = vunpack.c.h.b16 %v2697
  %v2730 = vunpack.c.l.b16 %v2698
  %v2731 = vunpack.c.h.b16 %v2698
  %v2732 = vunpack.c.l.b16 %v2699
  %v2733 = vunpack.c.h.b16 %v2699
  %v2734 = vunpack.c.l.b16 %v2700
  %v2735 = vunpack.c.h.b16 %v2700
  %v2736 = vunpack.c.l.b16 %v2701
  %v2737 = vunpack.c.h.b16 %v2701
  %v2738 = vunpack.c.l.b16 %v2702
  %v2739 = vunpack.c.h.b16 %v2702
  %v2740 = vunpack.c.l.b16 %v2703
  %v2741 = vunpack.c.h.b16 %v2703
  %v2742 = vunpack.c.l.b16 %v2704
  %v2743 = vunpack.c.h.b16 %v2704
  %v2744 = vunpack.c.l.b16 %v2705
  %v2745 = vunpack.c.h.b16 %v2705
  %v2746 = vunpack.c.l.b16 %v2706
  %v2747 = vunpack.c.h.b16 %v2706
  %v2748 = vunpack.c.l.b16 %v2707
  %v2749 = vpack.c.b16 %v2722, %v2722
  %v2750 = vpack.c.b16 %v2723, %v2723
  %v2751 = vpack.c.b16 %v2724, %v2724
  %v2752 = vpack.c.b16 %v2725, %v2725
  %v2753 = vpack.c.b16 %v2726, %v2726
  %v2754 = vpack.c.b16 %v2727, %v2727
  %v2755 = vpack.c.b16 %v2728, %v2728
  %v2756 = vpack.c.b16 %v2729, %v2729
  %v2757 = vpack.c.b16 %v2730, %v2730
  %v2758 = vpack.c.b16 %v2731, %v2731
  %v2759 = vpack.c.b16 %v2732, %v2732
  %v2760 = vpack.c.b16 %v2733, %v2733
  %v2761 = vpack.c.b16 %v2734, %v2734
  %v2762 = vpack.c.b16 %v2735, %v2735
  %v2763 = vpack.c.b16 %v2736, %v2736
  %v2764 = vpack.c.b16 %v2737, %v2737
  %v2765 = vpack.c.b16 %v2738, %v2738
  %v2766 = vpack.c.b16 %v2739, %v2739
  %v2767 = vpack.c.b16 %v2740, %v2740
  %v2768 = vpack.c.b16 %v2741, %v2741
  %v2769 = vpack.c.b16 %v2742, %v2742
  %v2770 = vpack.c.b16 %v2743, %v2743
  %v2771 = vpack.c.b16 %v2744, %v2744
  %v2772 = vpack.c.b16 %v2745, %v2745
  %v2773 = vpack.c.b16 %v2746, %v2746
  %v2774 = vpack.c.b16 %v2747, %v2747
  %v2775 = vpack.c.b16 %v2748, %v2748
  %s2803 = scalar_lea.vmem %s3, 108
  %2804 = vst.msk [vmem:[%s2803] sm:$0xf] %vm1402, %v2749
  %2805 = vst.msk [vmem:[%s2803 + $0x4] sm:$0xf] %vm1402, %v2750
  %2806 = vst.msk [vmem:[%s2803 + $0x8] sm:$0xf] %vm1402, %v2751
  %2807 = vst.msk [vmem:[%s2803 + $0xc] sm:$0xf] %vm1402, %v2752
  %2808 = vst.msk [vmem:[%s2803 + $0x10] sm:$0xf] %vm1402, %v2753
  %2809 = vst.msk [vmem:[%s2803 + $0x14] sm:$0xf] %vm1402, %v2754
  %2810 = vst.msk [vmem:[%s2803 + $0x18] sm:$0xf] %vm1402, %v2755
  %2811 = vst.msk [vmem:[%s2803 + $0x1c] sm:$0xf] %vm1402, %v2756
  %2812 = vst.msk [vmem:[%s2803 + $0x20] sm:$0xf] %vm1402, %v2757
  %2813 = vst.msk [vmem:[%s2803 + $0x24] sm:$0xf] %vm1402, %v2758
  %2814 = vst.msk [vmem:[%s2803 + $0x28] sm:$0xf] %vm1402, %v2759
  %2815 = vst.msk [vmem:[%s2803 + $0x2c] sm:$0xf] %vm1402, %v2760
  %2816 = vst.msk [vmem:[%s2803 + $0x30] sm:$0xf] %vm1402, %v2761
  %2817 = vst.msk [vmem:[%s2803 + $0x34] sm:$0xf] %vm1402, %v2762
  %2818 = vst.msk [vmem:[%s2803 + $0x38] sm:$0xf] %vm1402, %v2763
  %2819 = vst.msk [vmem:[%s2803 + $0x3c] sm:$0xf] %vm1402, %v2764
  %2820 = vst.msk [vmem:[%s2803 + $0x40] sm:$0xf] %vm1402, %v2765
  %2821 = vst.msk [vmem:[%s2803 + $0x44] sm:$0xf] %vm1402, %v2766
  %2822 = vst.msk [vmem:[%s2803 + $0x48] sm:$0xf] %vm1402, %v2767
  %2823 = vst.msk [vmem:[%s2803 + $0x4c] sm:$0xf] %vm1402, %v2768
  %2824 = vst.msk [vmem:[%s2803 + $0x50] sm:$0xf] %vm1402, %v2769
  %2825 = vst.msk [vmem:[%s2803 + $0x54] sm:$0xf] %vm1402, %v2770
  %2826 = vst.msk [vmem:[%s2803 + $0x58] sm:$0xf] %vm1402, %v2771
  %2827 = vst.msk [vmem:[%s2803 + $0x5c] sm:$0xf] %vm1402, %v2772
  %2828 = vst.msk [vmem:[%s2803 + $0x60] sm:$0xf] %vm1402, %v2773
  %2829 = vst.msk [vmem:[%s2803 + $0x64] sm:$0xf] %vm1402, %v2774
  %2830 = vst.msk [vmem:[%s2803 + $0x68] sm:$0x1] %vm1429, %v2775
  // Predicated region
  $region14: #{cnn_forward.3} parent=0 // pred_check
    _
  $region15: #{cnn_forward.3} parent=0 // pred_check_branch
    %2832 = sbr.rel (0) target = $region17
  $region16: #{cnn_forward.3} parent=0 // pred_region
    _
  $region17: #{cnn_forward.3} parent=0 // pred_fallthru
    _
  // Predicated region
  $region18: #{cnn_forward.3} parent=0 // pred_check
    _
  $region19: #{cnn_forward.3} parent=0 // pred_check_branch
    %2834 = sbr.rel (0) target = $region21
  $region20: #{cnn_forward.3} parent=0 // pred_region
    _
  $region21: #{cnn_forward.3} parent=0 // pred_fallthru
    _

// kernel: cnn_forward.5
$region0: #{cnn_forward.5}
  #allocation0 [shape = 'u32[]', space=smem, size = 0x4, offset = 0x4, fixed_abs, tag = 'smem constant byte address 0x4 - core index']
  #allocation1 [shape = 'u32[144,128]{1,0:T(1,128)}', space=vmem, size = 0x12000, scoped, tag = 'internal scratch']
  %s0 = inlined_call_operand.vmem [shape: bf16[2,3584], index: 0, kind: input, shape index: {}]
  %s1 = inlined_call_operand.vmem [shape: bf16[3584,128], index: 1, kind: input, shape index: {}]
  %s2 = inlined_call_operand.vmem [shape: f32[1,128], index: 2, kind: input, shape index: {}]
  %s3 = inlined_call_operand.vmem [shape: bf16[128,128], index: 3, kind: input, shape index: {}]
  %s4 = inlined_call_operand.vmem [shape: f32[1,128], index: 4, kind: input, shape index: {}]
  %s5 = inlined_call_operand.hbm [shape: f32[2,128], index: 5, kind: output, shape index: {}]
  %s6 = sld [smem:[#allocation0]]
  $region30: #{cnn_forward.5} parent=0
    _
  %s8 = ssub.s32 1, %s6
  %s9 = scalar_select 0, %s8, %s6
  $region1: #{cnn_forward.5} parent=0
    #allocation2 [shape = 'u8[1024]{0}', space=vmem, size = 0x400, scoped, tag = 'output window, operand 0, single buffered']
    #allocation3 [shape = 's32[1]{0}', space=sflag, size = 0x4, scoped, tag = 'scoped memory for cnn_forward.5']
    %10 = vsyncpa [#allocation3], 0
    // Predicated region
    $region2: #{cnn_forward.5} parent=1 // pred_check
      _
    $region3: #{cnn_forward.5} parent=1 // pred_check_branch
      %12 = sbr.rel (0) target = $region5
    $region4: #{cnn_forward.5} parent=1 // pred_region
      _
    $region5: #{cnn_forward.5} parent=1 // pred_fallthru
      _
    // Predicated region
    $region6: #{cnn_forward.5} parent=1 // pred_check
      _
    $region7: #{cnn_forward.5} parent=1 // pred_check_branch
      %14 = sbr.rel (0) target = $region9
    $region8: #{cnn_forward.5} parent=1 // pred_region
      _
    $region9: #{cnn_forward.5} parent=1 // pred_fallthru
      _
    // Predicated region
    $region10: #{cnn_forward.5} parent=1 // pred_check
      _
    $region11: #{cnn_forward.5} parent=1 // pred_check_branch
      %16 = sbr.rel (0) target = $region13
    $region12: #{cnn_forward.5} parent=1 // pred_region
      _
    $region13: #{cnn_forward.5} parent=1 // pred_fallthru
      _
    // Predicated region
    $region14: #{cnn_forward.5} parent=1 // pred_check
      _
    $region15: #{cnn_forward.5} parent=1 // pred_check_branch
      %18 = sbr.rel (0) target = $region17
    $region16: #{cnn_forward.5} parent=1 // pred_region
      _
    $region17: #{cnn_forward.5} parent=1 // pred_fallthru
      _
    // Predicated region
    $region18: #{cnn_forward.5} parent=1 // pred_check
      _
    $region19: #{cnn_forward.5} parent=1 // pred_check_branch
      %20 = sbr.rel (0) target = $region21
    $region20: #{cnn_forward.5} parent=1 // pred_region
      _
    $region21: #{cnn_forward.5} parent=1 // pred_fallthru
      _
    %v22 = vld [vmem:[%s0] sm:$0xff]
    %v23 = vld [vmem:[%s0 + $0x8] sm:$0xff]
    %v24 = vld [vmem:[%s0 + $0x10] sm:$0xff]
    %v25 = vld [vmem:[%s0 + $0x18] sm:$0xf]
    %v26 = vld [vmem:[%s1] sm:$0xf]
    %v27 = vld [vmem:[%s1 + $0x4] sm:$0xf]
    %v28 = vld [vmem:[%s1 + $0x8] sm:$0xf]
    %v29 = vld [vmem:[%s1 + $0xc] sm:$0xf]
    %v30 = vld [vmem:[%s1 + $0x10] sm:$0xf]
    %v31 = vld [vmem:[%s1 + $0x14] sm:$0xf]
    %v32 = vld [vmem:[%s1 + $0x18] sm:$0xf]
    %v33 = vld [vmem:[%s1 + $0x1c] sm:$0xf]
    %v34 = vld [vmem:[%s1 + $0x20] sm:$0xf]
    %v35 = vld [vmem:[%s1 + $0x24] sm:$0xf]
    %v36 = vld [vmem:[%s1 + $0x28] sm:$0xf]
    %v37 = vld [vmem:[%s1 + $0x2c] sm:$0xf]
    %v38 = vld [vmem:[%s1 + $0x30] sm:$0xf]
    %v39 = vld [vmem:[%s1 + $0x34] sm:$0xf]
    %v40 = vld [vmem:[%s1 + $0x38] sm:$0xf]
    %v41 = vld [vmem:[%s1 + $0x3c] sm:$0xf]
    %v42 = vld [vmem:[%s1 + $0x40] sm:$0xf]
    %v43 = vld [vmem:[%s1 + $0x44] sm:$0xf]
    %v44 = vld [vmem:[%s1 + $0x48] sm:$0xf]
    %v45 = vld [vmem:[%s1 + $0x4c] sm:$0xf]
    %v46 = vld [vmem:[%s1 + $0x50] sm:$0xf]
    %v47 = vld [vmem:[%s1 + $0x54] sm:$0xf]
    %v48 = vld [vmem:[%s1 + $0x58] sm:$0xf]
    %v49 = vld [vmem:[%s1 + $0x5c] sm:$0xf]
    %v50 = vld [vmem:[%s1 + $0x60] sm:$0xf]
    %v51 = vld [vmem:[%s1 + $0x64] sm:$0xf]
    %v52 = vld [vmem:[%s1 + $0x68] sm:$0xf]
    %v53 = vld [vmem:[%s1 + $0x6c] sm:$0xf]
    %v54 = vld [vmem:[%s1 + $0x70] sm:$0xf]
    %v55 = vld [vmem:[%s1 + $0x74] sm:$0xf]
    %v56 = vld [vmem:[%s1 + $0x78] sm:$0xf]
    %v57 = vld [vmem:[%s1 + $0x7c] sm:$0xf]
    %v58 = vld [vmem:[%s1 + $0x80] sm:$0xf]
    %v59 = vld [vmem:[%s1 + $0x84] sm:$0xf]
    %v60 = vld [vmem:[%s1 + $0x88] sm:$0xf]
    %v61 = vld [vmem:[%s1 + $0x8c] sm:$0xf]
    %v62 = vld [vmem:[%s1 + $0x90] sm:$0xf]
    %v63 = vld [vmem:[%s1 + $0x94] sm:$0xf]
    %v64 = vld [vmem:[%s1 + $0x98] sm:$0xf]
    %v65 = vld [vmem:[%s1 + $0x9c] sm:$0xf]
    %v66 = vld [vmem:[%s1 + $0xa0] sm:$0xf]
    %v67 = vld [vmem:[%s1 + $0xa4] sm:$0xf]
    %v68 = vld [vmem:[%s1 + $0xa8] sm:$0xf]
    %v69 = vld [vmem:[%s1 + $0xac] sm:$0xf]
    %v70 = vld [vmem:[%s1 + $0xb0] sm:$0xf]
    %v71 = vld [vmem:[%s1 + $0xb4] sm:$0xf]
    %v72 = vld [vmem:[%s1 + $0xb8] sm:$0xf]
    %v73 = vld [vmem:[%s1 + $0xbc] sm:$0xf]
    %v74 = vld [vmem:[%s1 + $0xc0] sm:$0xf]
    %v75 = vld [vmem:[%s1 + $0xc4] sm:$0xf]
    %v76 = vld [vmem:[%s1 + $0xc8] sm:$0xf]
    %v77 = vld [vmem:[%s1 + $0xcc] sm:$0xf]
    %v78 = vld [vmem:[%s1 + $0xd0] sm:$0xf]
    %v79 = vld [vmem:[%s1 + $0xd4] sm:$0xf]
    %v80 = vld [vmem:[%s1 + $0xd8] sm:$0xf]
    %v81 = vld [vmem:[%s1 + $0xdc] sm:$0xf]
    %v82 = vld [vmem:[%s1 + $0xe0] sm:$0xf]
    %v83 = vld [vmem:[%s1 + $0xe4] sm:$0xf]
    %v84 = vld [vmem:[%s1 + $0xe8] sm:$0xf]
    %v85 = vld [vmem:[%s1 + $0xec] sm:$0xf]
    %v86 = vld [vmem:[%s1 + $0xf0] sm:$0xf]
    %v87 = vld [vmem:[%s1 + $0xf4] sm:$0xf]
    %v88 = vld [vmem:[%s1 + $0xf8] sm:$0xf]
    %v89 = vld [vmem:[%s1 + $0xfc] sm:$0xf]
    %v90 = vld [vmem:[%s1 + $0x100] sm:$0xf]
    %v91 = vld [vmem:[%s1 + $0x104] sm:$0xf]
    %v92 = vld [vmem:[%s1 + $0x108] sm:$0xf]
    %v93 = vld [vmem:[%s1 + $0x10c] sm:$0xf]
    %v94 = vld [vmem:[%s1 + $0x110] sm:$0xf]
    %v95 = vld [vmem:[%s1 + $0x114] sm:$0xf]
    %v96 = vld [vmem:[%s1 + $0x118] sm:$0xf]
    %v97 = vld [vmem:[%s1 + $0x11c] sm:$0xf]
    %v98 = vld [vmem:[%s1 + $0x120] sm:$0xf]
    %v99 = vld [vmem:[%s1 + $0x124] sm:$0xf]
    %v100 = vld [vmem:[%s1 + $0x128] sm:$0xf]
    %v101 = vld [vmem:[%s1 + $0x12c] sm:$0xf]
    %v102 = vld [vmem:[%s1 + $0x130] sm:$0xf]
    %v103 = vld [vmem:[%s1 + $0x134] sm:$0xf]
    %v104 = vld [vmem:[%s1 + $0x138] sm:$0xf]
    %v105 = vld [vmem:[%s1 + $0x13c] sm:$0xf]
    %v106 = vld [vmem:[%s1 + $0x140] sm:$0xf]
    %v107 = vld [vmem:[%s1 + $0x144] sm:$0xf]
    %v108 = vld [vmem:[%s1 + $0x148] sm:$0xf]
    %v109 = vld [vmem:[%s1 + $0x14c] sm:$0xf]
    %v110 = vld [vmem:[%s1 + $0x150] sm:$0xf]
    %v111 = vld [vmem:[%s1 + $0x154] sm:$0xf]
    %v112 = vld [vmem:[%s1 + $0x158] sm:$0xf]
    %v113 = vld [vmem:[%s1 + $0x15c] sm:$0xf]
    %v114 = vld [vmem:[%s1 + $0x160] sm:$0xf]
    %v115 = vld [vmem:[%s1 + $0x164] sm:$0xf]
    %v116 = vld [vmem:[%s1 + $0x168] sm:$0xf]
    %v117 = vld [vmem:[%s1 + $0x16c] sm:$0xf]
    %v118 = vld [vmem:[%s1 + $0x170] sm:$0xf]
    %v119 = vld [vmem:[%s1 + $0x174] sm:$0xf]
    %v120 = vld [vmem:[%s1 + $0x178] sm:$0xf]
    %v121 = vld [vmem:[%s1 + $0x17c] sm:$0xf]
    %v122 = vld [vmem:[%s1 + $0x180] sm:$0xf]
    %v123 = vld [vmem:[%s1 + $0x184] sm:$0xf]
    %v124 = vld [vmem:[%s1 + $0x188] sm:$0xf]
    %v125 = vld [vmem:[%s1 + $0x18c] sm:$0xf]
    %v126 = vld [vmem:[%s1 + $0x190] sm:$0xf]
    %v127 = vld [vmem:[%s1 + $0x194] sm:$0xf]
    %v128 = vld [vmem:[%s1 + $0x198] sm:$0xf]
    %v129 = vld [vmem:[%s1 + $0x19c] sm:$0xf]
    %v130 = vld [vmem:[%s1 + $0x1a0] sm:$0xf]
    %v131 = vld [vmem:[%s1 + $0x1a4] sm:$0xf]
    %v132 = vld [vmem:[%s1 + $0x1a8] sm:$0xf]
    %v133 = vld [vmem:[%s1 + $0x1ac] sm:$0xf]
    %v134 = vld [vmem:[%s1 + $0x1b0] sm:$0xf]
    %v135 = vld [vmem:[%s1 + $0x1b4] sm:$0xf]
    %v136 = vld [vmem:[%s1 + $0x1b8] sm:$0xf]
    %v137 = vld [vmem:[%s1 + $0x1bc] sm:$0xf]
    %v138 = vld [vmem:[%s1 + $0x1c0] sm:$0xf]
    %v139 = vld [vmem:[%s1 + $0x1c4] sm:$0xf]
    %v140 = vld [vmem:[%s1 + $0x1c8] sm:$0xf]
    %v141 = vld [vmem:[%s1 + $0x1cc] sm:$0xf]
    %v142 = vld [vmem:[%s1 + $0x1d0] sm:$0xf]
    %v143 = vld [vmem:[%s1 + $0x1d4] sm:$0xf]
    %v144 = vld [vmem:[%s1 + $0x1d8] sm:$0xf]
    %v145 = vld [vmem:[%s1 + $0x1dc] sm:$0xf]
    %v146 = vld [vmem:[%s1 + $0x1e0] sm:$0xf]
    %v147 = vld [vmem:[%s1 + $0x1e4] sm:$0xf]
    %v148 = vld [vmem:[%s1 + $0x1e8] sm:$0xf]
    %v149 = vld [vmem:[%s1 + $0x1ec] sm:$0xf]
    %v150 = vld [vmem:[%s1 + $0x1f0] sm:$0xf]
    %v151 = vld [vmem:[%s1 + $0x1f4] sm:$0xf]
    %v152 = vld [vmem:[%s1 + $0x1f8] sm:$0xf]
    %v153 = vld [vmem:[%s1 + $0x1fc] sm:$0xf]
    %v154 = vld [vmem:[%s1 + $0x200] sm:$0xf]
    %v155 = vld [vmem:[%s1 + $0x204] sm:$0xf]
    %v156 = vld [vmem:[%s1 + $0x208] sm:$0xf]
    %v157 = vld [vmem:[%s1 + $0x20c] sm:$0xf]
    %v158 = vld [vmem:[%s1 + $0x210] sm:$0xf]
    %v159 = vld [vmem:[%s1 + $0x214] sm:$0xf]
    %v160 = vld [vmem:[%s1 + $0x218] sm:$0xf]
    %v161 = vld [vmem:[%s1 + $0x21c] sm:$0xf]
    %v162 = vld [vmem:[%s1 + $0x220] sm:$0xf]
    %v163 = vld [vmem:[%s1 + $0x224] sm:$0xf]
    %v164 = vld [vmem:[%s1 + $0x228] sm:$0xf]
    %v165 = vld [vmem:[%s1 + $0x22c] sm:$0xf]
    %v166 = vld [vmem:[%s1 + $0x230] sm:$0xf]
    %v167 = vld [vmem:[%s1 + $0x234] sm:$0xf]
    %v168 = vld [vmem:[%s1 + $0x238] sm:$0xf]
    %v169 = vld [vmem:[%s1 + $0x23c] sm:$0xf]
    %v170 = vld [vmem:[%s1 + $0x240] sm:$0xf]
    %v171 = vld [vmem:[%s1 + $0x244] sm:$0xf]
    %v172 = vld [vmem:[%s1 + $0x248] sm:$0xf]
    %v173 = vld [vmem:[%s1 + $0x24c] sm:$0xf]
    %v174 = vld [vmem:[%s1 + $0x250] sm:$0xf]
    %v175 = vld [vmem:[%s1 + $0x254] sm:$0xf]
    %v176 = vld [vmem:[%s1 + $0x258] sm:$0xf]
    %v177 = vld [vmem:[%s1 + $0x25c] sm:$0xf]
    %v178 = vld [vmem:[%s1 + $0x260] sm:$0xf]
    %v179 = vld [vmem:[%s1 + $0x264] sm:$0xf]
    %v180 = vld [vmem:[%s1 + $0x268] sm:$0xf]
    %v181 = vld [vmem:[%s1 + $0x26c] sm:$0xf]
    %v182 = vld [vmem:[%s1 + $0x270] sm:$0xf]
    %v183 = vld [vmem:[%s1 + $0x274] sm:$0xf]
    %v184 = vld [vmem:[%s1 + $0x278] sm:$0xf]
    %v185 = vld [vmem:[%s1 + $0x27c] sm:$0xf]
    %v186 = vld [vmem:[%s1 + $0x280] sm:$0xf]
    %v187 = vld [vmem:[%s1 + $0x284] sm:$0xf]
    %v188 = vld [vmem:[%s1 + $0x288] sm:$0xf]
    %v189 = vld [vmem:[%s1 + $0x28c] sm:$0xf]
    %v190 = vld [vmem:[%s1 + $0x290] sm:$0xf]
    %v191 = vld [vmem:[%s1 + $0x294] sm:$0xf]
    %v192 = vld [vmem:[%s1 + $0x298] sm:$0xf]
    %v193 = vld [vmem:[%s1 + $0x29c] sm:$0xf]
    %v194 = vld [vmem:[%s1 + $0x2a0] sm:$0xf]
    %v195 = vld [vmem:[%s1 + $0x2a4] sm:$0xf]
    %v196 = vld [vmem:[%s1 + $0x2a8] sm:$0xf]
    %v197 = vld [vmem:[%s1 + $0x2ac] sm:$0xf]
    %v198 = vld [vmem:[%s1 + $0x2b0] sm:$0xf]
    %v199 = vld [vmem:[%s1 + $0x2b4] sm:$0xf]
    %v200 = vld [vmem:[%s1 + $0x2b8] sm:$0xf]
    %v201 = vld [vmem:[%s1 + $0x2bc] sm:$0xf]
    %v202 = vld [vmem:[%s1 + $0x2c0] sm:$0xf]
    %v203 = vld [vmem:[%s1 + $0x2c4] sm:$0xf]
    %v204 = vld [vmem:[%s1 + $0x2c8] sm:$0xf]
    %v205 = vld [vmem:[%s1 + $0x2cc] sm:$0xf]
    %v206 = vld [vmem:[%s1 + $0x2d0] sm:$0xf]
    %v207 = vld [vmem:[%s1 + $0x2d4] sm:$0xf]
    %v208 = vld [vmem:[%s1 + $0x2d8] sm:$0xf]
    %v209 = vld [vmem:[%s1 + $0x2dc] sm:$0xf]
    %v210 = vld [vmem:[%s1 + $0x2e0] sm:$0xf]
    %v211 = vld [vmem:[%s1 + $0x2e4] sm:$0xf]
    %v212 = vld [vmem:[%s1 + $0x2e8] sm:$0xf]
    %v213 = vld [vmem:[%s1 + $0x2ec] sm:$0xf]
    %v214 = vld [vmem:[%s1 + $0x2f0] sm:$0xf]
    %v215 = vld [vmem:[%s1 + $0x2f4] sm:$0xf]
    %v216 = vld [vmem:[%s1 + $0x2f8] sm:$0xf]
    %v217 = vld [vmem:[%s1 + $0x2fc] sm:$0xf]
    %v218 = vld [vmem:[%s1 + $0x300] sm:$0xf]
    %v219 = vld [vmem:[%s1 + $0x304] sm:$0xf]
    %v220 = vld [vmem:[%s1 + $0x308] sm:$0xf]
    %v221 = vld [vmem:[%s1 + $0x30c] sm:$0xf]
    %v222 = vld [vmem:[%s1 + $0x310] sm:$0xf]
    %v223 = vld [vmem:[%s1 + $0x314] sm:$0xf]
    %v224 = vld [vmem:[%s1 + $0x318] sm:$0xf]
    %v225 = vld [vmem:[%s1 + $0x31c] sm:$0xf]
    %v226 = vld [vmem:[%s1 + $0x320] sm:$0xf]
    %v227 = vld [vmem:[%s1 + $0x324] sm:$0xf]
    %v228 = vld [vmem:[%s1 + $0x328] sm:$0xf]
    %v229 = vld [vmem:[%s1 + $0x32c] sm:$0xf]
    %v230 = vld [vmem:[%s1 + $0x330] sm:$0xf]
    %v231 = vld [vmem:[%s1 + $0x334] sm:$0xf]
    %v232 = vld [vmem:[%s1 + $0x338] sm:$0xf]
    %v233 = vld [vmem:[%s1 + $0x33c] sm:$0xf]
    %v234 = vld [vmem:[%s1 + $0x340] sm:$0xf]
    %v235 = vld [vmem:[%s1 + $0x344] sm:$0xf]
    %v236 = vld [vmem:[%s1 + $0x348] sm:$0xf]
    %v237 = vld [vmem:[%s1 + $0x34c] sm:$0xf]
    %v238 = vld [vmem:[%s1 + $0x350] sm:$0xf]
    %v239 = vld [vmem:[%s1 + $0x354] sm:$0xf]
    %v240 = vld [vmem:[%s1 + $0x358] sm:$0xf]
    %v241 = vld [vmem:[%s1 + $0x35c] sm:$0xf]
    %v242 = vld [vmem:[%s1 + $0x360] sm:$0xf]
    %v243 = vld [vmem:[%s1 + $0x364] sm:$0xf]
    %v244 = vld [vmem:[%s1 + $0x368] sm:$0xf]
    %v245 = vld [vmem:[%s1 + $0x36c] sm:$0xf]
    %v246 = vld [vmem:[%s1 + $0x370] sm:$0xf]
    %v247 = vld [vmem:[%s1 + $0x374] sm:$0xf]
    %v248 = vld [vmem:[%s1 + $0x378] sm:$0xf]
    %v249 = vld [vmem:[%s1 + $0x37c] sm:$0xf]
    %v250 = vld [vmem:[%s1 + $0x380] sm:$0xf]
    %v251 = vld [vmem:[%s1 + $0x384] sm:$0xf]
    %v252 = vld [vmem:[%s1 + $0x388] sm:$0xf]
    %v253 = vld [vmem:[%s1 + $0x38c] sm:$0xf]
    %v254 = vld [vmem:[%s1 + $0x390] sm:$0xf]
    %v255 = vld [vmem:[%s1 + $0x394] sm:$0xf]
    %v256 = vld [vmem:[%s1 + $0x398] sm:$0xf]
    %v257 = vld [vmem:[%s1 + $0x39c] sm:$0xf]
    %v258 = vld [vmem:[%s1 + $0x3a0] sm:$0xf]
    %v259 = vld [vmem:[%s1 + $0x3a4] sm:$0xf]
    %v260 = vld [vmem:[%s1 + $0x3a8] sm:$0xf]
    %v261 = vld [vmem:[%s1 + $0x3ac] sm:$0xf]
    %v262 = vld [vmem:[%s1 + $0x3b0] sm:$0xf]
    %v263 = vld [vmem:[%s1 + $0x3b4] sm:$0xf]
    %v264 = vld [vmem:[%s1 + $0x3b8] sm:$0xf]
    %v265 = vld [vmem:[%s1 + $0x3bc] sm:$0xf]
    %v266 = vld [vmem:[%s1 + $0x3c0] sm:$0xf]
    %v267 = vld [vmem:[%s1 + $0x3c4] sm:$0xf]
    %v268 = vld [vmem:[%s1 + $0x3c8] sm:$0xf]
    %v269 = vld [vmem:[%s1 + $0x3cc] sm:$0xf]
    %v270 = vld [vmem:[%s1 + $0x3d0] sm:$0xf]
    %v271 = vld [vmem:[%s1 + $0x3d4] sm:$0xf]
    %v272 = vld [vmem:[%s1 + $0x3d8] sm:$0xf]
    %v273 = vld [vmem:[%s1 + $0x3dc] sm:$0xf]
    %v274 = vld [vmem:[%s1 + $0x3e0] sm:$0xf]
    %v275 = vld [vmem:[%s1 + $0x3e4] sm:$0xf]
    %v276 = vld [vmem:[%s1 + $0x3e8] sm:$0xf]
    %v277 = vld [vmem:[%s1 + $0x3ec] sm:$0xf]
    %v278 = vld [vmem:[%s1 + $0x3f0] sm:$0xf]
    %v279 = vld [vmem:[%s1 + $0x3f4] sm:$0xf]
    %v280 = vld [vmem:[%s1 + $0x3f8] sm:$0xf]
    %v281 = vld [vmem:[%s1 + $0x3fc] sm:$0xf]
    %v282 = vld [vmem:[%s1 + $0x400] sm:$0xf]
    %v283 = vld [vmem:[%s1 + $0x404] sm:$0xf]
    %v284 = vld [vmem:[%s1 + $0x408] sm:$0xf]
    %v285 = vld [vmem:[%s1 + $0x40c] sm:$0xf]
    %v286 = vld [vmem:[%s1 + $0x410] sm:$0xf]
    %v287 = vld [vmem:[%s1 + $0x414] sm:$0xf]
    %v288 = vld [vmem:[%s1 + $0x418] sm:$0xf]
    %v289 = vld [vmem:[%s1 + $0x41c] sm:$0xf]
    %v290 = vld [vmem:[%s1 + $0x420] sm:$0xf]
    %v291 = vld [vmem:[%s1 + $0x424] sm:$0xf]
    %v292 = vld [vmem:[%s1 + $0x428] sm:$0xf]
    %v293 = vld [vmem:[%s1 + $0x42c] sm:$0xf]
    %v294 = vld [vmem:[%s1 + $0x430] sm:$0xf]
    %v295 = vld [vmem:[%s1 + $0x434] sm:$0xf]
    %v296 = vld [vmem:[%s1 + $0x438] sm:$0xf]
    %v297 = vld [vmem:[%s1 + $0x43c] sm:$0xf]
    %v298 = vld [vmem:[%s1 + $0x440] sm:$0xf]
    %v299 = vld [vmem:[%s1 + $0x444] sm:$0xf]
    %v300 = vld [vmem:[%s1 + $0x448] sm:$0xf]
    %v301 = vld [vmem:[%s1 + $0x44c] sm:$0xf]
    %v302 = vld [vmem:[%s1 + $0x450] sm:$0xf]
    %v303 = vld [vmem:[%s1 + $0x454] sm:$0xf]
    %v304 = vld [vmem:[%s1 + $0x458] sm:$0xf]
    %v305 = vld [vmem:[%s1 + $0x45c] sm:$0xf]
    %v306 = vld [vmem:[%s1 + $0x460] sm:$0xf]
    %v307 = vld [vmem:[%s1 + $0x464] sm:$0xf]
    %v308 = vld [vmem:[%s1 + $0x468] sm:$0xf]
    %v309 = vld [vmem:[%s1 + $0x46c] sm:$0xf]
    %v310 = vld [vmem:[%s1 + $0x470] sm:$0xf]
    %v311 = vld [vmem:[%s1 + $0x474] sm:$0xf]
    %v312 = vld [vmem:[%s1 + $0x478] sm:$0xf]
    %v313 = vld [vmem:[%s1 + $0x47c] sm:$0xf]
    %v314 = vld [vmem:[%s1 + $0x480] sm:$0xf]
    %v315 = vld [vmem:[%s1 + $0x484] sm:$0xf]
    %v316 = vld [vmem:[%s1 + $0x488] sm:$0xf]
    %v317 = vld [vmem:[%s1 + $0x48c] sm:$0xf]
    %v318 = vld [vmem:[%s1 + $0x490] sm:$0xf]
    %v319 = vld [vmem:[%s1 + $0x494] sm:$0xf]
    %v320 = vld [vmem:[%s1 + $0x498] sm:$0xf]
    %v321 = vld [vmem:[%s1 + $0x49c] sm:$0xf]
    %v322 = vld [vmem:[%s1 + $0x4a0] sm:$0xf]
    %v323 = vld [vmem:[%s1 + $0x4a4] sm:$0xf]
    %v324 = vld [vmem:[%s1 + $0x4a8] sm:$0xf]
    %v325 = vld [vmem:[%s1 + $0x4ac] sm:$0xf]
    %v326 = vld [vmem:[%s1 + $0x4b0] sm:$0xf]
    %v327 = vld [vmem:[%s1 + $0x4b4] sm:$0xf]
    %v328 = vld [vmem:[%s1 + $0x4b8] sm:$0xf]
    %v329 = vld [vmem:[%s1 + $0x4bc] sm:$0xf]
    %v330 = vld [vmem:[%s1 + $0x4c0] sm:$0xf]
    %v331 = vld [vmem:[%s1 + $0x4c4] sm:$0xf]
    %v332 = vld [vmem:[%s1 + $0x4c8] sm:$0xf]
    %v333 = vld [vmem:[%s1 + $0x4cc] sm:$0xf]
    %v334 = vld [vmem:[%s1 + $0x4d0] sm:$0xf]
    %v335 = vld [vmem:[%s1 + $0x4d4] sm:$0xf]
    %v336 = vld [vmem:[%s1 + $0x4d8] sm:$0xf]
    %v337 = vld [vmem:[%s1 + $0x4dc] sm:$0xf]
    %v338 = vld [vmem:[%s1 + $0x4e0] sm:$0xf]
    %v339 = vld [vmem:[%s1 + $0x4e4] sm:$0xf]
    %v340 = vld [vmem:[%s1 + $0x4e8] sm:$0xf]
    %v341 = vld [vmem:[%s1 + $0x4ec] sm:$0xf]
    %v342 = vld [vmem:[%s1 + $0x4f0] sm:$0xf]
    %v343 = vld [vmem:[%s1 + $0x4f4] sm:$0xf]
    %v344 = vld [vmem:[%s1 + $0x4f8] sm:$0xf]
    %v345 = vld [vmem:[%s1 + $0x4fc] sm:$0xf]
    %v346 = vld [vmem:[%s1 + $0x500] sm:$0xf]
    %v347 = vld [vmem:[%s1 + $0x504] sm:$0xf]
    %v348 = vld [vmem:[%s1 + $0x508] sm:$0xf]
    %v349 = vld [vmem:[%s1 + $0x50c] sm:$0xf]
    %v350 = vld [vmem:[%s1 + $0x510] sm:$0xf]
    %v351 = vld [vmem:[%s1 + $0x514] sm:$0xf]
    %v352 = vld [vmem:[%s1 + $0x518] sm:$0xf]
    %v353 = vld [vmem:[%s1 + $0x51c] sm:$0xf]
    %v354 = vld [vmem:[%s1 + $0x520] sm:$0xf]
    %v355 = vld [vmem:[%s1 + $0x524] sm:$0xf]
    %v356 = vld [vmem:[%s1 + $0x528] sm:$0xf]
    %v357 = vld [vmem:[%s1 + $0x52c] sm:$0xf]
    %v358 = vld [vmem:[%s1 + $0x530] sm:$0xf]
    %v359 = vld [vmem:[%s1 + $0x534] sm:$0xf]
    %v360 = vld [vmem:[%s1 + $0x538] sm:$0xf]
    %v361 = vld [vmem:[%s1 + $0x53c] sm:$0xf]
    %v362 = vld [vmem:[%s1 + $0x540] sm:$0xf]
    %v363 = vld [vmem:[%s1 + $0x544] sm:$0xf]
    %v364 = vld [vmem:[%s1 + $0x548] sm:$0xf]
    %v365 = vld [vmem:[%s1 + $0x54c] sm:$0xf]
    %v366 = vld [vmem:[%s1 + $0x550] sm:$0xf]
    %v367 = vld [vmem:[%s1 + $0x554] sm:$0xf]
    %v368 = vld [vmem:[%s1 + $0x558] sm:$0xf]
    %v369 = vld [vmem:[%s1 + $0x55c] sm:$0xf]
    %v370 = vld [vmem:[%s1 + $0x560] sm:$0xf]
    %v371 = vld [vmem:[%s1 + $0x564] sm:$0xf]
    %v372 = vld [vmem:[%s1 + $0x568] sm:$0xf]
    %v373 = vld [vmem:[%s1 + $0x56c] sm:$0xf]
    %v374 = vld [vmem:[%s1 + $0x570] sm:$0xf]
    %v375 = vld [vmem:[%s1 + $0x574] sm:$0xf]
    %v376 = vld [vmem:[%s1 + $0x578] sm:$0xf]
    %v377 = vld [vmem:[%s1 + $0x57c] sm:$0xf]
    %v378 = vld [vmem:[%s1 + $0x580] sm:$0xf]
    %v379 = vld [vmem:[%s1 + $0x584] sm:$0xf]
    %v380 = vld [vmem:[%s1 + $0x588] sm:$0xf]
    %v381 = vld [vmem:[%s1 + $0x58c] sm:$0xf]
    %v382 = vld [vmem:[%s1 + $0x590] sm:$0xf]
    %v383 = vld [vmem:[%s1 + $0x594] sm:$0xf]
    %v384 = vld [vmem:[%s1 + $0x598] sm:$0xf]
    %v385 = vld [vmem:[%s1 + $0x59c] sm:$0xf]
    %v386 = vld [vmem:[%s1 + $0x5a0] sm:$0xf]
    %v387 = vld [vmem:[%s1 + $0x5a4] sm:$0xf]
    %v388 = vld [vmem:[%s1 + $0x5a8] sm:$0xf]
    %v389 = vld [vmem:[%s1 + $0x5ac] sm:$0xf]
    %v390 = vld [vmem:[%s1 + $0x5b0] sm:$0xf]
    %v391 = vld [vmem:[%s1 + $0x5b4] sm:$0xf]
    %v392 = vld [vmem:[%s1 + $0x5b8] sm:$0xf]
    %v393 = vld [vmem:[%s1 + $0x5bc] sm:$0xf]
    %v394 = vld [vmem:[%s1 + $0x5c0] sm:$0xf]
    %v395 = vld [vmem:[%s1 + $0x5c4] sm:$0xf]
    %v396 = vld [vmem:[%s1 + $0x5c8] sm:$0xf]
    %v397 = vld [vmem:[%s1 + $0x5cc] sm:$0xf]
    %v398 = vld [vmem:[%s1 + $0x5d0] sm:$0xf]
    %v399 = vld [vmem:[%s1 + $0x5d4] sm:$0xf]
    %v400 = vld [vmem:[%s1 + $0x5d8] sm:$0xf]
    %v401 = vld [vmem:[%s1 + $0x5dc] sm:$0xf]
    %v402 = vld [vmem:[%s1 + $0x5e0] sm:$0xf]
    %v403 = vld [vmem:[%s1 + $0x5e4] sm:$0xf]
    %v404 = vld [vmem:[%s1 + $0x5e8] sm:$0xf]
    %v405 = vld [vmem:[%s1 + $0x5ec] sm:$0xf]
    %v406 = vld [vmem:[%s1 + $0x5f0] sm:$0xf]
    %v407 = vld [vmem:[%s1 + $0x5f4] sm:$0xf]
    %v408 = vld [vmem:[%s1 + $0x5f8] sm:$0xf]
    %v409 = vld [vmem:[%s1 + $0x5fc] sm:$0xf]
    %v410 = vld [vmem:[%s1 + $0x600] sm:$0xf]
    %v411 = vld [vmem:[%s1 + $0x604] sm:$0xf]
    %v412 = vld [vmem:[%s1 + $0x608] sm:$0xf]
    %v413 = vld [vmem:[%s1 + $0x60c] sm:$0xf]
    %v414 = vld [vmem:[%s1 + $0x610] sm:$0xf]
    %v415 = vld [vmem:[%s1 + $0x614] sm:$0xf]
    %v416 = vld [vmem:[%s1 + $0x618] sm:$0xf]
    %v417 = vld [vmem:[%s1 + $0x61c] sm:$0xf]
    %v418 = vld [vmem:[%s1 + $0x620] sm:$0xf]
    %v419 = vld [vmem:[%s1 + $0x624] sm:$0xf]
    %v420 = vld [vmem:[%s1 + $0x628] sm:$0xf]
    %v421 = vld [vmem:[%s1 + $0x62c] sm:$0xf]
    %v422 = vld [vmem:[%s1 + $0x630] sm:$0xf]
    %v423 = vld [vmem:[%s1 + $0x634] sm:$0xf]
    %v424 = vld [vmem:[%s1 + $0x638] sm:$0xf]
    %v425 = vld [vmem:[%s1 + $0x63c] sm:$0xf]
    %v426 = vld [vmem:[%s1 + $0x640] sm:$0xf]
    %v427 = vld [vmem:[%s1 + $0x644] sm:$0xf]
    %v428 = vld [vmem:[%s1 + $0x648] sm:$0xf]
    %v429 = vld [vmem:[%s1 + $0x64c] sm:$0xf]
    %v430 = vld [vmem:[%s1 + $0x650] sm:$0xf]
    %v431 = vld [vmem:[%s1 + $0x654] sm:$0xf]
    %v432 = vld [vmem:[%s1 + $0x658] sm:$0xf]
    %v433 = vld [vmem:[%s1 + $0x65c] sm:$0xf]
    %v434 = vld [vmem:[%s1 + $0x660] sm:$0xf]
    %v435 = vld [vmem:[%s1 + $0x664] sm:$0xf]
    %v436 = vld [vmem:[%s1 + $0x668] sm:$0xf]
    %v437 = vld [vmem:[%s1 + $0x66c] sm:$0xf]
    %v438 = vld [vmem:[%s1 + $0x670] sm:$0xf]
    %v439 = vld [vmem:[%s1 + $0x674] sm:$0xf]
    %v440 = vld [vmem:[%s1 + $0x678] sm:$0xf]
    %v441 = vld [vmem:[%s1 + $0x67c] sm:$0xf]
    %v442 = vld [vmem:[%s1 + $0x680] sm:$0xf]
    %v443 = vld [vmem:[%s1 + $0x684] sm:$0xf]
    %v444 = vld [vmem:[%s1 + $0x688] sm:$0xf]
    %v445 = vld [vmem:[%s1 + $0x68c] sm:$0xf]
    %v446 = vld [vmem:[%s1 + $0x690] sm:$0xf]
    %v447 = vld [vmem:[%s1 + $0x694] sm:$0xf]
    %v448 = vld [vmem:[%s1 + $0x698] sm:$0xf]
    %v449 = vld [vmem:[%s1 + $0x69c] sm:$0xf]
    %v450 = vld [vmem:[%s1 + $0x6a0] sm:$0xf]
    %v451 = vld [vmem:[%s1 + $0x6a4] sm:$0xf]
    %v452 = vld [vmem:[%s1 + $0x6a8] sm:$0xf]
    %v453 = vld [vmem:[%s1 + $0x6ac] sm:$0xf]
    %v454 = vld [vmem:[%s1 + $0x6b0] sm:$0xf]
    %v455 = vld [vmem:[%s1 + $0x6b4] sm:$0xf]
    %v456 = vld [vmem:[%s1 + $0x6b8] sm:$0xf]
    %v457 = vld [vmem:[%s1 + $0x6bc] sm:$0xf]
    %v458 = vld [vmem:[%s1 + $0x6c0] sm:$0xf]
    %v459 = vld [vmem:[%s1 + $0x6c4] sm:$0xf]
    %v460 = vld [vmem:[%s1 + $0x6c8] sm:$0xf]
    %v461 = vld [vmem:[%s1 + $0x6cc] sm:$0xf]
    %v462 = vld [vmem:[%s1 + $0x6d0] sm:$0xf]
    %v463 = vld [vmem:[%s1 + $0x6d4] sm:$0xf]
    %v464 = vld [vmem:[%s1 + $0x6d8] sm:$0xf]
    %v465 = vld [vmem:[%s1 + $0x6dc] sm:$0xf]
    %v466 = vld [vmem:[%s1 + $0x6e0] sm:$0xf]
    %v467 = vld [vmem:[%s1 + $0x6e4] sm:$0xf]
    %v468 = vld [vmem:[%s1 + $0x6e8] sm:$0xf]
    %v469 = vld [vmem:[%s1 + $0x6ec] sm:$0xf]
    %v470 = vld [vmem:[%s1 + $0x6f0] sm:$0xf]
    %v471 = vld [vmem:[%s1 + $0x6f4] sm:$0xf]
    %v472 = vld [vmem:[%s1 + $0x6f8] sm:$0xf]
    %v473 = vld [vmem:[%s1 + $0x6fc] sm:$0xf]
    %v474 = vld [vmem:[%s2] sm:$0x1]
    %v476 = vlaneseq
    %v477 = vshrl.u32 %v476, 7
    %v478 = vsub.s32 0, %v477
    %v479 = vrot.slane %v474, %v478
    %v485 = vcombine.high %v22, %v22
    %v487 = vunpack.c.l.s4 1966171168
    %v488 = vunpack.c.0.s8 %v487
    %v489 = vlaneseq
    %v490 = vshrl.u32 %v489, 7
    %v491 = vsub.s32 %v488, %v490
    %v492 = vrot.slane %v22, %v491
    %v494 = vunpack.c.l.s4 1966171168
    %v495 = vunpack.c.0.s8 %v494
    %v496 = vlaneseq
    %v497 = vshrl.u32 %v496, 7
    %v498 = vsub.s32 %v495, %v497
    %v499 = vrot.slane %v485, %v498
    %v500 = vcombine.high %v492, %v492
    %v501 = vcombine.high %v499, %v499
    %v503 = vunpack.c.l.s4 1966171168
    %v504 = vunpack.c.0.s8 %v503
    %v505 = vlaneseq
    %v506 = vshrl.u32 %v505, 7
    %v507 = vsub.s32 %v504, %v506
    %v508 = vrot.slane %v492, %v507
    %v510 = vunpack.c.l.s4 1966171168
    %v511 = vunpack.c.0.s8 %v510
    %v512 = vlaneseq
    %v513 = vshrl.u32 %v512, 7
    %v514 = vsub.s32 %v511, %v513
    %v515 = vrot.slane %v499, %v514
    %v517 = vunpack.c.l.s4 1966171168
    %v518 = vunpack.c.0.s8 %v517
    %v519 = vlaneseq
    %v520 = vshrl.u32 %v519, 7
    %v521 = vsub.s32 %v518, %v520
    %v522 = vrot.slane %v500, %v521
    %v524 = vunpack.c.l.s4 1966171168
    %v525 = vunpack.c.0.s8 %v524
    %v526 = vlaneseq
    %v527 = vshrl.u32 %v526, 7
    %v528 = vsub.s32 %v525, %v527
    %v529 = vrot.slane %v501, %v528
    %v530 = vcombine.high %v508, %v508
    %v531 = vcombine.high %v515, %v515
    %v532 = vcombine.high %v522, %v522
    %v533 = vcombine.high %v529, %v529
    %v534 = vcombine.high %v23, %v23
    %v536 = vunpack.c.l.s4 1966171168
    %v537 = vunpack.c.0.s8 %v536
    %v538 = vlaneseq
    %v539 = vshrl.u32 %v538, 7
    %v540 = vsub.s32 %v537, %v539
    %v541 = vrot.slane %v23, %v540
    %v543 = vunpack.c.l.s4 1966171168
    %v544 = vunpack.c.0.s8 %v543
    %v545 = vlaneseq
    %v546 = vshrl.u32 %v545, 7
    %v547 = vsub.s32 %v544, %v546
    %v548 = vrot.slane %v534, %v547
    %v549 = vcombine.high %v541, %v541
    %v550 = vcombine.high %v548, %v548
    %v552 = vunpack.c.l.s4 1966171168
    %v553 = vunpack.c.0.s8 %v552
    %v554 = vlaneseq
    %v555 = vshrl.u32 %v554, 7
    %v556 = vsub.s32 %v553, %v555
    %v557 = vrot.slane %v541, %v556
    %v559 = vunpack.c.l.s4 1966171168
    %v560 = vunpack.c.0.s8 %v559
    %v561 = vlaneseq
    %v562 = vshrl.u32 %v561, 7
    %v563 = vsub.s32 %v560, %v562
    %v564 = vrot.slane %v548, %v563
    %v566 = vunpack.c.l.s4 1966171168
    %v567 = vunpack.c.0.s8 %v566
    %v568 = vlaneseq
    %v569 = vshrl.u32 %v568, 7
    %v570 = vsub.s32 %v567, %v569
    %v571 = vrot.slane %v549, %v570
    %v573 = vunpack.c.l.s4 1966171168
    %v574 = vunpack.c.0.s8 %v573
    %v575 = vlaneseq
    %v576 = vshrl.u32 %v575, 7
    %v577 = vsub.s32 %v574, %v576
    %v578 = vrot.slane %v550, %v577
    %v579 = vcombine.high %v557, %v557
    %v580 = vcombine.high %v564, %v564
    %v581 = vcombine.high %v571, %v571
    %v582 = vcombine.high %v578, %v578
    %v583 = vcombine.high %v24, %v24
    %v585 = vunpack.c.l.s4 1966171168
    %v586 = vunpack.c.0.s8 %v585
    %v587 = vlaneseq
    %v588 = vshrl.u32 %v587, 7
    %v589 = vsub.s32 %v586, %v588
    %v590 = vrot.slane %v24, %v589
    %v592 = vunpack.c.l.s4 1966171168
    %v593 = vunpack.c.0.s8 %v592
    %v594 = vlaneseq
    %v595 = vshrl.u32 %v594, 7
    %v596 = vsub.s32 %v593, %v595
    %v597 = vrot.slane %v583, %v596
    %v598 = vcombine.high %v590, %v590
    %v599 = vcombine.high %v597, %v597
    %v601 = vunpack.c.l.s4 1966171168
    %v602 = vunpack.c.0.s8 %v601
    %v603 = vlaneseq
    %v604 = vshrl.u32 %v603, 7
    %v605 = vsub.s32 %v602, %v604
    %v606 = vrot.slane %v590, %v605
    %v608 = vunpack.c.l.s4 1966171168
    %v609 = vunpack.c.0.s8 %v608
    %v610 = vlaneseq
    %v611 = vshrl.u32 %v610, 7
    %v612 = vsub.s32 %v609, %v611
    %v613 = vrot.slane %v597, %v612
    %v615 = vunpack.c.l.s4 1966171168
    %v616 = vunpack.c.0.s8 %v615
    %v617 = vlaneseq
    %v618 = vshrl.u32 %v617, 7
    %v619 = vsub.s32 %v616, %v618
    %v620 = vrot.slane %v598, %v619
    %v622 = vunpack.c.l.s4 1966171168
    %v623 = vunpack.c.0.s8 %v622
    %v624 = vlaneseq
    %v625 = vshrl.u32 %v624, 7
    %v626 = vsub.s32 %v623, %v625
    %v627 = vrot.slane %v599, %v626
    %v628 = vcombine.high %v606, %v606
    %v629 = vcombine.high %v613, %v613
    %v630 = vcombine.high %v620, %v620
    %v631 = vcombine.high %v627, %v627
    %v633 = vunpack.c.l.s4 1966171168
    %v634 = vunpack.c.0.s8 %v633
    %v635 = vlaneseq
    %v636 = vshrl.u32 %v635, 7
    %v637 = vsub.s32 %v634, %v636
    %v638 = vrot.slane %v25, %v637
    %v639 = vcombine.high %v638, %v638
    %v641 = vunpack.c.l.s4 1966171168
    %v642 = vunpack.c.0.s8 %v641
    %v643 = vlaneseq
    %v644 = vshrl.u32 %v643, 7
    %v645 = vsub.s32 %v642, %v644
    %v646 = vrot.slane %v638, %v645
    %v648 = vunpack.c.l.s4 1966171168
    %v649 = vunpack.c.0.s8 %v648
    %v650 = vlaneseq
    %v651 = vshrl.u32 %v650, 7
    %v652 = vsub.s32 %v649, %v651
    %v653 = vrot.slane %v639, %v652
    %v654 = vcombine.high %v646, %v646
    %v655 = vcombine.high %v653, %v653
    %v1132 = vunpack.c.l.b16 %v26
    %v1133 = vunpack.c.l.b16 %v27
    %v1134 = vunpack.c.l.b16 %v28
    %v1135 = vunpack.c.l.b16 %v29
    %v1136 = vunpack.c.l.b16 %v30
    %v1137 = vunpack.c.l.b16 %v31
    %v1138 = vunpack.c.l.b16 %v32
    %v1139 = vunpack.c.l.b16 %v33
    %v1140 = vunpack.c.l.b16 %v34
    %v1141 = vunpack.c.l.b16 %v35
    %v1142 = vunpack.c.l.b16 %v36
    %v1143 = vunpack.c.l.b16 %v37
    %v1144 = vunpack.c.l.b16 %v38
    %v1145 = vunpack.c.l.b16 %v39
    %v1146 = vunpack.c.l.b16 %v40
    %v1147 = vunpack.c.l.b16 %v41
    %v1148 = vunpack.c.l.b16 %v42
    %v1149 = vunpack.c.l.b16 %v43
    %v1150 = vunpack.c.l.b16 %v44
    %v1151 = vunpack.c.l.b16 %v45
    %v1152 = vunpack.c.l.b16 %v46
    %v1153 = vunpack.c.l.b16 %v47
    %v1154 = vunpack.c.l.b16 %v48
    %v1155 = vunpack.c.l.b16 %v49
    %v1156 = vunpack.c.l.b16 %v50
    %v1157 = vunpack.c.l.b16 %v51
    %v1158 = vunpack.c.l.b16 %v52
    %v1159 = vunpack.c.l.b16 %v53
    %v1160 = vunpack.c.l.b16 %v54
    %v1161 = vunpack.c.l.b16 %v55
    %v1162 = vunpack.c.l.b16 %v56
    %v1163 = vunpack.c.l.b16 %v57
    %v1164 = vunpack.c.l.b16 %v58
    %v1165 = vunpack.c.l.b16 %v59
    %v1166 = vunpack.c.l.b16 %v60
    %v1167 = vunpack.c.l.b16 %v61
    %v1168 = vunpack.c.l.b16 %v62
    %v1169 = vunpack.c.l.b16 %v63
    %v1170 = vunpack.c.l.b16 %v64
    %v1171 = vunpack.c.l.b16 %v65
    %v1172 = vunpack.c.l.b16 %v66
    %v1173 = vunpack.c.l.b16 %v67
    %v1174 = vunpack.c.l.b16 %v68
    %v1175 = vunpack.c.l.b16 %v69
    %v1176 = vunpack.c.l.b16 %v70
    %v1177 = vunpack.c.l.b16 %v71
    %v1178 = vunpack.c.l.b16 %v72
    %v1179 = vunpack.c.l.b16 %v73
    %v1180 = vunpack.c.l.b16 %v74
    %v1181 = vunpack.c.l.b16 %v75
    %v1182 = vunpack.c.l.b16 %v76
    %v1183 = vunpack.c.l.b16 %v77
    %v1184 = vunpack.c.l.b16 %v78
    %v1185 = vunpack.c.l.b16 %v79
    %v1186 = vunpack.c.l.b16 %v80
    %v1187 = vunpack.c.l.b16 %v81
    %v1188 = vunpack.c.l.b16 %v82
    %v1189 = vunpack.c.l.b16 %v83
    %v1190 = vunpack.c.l.b16 %v84
    %v1191 = vunpack.c.l.b16 %v85
    %v1192 = vunpack.c.l.b16 %v86
    %v1193 = vunpack.c.l.b16 %v87
    %v1194 = vunpack.c.l.b16 %v88
    %v1195 = vunpack.c.l.b16 %v89
    %v1196 = vunpack.c.l.b16 %v90
    %v1197 = vunpack.c.l.b16 %v91
    %v1198 = vunpack.c.l.b16 %v92
    %v1199 = vunpack.c.l.b16 %v93
    %v1200 = vunpack.c.l.b16 %v94
    %v1201 = vunpack.c.l.b16 %v95
    %v1202 = vunpack.c.l.b16 %v96
    %v1203 = vunpack.c.l.b16 %v97
    %v1204 = vunpack.c.l.b16 %v98
    %v1205 = vunpack.c.l.b16 %v99
    %v1206 = vunpack.c.l.b16 %v100
    %v1207 = vunpack.c.l.b16 %v101
    %v1208 = vunpack.c.l.b16 %v102
    %v1209 = vunpack.c.l.b16 %v103
    %v1210 = vunpack.c.l.b16 %v104
    %v1211 = vunpack.c.l.b16 %v105
    %v1212 = vunpack.c.l.b16 %v106
    %v1213 = vunpack.c.l.b16 %v107
    %v1214 = vunpack.c.l.b16 %v108
    %v1215 = vunpack.c.l.b16 %v109
    %v1216 = vunpack.c.l.b16 %v110
    %v1217 = vunpack.c.l.b16 %v111
    %v1218 = vunpack.c.l.b16 %v112
    %v1219 = vunpack.c.l.b16 %v113
    %v1220 = vunpack.c.l.b16 %v114
    %v1221 = vunpack.c.l.b16 %v115
    %v1222 = vunpack.c.l.b16 %v116
    %v1223 = vunpack.c.l.b16 %v117
    %v1224 = vunpack.c.l.b16 %v118
    %v1225 = vunpack.c.l.b16 %v119
    %v1226 = vunpack.c.l.b16 %v120
    %v1227 = vunpack.c.l.b16 %v121
    %v1228 = vunpack.c.l.b16 %v122
    %v1229 = vunpack.c.l.b16 %v123
    %v1230 = vunpack.c.l.b16 %v124
    %v1231 = vunpack.c.l.b16 %v125
    %v1232 = vunpack.c.l.b16 %v126
    %v1233 = vunpack.c.l.b16 %v127
    %v1234 = vunpack.c.l.b16 %v128
    %v1235 = vunpack.c.l.b16 %v129
    %v1236 = vunpack.c.l.b16 %v130
    %v1237 = vunpack.c.l.b16 %v131
    %v1238 = vunpack.c.l.b16 %v132
    %v1239 = vunpack.c.l.b16 %v133
    %v1240 = vunpack.c.l.b16 %v134
    %v1241 = vunpack.c.l.b16 %v135
    %v1242 = vunpack.c.l.b16 %v136
    %v1243 = vunpack.c.l.b16 %v137
    %v1244 = vunpack.c.l.b16 %v138
    %v1245 = vunpack.c.l.b16 %v139
    %v1246 = vunpack.c.l.b16 %v140
    %v1247 = vunpack.c.l.b16 %v141
    %v1248 = vunpack.c.l.b16 %v142
    %v1249 = vunpack.c.l.b16 %v143
    %v1250 = vunpack.c.l.b16 %v144
    %v1251 = vunpack.c.l.b16 %v145
    %v1252 = vunpack.c.l.b16 %v146
    %v1253 = vunpack.c.l.b16 %v147
    %v1254 = vunpack.c.l.b16 %v148
    %v1255 = vunpack.c.l.b16 %v149
    %v1256 = vunpack.c.l.b16 %v150
    %v1257 = vunpack.c.l.b16 %v151
    %v1258 = vunpack.c.l.b16 %v152
    %v1259 = vunpack.c.l.b16 %v153
    %v1260 = vunpack.c.l.b16 %v154
    %v1261 = vunpack.c.l.b16 %v155
    %v1262 = vunpack.c.l.b16 %v156
    %v1263 = vunpack.c.l.b16 %v157
    %v1264 = vunpack.c.l.b16 %v158
    %v1265 = vunpack.c.l.b16 %v159
    %v1266 = vunpack.c.l.b16 %v160
    %v1267 = vunpack.c.l.b16 %v161
    %v1268 = vunpack.c.l.b16 %v162
    %v1269 = vunpack.c.l.b16 %v163
    %v1270 = vunpack.c.l.b16 %v164
    %v1271 = vunpack.c.l.b16 %v165
    %v1272 = vunpack.c.l.b16 %v166
    %v1273 = vunpack.c.l.b16 %v167
    %v1274 = vunpack.c.l.b16 %v168
    %v1275 = vunpack.c.l.b16 %v169
    %v1276 = vunpack.c.l.b16 %v170
    %v1277 = vunpack.c.l.b16 %v171
    %v1278 = vunpack.c.l.b16 %v172
    %v1279 = vunpack.c.l.b16 %v173
    %v1280 = vunpack.c.l.b16 %v174
    %v1281 = vunpack.c.l.b16 %v175
    %v1282 = vunpack.c.l.b16 %v176
    %v1283 = vunpack.c.l.b16 %v177
    %v1284 = vunpack.c.l.b16 %v178
    %v1285 = vunpack.c.l.b16 %v179
    %v1286 = vunpack.c.l.b16 %v180
    %v1287 = vunpack.c.l.b16 %v181
    %v1288 = vunpack.c.l.b16 %v182
    %v1289 = vunpack.c.l.b16 %v183
    %v1290 = vunpack.c.l.b16 %v184
    %v1291 = vunpack.c.l.b16 %v185
    %v1292 = vunpack.c.l.b16 %v186
    %v1293 = vunpack.c.l.b16 %v187
    %v1294 = vunpack.c.l.b16 %v188
    %v1295 = vunpack.c.l.b16 %v189
    %v1296 = vunpack.c.l.b16 %v190
    %v1297 = vunpack.c.l.b16 %v191
    %v1298 = vunpack.c.l.b16 %v192
    %v1299 = vunpack.c.l.b16 %v193
    %v1300 = vunpack.c.l.b16 %v194
    %v1301 = vunpack.c.l.b16 %v195
    %v1302 = vunpack.c.l.b16 %v196
    %v1303 = vunpack.c.l.b16 %v197
    %v1304 = vunpack.c.l.b16 %v198
    %v1305 = vunpack.c.l.b16 %v199
    %v1306 = vunpack.c.l.b16 %v200
    %v1307 = vunpack.c.l.b16 %v201
    %v1308 = vunpack.c.l.b16 %v202
    %v1309 = vunpack.c.l.b16 %v203
    %v1310 = vunpack.c.l.b16 %v204
    %v1311 = vunpack.c.l.b16 %v205
    %v1312 = vunpack.c.l.b16 %v206
    %v1313 = vunpack.c.l.b16 %v207
    %v1314 = vunpack.c.l.b16 %v208
    %v1315 = vunpack.c.l.b16 %v209
    %v1316 = vunpack.c.l.b16 %v210
    %v1317 = vunpack.c.l.b16 %v211
    %v1318 = vunpack.c.l.b16 %v212
    %v1319 = vunpack.c.l.b16 %v213
    %v1320 = vunpack.c.l.b16 %v214
    %v1321 = vunpack.c.l.b16 %v215
    %v1322 = vunpack.c.l.b16 %v216
    %v1323 = vunpack.c.l.b16 %v217
    %v1324 = vunpack.c.l.b16 %v218
    %v1325 = vunpack.c.l.b16 %v219
    %v1326 = vunpack.c.l.b16 %v220
    %v1327 = vunpack.c.l.b16 %v221
    %v1328 = vunpack.c.l.b16 %v222
    %v1329 = vunpack.c.l.b16 %v223
    %v1330 = vunpack.c.l.b16 %v224
    %v1331 = vunpack.c.l.b16 %v225
    %v1332 = vunpack.c.l.b16 %v226
    %v1333 = vunpack.c.l.b16 %v227
    %v1334 = vunpack.c.l.b16 %v228
    %v1335 = vunpack.c.l.b16 %v229
    %v1336 = vunpack.c.l.b16 %v230
    %v1337 = vunpack.c.l.b16 %v231
    %v1338 = vunpack.c.l.b16 %v232
    %v1339 = vunpack.c.l.b16 %v233
    %v1340 = vunpack.c.l.b16 %v234
    %v1341 = vunpack.c.l.b16 %v235
    %v1342 = vunpack.c.l.b16 %v236
    %v1343 = vunpack.c.l.b16 %v237
    %v1344 = vunpack.c.l.b16 %v238
    %v1345 = vunpack.c.l.b16 %v239
    %v1346 = vunpack.c.l.b16 %v240
    %v1347 = vunpack.c.l.b16 %v241
    %v1348 = vunpack.c.l.b16 %v242
    %v1349 = vunpack.c.l.b16 %v243
    %v1350 = vunpack.c.l.b16 %v244
    %v1351 = vunpack.c.l.b16 %v245
    %v1352 = vunpack.c.l.b16 %v246
    %v1353 = vunpack.c.l.b16 %v247
    %v1354 = vunpack.c.l.b16 %v248
    %v1355 = vunpack.c.l.b16 %v249
    %v1356 = vunpack.c.l.b16 %v250
    %v1357 = vunpack.c.l.b16 %v251
    %v1358 = vunpack.c.l.b16 %v252
    %v1359 = vunpack.c.l.b16 %v253
    %v1360 = vunpack.c.l.b16 %v254
    %v1361 = vunpack.c.l.b16 %v255
    %v1362 = vunpack.c.l.b16 %v256
    %v1363 = vunpack.c.l.b16 %v257
    %v1364 = vunpack.c.l.b16 %v258
    %v1365 = vunpack.c.l.b16 %v259
    %v1366 = vunpack.c.l.b16 %v260
    %v1367 = vunpack.c.l.b16 %v261
    %v1368 = vunpack.c.l.b16 %v262
    %v1369 = vunpack.c.l.b16 %v263
    %v1370 = vunpack.c.l.b16 %v264
    %v1371 = vunpack.c.l.b16 %v265
    %v1372 = vunpack.c.l.b16 %v266
    %v1373 = vunpack.c.l.b16 %v267
    %v1374 = vunpack.c.l.b16 %v268
    %v1375 = vunpack.c.l.b16 %v269
    %v1376 = vunpack.c.l.b16 %v270
    %v1377 = vunpack.c.l.b16 %v271
    %v1378 = vunpack.c.l.b16 %v272
    %v1379 = vunpack.c.l.b16 %v273
    %v1380 = vunpack.c.l.b16 %v274
    %v1381 = vunpack.c.l.b16 %v275
    %v1382 = vunpack.c.l.b16 %v276
    %v1383 = vunpack.c.l.b16 %v277
    %v1384 = vunpack.c.l.b16 %v278
    %v1385 = vunpack.c.l.b16 %v279
    %v1386 = vunpack.c.l.b16 %v280
    %v1387 = vunpack.c.l.b16 %v281
    %v1388 = vunpack.c.l.b16 %v282
    %v1389 = vunpack.c.l.b16 %v283
    %v1390 = vunpack.c.l.b16 %v284
    %v1391 = vunpack.c.l.b16 %v285
    %v1392 = vunpack.c.l.b16 %v286
    %v1393 = vunpack.c.l.b16 %v287
    %v1394 = vunpack.c.l.b16 %v288
    %v1395 = vunpack.c.l.b16 %v289
    %v1396 = vunpack.c.l.b16 %v290
    %v1397 = vunpack.c.l.b16 %v291
    %v1398 = vunpack.c.l.b16 %v292
    %v1399 = vunpack.c.l.b16 %v293
    %v1400 = vunpack.c.l.b16 %v294
    %v1401 = vunpack.c.l.b16 %v295
    %v1402 = vunpack.c.l.b16 %v296
    %v1403 = vunpack.c.l.b16 %v297
    %v1404 = vunpack.c.l.b16 %v298
    %v1405 = vunpack.c.l.b16 %v299
    %v1406 = vunpack.c.l.b16 %v300
    %v1407 = vunpack.c.l.b16 %v301
    %v1408 = vunpack.c.l.b16 %v302
    %v1409 = vunpack.c.l.b16 %v303
    %v1410 = vunpack.c.l.b16 %v304
    %v1411 = vunpack.c.l.b16 %v305
    %v1412 = vunpack.c.l.b16 %v306
    %v1413 = vunpack.c.l.b16 %v307
    %v1414 = vunpack.c.l.b16 %v308
    %v1415 = vunpack.c.l.b16 %v309
    %v1416 = vunpack.c.l.b16 %v310
    %v1417 = vunpack.c.l.b16 %v311
    %v1418 = vunpack.c.l.b16 %v312
    %v1419 = vunpack.c.l.b16 %v313
    %v1420 = vunpack.c.l.b16 %v314
    %v1421 = vunpack.c.l.b16 %v315
    %v1422 = vunpack.c.l.b16 %v316
    %v1423 = vunpack.c.l.b16 %v317
    %v1424 = vunpack.c.l.b16 %v318
    %v1425 = vunpack.c.l.b16 %v319
    %v1426 = vunpack.c.l.b16 %v320
    %v1427 = vunpack.c.l.b16 %v321
    %v1428 = vunpack.c.l.b16 %v322
    %v1429 = vunpack.c.l.b16 %v323
    %v1430 = vunpack.c.l.b16 %v324
    %v1431 = vunpack.c.l.b16 %v325
    %v1432 = vunpack.c.l.b16 %v326
    %v1433 = vunpack.c.l.b16 %v327
    %v1434 = vunpack.c.l.b16 %v328
    %v1435 = vunpack.c.l.b16 %v329
    %v1436 = vunpack.c.l.b16 %v330
    %v1437 = vunpack.c.l.b16 %v331
    %v1438 = vunpack.c.l.b16 %v332
    %v1439 = vunpack.c.l.b16 %v333
    %v1440 = vunpack.c.l.b16 %v334
    %v1441 = vunpack.c.l.b16 %v335
    %v1442 = vunpack.c.l.b16 %v336
    %v1443 = vunpack.c.l.b16 %v337
    %v1444 = vunpack.c.l.b16 %v338
    %v1445 = vunpack.c.l.b16 %v339
    %v1446 = vunpack.c.l.b16 %v340
    %v1447 = vunpack.c.l.b16 %v341
    %v1448 = vunpack.c.l.b16 %v342
    %v1449 = vunpack.c.l.b16 %v343
    %v1450 = vunpack.c.l.b16 %v344
    %v1451 = vunpack.c.l.b16 %v345
    %v1452 = vunpack.c.l.b16 %v346
    %v1453 = vunpack.c.l.b16 %v347
    %v1454 = vunpack.c.l.b16 %v348
    %v1455 = vunpack.c.l.b16 %v349
    %v1456 = vunpack.c.l.b16 %v350
    %v1457 = vunpack.c.l.b16 %v351
    %v1458 = vunpack.c.l.b16 %v352
    %v1459 = vunpack.c.l.b16 %v353
    %v1460 = vunpack.c.l.b16 %v354
    %v1461 = vunpack.c.l.b16 %v355
    %v1462 = vunpack.c.l.b16 %v356
    %v1463 = vunpack.c.l.b16 %v357
    %v1464 = vunpack.c.l.b16 %v358
    %v1465 = vunpack.c.l.b16 %v359
    %v1466 = vunpack.c.l.b16 %v360
    %v1467 = vunpack.c.l.b16 %v361
    %v1468 = vunpack.c.l.b16 %v362
    %v1469 = vunpack.c.l.b16 %v363
    %v1470 = vunpack.c.l.b16 %v364
    %v1471 = vunpack.c.l.b16 %v365
    %v1472 = vunpack.c.l.b16 %v366
    %v1473 = vunpack.c.l.b16 %v367
    %v1474 = vunpack.c.l.b16 %v368
    %v1475 = vunpack.c.l.b16 %v369
    %v1476 = vunpack.c.l.b16 %v370
    %v1477 = vunpack.c.l.b16 %v371
    %v1478 = vunpack.c.l.b16 %v372
    %v1479 = vunpack.c.l.b16 %v373
    %v1480 = vunpack.c.l.b16 %v374
    %v1481 = vunpack.c.l.b16 %v375
    %v1482 = vunpack.c.l.b16 %v376
    %v1483 = vunpack.c.l.b16 %v377
    %v1484 = vunpack.c.l.b16 %v378
    %v1485 = vunpack.c.l.b16 %v379
    %v1486 = vunpack.c.l.b16 %v380
    %v1487 = vunpack.c.l.b16 %v381
    %v1488 = vunpack.c.l.b16 %v382
    %v1489 = vunpack.c.l.b16 %v383
    %v1490 = vunpack.c.l.b16 %v384
    %v1491 = vunpack.c.l.b16 %v385
    %v1492 = vunpack.c.l.b16 %v386
    %v1493 = vunpack.c.l.b16 %v387
    %v1494 = vunpack.c.l.b16 %v388
    %v1495 = vunpack.c.l.b16 %v389
    %v1496 = vunpack.c.l.b16 %v390
    %v1497 = vunpack.c.l.b16 %v391
    %v1498 = vunpack.c.l.b16 %v392
    %v1499 = vunpack.c.l.b16 %v393
    %v1500 = vunpack.c.l.b16 %v394
    %v1501 = vunpack.c.l.b16 %v395
    %v1502 = vunpack.c.l.b16 %v396
    %v1503 = vunpack.c.l.b16 %v397
    %v1504 = vunpack.c.l.b16 %v398
    %v1505 = vunpack.c.l.b16 %v399
    %v1506 = vunpack.c.l.b16 %v400
    %v1507 = vunpack.c.l.b16 %v401
    %v1508 = vunpack.c.l.b16 %v402
    %v1509 = vunpack.c.l.b16 %v403
    %v1510 = vunpack.c.l.b16 %v404
    %v1511 = vunpack.c.l.b16 %v405
    %v1512 = vunpack.c.l.b16 %v406
    %v1513 = vunpack.c.l.b16 %v407
    %v1514 = vunpack.c.l.b16 %v408
    %v1515 = vunpack.c.l.b16 %v409
    %v1516 = vunpack.c.l.b16 %v410
    %v1517 = vunpack.c.l.b16 %v411
    %v1518 = vunpack.c.l.b16 %v412
    %v1519 = vunpack.c.l.b16 %v413
    %v1520 = vunpack.c.l.b16 %v414
    %v1521 = vunpack.c.l.b16 %v415
    %v1522 = vunpack.c.l.b16 %v416
    %v1523 = vunpack.c.l.b16 %v417
    %v1524 = vunpack.c.l.b16 %v418
    %v1525 = vunpack.c.l.b16 %v419
    %v1526 = vunpack.c.l.b16 %v420
    %v1527 = vunpack.c.l.b16 %v421
    %v1528 = vunpack.c.l.b16 %v422
    %v1529 = vunpack.c.l.b16 %v423
    %v1530 = vunpack.c.l.b16 %v424
    %v1531 = vunpack.c.l.b16 %v425
    %v1532 = vunpack.c.l.b16 %v426
    %v1533 = vunpack.c.l.b16 %v427
    %v1534 = vunpack.c.l.b16 %v428
    %v1535 = vunpack.c.l.b16 %v429
    %v1536 = vunpack.c.l.b16 %v430
    %v1537 = vunpack.c.l.b16 %v431
    %v1538 = vunpack.c.l.b16 %v432
    %v1539 = vunpack.c.l.b16 %v433
    %v1540 = vunpack.c.l.b16 %v434
    %v1541 = vunpack.c.l.b16 %v435
    %v1542 = vunpack.c.l.b16 %v436
    %v1543 = vunpack.c.l.b16 %v437
    %v1544 = vunpack.c.l.b16 %v438
    %v1545 = vunpack.c.l.b16 %v439
    %v1546 = vunpack.c.l.b16 %v440
    %v1547 = vunpack.c.l.b16 %v441
    %v1548 = vunpack.c.l.b16 %v442
    %v1549 = vunpack.c.l.b16 %v443
    %v1550 = vunpack.c.l.b16 %v444
    %v1551 = vunpack.c.l.b16 %v445
    %v1552 = vunpack.c.l.b16 %v446
    %v1553 = vunpack.c.l.b16 %v447
    %v1554 = vunpack.c.l.b16 %v448
    %v1555 = vunpack.c.l.b16 %v449
    %v1556 = vunpack.c.l.b16 %v450
    %v1557 = vunpack.c.l.b16 %v451
    %v1558 = vunpack.c.l.b16 %v452
    %v1559 = vunpack.c.l.b16 %v453
    %v1560 = vunpack.c.l.b16 %v454
    %v1561 = vunpack.c.l.b16 %v455
    %v1562 = vunpack.c.l.b16 %v456
    %v1563 = vunpack.c.l.b16 %v457
    %v1564 = vunpack.c.l.b16 %v458
    %v1565 = vunpack.c.l.b16 %v459
    %v1566 = vunpack.c.l.b16 %v460
    %v1567 = vunpack.c.l.b16 %v461
    %v1568 = vunpack.c.l.b16 %v462
    %v1569 = vunpack.c.l.b16 %v463
    %v1570 = vunpack.c.l.b16 %v464
    %v1571 = vunpack.c.l.b16 %v465
    %v1572 = vunpack.c.l.b16 %v466
    %v1573 = vunpack.c.l.b16 %v467
    %v1574 = vunpack.c.l.b16 %v468
    %v1575 = vunpack.c.l.b16 %v469
    %v1576 = vunpack.c.l.b16 %v470
    %v1577 = vunpack.c.l.b16 %v471
    %v1578 = vunpack.c.l.b16 %v472
    %v1579 = vunpack.c.l.b16 %v473
    %v1580 = vpack.c.b16 %v1133, %v1132
    %v1581 = vpack.c.b16 %v1135, %v1134
    %v1582 = vpack.c.b16 %v1137, %v1136
    %v1583 = vpack.c.b16 %v1139, %v1138
    %v1584 = vpack.c.b16 %v1141, %v1140
    %v1585 = vpack.c.b16 %v1143, %v1142
    %v1586 = vpack.c.b16 %v1145, %v1144
    %v1587 = vpack.c.b16 %v1147, %v1146
    %v1588 = vpack.c.b16 %v1149, %v1148
    %v1589 = vpack.c.b16 %v1151, %v1150
    %v1590 = vpack.c.b16 %v1153, %v1152
    %v1591 = vpack.c.b16 %v1155, %v1154
    %v1592 = vpack.c.b16 %v1157, %v1156
    %v1593 = vpack.c.b16 %v1159, %v1158
    %v1594 = vpack.c.b16 %v1161, %v1160
    %v1595 = vpack.c.b16 %v1163, %v1162
    %v1596 = vpack.c.b16 %v1165, %v1164
    %v1597 = vpack.c.b16 %v1167, %v1166
    %v1598 = vpack.c.b16 %v1169, %v1168
    %v1599 = vpack.c.b16 %v1171, %v1170
    %v1600 = vpack.c.b16 %v1173, %v1172
    %v1601 = vpack.c.b16 %v1175, %v1174
    %v1602 = vpack.c.b16 %v1177, %v1176
    %v1603 = vpack.c.b16 %v1179, %v1178
    %v1604 = vpack.c.b16 %v1181, %v1180
    %v1605 = vpack.c.b16 %v1183, %v1182
    %v1606 = vpack.c.b16 %v1185, %v1184
    %v1607 = vpack.c.b16 %v1187, %v1186
    %v1608 = vpack.c.b16 %v1189, %v1188
    %v1609 = vpack.c.b16 %v1191, %v1190
    %v1610 = vpack.c.b16 %v1193, %v1192
    %v1611 = vpack.c.b16 %v1195, %v1194
    %v1612 = vpack.c.b16 %v1197, %v1196
    %v1613 = vpack.c.b16 %v1199, %v1198
    %v1614 = vpack.c.b16 %v1201, %v1200
    %v1615 = vpack.c.b16 %v1203, %v1202
    %v1616 = vpack.c.b16 %v1205, %v1204
    %v1617 = vpack.c.b16 %v1207, %v1206
    %v1618 = vpack.c.b16 %v1209, %v1208
    %v1619 = vpack.c.b16 %v1211, %v1210
    %v1620 = vpack.c.b16 %v1213, %v1212
    %v1621 = vpack.c.b16 %v1215, %v1214
    %v1622 = vpack.c.b16 %v1217, %v1216
    %v1623 = vpack.c.b16 %v1219, %v1218
    %v1624 = vpack.c.b16 %v1221, %v1220
    %v1625 = vpack.c.b16 %v1223, %v1222
    %v1626 = vpack.c.b16 %v1225, %v1224
    %v1627 = vpack.c.b16 %v1227, %v1226
    %v1628 = vpack.c.b16 %v1229, %v1228
    %v1629 = vpack.c.b16 %v1231, %v1230
    %v1630 = vpack.c.b16 %v1233, %v1232
    %v1631 = vpack.c.b16 %v1235, %v1234
    %v1632 = vpack.c.b16 %v1237, %v1236
    %v1633 = vpack.c.b16 %v1239, %v1238
    %v1634 = vpack.c.b16 %v1241, %v1240
    %v1635 = vpack.c.b16 %v1243, %v1242
    %v1636 = vpack.c.b16 %v1245, %v1244
    %v1637 = vpack.c.b16 %v1247, %v1246
    %v1638 = vpack.c.b16 %v1249, %v1248
    %v1639 = vpack.c.b16 %v1251, %v1250
    %v1640 = vpack.c.b16 %v1253, %v1252
    %v1641 = vpack.c.b16 %v1255, %v1254
    %v1642 = vpack.c.b16 %v1257, %v1256
    %v1643 = vpack.c.b16 %v1259, %v1258
    %v1644 = vpack.c.b16 %v1261, %v1260
    %v1645 = vpack.c.b16 %v1263, %v1262
    %v1646 = vpack.c.b16 %v1265, %v1264
    %v1647 = vpack.c.b16 %v1267, %v1266
    %v1648 = vpack.c.b16 %v1269, %v1268
    %v1649 = vpack.c.b16 %v1271, %v1270
    %v1650 = vpack.c.b16 %v1273, %v1272
    %v1651 = vpack.c.b16 %v1275, %v1274
    %v1652 = vpack.c.b16 %v1277, %v1276
    %v1653 = vpack.c.b16 %v1279, %v1278
    %v1654 = vpack.c.b16 %v1281, %v1280
    %v1655 = vpack.c.b16 %v1283, %v1282
    %v1656 = vpack.c.b16 %v1285, %v1284
    %v1657 = vpack.c.b16 %v1287, %v1286
    %v1658 = vpack.c.b16 %v1289, %v1288
    %v1659 = vpack.c.b16 %v1291, %v1290
    %v1660 = vpack.c.b16 %v1293, %v1292
    %v1661 = vpack.c.b16 %v1295, %v1294
    %v1662 = vpack.c.b16 %v1297, %v1296
    %v1663 = vpack.c.b16 %v1299, %v1298
    %v1664 = vpack.c.b16 %v1301, %v1300
    %v1665 = vpack.c.b16 %v1303, %v1302
    %v1666 = vpack.c.b16 %v1305, %v1304
    %v1667 = vpack.c.b16 %v1307, %v1306
    %v1668 = vpack.c.b16 %v1309, %v1308
    %v1669 = vpack.c.b16 %v1311, %v1310
    %v1670 = vpack.c.b16 %v1313, %v1312
    %v1671 = vpack.c.b16 %v1315, %v1314
    %v1672 = vpack.c.b16 %v1317, %v1316
    %v1673 = vpack.c.b16 %v1319, %v1318
    %v1674 = vpack.c.b16 %v1321, %v1320
    %v1675 = vpack.c.b16 %v1323, %v1322
    %v1676 = vpack.c.b16 %v1325, %v1324
    %v1677 = vpack.c.b16 %v1327, %v1326
    %v1678 = vpack.c.b16 %v1329, %v1328
    %v1679 = vpack.c.b16 %v1331, %v1330
    %v1680 = vpack.c.b16 %v1333, %v1332
    %v1681 = vpack.c.b16 %v1335, %v1334
    %v1682 = vpack.c.b16 %v1337, %v1336
    %v1683 = vpack.c.b16 %v1339, %v1338
    %v1684 = vpack.c.b16 %v1341, %v1340
    %v1685 = vpack.c.b16 %v1343, %v1342
    %v1686 = vpack.c.b16 %v1345, %v1344
    %v1687 = vpack.c.b16 %v1347, %v1346
    %v1688 = vpack.c.b16 %v1349, %v1348
    %v1689 = vpack.c.b16 %v1351, %v1350
    %v1690 = vpack.c.b16 %v1353, %v1352
    %v1691 = vpack.c.b16 %v1355, %v1354
    %v1692 = vpack.c.b16 %v1357, %v1356
    %v1693 = vpack.c.b16 %v1359, %v1358
    %v1694 = vpack.c.b16 %v1361, %v1360
    %v1695 = vpack.c.b16 %v1363, %v1362
    %v1696 = vpack.c.b16 %v1365, %v1364
    %v1697 = vpack.c.b16 %v1367, %v1366
    %v1698 = vpack.c.b16 %v1369, %v1368
    %v1699 = vpack.c.b16 %v1371, %v1370
    %v1700 = vpack.c.b16 %v1373, %v1372
    %v1701 = vpack.c.b16 %v1375, %v1374
    %v1702 = vpack.c.b16 %v1377, %v1376
    %v1703 = vpack.c.b16 %v1379, %v1378
    %v1704 = vpack.c.b16 %v1381, %v1380
    %v1705 = vpack.c.b16 %v1383, %v1382
    %v1706 = vpack.c.b16 %v1385, %v1384
    %v1707 = vpack.c.b16 %v1387, %v1386
    %v1708 = vpack.c.b16 %v1389, %v1388
    %v1709 = vpack.c.b16 %v1391, %v1390
    %v1710 = vpack.c.b16 %v1393, %v1392
    %v1711 = vpack.c.b16 %v1395, %v1394
    %v1712 = vpack.c.b16 %v1397, %v1396
    %v1713 = vpack.c.b16 %v1399, %v1398
    %v1714 = vpack.c.b16 %v1401, %v1400
    %v1715 = vpack.c.b16 %v1403, %v1402
    %v1716 = vpack.c.b16 %v1405, %v1404
    %v1717 = vpack.c.b16 %v1407, %v1406
    %v1718 = vpack.c.b16 %v1409, %v1408
    %v1719 = vpack.c.b16 %v1411, %v1410
    %v1720 = vpack.c.b16 %v1413, %v1412
    %v1721 = vpack.c.b16 %v1415, %v1414
    %v1722 = vpack.c.b16 %v1417, %v1416
    %v1723 = vpack.c.b16 %v1419, %v1418
    %v1724 = vpack.c.b16 %v1421, %v1420
    %v1725 = vpack.c.b16 %v1423, %v1422
    %v1726 = vpack.c.b16 %v1425, %v1424
    %v1727 = vpack.c.b16 %v1427, %v1426
    %v1728 = vpack.c.b16 %v1429, %v1428
    %v1729 = vpack.c.b16 %v1431, %v1430
    %v1730 = vpack.c.b16 %v1433, %v1432
    %v1731 = vpack.c.b16 %v1435, %v1434
    %v1732 = vpack.c.b16 %v1437, %v1436
    %v1733 = vpack.c.b16 %v1439, %v1438
    %v1734 = vpack.c.b16 %v1441, %v1440
    %v1735 = vpack.c.b16 %v1443, %v1442
    %v1736 = vpack.c.b16 %v1445, %v1444
    %v1737 = vpack.c.b16 %v1447, %v1446
    %v1738 = vpack.c.b16 %v1449, %v1448
    %v1739 = vpack.c.b16 %v1451, %v1450
    %v1740 = vpack.c.b16 %v1453, %v1452
    %v1741 = vpack.c.b16 %v1455, %v1454
    %v1742 = vpack.c.b16 %v1457, %v1456
    %v1743 = vpack.c.b16 %v1459, %v1458
    %v1744 = vpack.c.b16 %v1461, %v1460
    %v1745 = vpack.c.b16 %v1463, %v1462
    %v1746 = vpack.c.b16 %v1465, %v1464
    %v1747 = vpack.c.b16 %v1467, %v1466
    %v1748 = vpack.c.b16 %v1469, %v1468
    %v1749 = vpack.c.b16 %v1471, %v1470
    %v1750 = vpack.c.b16 %v1473, %v1472
    %v1751 = vpack.c.b16 %v1475, %v1474
    %v1752 = vpack.c.b16 %v1477, %v1476
    %v1753 = vpack.c.b16 %v1479, %v1478
    %v1754 = vpack.c.b16 %v1481, %v1480
    %v1755 = vpack.c.b16 %v1483, %v1482
    %v1756 = vpack.c.b16 %v1485, %v1484
    %v1757 = vpack.c.b16 %v1487, %v1486
    %v1758 = vpack.c.b16 %v1489, %v1488
    %v1759 = vpack.c.b16 %v1491, %v1490
    %v1760 = vpack.c.b16 %v1493, %v1492
    %v1761 = vpack.c.b16 %v1495, %v1494
    %v1762 = vpack.c.b16 %v1497, %v1496
    %v1763 = vpack.c.b16 %v1499, %v1498
    %v1764 = vpack.c.b16 %v1501, %v1500
    %v1765 = vpack.c.b16 %v1503, %v1502
    %v1766 = vpack.c.b16 %v1505, %v1504
    %v1767 = vpack.c.b16 %v1507, %v1506
    %v1768 = vpack.c.b16 %v1509, %v1508
    %v1769 = vpack.c.b16 %v1511, %v1510
    %v1770 = vpack.c.b16 %v1513, %v1512
    %v1771 = vpack.c.b16 %v1515, %v1514
    %v1772 = vpack.c.b16 %v1517, %v1516
    %v1773 = vpack.c.b16 %v1519, %v1518
    %v1774 = vpack.c.b16 %v1521, %v1520
    %v1775 = vpack.c.b16 %v1523, %v1522
    %v1776 = vpack.c.b16 %v1525, %v1524
    %v1777 = vpack.c.b16 %v1527, %v1526
    %v1778 = vpack.c.b16 %v1529, %v1528
    %v1779 = vpack.c.b16 %v1531, %v1530
    %v1780 = vpack.c.b16 %v1533, %v1532
    %v1781 = vpack.c.b16 %v1535, %v1534
    %v1782 = vpack.c.b16 %v1537, %v1536
    %v1783 = vpack.c.b16 %v1539, %v1538
    %v1784 = vpack.c.b16 %v1541, %v1540
    %v1785 = vpack.c.b16 %v1543, %v1542
    %v1786 = vpack.c.b16 %v1545, %v1544
    %v1787 = vpack.c.b16 %v1547, %v1546
    %v1788 = vpack.c.b16 %v1549, %v1548
    %v1789 = vpack.c.b16 %v1551, %v1550
    %v1790 = vpack.c.b16 %v1553, %v1552
    %v1791 = vpack.c.b16 %v1555, %v1554
    %v1792 = vpack.c.b16 %v1557, %v1556
    %v1793 = vpack.c.b16 %v1559, %v1558
    %v1794 = vpack.c.b16 %v1561, %v1560
    %v1795 = vpack.c.b16 %v1563, %v1562
    %v1796 = vpack.c.b16 %v1565, %v1564
    %v1797 = vpack.c.b16 %v1567, %v1566
    %v1798 = vpack.c.b16 %v1569, %v1568
    %v1799 = vpack.c.b16 %v1571, %v1570
    %v1800 = vpack.c.b16 %v1573, %v1572
    %v1801 = vpack.c.b16 %v1575, %v1574
    %v1802 = vpack.c.b16 %v1577, %v1576
    %v1803 = vpack.c.b16 %v1579, %v1578
    %2028 = vmatprep.subr.bf16.mxu0 0
    %2029 = vmatpush1.bf16.msra.mxu0 %v1580
    %2030 = vmatprep.subr.bf16.mxu0 0
    %2031 = vmatpush1.bf16.msra.mxu0 %v1581
    %2032 = vmatprep.subr.bf16.mxu0 0
    %2033 = vmatpush1.bf16.msra.mxu0 %v1582
    %2034 = vmatprep.subr.bf16.mxu0 0
    %2035 = vmatpush1.bf16.msra.mxu0 %v1583
    %2036 = vmatprep.subr.bf16.mxu0 0
    %2037 = vmatpush1.bf16.msra.mxu0 %v1584
    %2038 = vmatprep.subr.bf16.mxu0 0
    %2039 = vmatpush1.bf16.msra.mxu0 %v1585
    %2040 = vmatprep.subr.bf16.mxu0 0
    %2041 = vmatpush1.bf16.msra.mxu0 %v1586
    %2042 = vmatprep.subr.bf16.mxu0 0
    %2043 = vmatpush1.bf16.msra.mxu0 %v1587
    %2044 = vmatprep.subr.bf16.mxu0 0
    %2045 = vmatpush1.bf16.msra.mxu0 %v1588
    %2046 = vmatprep.subr.bf16.mxu0 0
    %2047 = vmatpush1.bf16.msra.mxu0 %v1589
    %2048 = vmatprep.subr.bf16.mxu0 0
    %2049 = vmatpush1.bf16.msra.mxu0 %v1590
    %2050 = vmatprep.subr.bf16.mxu0 0
    %2051 = vmatpush1.bf16.msra.mxu0 %v1591
    %2052 = vmatprep.subr.bf16.mxu0 0
    %2053 = vmatpush1.bf16.msra.mxu0 %v1592
    %2054 = vmatprep.subr.bf16.mxu0 0
    %2055 = vmatpush1.bf16.msra.mxu0 %v1593
    %2056 = vmatprep.subr.bf16.mxu0 0
    %2057 = vmatpush1.bf16.msra.mxu0 %v1594
    %2058 = vmatprep.subr.bf16.mxu0 0
    %2059 = vmatpush1.bf16.msra.mxu0 %v1595
    %2060 = vmatprep.mubr.bf16.mxu0 %v522
    %2061 = vmatmul.mubr.bf16.gmra.mrb[0].mxu0 %v508
    %v2062 = vpop.f32.mrb[0].mxu0
    %v2063 = vadd.f32 %v479, %v2062
    %v2064 = vpop.f32.mrb[0].mxu0
    %v2065 = vpop.f32.mrb[0].mxu0
    %v2066 = vpop.f32.mrb[0].mxu0
    %2067 = vdwg.mxu0
    %2068 = vmatprep.subr.bf16.mxu0 0
    %2069 = vmatpush1.bf16.msra.mxu0 %v1596
    %2070 = vmatprep.subr.bf16.mxu0 0
    %2071 = vmatpush1.bf16.msra.mxu0 %v1597
    %2072 = vmatprep.subr.bf16.mxu0 0
    %2073 = vmatpush1.bf16.msra.mxu0 %v1598
    %2074 = vmatprep.subr.bf16.mxu0 0
    %2075 = vmatpush1.bf16.msra.mxu0 %v1599
    %2076 = vmatprep.subr.bf16.mxu0 0
    %2077 = vmatpush1.bf16.msra.mxu0 %v1600
    %2078 = vmatprep.subr.bf16.mxu0 0
    %2079 = vmatpush1.bf16.msra.mxu0 %v1601
    %2080 = vmatprep.subr.bf16.mxu0 0
    %2081 = vmatpush1.bf16.msra.mxu0 %v1602
    %2082 = vmatprep.subr.bf16.mxu0 0
    %2083 = vmatpush1.bf16.msra.mxu0 %v1603
    %2084 = vmatprep.subr.bf16.mxu0 0
    %2085 = vmatpush1.bf16.msra.mxu0 %v1604
    %2086 = vmatprep.subr.bf16.mxu0 0
    %2087 = vmatpush1.bf16.msra.mxu0 %v1605
    %2088 = vmatprep.subr.bf16.mxu0 0
    %2089 = vmatpush1.bf16.msra.mxu0 %v1606
    %2090 = vmatprep.subr.bf16.mxu0 0
    %2091 = vmatpush1.bf16.msra.mxu0 %v1607
    %2092 = vmatprep.subr.bf16.mxu0 0
    %2093 = vmatpush1.bf16.msra.mxu0 %v1608
    %2094 = vmatprep.subr.bf16.mxu0 0
    %2095 = vmatpush1.bf16.msra.mxu0 %v1609
    %2096 = vmatprep.subr.bf16.mxu0 0
    %2097 = vmatpush1.bf16.msra.mxu0 %v1610
    %2098 = vmatprep.subr.bf16.mxu0 0
    %2099 = vmatpush1.bf16.msra.mxu0 %v1611
    %2100 = vmatprep.mubr.bf16.mxu0 %v532
    %2101 = vmatmul.mubr.bf16.gmra.mrb[0].mxu0 %v530
    %v2102 = vpop.f32.mrb[0].mxu0
    %v2103 = vadd.f32 %v2063, %v2102
    %v2104 = vpop.f32.mrb[0].mxu0
    %v2105 = vpop.f32.mrb[0].mxu0
    %v2106 = vpop.f32.mrb[0].mxu0
    %2107 = vdwg.mxu0
    %2108 = vmatprep.subr.bf16.mxu0 0
    %2109 = vmatpush1.bf16.msra.mxu0 %v1612
    %2110 = vmatprep.subr.bf16.mxu0 0
    %2111 = vmatpush1.bf16.msra.mxu0 %v1613
    %2112 = vmatprep.subr.bf16.mxu0 0
    %2113 = vmatpush1.bf16.msra.mxu0 %v1614
    %2114 = vmatprep.subr.bf16.mxu0 0
    %2115 = vmatpush1.bf16.msra.mxu0 %v1615
    %2116 = vmatprep.subr.bf16.mxu0 0
    %2117 = vmatpush1.bf16.msra.mxu0 %v1616
    %2118 = vmatprep.subr.bf16.mxu0 0
    %2119 = vmatpush1.bf16.msra.mxu0 %v1617
    %2120 = vmatprep.subr.bf16.mxu0 0
    %2121 = vmatpush1.bf16.msra.mxu0 %v1618
    %2122 = vmatprep.subr.bf16.mxu0 0
    %2123 = vmatpush1.bf16.msra.mxu0 %v1619
    %2124 = vmatprep.subr.bf16.mxu0 0
    %2125 = vmatpush1.bf16.msra.mxu0 %v1620
    %2126 = vmatprep.subr.bf16.mxu0 0
    %2127 = vmatpush1.bf16.msra.mxu0 %v1621
    %2128 = vmatprep.subr.bf16.mxu0 0
    %2129 = vmatpush1.bf16.msra.mxu0 %v1622
    %2130 = vmatprep.subr.bf16.mxu0 0
    %2131 = vmatpush1.bf16.msra.mxu0 %v1623
    %2132 = vmatprep.subr.bf16.mxu0 0
    %2133 = vmatpush1.bf16.msra.mxu0 %v1624
    %2134 = vmatprep.subr.bf16.mxu0 0
    %2135 = vmatpush1.bf16.msra.mxu0 %v1625
    %2136 = vmatprep.subr.bf16.mxu0 0
    %2137 = vmatpush1.bf16.msra.mxu0 %v1626
    %2138 = vmatprep.subr.bf16.mxu0 0
    %2139 = vmatpush1.bf16.msra.mxu0 %v1627
    %2140 = vmatprep.mubr.bf16.mxu0 %v529
    %2141 = vmatmul.mubr.bf16.gmra.mrb[0].mxu0 %v515
    %v2142 = vpop.f32.mrb[0].mxu0
    %v2143 = vadd.f32 %v2103, %v2142
    %v2144 = vpop.f32.mrb[0].mxu0
    %v2145 = vpop.f32.mrb[0].mxu0
    %v2146 = vpop.f32.mrb[0].mxu0
    %2147 = vdwg.mxu0
    %2148 = vmatprep.subr.bf16.mxu0 0
    %2149 = vmatpush1.bf16.msra.mxu0 %v1628
    %2150 = vmatprep.subr.bf16.mxu0 0
    %2151 = vmatpush1.bf16.msra.mxu0 %v1629
    %2152 = vmatprep.subr.bf16.mxu0 0
    %2153 = vmatpush1.bf16.msra.mxu0 %v1630
    %2154 = vmatprep.subr.bf16.mxu0 0
    %2155 = vmatpush1.bf16.msra.mxu0 %v1631
    %2156 = vmatprep.subr.bf16.mxu0 0
    %2157 = vmatpush1.bf16.msra.mxu0 %v1632
    %2158 = vmatprep.subr.bf16.mxu0 0
    %2159 = vmatpush1.bf16.msra.mxu0 %v1633
    %2160 = vmatprep.subr.bf16.mxu0 0
    %2161 = vmatpush1.bf16.msra.mxu0 %v1634
    %2162 = vmatprep.subr.bf16.mxu0 0
    %2163 = vmatpush1.bf16.msra.mxu0 %v1635
    %2164 = vmatprep.subr.bf16.mxu0 0
    %2165 = vmatpush1.bf16.msra.mxu0 %v1636
    %2166 = vmatprep.subr.bf16.mxu0 0
    %2167 = vmatpush1.bf16.msra.mxu0 %v1637
    %2168 = vmatprep.subr.bf16.mxu0 0
    %2169 = vmatpush1.bf16.msra.mxu0 %v1638
    %2170 = vmatprep.subr.bf16.mxu0 0
    %2171 = vmatpush1.bf16.msra.mxu0 %v1639
    %2172 = vmatprep.subr.bf16.mxu0 0
    %2173 = vmatpush1.bf16.msra.mxu0 %v1640
    %2174 = vmatprep.subr.bf16.mxu0 0
    %2175 = vmatpush1.bf16.msra.mxu0 %v1641
    %2176 = vmatprep.subr.bf16.mxu0 0
    %2177 = vmatpush1.bf16.msra.mxu0 %v1642
    %2178 = vmatprep.subr.bf16.mxu0 0
    %2179 = vmatpush1.bf16.msra.mxu0 %v1643
    %2180 = vmatprep.mubr.bf16.mxu0 %v533
    %2181 = vmatmul.mubr.bf16.gmra.mrb[0].mxu0 %v531
    %v2182 = vpop.f32.mrb[0].mxu0
    %v2183 = vadd.f32 %v2143, %v2182
    %v2184 = vpop.f32.mrb[0].mxu0
    %v2185 = vpop.f32.mrb[0].mxu0
    %v2186 = vpop.f32.mrb[0].mxu0
    %2187 = vdwg.mxu0
    %2188 = vmatprep.subr.bf16.mxu0 0
    %2189 = vmatpush1.bf16.msra.mxu0 %v1644
    %2190 = vmatprep.subr.bf16.mxu0 0
    %2191 = vmatpush1.bf16.msra.mxu0 %v1645
    %2192 = vmatprep.subr.bf16.mxu0 0
    %2193 = vmatpush1.bf16.msra.mxu0 %v1646
    %2194 = vmatprep.subr.bf16.mxu0 0
    %2195 = vmatpush1.bf16.msra.mxu0 %v1647
    %2196 = vmatprep.subr.bf16.mxu0 0
    %2197 = vmatpush1.bf16.msra.mxu0 %v1648
    %2198 = vmatprep.subr.bf16.mxu0 0
    %2199 = vmatpush1.bf16.msra.mxu0 %v1649
    %2200 = vmatprep.subr.bf16.mxu0 0
    %2201 = vmatpush1.bf16.msra.mxu0 %v1650
    %2202 = vmatprep.subr.bf16.mxu0 0
    %2203 = vmatpush1.bf16.msra.mxu0 %v1651
    %2204 = vmatprep.subr.bf16.mxu0 0
    %2205 = vmatpush1.bf16.msra.mxu0 %v1652
    %2206 = vmatprep.subr.bf16.mxu0 0
    %2207 = vmatpush1.bf16.msra.mxu0 %v1653
    %2208 = vmatprep.subr.bf16.mxu0 0
    %2209 = vmatpush1.bf16.msra.mxu0 %v1654
    %2210 = vmatprep.subr.bf16.mxu0 0
    %2211 = vmatpush1.bf16.msra.mxu0 %v1655
    %2212 = vmatprep.subr.bf16.mxu0 0
    %2213 = vmatpush1.bf16.msra.mxu0 %v1656
    %2214 = vmatprep.subr.bf16.mxu0 0
    %2215 = vmatpush1.bf16.msra.mxu0 %v1657
    %2216 = vmatprep.subr.bf16.mxu0 0
    %2217 = vmatpush1.bf16.msra.mxu0 %v1658
    %2218 = vmatprep.subr.bf16.mxu0 0
    %2219 = vmatpush1.bf16.msra.mxu0 %v1659
    %2220 = vmatprep.mubr.bf16.mxu0 %v571
    %2221 = vmatmul.mubr.bf16.gmra.mrb[0].mxu0 %v557
    %v2222 = vpop.f32.mrb[0].mxu0
    %v2223 = vadd.f32 %v2183, %v2222
    %v2224 = vpop.f32.mrb[0].mxu0
    %v2225 = vpop.f32.mrb[0].mxu0
    %v2226 = vpop.f32.mrb[0].mxu0
    %2227 = vdwg.mxu0
    %2228 = vmatprep.subr.bf16.mxu0 0
    %2229 = vmatpush1.bf16.msra.mxu0 %v1660
    %2230 = vmatprep.subr.bf16.mxu0 0
    %2231 = vmatpush1.bf16.msra.mxu0 %v1661
    %2232 = vmatprep.subr.bf16.mxu0 0
    %2233 = vmatpush1.bf16.msra.mxu0 %v1662
    %2234 = vmatprep.subr.bf16.mxu0 0
    %2235 = vmatpush1.bf16.msra.mxu0 %v1663
    %2236 = vmatprep.subr.bf16.mxu0 0
    %2237 = vmatpush1.bf16.msra.mxu0 %v1664
    %2238 = vmatprep.subr.bf16.mxu0 0
    %2239 = vmatpush1.bf16.msra.mxu0 %v1665
    %2240 = vmatprep.subr.bf16.mxu0 0
    %2241 = vmatpush1.bf16.msra.mxu0 %v1666
    %2242 = vmatprep.subr.bf16.mxu0 0
    %2243 = vmatpush1.bf16.msra.mxu0 %v1667
    %2244 = vmatprep.subr.bf16.mxu0 0
    %2245 = vmatpush1.bf16.msra.mxu0 %v1668
    %2246 = vmatprep.subr.bf16.mxu0 0
    %2247 = vmatpush1.bf16.msra.mxu0 %v1669
    %2248 = vmatprep.subr.bf16.mxu0 0
    %2249 = vmatpush1.bf16.msra.mxu0 %v1670
    %2250 = vmatprep.subr.bf16.mxu0 0
    %2251 = vmatpush1.bf16.msra.mxu0 %v1671
    %2252 = vmatprep.subr.bf16.mxu0 0
    %2253 = vmatpush1.bf16.msra.mxu0 %v1672
    %2254 = vmatprep.subr.bf16.mxu0 0
    %2255 = vmatpush1.bf16.msra.mxu0 %v1673
    %2256 = vmatprep.subr.bf16.mxu0 0
    %2257 = vmatpush1.bf16.msra.mxu0 %v1674
    %2258 = vmatprep.subr.bf16.mxu0 0
    %2259 = vmatpush1.bf16.msra.mxu0 %v1675
    %2260 = vmatprep.mubr.bf16.mxu0 %v581
    %2261 = vmatmul.mubr.bf16.gmra.mrb[0].mxu0 %v579
    %v2262 = vpop.f32.mrb[0].mxu0
    %v2263 = vadd.f32 %v2223, %v2262
    %v2264 = vpop.f32.mrb[0].mxu0
    %v2265 = vpop.f32.mrb[0].mxu0
    %v2266 = vpop.f32.mrb[0].mxu0
    %2267 = vdwg.mxu0
    %2268 = vmatprep.subr.bf16.mxu0 0
    %2269 = vmatpush1.bf16.msra.mxu0 %v1676
    %2270 = vmatprep.subr.bf16.mxu0 0
    %2271 = vmatpush1.bf16.msra.mxu0 %v1677
    %2272 = vmatprep.subr.bf16.mxu0 0
    %2273 = vmatpush1.bf16.msra.mxu0 %v1678
    %2274 = vmatprep.subr.bf16.mxu0 0
    %2275 = vmatpush1.bf16.msra.mxu0 %v1679
    %2276 = vmatprep.subr.bf16.mxu0 0
    %2277 = vmatpush1.bf16.msra.mxu0 %v1680
    %2278 = vmatprep.subr.bf16.mxu0 0
    %2279 = vmatpush1.bf16.msra.mxu0 %v1681
    %2280 = vmatprep.subr.bf16.mxu0 0
    %2281 = vmatpush1.bf16.msra.mxu0 %v1682
    %2282 = vmatprep.subr.bf16.mxu0 0
    %2283 = vmatpush1.bf16.msra.mxu0 %v1683
    %2284 = vmatprep.subr.bf16.mxu0 0
    %2285 = vmatpush1.bf16.msra.mxu0 %v1684
    %2286 = vmatprep.subr.bf16.mxu0 0
    %2287 = vmatpush1.bf16.msra.mxu0 %v1685
    %2288 = vmatprep.subr.bf16.mxu0 0
    %2289 = vmatpush1.bf16.msra.mxu0 %v1686
    %2290 = vmatprep.subr.bf16.mxu0 0
    %2291 = vmatpush1.bf16.msra.mxu0 %v1687
    %2292 = vmatprep.subr.bf16.mxu0 0
    %2293 = vmatpush1.bf16.msra.mxu0 %v1688
    %2294 = vmatprep.subr.bf16.mxu0 0
    %2295 = vmatpush1.bf16.msra.mxu0 %v1689
    %2296 = vmatprep.subr.bf16.mxu0 0
    %2297 = vmatpush1.bf16.msra.mxu0 %v1690
    %2298 = vmatprep.subr.bf16.mxu0 0
    %2299 = vmatpush1.bf16.msra.mxu0 %v1691
    %2300 = vmatprep.mubr.bf16.mxu0 %v578
    %2301 = vmatmul.mubr.bf16.gmra.mrb[0].mxu0 %v564
    %v2302 = vpop.f32.mrb[0].mxu0
    %v2303 = vadd.f32 %v2263, %v2302
    %v2304 = vpop.f32.mrb[0].mxu0
    %v2305 = vpop.f32.mrb[0].mxu0
    %v2306 = vpop.f32.mrb[0].mxu0
    %2307 = vdwg.mxu0
    %2308 = vmatprep.subr.bf16.mxu0 0
    %2309 = vmatpush1.bf16.msra.mxu0 %v1692
    %2310 = vmatprep.subr.bf16.mxu0 0
    %2311 = vmatpush1.bf16.msra.mxu0 %v1693
    %2312 = vmatprep.subr.bf16.mxu0 0
    %2313 = vmatpush1.bf16.msra.mxu0 %v1694
    %2314 = vmatprep.subr.bf16.mxu0 0
    %2315 = vmatpush1.bf16.msra.mxu0 %v1695
    %2316 = vmatprep.subr.bf16.mxu0 0
    %2317 = vmatpush1.bf16.msra.mxu0 %v1696
    %2318 = vmatprep.subr.bf16.mxu0 0
    %2319 = vmatpush1.bf16.msra.mxu0 %v1697
    %2320 = vmatprep.subr.bf16.mxu0 0
    %2321 = vmatpush1.bf16.msra.mxu0 %v1698
    %2322 = vmatprep.subr.bf16.mxu0 0
    %2323 = vmatpush1.bf16.msra.mxu0 %v1699
    %2324 = vmatprep.subr.bf16.mxu0 0
    %2325 = vmatpush1.bf16.msra.mxu0 %v1700
    %2326 = vmatprep.subr.bf16.mxu0 0
    %2327 = vmatpush1.bf16.msra.mxu0 %v1701
    %2328 = vmatprep.subr.bf16.mxu0 0
    %2329 = vmatpush1.bf16.msra.mxu0 %v1702
    %2330 = vmatprep.subr.bf16.mxu0 0
    %2331 = vmatpush1.bf16.msra.mxu0 %v1703
    %2332 = vmatprep.subr.bf16.mxu0 0
    %2333 = vmatpush1.bf16.msra.mxu0 %v1704
    %2334 = vmatprep.subr.bf16.mxu0 0
    %2335 = vmatpush1.bf16.msra.mxu0 %v1705
    %2336 = vmatprep.subr.bf16.mxu0 0
    %2337 = vmatpush1.bf16.msra.mxu0 %v1706
    %2338 = vmatprep.subr.bf16.mxu0 0
    %2339 = vmatpush1.bf16.msra.mxu0 %v1707
    %2340 = vmatprep.mubr.bf16.mxu0 %v582
    %2341 = vmatmul.mubr.bf16.gmra.mrb[0].mxu0 %v580
    %v2342 = vpop.f32.mrb[0].mxu0
    %v2343 = vadd.f32 %v2303, %v2342
    %v2344 = vpop.f32.mrb[0].mxu0
    %v2345 = vpop.f32.mrb[0].mxu0
    %v2346 = vpop.f32.mrb[0].mxu0
    %2347 = vdwg.mxu0
    %2348 = vmatprep.subr.bf16.mxu0 0
    %2349 = vmatpush1.bf16.msra.mxu0 %v1708
    %2350 = vmatprep.subr.bf16.mxu0 0
    %2351 = vmatpush1.bf16.msra.mxu0 %v1709
    %2352 = vmatprep.subr.bf16.mxu0 0
    %2353 = vmatpush1.bf16.msra.mxu0 %v1710
    %2354 = vmatprep.subr.bf16.mxu0 0
    %2355 = vmatpush1.bf16.msra.mxu0 %v1711
    %2356 = vmatprep.subr.bf16.mxu0 0
    %2357 = vmatpush1.bf16.msra.mxu0 %v1712
    %2358 = vmatprep.subr.bf16.mxu0 0
    %2359 = vmatpush1.bf16.msra.mxu0 %v1713
    %2360 = vmatprep.subr.bf16.mxu0 0
    %2361 = vmatpush1.bf16.msra.mxu0 %v1714
    %2362 = vmatprep.subr.bf16.mxu0 0
    %2363 = vmatpush1.bf16.msra.mxu0 %v1715
    %2364 = vmatprep.subr.bf16.mxu0 0
    %2365 = vmatpush1.bf16.msra.mxu0 %v1716
    %2366 = vmatprep.subr.bf16.mxu0 0
    %2367 = vmatpush1.bf16.msra.mxu0 %v1717
    %2368 = vmatprep.subr.bf16.mxu0 0
    %2369 = vmatpush1.bf16.msra.mxu0 %v1718
    %2370 = vmatprep.subr.bf16.mxu0 0
    %2371 = vmatpush1.bf16.msra.mxu0 %v1719
    %2372 = vmatprep.subr.bf16.mxu0 0
    %2373 = vmatpush1.bf16.msra.mxu0 %v1720
    %2374 = vmatprep.subr.bf16.mxu0 0
    %2375 = vmatpush1.bf16.msra.mxu0 %v1721
    %2376 = vmatprep.subr.bf16.mxu0 0
    %2377 = vmatpush1.bf16.msra.mxu0 %v1722
    %2378 = vmatprep.subr.bf16.mxu0 0
    %2379 = vmatpush1.bf16.msra.mxu0 %v1723
    %2380 = vmatprep.mubr.bf16.mxu0 %v620
    %2381 = vmatmul.mubr.bf16.gmra.mrb[0].mxu0 %v606
    %v2382 = vpop.f32.mrb[0].mxu0
    %v2383 = vadd.f32 %v2343, %v2382
    %v2384 = vpop.f32.mrb[0].mxu0
    %v2385 = vpop.f32.mrb[0].mxu0
    %v2386 = vpop.f32.mrb[0].mxu0
    %2387 = vdwg.mxu0
    %2388 = vmatprep.subr.bf16.mxu0 0
    %2389 = vmatpush1.bf16.msra.mxu0 %v1724
    %2390 = vmatprep.subr.bf16.mxu0 0
    %2391 = vmatpush1.bf16.msra.mxu0 %v1725
    %2392 = vmatprep.subr.bf16.mxu0 0
    %2393 = vmatpush1.bf16.msra.mxu0 %v1726
    %2394 = vmatprep.subr.bf16.mxu0 0
    %2395 = vmatpush1.bf16.msra.mxu0 %v1727
    %2396 = vmatprep.subr.bf16.mxu0 0
    %2397 = vmatpush1.bf16.msra.mxu0 %v1728
    %2398 = vmatprep.subr.bf16.mxu0 0
    %2399 = vmatpush1.bf16.msra.mxu0 %v1729
    %2400 = vmatprep.subr.bf16.mxu0 0
    %2401 = vmatpush1.bf16.msra.mxu0 %v1730
    %2402 = vmatprep.subr.bf16.mxu0 0
    %2403 = vmatpush1.bf16.msra.mxu0 %v1731
    %2404 = vmatprep.subr.bf16.mxu0 0
    %2405 = vmatpush1.bf16.msra.mxu0 %v1732
    %2406 = vmatprep.subr.bf16.mxu0 0
    %2407 = vmatpush1.bf16.msra.mxu0 %v1733
    %2408 = vmatprep.subr.bf16.mxu0 0
    %2409 = vmatpush1.bf16.msra.mxu0 %v1734
    %2410 = vmatprep.subr.bf16.mxu0 0
    %2411 = vmatpush1.bf16.msra.mxu0 %v1735
    %2412 = vmatprep.subr.bf16.mxu0 0
    %2413 = vmatpush1.bf16.msra.mxu0 %v1736
    %2414 = vmatprep.subr.bf16.mxu0 0
    %2415 = vmatpush1.bf16.msra.mxu0 %v1737
    %2416 = vmatprep.subr.bf16.mxu0 0
    %2417 = vmatpush1.bf16.msra.mxu0 %v1738
    %2418 = vmatprep.subr.bf16.mxu0 0
    %2419 = vmatpush1.bf16.msra.mxu0 %v1739
    %2420 = vmatprep.mubr.bf16.mxu0 %v630
    %2421 = vmatmul.mubr.bf16.gmra.mrb[0].mxu0 %v628
    %v2422 = vpop.f32.mrb[0].mxu0
    %v2423 = vadd.f32 %v2383, %v2422
    %v2424 = vpop.f32.mrb[0].mxu0
    %v2425 = vpop.f32.mrb[0].mxu0
    %v2426 = vpop.f32.mrb[0].mxu0
    %2427 = vdwg.mxu0
    %2428 = vmatprep.subr.bf16.mxu0 0
    %2429 = vmatpush1.bf16.msra.mxu0 %v1740
    %2430 = vmatprep.subr.bf16.mxu0 0
    %2431 = vmatpush1.bf16.msra.mxu0 %v1741
    %2432 = vmatprep.subr.bf16.mxu0 0
    %2433 = vmatpush1.bf16.msra.mxu0 %v1742
    %2434 = vmatprep.subr.bf16.mxu0 0
    %2435 = vmatpush1.bf16.msra.mxu0 %v1743
    %2436 = vmatprep.subr.bf16.mxu0 0
    %2437 = vmatpush1.bf16.msra.mxu0 %v1744
    %2438 = vmatprep.subr.bf16.mxu0 0
    %2439 = vmatpush1.bf16.msra.mxu0 %v1745
    %2440 = vmatprep.subr.bf16.mxu0 0
    %2441 = vmatpush1.bf16.msra.mxu0 %v1746
    %2442 = vmatprep.subr.bf16.mxu0 0
    %2443 = vmatpush1.bf16.msra.mxu0 %v1747
    %2444 = vmatprep.subr.bf16.mxu0 0
    %2445 = vmatpush1.bf16.msra.mxu0 %v1748
    %2446 = vmatprep.subr.bf16.mxu0 0
    %2447 = vmatpush1.bf16.msra.mxu0 %v1749
    %2448 = vmatprep.subr.bf16.mxu0 0
    %2449 = vmatpush1.bf16.msra.mxu0 %v1750
    %2450 = vmatprep.subr.bf16.mxu0 0
    %2451 = vmatpush1.bf16.msra.mxu0 %v1751
    %2452 = vmatprep.subr.bf16.mxu0 0
    %2453 = vmatpush1.bf16.msra.mxu0 %v1752
    %2454 = vmatprep.subr.bf16.mxu0 0
    %2455 = vmatpush1.bf16.msra.mxu0 %v1753
    %2456 = vmatprep.subr.bf16.mxu0 0
    %2457 = vmatpush1.bf16.msra.mxu0 %v1754
    %2458 = vmatprep.subr.bf16.mxu0 0
    %2459 = vmatpush1.bf16.msra.mxu0 %v1755
    %2460 = vmatprep.mubr.bf16.mxu0 %v627
    %2461 = vmatmul.mubr.bf16.gmra.mrb[0].mxu0 %v613
    %v2462 = vpop.f32.mrb[0].mxu0
    %v2463 = vadd.f32 %v2423, %v2462
    %v2464 = vpop.f32.mrb[0].mxu0
    %v2465 = vpop.f32.mrb[0].mxu0
    %v2466 = vpop.f32.mrb[0].mxu0
    %2467 = vdwg.mxu0
    %2468 = vmatprep.subr.bf16.mxu0 0
    %2469 = vmatpush1.bf16.msra.mxu0 %v1756
    %2470 = vmatprep.subr.bf16.mxu0 0
    %2471 = vmatpush1.bf16.msra.mxu0 %v1757
    %2472 = vmatprep.subr.bf16.mxu0 0
    %2473 = vmatpush1.bf16.msra.mxu0 %v1758
    %2474 = vmatprep.subr.bf16.mxu0 0
    %2475 = vmatpush1.bf16.msra.mxu0 %v1759
    %2476 = vmatprep.subr.bf16.mxu0 0
    %2477 = vmatpush1.bf16.msra.mxu0 %v1760
    %2478 = vmatprep.subr.bf16.mxu0 0
    %2479 = vmatpush1.bf16.msra.mxu0 %v1761
    %2480 = vmatprep.subr.bf16.mxu0 0
    %2481 = vmatpush1.bf16.msra.mxu0 %v1762
    %2482 = vmatprep.subr.bf16.mxu0 0
    %2483 = vmatpush1.bf16.msra.mxu0 %v1763
    %2484 = vmatprep.subr.bf16.mxu0 0
    %2485 = vmatpush1.bf16.msra.mxu0 %v1764
    %2486 = vmatprep.subr.bf16.mxu0 0
    %2487 = vmatpush1.bf16.msra.mxu0 %v1765
    %2488 = vmatprep.subr.bf16.mxu0 0
    %2489 = vmatpush1.bf16.msra.mxu0 %v1766
    %2490 = vmatprep.subr.bf16.mxu0 0
    %2491 = vmatpush1.bf16.msra.mxu0 %v1767
    %2492 = vmatprep.subr.bf16.mxu0 0
    %2493 = vmatpush1.bf16.msra.mxu0 %v1768
    %2494 = vmatprep.subr.bf16.mxu0 0
    %2495 = vmatpush1.bf16.msra.mxu0 %v1769
    %2496 = vmatprep.subr.bf16.mxu0 0
    %2497 = vmatpush1.bf16.msra.mxu0 %v1770
    %2498 = vmatprep.subr.bf16.mxu0 0
    %2499 = vmatpush1.bf16.msra.mxu0 %v1771
    %2500 = vmatprep.mubr.bf16.mxu0 %v631
    %2501 = vmatmul.mubr.bf16.gmra.mrb[0].mxu0 %v629
    %v2502 = vpop.f32.mrb[0].mxu0
    %v2503 = vadd.f32 %v2463, %v2502
    %v2504 = vpop.f32.mrb[0].mxu0
    %v2505 = vpop.f32.mrb[0].mxu0
    %v2506 = vpop.f32.mrb[0].mxu0
    %2507 = vdwg.mxu0
    %2508 = vmatprep.subr.bf16.mxu0 0
    %2509 = vmatpush1.bf16.msra.mxu0 %v1772
    %2510 = vmatprep.subr.bf16.mxu0 0
    %2511 = vmatpush1.bf16.msra.mxu0 %v1773
    %2512 = vmatprep.subr.bf16.mxu0 0
    %2513 = vmatpush1.bf16.msra.mxu0 %v1774
    %2514 = vmatprep.subr.bf16.mxu0 0
    %2515 = vmatpush1.bf16.msra.mxu0 %v1775
    %2516 = vmatprep.subr.bf16.mxu0 0
    %2517 = vmatpush1.bf16.msra.mxu0 %v1776
    %2518 = vmatprep.subr.bf16.mxu0 0
    %2519 = vmatpush1.bf16.msra.mxu0 %v1777
    %2520 = vmatprep.subr.bf16.mxu0 0
    %2521 = vmatpush1.bf16.msra.mxu0 %v1778
    %2522 = vmatprep.subr.bf16.mxu0 0
    %2523 = vmatpush1.bf16.msra.mxu0 %v1779
    %2524 = vmatprep.subr.bf16.mxu0 0
    %2525 = vmatpush1.bf16.msra.mxu0 %v1780
    %2526 = vmatprep.subr.bf16.mxu0 0
    %2527 = vmatpush1.bf16.msra.mxu0 %v1781
    %2528 = vmatprep.subr.bf16.mxu0 0
    %2529 = vmatpush1.bf16.msra.mxu0 %v1782
    %2530 = vmatprep.subr.bf16.mxu0 0
    %2531 = vmatpush1.bf16.msra.mxu0 %v1783
    %2532 = vmatprep.subr.bf16.mxu0 0
    %2533 = vmatpush1.bf16.msra.mxu0 %v1784
    %2534 = vmatprep.subr.bf16.mxu0 0
    %2535 = vmatpush1.bf16.msra.mxu0 %v1785
    %2536 = vmatprep.subr.bf16.mxu0 0
    %2537 = vmatpush1.bf16.msra.mxu0 %v1786
    %2538 = vmatprep.subr.bf16.mxu0 0
    %2539 = vmatpush1.bf16.msra.mxu0 %v1787
    %2540 = vmatprep.mubr.bf16.mxu0 %v653
    %2541 = vmatmul.mubr.bf16.gmra.mrb[0].mxu0 %v646
    %v2542 = vpop.f32.mrb[0].mxu0
    %v2543 = vadd.f32 %v2503, %v2542
    %v2544 = vpop.f32.mrb[0].mxu0
    %v2545 = vpop.f32.mrb[0].mxu0
    %v2546 = vpop.f32.mrb[0].mxu0
    %2547 = vdwg.mxu0
    %2548 = vmatprep.subr.bf16.mxu0 0
    %2549 = vmatpush1.bf16.msra.mxu0 %v1788
    %2550 = vmatprep.subr.bf16.mxu0 0
    %2551 = vmatpush1.bf16.msra.mxu0 %v1789
    %2552 = vmatprep.subr.bf16.mxu0 0
    %2553 = vmatpush1.bf16.msra.mxu0 %v1790
    %2554 = vmatprep.subr.bf16.mxu0 0
    %2555 = vmatpush1.bf16.msra.mxu0 %v1791
    %2556 = vmatprep.subr.bf16.mxu0 0
    %2557 = vmatpush1.bf16.msra.mxu0 %v1792
    %2558 = vmatprep.subr.bf16.mxu0 0
    %2559 = vmatpush1.bf16.msra.mxu0 %v1793
    %2560 = vmatprep.subr.bf16.mxu0 0
    %2561 = vmatpush1.bf16.msra.mxu0 %v1794
    %2562 = vmatprep.subr.bf16.mxu0 0
    %2563 = vmatpush1.bf16.msra.mxu0 %v1795
    %2564 = vmatprep.subr.bf16.mxu0 0
    %2565 = vmatpush1.bf16.msra.mxu0 %v1796
    %2566 = vmatprep.subr.bf16.mxu0 0
    %2567 = vmatpush1.bf16.msra.mxu0 %v1797
    %2568 = vmatprep.subr.bf16.mxu0 0
    %2569 = vmatpush1.bf16.msra.mxu0 %v1798
    %2570 = vmatprep.subr.bf16.mxu0 0
    %2571 = vmatpush1.bf16.msra.mxu0 %v1799
    %2572 = vmatprep.subr.bf16.mxu0 0
    %2573 = vmatpush1.bf16.msra.mxu0 %v1800
    %2574 = vmatprep.subr.bf16.mxu0 0
    %2575 = vmatpush1.bf16.msra.mxu0 %v1801
    %2576 = vmatprep.subr.bf16.mxu0 0
    %2577 = vmatpush1.bf16.msra.mxu0 %v1802
    %2578 = vmatprep.subr.bf16.mxu0 0
    %2579 = vmatpush1.bf16.msra.mxu0 %v1803
    %2580 = vmatprep.mubr.bf16.mxu0 %v655
    %2581 = vmatmul.mubr.bf16.gmra.mrb[0].mxu0 %v654
    %v2582 = vpop.f32.mrb[0].mxu0
    %v2583 = vadd.f32 %v2543, %v2582
    %v2584 = vpop.f32.mrb[0].mxu0
    %v2585 = vpop.f32.mrb[0].mxu0
    %v2586 = vpop.f32.mrb[0].mxu0
    %2587 = vdwg.mxu0
    %v2588 = vmax.f32 %v2583, 0.0
    %v2589 = vpack.c.bf16 %v2588, %v2588
    %v2590 = vld [vmem:[%s3] sm:$0xf]
    %v2591 = vld [vmem:[%s3 + $0x4] sm:$0xf]
    %v2592 = vld [vmem:[%s3 + $0x8] sm:$0xf]
    %v2593 = vld [vmem:[%s3 + $0xc] sm:$0xf]
    %v2594 = vld [vmem:[%s3 + $0x10] sm:$0xf]
    %v2595 = vld [vmem:[%s3 + $0x14] sm:$0xf]
    %v2596 = vld [vmem:[%s3 + $0x18] sm:$0xf]
    %v2597 = vld [vmem:[%s3 + $0x1c] sm:$0xf]
    %v2598 = vld [vmem:[%s3 + $0x20] sm:$0xf]
    %v2599 = vld [vmem:[%s3 + $0x24] sm:$0xf]
    %v2600 = vld [vmem:[%s3 + $0x28] sm:$0xf]
    %v2601 = vld [vmem:[%s3 + $0x2c] sm:$0xf]
    %v2602 = vld [vmem:[%s3 + $0x30] sm:$0xf]
    %v2603 = vld [vmem:[%s3 + $0x34] sm:$0xf]
    %v2604 = vld [vmem:[%s3 + $0x38] sm:$0xf]
    %v2605 = vld [vmem:[%s3 + $0x3c] sm:$0xf]
    %v2606 = vld [vmem:[%s4] sm:$0x1]
    %v2608 = vlaneseq
    %v2609 = vshrl.u32 %v2608, 7
    %v2610 = vsub.s32 0, %v2609
    %v2611 = vrot.slane %v2606, %v2610
    %v2629 = vunpack.c.l.b16 %v2590
    %v2630 = vunpack.c.l.b16 %v2591
    %v2631 = vunpack.c.l.b16 %v2592
    %v2632 = vunpack.c.l.b16 %v2593
    %v2633 = vunpack.c.l.b16 %v2594
    %v2634 = vunpack.c.l.b16 %v2595
    %v2635 = vunpack.c.l.b16 %v2596
    %v2636 = vunpack.c.l.b16 %v2597
    %v2637 = vunpack.c.l.b16 %v2598
    %v2638 = vunpack.c.l.b16 %v2599
    %v2639 = vunpack.c.l.b16 %v2600
    %v2640 = vunpack.c.l.b16 %v2601
    %v2641 = vunpack.c.l.b16 %v2602
    %v2642 = vunpack.c.l.b16 %v2603
    %v2643 = vunpack.c.l.b16 %v2604
    %v2644 = vunpack.c.l.b16 %v2605
    %v2645 = vpack.c.b16 %v2630, %v2629
    %v2646 = vpack.c.b16 %v2632, %v2631
    %v2647 = vpack.c.b16 %v2634, %v2633
    %v2648 = vpack.c.b16 %v2636, %v2635
    %v2649 = vpack.c.b16 %v2638, %v2637
    %v2650 = vpack.c.b16 %v2640, %v2639
    %v2651 = vpack.c.b16 %v2642, %v2641
    %v2652 = vpack.c.b16 %v2644, %v2643
    %2661 = vmatprep.subr.bf16.mxu0 0
    %2662 = vmatpush1.bf16.msra.mxu0 %v2645
    %2663 = vmatprep.subr.bf16.mxu0 0
    %2664 = vmatpush1.bf16.msra.mxu0 %v2646
    %2665 = vmatprep.subr.bf16.mxu0 0
    %2666 = vmatpush1.bf16.msra.mxu0 %v2647
    %2667 = vmatprep.subr.bf16.mxu0 0
    %2668 = vmatpush1.bf16.msra.mxu0 %v2648
    %2669 = vmatprep.subr.bf16.mxu0 0
    %2670 = vmatpush1.bf16.msra.mxu0 %v2649
    %2671 = vmatprep.subr.bf16.mxu0 0
    %2672 = vmatpush1.bf16.msra.mxu0 %v2650
    %2673 = vmatprep.subr.bf16.mxu0 0
    %2674 = vmatpush1.bf16.msra.mxu0 %v2651
    %2675 = vmatprep.subr.bf16.mxu0 0
    %2676 = vmatpush1.bf16.msra.mxu0 %v2652
    %2677 = vmatprep.subr.bf16.mxu0 0
    %2678 = vmatpush1.bf16.msra.mxu0 0
    %2679 = vmatprep.subr.bf16.mxu0 0
    %2680 = vmatpush1.bf16.msra.mxu0 0
    %2681 = vmatprep.subr.bf16.mxu0 0
    %2682 = vmatpush1.bf16.msra.mxu0 0
    %2683 = vmatprep.subr.bf16.mxu0 0
    %2684 = vmatpush1.bf16.msra.mxu0 0
    %2685 = vmatprep.subr.bf16.mxu0 0
    %2686 = vmatpush1.bf16.msra.mxu0 0
    %2687 = vmatprep.subr.bf16.mxu0 0
    %2688 = vmatpush1.bf16.msra.mxu0 0
    %2689 = vmatprep.subr.bf16.mxu0 0
    %2690 = vmatpush1.bf16.msra.mxu0 0
    %2691 = vmatprep.subr.bf16.mxu0 0
    %2692 = vmatpush1.bf16.msra.mxu0 0
    %2693 = vmatprep.mubr.bf16.mxu0 0
    %2694 = vmatmul.mubr.bf16.gmra.mrb[0].mxu0 %v2589
    %v2695 = vpop.f32.mrb[0].mxu0
    %v2696 = vadd.f32 %v2611, %v2695
    %v2697 = vpop.f32.mrb[0].mxu0
    %v2698 = vpop.f32.mrb[0].mxu0
    %v2699 = vpop.f32.mrb[0].mxu0
    %2700 = vdwg.mxu0
    %2701 = vst [vmem:[#allocation2] sm:$0x3] %v2696
    // Predicated region
    $region22: #{cnn_forward.5} parent=1 // pred_check
      _
    $region23: #{cnn_forward.5} parent=1 // pred_check_branch
      %2703 = sbr.rel (0) target = $region25
    $region24: #{cnn_forward.5} parent=1 // pred_region
      %s2705 = ssub.s32 32, 32
      %2706 = vsyncadd [#allocation3], %s2705
      %s2708 = sshll.u32 [#allocation2], 4
      %s2709 = int_to_ptr.vmem [resolvable:$true] %s2708
      %2711 = dma.vmem_to_hbm [thread:$0]  %s2709, 32, %s5, [#allocation3]
    $region25: #{cnn_forward.5} parent=1 // pred_fallthru
      _
    // Predicated region
    $region26: #{cnn_forward.5} parent=1 // pred_check
      _
    $region27: #{cnn_forward.5} parent=1 // pred_check_branch
      %2713 = sbr.rel (0) target = $region29
    $region28: #{cnn_forward.5} parent=1 // pred_region
      %2714 = dma.done [#allocation3], 32
    $region29: #{cnn_forward.5} parent=1 // pred_fallthru
      _
    %2715 = vsyncpa [#allocation3], 1

// kernel: cnn_forward.4
$region0: #{cnn_forward.4}
  #allocation0 [shape = 'u32[]', space=smem, size = 0x4, offset = 0x4, fixed_abs, tag = 'smem constant byte address 0x4 - core index']
  #allocation1 [shape = 'u32[144,128]{1,0:T(1,128)}', space=vmem, size = 0x12000, scoped, tag = 'internal scratch']
  #allocation2 [shape = 'bf16[56,288]{1,0:T(8,128)(2,1)}', space=vmem, size = 0xa800, scoped, tag = 'scratch operand']
  %s0 = inlined_call_operand.vmem [shape: bf16[2,72,128], index: 0, kind: input, shape index: {}]
  %s1 = inlined_call_operand.vmem [shape: bf16[288,64], index: 1, kind: input, shape index: {}]
  %s2 = inlined_call_operand.vmem [shape: f32[1,64], index: 2, kind: input, shape index: {}]
  %s3 = inlined_call_operand.vmem [shape: bf16[2,56,64], index: 3, kind: output, shape index: {}]
  %s4 = sld [smem:[#allocation0]]
  $region22: #{cnn_forward.4} parent=0
    _
  %s6 = ssub.s32 1, %s4
  %s7 = scalar_select 0, %s6, %s4
  // Predicated region
  $region2: #{cnn_forward.4} parent=0 // pred_check
    _
  $region3: #{cnn_forward.4} parent=0 // pred_check_branch
    %9 = sbr.rel (0) target = $region5
  $region4: #{cnn_forward.4} parent=0 // pred_region
    _
  $region5: #{cnn_forward.4} parent=0 // pred_fallthru
    _
  // Predicated region
  $region6: #{cnn_forward.4} parent=0 // pred_check
    _
  $region7: #{cnn_forward.4} parent=0 // pred_check_branch
    %11 = sbr.rel (0) target = $region9
  $region8: #{cnn_forward.4} parent=0 // pred_region
    _
  $region9: #{cnn_forward.4} parent=0 // pred_fallthru
    _
  // Predicated region
  $region10: #{cnn_forward.4} parent=0 // pred_check
    _
  $region11: #{cnn_forward.4} parent=0 // pred_check_branch
    %13 = sbr.rel (0) target = $region13
  $region12: #{cnn_forward.4} parent=0 // pred_region
    _
  $region13: #{cnn_forward.4} parent=0 // pred_fallthru
    _
  %v15 = vld [vmem:[%s1] sm:$0xf]
  %v16 = vld [vmem:[%s1 + $0x4] sm:$0xf]
  %v17 = vld [vmem:[%s1 + $0x8] sm:$0xf]
  %v18 = vld [vmem:[%s1 + $0xc] sm:$0xf]
  %v19 = vld [vmem:[%s1 + $0x10] sm:$0xf]
  %v20 = vld [vmem:[%s1 + $0x14] sm:$0xf]
  %v21 = vld [vmem:[%s1 + $0x18] sm:$0xf]
  %v22 = vld [vmem:[%s1 + $0x1c] sm:$0xf]
  %v23 = vld [vmem:[%s1 + $0x20] sm:$0xf]
  %v24 = vld [vmem:[%s1 + $0x24] sm:$0xf]
  %v25 = vld [vmem:[%s1 + $0x28] sm:$0xf]
  %v26 = vld [vmem:[%s1 + $0x2c] sm:$0xf]
  %v27 = vld [vmem:[%s1 + $0x30] sm:$0xf]
  %v28 = vld [vmem:[%s1 + $0x34] sm:$0xf]
  %v29 = vld [vmem:[%s1 + $0x38] sm:$0xf]
  %v30 = vld [vmem:[%s1 + $0x3c] sm:$0xf]
  %v31 = vld [vmem:[%s1 + $0x40] sm:$0xf]
  %v32 = vld [vmem:[%s1 + $0x44] sm:$0xf]
  %v33 = vld [vmem:[%s1 + $0x48] sm:$0xf]
  %v34 = vld [vmem:[%s1 + $0x4c] sm:$0xf]
  %v35 = vld [vmem:[%s1 + $0x50] sm:$0xf]
  %v36 = vld [vmem:[%s1 + $0x54] sm:$0xf]
  %v37 = vld [vmem:[%s1 + $0x58] sm:$0xf]
  %v38 = vld [vmem:[%s1 + $0x5c] sm:$0xf]
  %v39 = vld [vmem:[%s1 + $0x60] sm:$0xf]
  %v40 = vld [vmem:[%s1 + $0x64] sm:$0xf]
  %v41 = vld [vmem:[%s1 + $0x68] sm:$0xf]
  %v42 = vld [vmem:[%s1 + $0x6c] sm:$0xf]
  %v43 = vld [vmem:[%s1 + $0x70] sm:$0xf]
  %v44 = vld [vmem:[%s1 + $0x74] sm:$0xf]
  %v45 = vld [vmem:[%s1 + $0x78] sm:$0xf]
  %v46 = vld [vmem:[%s1 + $0x7c] sm:$0xf]
  %v47 = vld [vmem:[%s1 + $0x80] sm:$0xf]
  %v48 = vld [vmem:[%s1 + $0x84] sm:$0xf]
  %v49 = vld [vmem:[%s1 + $0x88] sm:$0xf]
  %v50 = vld [vmem:[%s1 + $0x8c] sm:$0xf]
  %v51 = vld [vmem:[%s2] sm:$0x1]
  %v52 = vld [vmem:[%s0] sm:$0xf]
  %v53 = vld [vmem:[%s0 + $0x4] sm:$0xf]
  %v54 = vld [vmem:[%s0 + $0x8] sm:$0xf]
  %v55 = vld [vmem:[%s0 + $0xc] sm:$0xf]
  %v56 = vld [vmem:[%s0 + $0x10] sm:$0xf]
  %v57 = vld [vmem:[%s0 + $0x14] sm:$0xf]
  %v58 = vld [vmem:[%s0 + $0x18] sm:$0xf]
  %vm59 = vcmask 257024
  %60 = vst.msk [vmem:[#allocation2] sm:$0xf] %vm59, %v52
  %61 = vst.msk [vmem:[#allocation2 + $0xc] sm:$0xf] %vm59, %v53
  %62 = vst.msk [vmem:[#allocation2 + $0x18] sm:$0xf] %vm59, %v54
  %63 = vst.msk [vmem:[#allocation2 + $0x24] sm:$0xf] %vm59, %v55
  %64 = vst.msk [vmem:[#allocation2 + $0x30] sm:$0xf] %vm59, %v56
  %65 = vst.msk [vmem:[#allocation2 + $0x3c] sm:$0xf] %vm59, %v57
  %66 = vst.msk [vmem:[#allocation2 + $0x48] sm:$0xf] %vm59, %v58
  %v67 = vld [vmem:[%s0] sm:$0xf]
  %v68 = vld [vmem:[%s0 + $0x4] sm:$0xf]
  %v69 = vld [vmem:[%s0 + $0x8] sm:$0xf]
  %v70 = vld [vmem:[%s0 + $0xc] sm:$0xf]
  %v71 = vld [vmem:[%s0 + $0x10] sm:$0xf]
  %v72 = vld [vmem:[%s0 + $0x14] sm:$0xf]
  %v73 = vld [vmem:[%s0 + $0x18] sm:$0xf]
  %vm74 = vcmask 519424
  %75 = vst.msk [vmem:[#allocation2] sm:$0xf] %vm74, %v67
  %76 = vst.msk [vmem:[#allocation2 + $0xc] sm:$0xf] %vm74, %v68
  %77 = vst.msk [vmem:[#allocation2 + $0x18] sm:$0xf] %vm74, %v69
  %78 = vst.msk [vmem:[#allocation2 + $0x24] sm:$0xf] %vm74, %v70
  %79 = vst.msk [vmem:[#allocation2 + $0x30] sm:$0xf] %vm74, %v71
  %80 = vst.msk [vmem:[#allocation2 + $0x3c] sm:$0xf] %vm74, %v72
  %81 = vst.msk [vmem:[#allocation2 + $0x48] sm:$0xf] %vm74, %v73
  %v82 = vld [vmem:[%s0] sm:$0xf]
  %v83 = vld [vmem:[%s0 + $0x4] sm:$0xf]
  %v84 = vld [vmem:[%s0 + $0x8] sm:$0xf]
  %v85 = vld [vmem:[%s0 + $0xc] sm:$0xf]
  %v86 = vld [vmem:[%s0 + $0x10] sm:$0xf]
  %v87 = vld [vmem:[%s0 + $0x14] sm:$0xf]
  %v88 = vld [vmem:[%s0 + $0x18] sm:$0xf]
  %v89 = vld [vmem:[%s0 + $0x1c] sm:$0x1]
  %vm90 = vsmask.f32 3328
  %vm91 = vsmask.f32 7440
  %vm92 = vmor %vm90, %vm91
  %v94 = vshrl.u32 %v82, 16
  %v96 = vrot.slane %v94, 4
  %v97 = vshll.u32 %v82, 16
  %v99 = vrot.slane %v97, 5
  %v100 = vor.u32 %v96, %v99
  %v101 = vrot.slane %v100, 4
  %v103 = vshll.u32 %v83, 16
  %v105 = vrot.slane %v103, 5
  %v106 = vsel %vm92, %v101, %v105
  %v107 = vshrl.u32 %v83, 16
  %v109 = vrot.slane %v107, 4
  %v110 = vor.u32 %v109, %v105
  %v111 = vrot.slane %v110, 4
  %v113 = vshll.u32 %v84, 16
  %v115 = vrot.slane %v113, 5
  %v116 = vsel %vm92, %v111, %v115
  %v117 = vshrl.u32 %v84, 16
  %v119 = vrot.slane %v117, 4
  %v120 = vor.u32 %v119, %v115
  %v121 = vrot.slane %v120, 4
  %v123 = vshll.u32 %v85, 16
  %v125 = vrot.slane %v123, 5
  %v126 = vsel %vm92, %v121, %v125
  %v127 = vshrl.u32 %v85, 16
  %v129 = vrot.slane %v127, 4
  %v130 = vor.u32 %v129, %v125
  %v131 = vrot.slane %v130, 4
  %v133 = vshll.u32 %v86, 16
  %v135 = vrot.slane %v133, 5
  %v136 = vsel %vm92, %v131, %v135
  %v137 = vshrl.u32 %v86, 16
  %v139 = vrot.slane %v137, 4
  %v140 = vor.u32 %v139, %v135
  %v141 = vrot.slane %v140, 4
  %v143 = vshll.u32 %v87, 16
  %v145 = vrot.slane %v143, 5
  %v146 = vsel %vm92, %v141, %v145
  %v147 = vshrl.u32 %v87, 16
  %v149 = vrot.slane %v147, 4
  %v150 = vor.u32 %v149, %v145
  %v151 = vrot.slane %v150, 4
  %v153 = vshll.u32 %v88, 16
  %v155 = vrot.slane %v153, 5
  %v156 = vsel %vm92, %v151, %v155
  %v157 = vshrl.u32 %v88, 16
  %v159 = vrot.slane %v157, 4
  %v160 = vor.u32 %v159, %v155
  %v161 = vrot.slane %v160, 4
  %v163 = vshll.u32 %v89, 16
  %v165 = vrot.slane %v163, 5
  %v166 = vsel %vm92, %v161, %v165
  %167 = vrot.lane.b32.xlu0 %v106, 64
  %v168 = vpop.permute.xlu0 %167
  %169 = vrot.lane.b32.xlu0 %v116, 64
  %v170 = vpop.permute.xlu0 %169
  %171 = vrot.lane.b32.xlu0 %v126, 64
  %v172 = vpop.permute.xlu0 %171
  %173 = vrot.lane.b32.xlu0 %v136, 64
  %v174 = vpop.permute.xlu0 %173
  %175 = vrot.lane.b32.xlu0 %v146, 64
  %v176 = vpop.permute.xlu0 %175
  %177 = vrot.lane.b32.xlu0 %v156, 64
  %v178 = vpop.permute.xlu0 %177
  %179 = vrot.lane.b32.xlu0 %v166, 64
  %v180 = vpop.permute.xlu0 %179
  %vm188 = vcmask 781824
  %189 = vst.msk [vmem:[#allocation2] sm:$0xf] %vm188, %v168
  %190 = vst.msk [vmem:[#allocation2 + $0xc] sm:$0xf] %vm188, %v170
  %191 = vst.msk [vmem:[#allocation2 + $0x18] sm:$0xf] %vm188, %v172
  %192 = vst.msk [vmem:[#allocation2 + $0x24] sm:$0xf] %vm188, %v174
  %193 = vst.msk [vmem:[#allocation2 + $0x30] sm:$0xf] %vm188, %v176
  %194 = vst.msk [vmem:[#allocation2 + $0x3c] sm:$0xf] %vm188, %v178
  %195 = vst.msk [vmem:[#allocation2 + $0x48] sm:$0xf] %vm188, %v180
  %v196 = vld [vmem:[%s0] sm:$0xf]
  %v197 = vld [vmem:[%s0 + $0x4] sm:$0xf]
  %v198 = vld [vmem:[%s0 + $0x8] sm:$0xf]
  %v199 = vld [vmem:[%s0 + $0xc] sm:$0xf]
  %v200 = vld [vmem:[%s0 + $0x10] sm:$0xf]
  %v201 = vld [vmem:[%s0 + $0x14] sm:$0xf]
  %v202 = vld [vmem:[%s0 + $0x18] sm:$0xf]
  %210 = vrot.lane.b32.xlu0 %v196, 32
  %v211 = vpop.permute.xlu0 %210
  %212 = vrot.lane.b32.xlu0 %v197, 32
  %v213 = vpop.permute.xlu0 %212
  %214 = vrot.lane.b32.xlu0 %v198, 32
  %v215 = vpop.permute.xlu0 %214
  %216 = vrot.lane.b32.xlu0 %v199, 32
  %v217 = vpop.permute.xlu0 %216
  %218 = vrot.lane.b32.xlu0 %v200, 32
  %v219 = vpop.permute.xlu0 %218
  %220 = vrot.lane.b32.xlu0 %v201, 32
  %v221 = vpop.permute.xlu0 %220
  %222 = vrot.lane.b32.xlu0 %v202, 32
  %v223 = vpop.permute.xlu0 %222
  %vm231 = vcmask 1044224
  %232 = vst.msk [vmem:[#allocation2] sm:$0xf] %vm231, %v211
  %233 = vst.msk [vmem:[#allocation2 + $0xc] sm:$0xf] %vm231, %v213
  %234 = vst.msk [vmem:[#allocation2 + $0x18] sm:$0xf] %vm231, %v215
  %235 = vst.msk [vmem:[#allocation2 + $0x24] sm:$0xf] %vm231, %v217
  %236 = vst.msk [vmem:[#allocation2 + $0x30] sm:$0xf] %vm231, %v219
  %237 = vst.msk [vmem:[#allocation2 + $0x3c] sm:$0xf] %vm231, %v221
  %238 = vst.msk [vmem:[#allocation2 + $0x48] sm:$0xf] %vm231, %v223
  %v239 = vld [vmem:[%s0] sm:$0xf]
  %v240 = vld [vmem:[%s0 + $0x4] sm:$0xf]
  %v241 = vld [vmem:[%s0 + $0x8] sm:$0xf]
  %v242 = vld [vmem:[%s0 + $0xc] sm:$0xf]
  %v243 = vld [vmem:[%s0 + $0x10] sm:$0xf]
  %v244 = vld [vmem:[%s0 + $0x14] sm:$0xf]
  %v245 = vld [vmem:[%s0 + $0x18] sm:$0xf]
  %253 = vrot.lane.b32.xlu0 %v239, 32
  %v254 = vpop.permute.xlu0 %253
  %255 = vrot.lane.b32.xlu0 %v240, 32
  %v256 = vpop.permute.xlu0 %255
  %257 = vrot.lane.b32.xlu0 %v241, 32
  %v258 = vpop.permute.xlu0 %257
  %259 = vrot.lane.b32.xlu0 %v242, 32
  %v260 = vpop.permute.xlu0 %259
  %261 = vrot.lane.b32.xlu0 %v243, 32
  %v262 = vpop.permute.xlu0 %261
  %263 = vrot.lane.b32.xlu0 %v244, 32
  %v264 = vpop.permute.xlu0 %263
  %265 = vrot.lane.b32.xlu0 %v245, 32
  %v266 = vpop.permute.xlu0 %265
  %274 = vst.msk [vmem:[#allocation2 + $0x4] sm:$0xf] %vm59, %v254
  %275 = vst.msk [vmem:[#allocation2 + $0x10] sm:$0xf] %vm59, %v256
  %276 = vst.msk [vmem:[#allocation2 + $0x1c] sm:$0xf] %vm59, %v258
  %277 = vst.msk [vmem:[#allocation2 + $0x28] sm:$0xf] %vm59, %v260
  %278 = vst.msk [vmem:[#allocation2 + $0x34] sm:$0xf] %vm59, %v262
  %279 = vst.msk [vmem:[#allocation2 + $0x40] sm:$0xf] %vm59, %v264
  %280 = vst.msk [vmem:[#allocation2 + $0x4c] sm:$0xf] %vm59, %v266
  %v281 = vld [vmem:[%s0] sm:$0xf]
  %v282 = vld [vmem:[%s0 + $0x4] sm:$0xf]
  %v283 = vld [vmem:[%s0 + $0x8] sm:$0xf]
  %v284 = vld [vmem:[%s0 + $0xc] sm:$0xf]
  %v285 = vld [vmem:[%s0 + $0x10] sm:$0xf]
  %v286 = vld [vmem:[%s0 + $0x14] sm:$0xf]
  %v287 = vld [vmem:[%s0 + $0x18] sm:$0xf]
  %v288 = vld [vmem:[%s0 + $0x1c] sm:$0x1]
  %v290 = vshrl.u32 %v281, 16
  %v292 = vrot.slane %v290, 4
  %v293 = vshll.u32 %v281, 16
  %v295 = vrot.slane %v293, 5
  %v296 = vor.u32 %v292, %v295
  %v297 = vrot.slane %v296, 4
  %v299 = vshll.u32 %v282, 16
  %v301 = vrot.slane %v299, 5
  %v302 = vsel %vm92, %v297, %v301
  %v303 = vshrl.u32 %v282, 16
  %v305 = vrot.slane %v303, 4
  %v306 = vor.u32 %v305, %v301
  %v307 = vrot.slane %v306, 4
  %v309 = vshll.u32 %v283, 16
  %v311 = vrot.slane %v309, 5
  %v312 = vsel %vm92, %v307, %v311
  %v313 = vshrl.u32 %v283, 16
  %v315 = vrot.slane %v313, 4
  %v316 = vor.u32 %v315, %v311
  %v317 = vrot.slane %v316, 4
  %v319 = vshll.u32 %v284, 16
  %v321 = vrot.slane %v319, 5
  %v322 = vsel %vm92, %v317, %v321
  %v323 = vshrl.u32 %v284, 16
  %v325 = vrot.slane %v323, 4
  %v326 = vor.u32 %v325, %v321
  %v327 = vrot.slane %v326, 4
  %v329 = vshll.u32 %v285, 16
  %v331 = vrot.slane %v329, 5
  %v332 = vsel %vm92, %v327, %v331
  %v333 = vshrl.u32 %v285, 16
  %v335 = vrot.slane %v333, 4
  %v336 = vor.u32 %v335, %v331
  %v337 = vrot.slane %v336, 4
  %v339 = vshll.u32 %v286, 16
  %v341 = vrot.slane %v339, 5
  %v342 = vsel %vm92, %v337, %v341
  %v343 = vshrl.u32 %v286, 16
  %v345 = vrot.slane %v343, 4
  %v346 = vor.u32 %v345, %v341
  %v347 = vrot.slane %v346, 4
  %v349 = vshll.u32 %v287, 16
  %v351 = vrot.slane %v349, 5
  %v352 = vsel %vm92, %v347, %v351
  %v353 = vshrl.u32 %v287, 16
  %v355 = vrot.slane %v353, 4
  %v356 = vor.u32 %v355, %v351
  %v357 = vrot.slane %v356, 4
  %v359 = vshll.u32 %v288, 16
  %v361 = vrot.slane %v359, 5
  %v362 = vsel %vm92, %v357, %v361
  %363 = vrot.lane.b32.xlu0 %v302, 96
  %v364 = vpop.permute.xlu0 %363
  %365 = vrot.lane.b32.xlu0 %v312, 96
  %v366 = vpop.permute.xlu0 %365
  %367 = vrot.lane.b32.xlu0 %v322, 96
  %v368 = vpop.permute.xlu0 %367
  %369 = vrot.lane.b32.xlu0 %v332, 96
  %v370 = vpop.permute.xlu0 %369
  %371 = vrot.lane.b32.xlu0 %v342, 96
  %v372 = vpop.permute.xlu0 %371
  %373 = vrot.lane.b32.xlu0 %v352, 96
  %v374 = vpop.permute.xlu0 %373
  %375 = vrot.lane.b32.xlu0 %v362, 96
  %v376 = vpop.permute.xlu0 %375
  %384 = vst.msk [vmem:[#allocation2 + $0x4] sm:$0xf] %vm74, %v364
  %385 = vst.msk [vmem:[#allocation2 + $0x10] sm:$0xf] %vm74, %v366
  %386 = vst.msk [vmem:[#allocation2 + $0x1c] sm:$0xf] %vm74, %v368
  %387 = vst.msk [vmem:[#allocation2 + $0x28] sm:$0xf] %vm74, %v370
  %388 = vst.msk [vmem:[#allocation2 + $0x34] sm:$0xf] %vm74, %v372
  %389 = vst.msk [vmem:[#allocation2 + $0x40] sm:$0xf] %vm74, %v374
  %390 = vst.msk [vmem:[#allocation2 + $0x4c] sm:$0xf] %vm74, %v376
  %v391 = vld [vmem:[%s0 + $0x4] sm:$0xf]
  %v392 = vld [vmem:[%s0 + $0x8] sm:$0xf]
  %v393 = vld [vmem:[%s0 + $0xc] sm:$0xf]
  %v394 = vld [vmem:[%s0 + $0x10] sm:$0xf]
  %v395 = vld [vmem:[%s0 + $0x14] sm:$0xf]
  %v396 = vld [vmem:[%s0 + $0x18] sm:$0xf]
  %v397 = vld [vmem:[%s0 + $0x1c] sm:$0xf]
  %405 = vrot.lane.b32.xlu0 %v391, 64
  %v406 = vpop.permute.xlu0 %405
  %407 = vrot.lane.b32.xlu0 %v392, 64
  %v408 = vpop.permute.xlu0 %407
  %409 = vrot.lane.b32.xlu0 %v393, 64
  %v410 = vpop.permute.xlu0 %409
  %411 = vrot.lane.b32.xlu0 %v394, 64
  %v412 = vpop.permute.xlu0 %411
  %413 = vrot.lane.b32.xlu0 %v395, 64
  %v414 = vpop.permute.xlu0 %413
  %415 = vrot.lane.b32.xlu0 %v396, 64
  %v416 = vpop.permute.xlu0 %415
  %417 = vrot.lane.b32.xlu0 %v397, 64
  %v418 = vpop.permute.xlu0 %417
  %426 = vst.msk [vmem:[#allocation2 + $0x4] sm:$0xf] %vm188, %v406
  %427 = vst.msk [vmem:[#allocation2 + $0x10] sm:$0xf] %vm188, %v408
  %428 = vst.msk [vmem:[#allocation2 + $0x1c] sm:$0xf] %vm188, %v410
  %429 = vst.msk [vmem:[#allocation2 + $0x28] sm:$0xf] %vm188, %v412
  %430 = vst.msk [vmem:[#allocation2 + $0x34] sm:$0xf] %vm188, %v414
  %431 = vst.msk [vmem:[#allocation2 + $0x40] sm:$0xf] %vm188, %v416
  %432 = vst.msk [vmem:[#allocation2 + $0x4c] sm:$0xf] %vm188, %v418
  %v433 = vld [vmem:[%s0 + $0x4] sm:$0xf]
  %v434 = vld [vmem:[%s0 + $0x8] sm:$0xf]
  %v435 = vld [vmem:[%s0 + $0xc] sm:$0xf]
  %v436 = vld [vmem:[%s0 + $0x10] sm:$0xf]
  %v437 = vld [vmem:[%s0 + $0x14] sm:$0xf]
  %v438 = vld [vmem:[%s0 + $0x18] sm:$0xf]
  %v439 = vld [vmem:[%s0 + $0x1c] sm:$0xf]
  %447 = vrot.lane.b32.xlu0 %v433, 64
  %v448 = vpop.permute.xlu0 %447
  %449 = vrot.lane.b32.xlu0 %v434, 64
  %v450 = vpop.permute.xlu0 %449
  %451 = vrot.lane.b32.xlu0 %v435, 64
  %v452 = vpop.permute.xlu0 %451
  %453 = vrot.lane.b32.xlu0 %v436, 64
  %v454 = vpop.permute.xlu0 %453
  %455 = vrot.lane.b32.xlu0 %v437, 64
  %v456 = vpop.permute.xlu0 %455
  %457 = vrot.lane.b32.xlu0 %v438, 64
  %v458 = vpop.permute.xlu0 %457
  %459 = vrot.lane.b32.xlu0 %v439, 64
  %v460 = vpop.permute.xlu0 %459
  %468 = vst.msk [vmem:[#allocation2 + $0x4] sm:$0xf] %vm231, %v448
  %469 = vst.msk [vmem:[#allocation2 + $0x10] sm:$0xf] %vm231, %v450
  %470 = vst.msk [vmem:[#allocation2 + $0x1c] sm:$0xf] %vm231, %v452
  %471 = vst.msk [vmem:[#allocation2 + $0x28] sm:$0xf] %vm231, %v454
  %472 = vst.msk [vmem:[#allocation2 + $0x34] sm:$0xf] %vm231, %v456
  %473 = vst.msk [vmem:[#allocation2 + $0x40] sm:$0xf] %vm231, %v458
  %474 = vst.msk [vmem:[#allocation2 + $0x4c] sm:$0xf] %vm231, %v460
  %v475 = vld [vmem:[%s0 + $0x4] sm:$0xf]
  %v476 = vld [vmem:[%s0 + $0x8] sm:$0xf]
  %v477 = vld [vmem:[%s0 + $0xc] sm:$0xf]
  %v478 = vld [vmem:[%s0 + $0x10] sm:$0xf]
  %v479 = vld [vmem:[%s0 + $0x14] sm:$0xf]
  %v480 = vld [vmem:[%s0 + $0x18] sm:$0xf]
  %v481 = vld [vmem:[%s0 + $0x1c] sm:$0xf]
  %v482 = vld [vmem:[%s0 + $0x20] sm:$0x1]
  %v484 = vshrl.u32 %v475, 16
  %v486 = vrot.slane %v484, 4
  %v487 = vshll.u32 %v475, 16
  %v489 = vrot.slane %v487, 5
  %v490 = vor.u32 %v486, %v489
  %v491 = vrot.slane %v490, 4
  %v493 = vshll.u32 %v476, 16
  %v495 = vrot.slane %v493, 5
  %v496 = vsel %vm92, %v491, %v495
  %v497 = vshrl.u32 %v476, 16
  %v499 = vrot.slane %v497, 4
  %v500 = vor.u32 %v499, %v495
  %v501 = vrot.slane %v500, 4
  %v503 = vshll.u32 %v477, 16
  %v505 = vrot.slane %v503, 5
  %v506 = vsel %vm92, %v501, %v505
  %v507 = vshrl.u32 %v477, 16
  %v509 = vrot.slane %v507, 4
  %v510 = vor.u32 %v509, %v505
  %v511 = vrot.slane %v510, 4
  %v513 = vshll.u32 %v478, 16
  %v515 = vrot.slane %v513, 5
  %v516 = vsel %vm92, %v511, %v515
  %v517 = vshrl.u32 %v478, 16
  %v519 = vrot.slane %v517, 4
  %v520 = vor.u32 %v519, %v515
  %v521 = vrot.slane %v520, 4
  %v523 = vshll.u32 %v479, 16
  %v525 = vrot.slane %v523, 5
  %v526 = vsel %vm92, %v521, %v525
  %v527 = vshrl.u32 %v479, 16
  %v529 = vrot.slane %v527, 4
  %v530 = vor.u32 %v529, %v525
  %v531 = vrot.slane %v530, 4
  %v533 = vshll.u32 %v480, 16
  %v535 = vrot.slane %v533, 5
  %v536 = vsel %vm92, %v531, %v535
  %v537 = vshrl.u32 %v480, 16
  %v539 = vrot.slane %v537, 4
  %v540 = vor.u32 %v539, %v535
  %v541 = vrot.slane %v540, 4
  %v543 = vshll.u32 %v481, 16
  %v545 = vrot.slane %v543, 5
  %v546 = vsel %vm92, %v541, %v545
  %v547 = vshrl.u32 %v481, 16
  %v549 = vrot.slane %v547, 4
  %v550 = vor.u32 %v549, %v545
  %v551 = vrot.slane %v550, 4
  %v553 = vshll.u32 %v482, 16
  %v555 = vrot.slane %v553, 5
  %v556 = vsel %vm92, %v551, %v555
  %564 = vst.msk [vmem:[#allocation2 + $0x8] sm:$0xf] %vm59, %v496
  %565 = vst.msk [vmem:[#allocation2 + $0x14] sm:$0xf] %vm59, %v506
  %566 = vst.msk [vmem:[#allocation2 + $0x20] sm:$0xf] %vm59, %v516
  %567 = vst.msk [vmem:[#allocation2 + $0x2c] sm:$0xf] %vm59, %v526
  %568 = vst.msk [vmem:[#allocation2 + $0x38] sm:$0xf] %vm59, %v536
  %569 = vst.msk [vmem:[#allocation2 + $0x44] sm:$0xf] %vm59, %v546
  %570 = vst.msk [vmem:[#allocation2 + $0x50] sm:$0xf] %vm59, %v556
  %v571 = vld [vmem:[#allocation2] sm:$0xff]
  %v572 = vld [vmem:[#allocation2 + $0x8] sm:$0xf]
  %v573 = vld [vmem:[#allocation2 + $0xc] sm:$0xff]
  %v574 = vld [vmem:[#allocation2 + $0x14] sm:$0xf]
  %v575 = vld [vmem:[#allocation2 + $0x18] sm:$0xff]
  %v576 = vld [vmem:[#allocation2 + $0x20] sm:$0xf]
  %v577 = vld [vmem:[#allocation2 + $0x24] sm:$0xff]
  %v578 = vld [vmem:[#allocation2 + $0x2c] sm:$0xf]
  %v579 = vld [vmem:[#allocation2 + $0x30] sm:$0xff]
  %v580 = vld [vmem:[#allocation2 + $0x38] sm:$0xf]
  %v581 = vld [vmem:[#allocation2 + $0x3c] sm:$0xff]
  %v582 = vld [vmem:[#allocation2 + $0x44] sm:$0xf]
  %v583 = vld [vmem:[#allocation2 + $0x48] sm:$0xff]
  %v584 = vld [vmem:[#allocation2 + $0x50] sm:$0xf]
  %v599 = vunpack.c.l.b16 %v571
  %v600 = vunpack.c.h.b16 %v571
  %v601 = vunpack.c.l.b16 %v572
  %v602 = vunpack.c.l.b16 %v573
  %v603 = vunpack.c.h.b16 %v573
  %v604 = vunpack.c.l.b16 %v574
  %v605 = vunpack.c.l.b16 %v575
  %v606 = vunpack.c.h.b16 %v575
  %v607 = vunpack.c.l.b16 %v576
  %v608 = vunpack.c.l.b16 %v577
  %v609 = vunpack.c.h.b16 %v577
  %v610 = vunpack.c.l.b16 %v578
  %v611 = vunpack.c.l.b16 %v579
  %v612 = vunpack.c.h.b16 %v579
  %v613 = vunpack.c.l.b16 %v580
  %v614 = vunpack.c.l.b16 %v581
  %v615 = vunpack.c.h.b16 %v581
  %v616 = vunpack.c.l.b16 %v582
  %v617 = vunpack.c.l.b16 %v583
  %v618 = vunpack.c.h.b16 %v583
  %v619 = vunpack.c.l.b16 %v584
  %v620 = vpack.c.b16 %v602, %v599
  %v621 = vpack.c.b16 %v603, %v600
  %v622 = vpack.c.b16 %v604, %v601
  %v623 = vpack.c.b16 %v608, %v605
  %v624 = vpack.c.b16 %v609, %v606
  %v625 = vpack.c.b16 %v610, %v607
  %v626 = vpack.c.b16 %v614, %v611
  %v627 = vpack.c.b16 %v615, %v612
  %v628 = vpack.c.b16 %v616, %v613
  %v629 = vpack.c.b16 %v617, %v617
  %v630 = vpack.c.b16 %v618, %v618
  %v631 = vpack.c.b16 %v619, %v619
  %v676 = vunpack.c.l.b16 %v15
  %v677 = vunpack.c.l.b16 %v16
  %v678 = vunpack.c.l.b16 %v17
  %v679 = vunpack.c.l.b16 %v18
  %v680 = vunpack.c.l.b16 %v19
  %v681 = vunpack.c.l.b16 %v20
  %v682 = vunpack.c.l.b16 %v21
  %v683 = vunpack.c.l.b16 %v22
  %v684 = vunpack.c.l.b16 %v23
  %v685 = vunpack.c.l.b16 %v24
  %v686 = vunpack.c.l.b16 %v25
  %v687 = vunpack.c.l.b16 %v26
  %v688 = vunpack.c.l.b16 %v27
  %v689 = vunpack.c.l.b16 %v28
  %v690 = vunpack.c.l.b16 %v29
  %v691 = vunpack.c.l.b16 %v30
  %v692 = vunpack.c.l.b16 %v31
  %v693 = vunpack.c.l.b16 %v32
  %v694 = vunpack.c.l.b16 %v33
  %v695 = vunpack.c.l.b16 %v34
  %v696 = vunpack.c.l.b16 %v35
  %v697 = vunpack.c.l.b16 %v36
  %v698 = vunpack.c.l.b16 %v37
  %v699 = vunpack.c.l.b16 %v38
  %v700 = vunpack.c.l.b16 %v39
  %v701 = vunpack.c.l.b16 %v40
  %v702 = vunpack.c.l.b16 %v41
  %v703 = vunpack.c.l.b16 %v42
  %v704 = vunpack.c.l.b16 %v43
  %v705 = vunpack.c.l.b16 %v44
  %v706 = vunpack.c.l.b16 %v45
  %v707 = vunpack.c.l.b16 %v46
  %v708 = vunpack.c.l.b16 %v47
  %v709 = vunpack.c.l.b16 %v48
  %v710 = vunpack.c.l.b16 %v49
  %v711 = vunpack.c.l.b16 %v50
  %v712 = vpack.c.b16 %v677, %v676
  %v713 = vpack.c.b16 %v679, %v678
  %v714 = vpack.c.b16 %v681, %v680
  %v715 = vpack.c.b16 %v683, %v682
  %v716 = vpack.c.b16 %v685, %v684
  %v717 = vpack.c.b16 %v687, %v686
  %v718 = vpack.c.b16 %v689, %v688
  %v719 = vpack.c.b16 %v691, %v690
  %v720 = vpack.c.b16 %v693, %v692
  %v721 = vpack.c.b16 %v695, %v694
  %v722 = vpack.c.b16 %v697, %v696
  %v723 = vpack.c.b16 %v699, %v698
  %v724 = vpack.c.b16 %v701, %v700
  %v725 = vpack.c.b16 %v703, %v702
  %v726 = vpack.c.b16 %v705, %v704
  %v727 = vpack.c.b16 %v707, %v706
  %v728 = vpack.c.b16 %v709, %v708
  %v729 = vpack.c.b16 %v711, %v710
  %vm748 = vcmask 261120
  %v750 = vsel %vm748, %v622, 0
  %v753 = vsel %vm748, %v625, 0
  %v756 = vsel %vm748, %v628, 0
  %v759 = vsel %vm748, %v631, 0
  %761 = vmatprep.subr.bf16.mxu0 0
  %762 = vmatpush1.bf16.msra.mxu0 %v712
  %763 = vmatprep.subr.bf16.mxu0 0
  %764 = vmatpush1.bf16.msra.mxu0 %v713
  %765 = vmatprep.subr.bf16.mxu0 0
  %766 = vmatpush1.bf16.msra.mxu0 %v714
  %767 = vmatprep.subr.bf16.mxu0 0
  %768 = vmatpush1.bf16.msra.mxu0 %v715
  %769 = vmatprep.subr.bf16.mxu0 0
  %770 = vmatpush1.bf16.msra.mxu0 %v716
  %771 = vmatprep.subr.bf16.mxu0 0
  %772 = vmatpush1.bf16.msra.mxu0 %v717
  %773 = vmatprep.subr.bf16.mxu0 0
  %774 = vmatpush1.bf16.msra.mxu0 %v718
  %775 = vmatprep.subr.bf16.mxu0 0
  %776 = vmatpush1.bf16.msra.mxu0 %v719
  %777 = vmatprep.subr.bf16.mxu0 0
  %778 = vmatpush1.bf16.msra.mxu0 %v720
  %779 = vmatprep.subr.bf16.mxu0 0
  %780 = vmatpush1.bf16.msra.mxu0 %v721
  %781 = vmatprep.subr.bf16.mxu0 0
  %782 = vmatpush1.bf16.msra.mxu0 %v722
  %783 = vmatprep.subr.bf16.mxu0 0
  %784 = vmatpush1.bf16.msra.mxu0 %v723
  %785 = vmatprep.subr.bf16.mxu0 0
  %786 = vmatpush1.bf16.msra.mxu0 %v724
  %787 = vmatprep.subr.bf16.mxu0 0
  %788 = vmatpush1.bf16.msra.mxu0 %v725
  %789 = vmatprep.subr.bf16.mxu0 0
  %790 = vmatpush1.bf16.msra.mxu0 %v726
  %791 = vmatprep.subr.bf16.mxu0 0
  %792 = vmatpush1.bf16.msra.mxu0 %v727
  %793 = vmatprep.mubr.bf16.mxu0 %v621
  %794 = vmatmul.mubr.bf16.gmra.mrb[0].mxu0 %v620
  %v795 = vpop.f32.mrb[0].mxu0
  %v796 = vadd.f32 0.0, %v795
  %v797 = vpop.f32.mrb[0].mxu0
  %v798 = vpop.f32.mrb[0].mxu0
  %v799 = vadd.f32 0.0, %v798
  %v800 = vpop.f32.mrb[0].mxu0
  %801 = vmatprep.mubr.bf16.mxu0 %v624
  %802 = vmatmul.mubr.bf16.gmra.mrb[0].mxu0 %v623
  %v803 = vpop.f32.mrb[0].mxu0
  %v804 = vadd.f32 0.0, %v803
  %v805 = vpop.f32.mrb[0].mxu0
  %v806 = vpop.f32.mrb[0].mxu0
  %v807 = vadd.f32 0.0, %v806
  %v808 = vpop.f32.mrb[0].mxu0
  %809 = vmatprep.mubr.bf16.mxu0 %v627
  %810 = vmatmul.mubr.bf16.gmra.mrb[0].mxu0 %v626
  %v811 = vpop.f32.mrb[0].mxu0
  %v812 = vadd.f32 0.0, %v811
  %v813 = vpop.f32.mrb[0].mxu0
  %v814 = vpop.f32.mrb[0].mxu0
  %v815 = vadd.f32 0.0, %v814
  %v816 = vpop.f32.mrb[0].mxu0
  %817 = vmatprep.mubr.bf16.mxu0 %v630
  %818 = vmatmul.mubr.bf16.gmra.mrb[0].mxu0 %v629
  %v819 = vpop.f32.mrb[0].mxu0
  %v820 = vadd.f32 0.0, %v819
  %v821 = vpop.f32.mrb[0].mxu0
  %v822 = vpop.f32.mrb[0].mxu0
  %v823 = vpop.f32.mrb[0].mxu0
  %824 = vdwg.mxu0
  %825 = vmatprep.subr.bf16.mxu0 0
  %826 = vmatpush1.bf16.msra.mxu0 %v728
  %827 = vmatprep.subr.bf16.mxu0 0
  %828 = vmatpush1.bf16.msra.mxu0 %v729
  %829 = vmatprep.subr.bf16.mxu0 0
  %830 = vmatpush1.bf16.msra.mxu0 0
  %831 = vmatprep.subr.bf16.mxu0 0
  %832 = vmatpush1.bf16.msra.mxu0 0
  %833 = vmatprep.subr.bf16.mxu0 0
  %834 = vmatpush1.bf16.msra.mxu0 0
  %835 = vmatprep.subr.bf16.mxu0 0
  %836 = vmatpush1.bf16.msra.mxu0 0
  %837 = vmatprep.subr.bf16.mxu0 0
  %838 = vmatpush1.bf16.msra.mxu0 0
  %839 = vmatprep.subr.bf16.mxu0 0
  %840 = vmatpush1.bf16.msra.mxu0 0
  %841 = vmatprep.subr.bf16.mxu0 0
  %842 = vmatpush1.bf16.msra.mxu0 0
  %843 = vmatprep.subr.bf16.mxu0 0
  %844 = vmatpush1.bf16.msra.mxu0 0
  %845 = vmatprep.subr.bf16.mxu0 0
  %846 = vmatpush1.bf16.msra.mxu0 0
  %847 = vmatprep.subr.bf16.mxu0 0
  %848 = vmatpush1.bf16.msra.mxu0 0
  %849 = vmatprep.subr.bf16.mxu0 0
  %850 = vmatpush1.bf16.msra.mxu0 0
  %851 = vmatprep.subr.bf16.mxu0 0
  %852 = vmatpush1.bf16.msra.mxu0 0
  %853 = vmatprep.subr.bf16.mxu0 0
  %854 = vmatpush1.bf16.msra.mxu0 0
  %855 = vmatprep.subr.bf16.mxu0 0
  %856 = vmatpush1.bf16.msra.mxu0 0
  %857 = vmatprep.mubr.bf16.mxu0 0
  %858 = vmatmul.mubr.bf16.gmra.mrb[0].mxu0 %v750
  %v859 = vpop.f32.mrb[0].mxu0
  %v860 = vadd.f32 %v796, %v859
  %v861 = vpop.f32.mrb[0].mxu0
  %v862 = vpop.f32.mrb[0].mxu0
  %v863 = vadd.f32 %v799, %v862
  %v864 = vpop.f32.mrb[0].mxu0
  %865 = vmatprep.mubr.bf16.mxu0 0
  %866 = vmatmul.mubr.bf16.gmra.mrb[0].mxu0 %v753
  %v867 = vpop.f32.mrb[0].mxu0
  %v868 = vadd.f32 %v804, %v867
  %v869 = vpop.f32.mrb[0].mxu0
  %v870 = vpop.f32.mrb[0].mxu0
  %v871 = vadd.f32 %v807, %v870
  %v872 = vpop.f32.mrb[0].mxu0
  %873 = vmatprep.mubr.bf16.mxu0 0
  %874 = vmatmul.mubr.bf16.gmra.mrb[0].mxu0 %v756
  %v875 = vpop.f32.mrb[0].mxu0
  %v876 = vadd.f32 %v812, %v875
  %v877 = vpop.f32.mrb[0].mxu0
  %v878 = vpop.f32.mrb[0].mxu0
  %v879 = vadd.f32 %v815, %v878
  %v880 = vpop.f32.mrb[0].mxu0
  %881 = vmatprep.mubr.bf16.mxu0 0
  %882 = vmatmul.mubr.bf16.gmra.mrb[0].mxu0 %v759
  %v883 = vpop.f32.mrb[0].mxu0
  %v884 = vadd.f32 %v820, %v883
  %v885 = vpop.f32.mrb[0].mxu0
  %v886 = vpop.f32.mrb[0].mxu0
  %v887 = vpop.f32.mrb[0].mxu0
  %888 = vdwg.mxu0
  %v889 = vld [vmem:[%s0] sm:$0xf]
  %v890 = vld [vmem:[%s0 + $0x4] sm:$0xf]
  %v891 = vld [vmem:[%s0 + $0x8] sm:$0xf]
  %v892 = vld [vmem:[%s0 + $0xc] sm:$0xf]
  %v893 = vld [vmem:[%s0 + $0x10] sm:$0xf]
  %v894 = vld [vmem:[%s0 + $0x14] sm:$0xf]
  %v895 = vld [vmem:[%s0 + $0x18] sm:$0xf]
  %903 = vrot.lane.b32.xlu0 %v889, 96
  %v904 = vpop.permute.xlu0 %903
  %905 = vrot.lane.b32.xlu0 %v890, 96
  %v906 = vpop.permute.xlu0 %905
  %907 = vrot.lane.b32.xlu0 %v891, 96
  %v908 = vpop.permute.xlu0 %907
  %909 = vrot.lane.b32.xlu0 %v892, 96
  %v910 = vpop.permute.xlu0 %909
  %911 = vrot.lane.b32.xlu0 %v893, 96
  %v912 = vpop.permute.xlu0 %911
  %913 = vrot.lane.b32.xlu0 %v894, 96
  %v914 = vpop.permute.xlu0 %913
  %915 = vrot.lane.b32.xlu0 %v895, 96
  %v916 = vpop.permute.xlu0 %915
  %924 = vst.msk [vmem:[#allocation2] sm:$0xf] %vm59, %v904
  %925 = vst.msk [vmem:[#allocation2 + $0xc] sm:$0xf] %vm59, %v906
  %926 = vst.msk [vmem:[#allocation2 + $0x18] sm:$0xf] %vm59, %v908
  %927 = vst.msk [vmem:[#allocation2 + $0x24] sm:$0xf] %vm59, %v910
  %928 = vst.msk [vmem:[#allocation2 + $0x30] sm:$0xf] %vm59, %v912
  %929 = vst.msk [vmem:[#allocation2 + $0x3c] sm:$0xf] %vm59, %v914
  %930 = vst.msk [vmem:[#allocation2 + $0x48] sm:$0xf] %vm59, %v916
  %v931 = vld [vmem:[%s0] sm:$0xf]
  %v932 = vld [vmem:[%s0 + $0x4] sm:$0xf]
  %v933 = vld [vmem:[%s0 + $0x8] sm:$0xf]
  %v934 = vld [vmem:[%s0 + $0xc] sm:$0xf]
  %v935 = vld [vmem:[%s0 + $0x10] sm:$0xf]
  %v936 = vld [vmem:[%s0 + $0x14] sm:$0xf]
  %v937 = vld [vmem:[%s0 + $0x18] sm:$0xf]
  %v938 = vld [vmem:[%s0 + $0x1c] sm:$0x1]
  %v940 = vshrl.u32 %v931, 16
  %v942 = vrot.slane %v940, 4
  %v943 = vshll.u32 %v931, 16
  %v945 = vrot.slane %v943, 5
  %v946 = vor.u32 %v942, %v945
  %v947 = vrot.slane %v946, 4
  %v949 = vshll.u32 %v932, 16
  %v951 = vrot.slane %v949, 5
  %v952 = vsel %vm92, %v947, %v951
  %v953 = vshrl.u32 %v932, 16
  %v955 = vrot.slane %v953, 4
  %v956 = vor.u32 %v955, %v951
  %v957 = vrot.slane %v956, 4
  %v959 = vshll.u32 %v933, 16
  %v961 = vrot.slane %v959, 5
  %v962 = vsel %vm92, %v957, %v961
  %v963 = vshrl.u32 %v933, 16
  %v965 = vrot.slane %v963, 4
  %v966 = vor.u32 %v965, %v961
  %v967 = vrot.slane %v966, 4
  %v969 = vshll.u32 %v934, 16
  %v971 = vrot.slane %v969, 5
  %v972 = vsel %vm92, %v967, %v971
  %v973 = vshrl.u32 %v934, 16
  %v975 = vrot.slane %v973, 4
  %v976 = vor.u32 %v975, %v971
  %v977 = vrot.slane %v976, 4
  %v979 = vshll.u32 %v935, 16
  %v981 = vrot.slane %v979, 5
  %v982 = vsel %vm92, %v977, %v981
  %v983 = vshrl.u32 %v935, 16
  %v985 = vrot.slane %v983, 4
  %v986 = vor.u32 %v985, %v981
  %v987 = vrot.slane %v986, 4
  %v989 = vshll.u32 %v936, 16
  %v991 = vrot.slane %v989, 5
  %v992 = vsel %vm92, %v987, %v991
  %v993 = vshrl.u32 %v936, 16
  %v995 = vrot.slane %v993, 4
  %v996 = vor.u32 %v995, %v991
  %v997 = vrot.slane %v996, 4
  %v999 = vshll.u32 %v937, 16
  %v1001 = vrot.slane %v999, 5
  %v1002 = vsel %vm92, %v997, %v1001
  %v1003 = vshrl.u32 %v937, 16
  %v1005 = vrot.slane %v1003, 4
  %v1006 = vor.u32 %v1005, %v1001
  %v1007 = vrot.slane %v1006, 4
  %v1009 = vshll.u32 %v938, 16
  %v1011 = vrot.slane %v1009, 5
  %v1012 = vsel %vm92, %v1007, %v1011
  %1013 = vrot.lane.b32.xlu0 %v952, 32
  %v1014 = vpop.permute.xlu0 %1013
  %1015 = vrot.lane.b32.xlu0 %v962, 32
  %v1016 = vpop.permute.xlu0 %1015
  %1017 = vrot.lane.b32.xlu0 %v972, 32
  %v1018 = vpop.permute.xlu0 %1017
  %1019 = vrot.lane.b32.xlu0 %v982, 32
  %v1020 = vpop.permute.xlu0 %1019
  %1021 = vrot.lane.b32.xlu0 %v992, 32
  %v1022 = vpop.permute.xlu0 %1021
  %1023 = vrot.lane.b32.xlu0 %v1002, 32
  %v1024 = vpop.permute.xlu0 %1023
  %1025 = vrot.lane.b32.xlu0 %v1012, 32
  %v1026 = vpop.permute.xlu0 %1025
  %1034 = vst.msk [vmem:[#allocation2] sm:$0xf] %vm74, %v1014
  %1035 = vst.msk [vmem:[#allocation2 + $0xc] sm:$0xf] %vm74, %v1016
  %1036 = vst.msk [vmem:[#allocation2 + $0x18] sm:$0xf] %vm74, %v1018
  %1037 = vst.msk [vmem:[#allocation2 + $0x24] sm:$0xf] %vm74, %v1020
  %1038 = vst.msk [vmem:[#allocation2 + $0x30] sm:$0xf] %vm74, %v1022
  %1039 = vst.msk [vmem:[#allocation2 + $0x3c] sm:$0xf] %vm74, %v1024
  %1040 = vst.msk [vmem:[#allocation2 + $0x48] sm:$0xf] %vm74, %v1026
  %v1041 = vld [vmem:[%s0] sm:$0xf]
  %v1042 = vld [vmem:[%s0 + $0x4] sm:$0xf]
  %v1043 = vld [vmem:[%s0 + $0x8] sm:$0xf]
  %v1044 = vld [vmem:[%s0 + $0xc] sm:$0xf]
  %v1045 = vld [vmem:[%s0 + $0x10] sm:$0xf]
  %v1046 = vld [vmem:[%s0 + $0x14] sm:$0xf]
  %v1047 = vld [vmem:[%s0 + $0x18] sm:$0xf]
  %v1048 = vld [vmem:[%s0 + $0x1c] sm:$0x1]
  %v1050 = vshrl.u32 %v1041, 16
  %v1052 = vrot.slane %v1050, 4
  %v1053 = vshll.u32 %v1041, 16
  %v1055 = vrot.slane %v1053, 5
  %v1056 = vor.u32 %v1052, %v1055
  %v1057 = vrot.slane %v1056, 4
  %v1059 = vshll.u32 %v1042, 16
  %v1061 = vrot.slane %v1059, 5
  %v1062 = vsel %vm92, %v1057, %v1061
  %v1063 = vshrl.u32 %v1042, 16
  %v1065 = vrot.slane %v1063, 4
  %v1066 = vor.u32 %v1065, %v1061
  %v1067 = vrot.slane %v1066, 4
  %v1069 = vshll.u32 %v1043, 16
  %v1071 = vrot.slane %v1069, 5
  %v1072 = vsel %vm92, %v1067, %v1071
  %v1073 = vshrl.u32 %v1043, 16
  %v1075 = vrot.slane %v1073, 4
  %v1076 = vor.u32 %v1075, %v1071
  %v1077 = vrot.slane %v1076, 4
  %v1079 = vshll.u32 %v1044, 16
  %v1081 = vrot.slane %v1079, 5
  %v1082 = vsel %vm92, %v1077, %v1081
  %v1083 = vshrl.u32 %v1044, 16
  %v1085 = vrot.slane %v1083, 4
  %v1086 = vor.u32 %v1085, %v1081
  %v1087 = vrot.slane %v1086, 4
  %v1089 = vshll.u32 %v1045, 16
  %v1091 = vrot.slane %v1089, 5
  %v1092 = vsel %vm92, %v1087, %v1091
  %v1093 = vshrl.u32 %v1045, 16
  %v1095 = vrot.slane %v1093, 4
  %v1096 = vor.u32 %v1095, %v1091
  %v1097 = vrot.slane %v1096, 4
  %v1099 = vshll.u32 %v1046, 16
  %v1101 = vrot.slane %v1099, 5
  %v1102 = vsel %vm92, %v1097, %v1101
  %v1103 = vshrl.u32 %v1046, 16
  %v1105 = vrot.slane %v1103, 4
  %v1106 = vor.u32 %v1105, %v1101
  %v1107 = vrot.slane %v1106, 4
  %v1109 = vshll.u32 %v1047, 16
  %v1111 = vrot.slane %v1109, 5
  %v1112 = vsel %vm92, %v1107, %v1111
  %v1113 = vshrl.u32 %v1047, 16
  %v1115 = vrot.slane %v1113, 4
  %v1116 = vor.u32 %v1115, %v1111
  %v1117 = vrot.slane %v1116, 4
  %v1119 = vshll.u32 %v1048, 16
  %v1121 = vrot.slane %v1119, 5
  %v1122 = vsel %vm92, %v1117, %v1121
  %1123 = vrot.lane.b32.xlu0 %v1062, 32
  %v1124 = vpop.permute.xlu0 %1123
  %1125 = vrot.lane.b32.xlu0 %v1072, 32
  %v1126 = vpop.permute.xlu0 %1125
  %1127 = vrot.lane.b32.xlu0 %v1082, 32
  %v1128 = vpop.permute.xlu0 %1127
  %1129 = vrot.lane.b32.xlu0 %v1092, 32
  %v1130 = vpop.permute.xlu0 %1129
  %1131 = vrot.lane.b32.xlu0 %v1102, 32
  %v1132 = vpop.permute.xlu0 %1131
  %1133 = vrot.lane.b32.xlu0 %v1112, 32
  %v1134 = vpop.permute.xlu0 %1133
  %1135 = vrot.lane.b32.xlu0 %v1122, 32
  %v1136 = vpop.permute.xlu0 %1135
  %1144 = vst.msk [vmem:[#allocation2] sm:$0xf] %vm188, %v1124
  %1145 = vst.msk [vmem:[#allocation2 + $0xc] sm:$0xf] %vm188, %v1126
  %1146 = vst.msk [vmem:[#allocation2 + $0x18] sm:$0xf] %vm188, %v1128
  %1147 = vst.msk [vmem:[#allocation2 + $0x24] sm:$0xf] %vm188, %v1130
  %1148 = vst.msk [vmem:[#allocation2 + $0x30] sm:$0xf] %vm188, %v1132
  %1149 = vst.msk [vmem:[#allocation2 + $0x3c] sm:$0xf] %vm188, %v1134
  %1150 = vst.msk [vmem:[#allocation2 + $0x48] sm:$0xf] %vm188, %v1136
  %v1151 = vld [vmem:[%s0] sm:$0xf]
  %v1152 = vld [vmem:[%s0 + $0x4] sm:$0xf]
  %v1153 = vld [vmem:[%s0 + $0x8] sm:$0xf]
  %v1154 = vld [vmem:[%s0 + $0xc] sm:$0xf]
  %v1155 = vld [vmem:[%s0 + $0x10] sm:$0xf]
  %v1156 = vld [vmem:[%s0 + $0x14] sm:$0xf]
  %v1157 = vld [vmem:[%s0 + $0x18] sm:$0xf]
  %1158 = vst.msk [vmem:[#allocation2] sm:$0xf] %vm231, %v1151
  %1159 = vst.msk [vmem:[#allocation2 + $0xc] sm:$0xf] %vm231, %v1152
  %1160 = vst.msk [vmem:[#allocation2 + $0x18] sm:$0xf] %vm231, %v1153
  %1161 = vst.msk [vmem:[#allocation2 + $0x24] sm:$0xf] %vm231, %v1154
  %1162 = vst.msk [vmem:[#allocation2 + $0x30] sm:$0xf] %vm231, %v1155
  %1163 = vst.msk [vmem:[#allocation2 + $0x3c] sm:$0xf] %vm231, %v1156
  %1164 = vst.msk [vmem:[#allocation2 + $0x48] sm:$0xf] %vm231, %v1157
  %v1165 = vld [vmem:[%s0] sm:$0xf]
  %v1166 = vld [vmem:[%s0 + $0x4] sm:$0xf]
  %v1167 = vld [vmem:[%s0 + $0x8] sm:$0xf]
  %v1168 = vld [vmem:[%s0 + $0xc] sm:$0xf]
  %v1169 = vld [vmem:[%s0 + $0x10] sm:$0xf]
  %v1170 = vld [vmem:[%s0 + $0x14] sm:$0xf]
  %v1171 = vld [vmem:[%s0 + $0x18] sm:$0xf]
  %v1172 = vld [vmem:[%s0 + $0x1c] sm:$0x1]
  %v1174 = vshrl.u32 %v1165, 16
  %v1176 = vrot.slane %v1174, 4
  %v1177 = vshll.u32 %v1165, 16
  %v1179 = vrot.slane %v1177, 5
  %v1180 = vor.u32 %v1176, %v1179
  %v1181 = vrot.slane %v1180, 4
  %v1183 = vshll.u32 %v1166, 16
  %v1185 = vrot.slane %v1183, 5
  %v1186 = vsel %vm92, %v1181, %v1185
  %v1187 = vshrl.u32 %v1166, 16
  %v1189 = vrot.slane %v1187, 4
  %v1190 = vor.u32 %v1189, %v1185
  %v1191 = vrot.slane %v1190, 4
  %v1193 = vshll.u32 %v1167, 16
  %v1195 = vrot.slane %v1193, 5
  %v1196 = vsel %vm92, %v1191, %v1195
  %v1197 = vshrl.u32 %v1167, 16
  %v1199 = vrot.slane %v1197, 4
  %v1200 = vor.u32 %v1199, %v1195
  %v1201 = vrot.slane %v1200, 4
  %v1203 = vshll.u32 %v1168, 16
  %v1205 = vrot.slane %v1203, 5
  %v1206 = vsel %vm92, %v1201, %v1205
  %v1207 = vshrl.u32 %v1168, 16
  %v1209 = vrot.slane %v1207, 4
  %v1210 = vor.u32 %v1209, %v1205
  %v1211 = vrot.slane %v1210, 4
  %v1213 = vshll.u32 %v1169, 16
  %v1215 = vrot.slane %v1213, 5
  %v1216 = vsel %vm92, %v1211, %v1215
  %v1217 = vshrl.u32 %v1169, 16
  %v1219 = vrot.slane %v1217, 4
  %v1220 = vor.u32 %v1219, %v1215
  %v1221 = vrot.slane %v1220, 4
  %v1223 = vshll.u32 %v1170, 16
  %v1225 = vrot.slane %v1223, 5
  %v1226 = vsel %vm92, %v1221, %v1225
  %v1227 = vshrl.u32 %v1170, 16
  %v1229 = vrot.slane %v1227, 4
  %v1230 = vor.u32 %v1229, %v1225
  %v1231 = vrot.slane %v1230, 4
  %v1233 = vshll.u32 %v1171, 16
  %v1235 = vrot.slane %v1233, 5
  %v1236 = vsel %vm92, %v1231, %v1235
  %v1237 = vshrl.u32 %v1171, 16
  %v1239 = vrot.slane %v1237, 4
  %v1240 = vor.u32 %v1239, %v1235
  %v1241 = vrot.slane %v1240, 4
  %v1243 = vshll.u32 %v1172, 16
  %v1245 = vrot.slane %v1243, 5
  %v1246 = vsel %vm92, %v1241, %v1245
  %1247 = vrot.lane.b32.xlu0 %v1186, 64
  %v1248 = vpop.permute.xlu0 %1247
  %1249 = vrot.lane.b32.xlu0 %v1196, 64
  %v1250 = vpop.permute.xlu0 %1249
  %1251 = vrot.lane.b32.xlu0 %v1206, 64
  %v1252 = vpop.permute.xlu0 %1251
  %1253 = vrot.lane.b32.xlu0 %v1216, 64
  %v1254 = vpop.permute.xlu0 %1253
  %1255 = vrot.lane.b32.xlu0 %v1226, 64
  %v1256 = vpop.permute.xlu0 %1255
  %1257 = vrot.lane.b32.xlu0 %v1236, 64
  %v1258 = vpop.permute.xlu0 %1257
  %1259 = vrot.lane.b32.xlu0 %v1246, 64
  %v1260 = vpop.permute.xlu0 %1259
  %1268 = vst.msk [vmem:[#allocation2 + $0x4] sm:$0xf] %vm59, %v1248
  %1269 = vst.msk [vmem:[#allocation2 + $0x10] sm:$0xf] %vm59, %v1250
  %1270 = vst.msk [vmem:[#allocation2 + $0x1c] sm:$0xf] %vm59, %v1252
  %1271 = vst.msk [vmem:[#allocation2 + $0x28] sm:$0xf] %vm59, %v1254
  %1272 = vst.msk [vmem:[#allocation2 + $0x34] sm:$0xf] %vm59, %v1256
  %1273 = vst.msk [vmem:[#allocation2 + $0x40] sm:$0xf] %vm59, %v1258
  %1274 = vst.msk [vmem:[#allocation2 + $0x4c] sm:$0xf] %vm59, %v1260
  %v1275 = vld [vmem:[%s0] sm:$0xf]
  %v1276 = vld [vmem:[%s0 + $0x4] sm:$0xf]
  %v1277 = vld [vmem:[%s0 + $0x8] sm:$0xf]
  %v1278 = vld [vmem:[%s0 + $0xc] sm:$0xf]
  %v1279 = vld [vmem:[%s0 + $0x10] sm:$0xf]
  %v1280 = vld [vmem:[%s0 + $0x14] sm:$0xf]
  %v1281 = vld [vmem:[%s0 + $0x18] sm:$0xf]
  %v1282 = vld [vmem:[%s0 + $0x1c] sm:$0x1]
  %v1284 = vshrl.u32 %v1275, 16
  %v1286 = vrot.slane %v1284, 4
  %v1287 = vshll.u32 %v1275, 16
  %v1289 = vrot.slane %v1287, 5
  %v1290 = vor.u32 %v1286, %v1289
  %v1291 = vrot.slane %v1290, 4
  %v1293 = vshll.u32 %v1276, 16
  %v1295 = vrot.slane %v1293, 5
  %v1296 = vsel %vm92, %v1291, %v1295
  %v1297 = vshrl.u32 %v1276, 16
  %v1299 = vrot.slane %v1297, 4
  %v1300 = vor.u32 %v1299, %v1295
  %v1301 = vrot.slane %v1300, 4
  %v1303 = vshll.u32 %v1277, 16
  %v1305 = vrot.slane %v1303, 5
  %v1306 = vsel %vm92, %v1301, %v1305
  %v1307 = vshrl.u32 %v1277, 16
  %v1309 = vrot.slane %v1307, 4
  %v1310 = vor.u32 %v1309, %v1305
  %v1311 = vrot.slane %v1310, 4
  %v1313 = vshll.u32 %v1278, 16
  %v1315 = vrot.slane %v1313, 5
  %v1316 = vsel %vm92, %v1311, %v1315
  %v1317 = vshrl.u32 %v1278, 16
  %v1319 = vrot.slane %v1317, 4
  %v1320 = vor.u32 %v1319, %v1315
  %v1321 = vrot.slane %v1320, 4
  %v1323 = vshll.u32 %v1279, 16
  %v1325 = vrot.slane %v1323, 5
  %v1326 = vsel %vm92, %v1321, %v1325
  %v1327 = vshrl.u32 %v1279, 16
  %v1329 = vrot.slane %v1327, 4
  %v1330 = vor.u32 %v1329, %v1325
  %v1331 = vrot.slane %v1330, 4
  %v1333 = vshll.u32 %v1280, 16
  %v1335 = vrot.slane %v1333, 5
  %v1336 = vsel %vm92, %v1331, %v1335
  %v1337 = vshrl.u32 %v1280, 16
  %v1339 = vrot.slane %v1337, 4
  %v1340 = vor.u32 %v1339, %v1335
  %v1341 = vrot.slane %v1340, 4
  %v1343 = vshll.u32 %v1281, 16
  %v1345 = vrot.slane %v1343, 5
  %v1346 = vsel %vm92, %v1341, %v1345
  %v1347 = vshrl.u32 %v1281, 16
  %v1349 = vrot.slane %v1347, 4
  %v1350 = vor.u32 %v1349, %v1345
  %v1351 = vrot.slane %v1350, 4
  %v1353 = vshll.u32 %v1282, 16
  %v1355 = vrot.slane %v1353, 5
  %v1356 = vsel %vm92, %v1351, %v1355
  %1357 = vrot.lane.b32.xlu0 %v1296, 64
  %v1358 = vpop.permute.xlu0 %1357
  %1359 = vrot.lane.b32.xlu0 %v1306, 64
  %v1360 = vpop.permute.xlu0 %1359
  %1361 = vrot.lane.b32.xlu0 %v1316, 64
  %v1362 = vpop.permute.xlu0 %1361
  %1363 = vrot.lane.b32.xlu0 %v1326, 64
  %v1364 = vpop.permute.xlu0 %1363
  %1365 = vrot.lane.b32.xlu0 %v1336, 64
  %v1366 = vpop.permute.xlu0 %1365
  %1367 = vrot.lane.b32.xlu0 %v1346, 64
  %v1368 = vpop.permute.xlu0 %1367
  %1369 = vrot.lane.b32.xlu0 %v1356, 64
  %v1370 = vpop.permute.xlu0 %1369
  %1378 = vst.msk [vmem:[#allocation2 + $0x4] sm:$0xf] %vm74, %v1358
  %1379 = vst.msk [vmem:[#allocation2 + $0x10] sm:$0xf] %vm74, %v1360
  %1380 = vst.msk [vmem:[#allocation2 + $0x1c] sm:$0xf] %vm74, %v1362
  %1381 = vst.msk [vmem:[#allocation2 + $0x28] sm:$0xf] %vm74, %v1364
  %1382 = vst.msk [vmem:[#allocation2 + $0x34] sm:$0xf] %vm74, %v1366
  %1383 = vst.msk [vmem:[#allocation2 + $0x40] sm:$0xf] %vm74, %v1368
  %1384 = vst.msk [vmem:[#allocation2 + $0x4c] sm:$0xf] %vm74, %v1370
  %v1385 = vld [vmem:[%s0 + $0x4] sm:$0xf]
  %v1386 = vld [vmem:[%s0 + $0x8] sm:$0xf]
  %v1387 = vld [vmem:[%s0 + $0xc] sm:$0xf]
  %v1388 = vld [vmem:[%s0 + $0x10] sm:$0xf]
  %v1389 = vld [vmem:[%s0 + $0x14] sm:$0xf]
  %v1390 = vld [vmem:[%s0 + $0x18] sm:$0xf]
  %v1391 = vld [vmem:[%s0 + $0x1c] sm:$0xf]
  %1399 = vrot.lane.b32.xlu0 %v1385, 32
  %v1400 = vpop.permute.xlu0 %1399
  %1401 = vrot.lane.b32.xlu0 %v1386, 32
  %v1402 = vpop.permute.xlu0 %1401
  %1403 = vrot.lane.b32.xlu0 %v1387, 32
  %v1404 = vpop.permute.xlu0 %1403
  %1405 = vrot.lane.b32.xlu0 %v1388, 32
  %v1406 = vpop.permute.xlu0 %1405
  %1407 = vrot.lane.b32.xlu0 %v1389, 32
  %v1408 = vpop.permute.xlu0 %1407
  %1409 = vrot.lane.b32.xlu0 %v1390, 32
  %v1410 = vpop.permute.xlu0 %1409
  %1411 = vrot.lane.b32.xlu0 %v1391, 32
  %v1412 = vpop.permute.xlu0 %1411
  %1420 = vst.msk [vmem:[#allocation2 + $0x4] sm:$0xf] %vm188, %v1400
  %1421 = vst.msk [vmem:[#allocation2 + $0x10] sm:$0xf] %vm188, %v1402
  %1422 = vst.msk [vmem:[#allocation2 + $0x1c] sm:$0xf] %vm188, %v1404
  %1423 = vst.msk [vmem:[#allocation2 + $0x28] sm:$0xf] %vm188, %v1406
  %1424 = vst.msk [vmem:[#allocation2 + $0x34] sm:$0xf] %vm188, %v1408
  %1425 = vst.msk [vmem:[#allocation2 + $0x40] sm:$0xf] %vm188, %v1410
  %1426 = vst.msk [vmem:[#allocation2 + $0x4c] sm:$0xf] %vm188, %v1412
  %v1427 = vld [vmem:[%s0 + $0x4] sm:$0xf]
  %v1428 = vld [vmem:[%s0 + $0x8] sm:$0xf]
  %v1429 = vld [vmem:[%s0 + $0xc] sm:$0xf]
  %v1430 = vld [vmem:[%s0 + $0x10] sm:$0xf]
  %v1431 = vld [vmem:[%s0 + $0x14] sm:$0xf]
  %v1432 = vld [vmem:[%s0 + $0x18] sm:$0xf]
  %v1433 = vld [vmem:[%s0 + $0x1c] sm:$0xf]
  %v1434 = vld [vmem:[%s0 + $0x20] sm:$0x1]
  %v1436 = vshrl.u32 %v1427, 16
  %v1438 = vrot.slane %v1436, 4
  %v1439 = vshll.u32 %v1427, 16
  %v1441 = vrot.slane %v1439, 5
  %v1442 = vor.u32 %v1438, %v1441
  %v1443 = vrot.slane %v1442, 4
  %v1445 = vshll.u32 %v1428, 16
  %v1447 = vrot.slane %v1445, 5
  %v1448 = vsel %vm92, %v1443, %v1447
  %v1449 = vshrl.u32 %v1428, 16
  %v1451 = vrot.slane %v1449, 4
  %v1452 = vor.u32 %v1451, %v1447
  %v1453 = vrot.slane %v1452, 4
  %v1455 = vshll.u32 %v1429, 16
  %v1457 = vrot.slane %v1455, 5
  %v1458 = vsel %vm92, %v1453, %v1457
  %v1459 = vshrl.u32 %v1429, 16
  %v1461 = vrot.slane %v1459, 4
  %v1462 = vor.u32 %v1461, %v1457
  %v1463 = vrot.slane %v1462, 4
  %v1465 = vshll.u32 %v1430, 16
  %v1467 = vrot.slane %v1465, 5
  %v1468 = vsel %vm92, %v1463, %v1467
  %v1469 = vshrl.u32 %v1430, 16
  %v1471 = vrot.slane %v1469, 4
  %v1472 = vor.u32 %v1471, %v1467
  %v1473 = vrot.slane %v1472, 4
  %v1475 = vshll.u32 %v1431, 16
  %v1477 = vrot.slane %v1475, 5
  %v1478 = vsel %vm92, %v1473, %v1477
  %v1479 = vshrl.u32 %v1431, 16
  %v1481 = vrot.slane %v1479, 4
  %v1482 = vor.u32 %v1481, %v1477
  %v1483 = vrot.slane %v1482, 4
  %v1485 = vshll.u32 %v1432, 16
  %v1487 = vrot.slane %v1485, 5
  %v1488 = vsel %vm92, %v1483, %v1487
  %v1489 = vshrl.u32 %v1432, 16
  %v1491 = vrot.slane %v1489, 4
  %v1492 = vor.u32 %v1491, %v1487
  %v1493 = vrot.slane %v1492, 4
  %v1495 = vshll.u32 %v1433, 16
  %v1497 = vrot.slane %v1495, 5
  %v1498 = vsel %vm92, %v1493, %v1497
  %v1499 = vshrl.u32 %v1433, 16
  %v1501 = vrot.slane %v1499, 4
  %v1502 = vor.u32 %v1501, %v1497
  %v1503 = vrot.slane %v1502, 4
  %v1505 = vshll.u32 %v1434, 16
  %v1507 = vrot.slane %v1505, 5
  %v1508 = vsel %vm92, %v1503, %v1507
  %1509 = vrot.lane.b32.xlu0 %v1448, 96
  %v1510 = vpop.permute.xlu0 %1509
  %1511 = vrot.lane.b32.xlu0 %v1458, 96
  %v1512 = vpop.permute.xlu0 %1511
  %1513 = vrot.lane.b32.xlu0 %v1468, 96
  %v1514 = vpop.permute.xlu0 %1513
  %1515 = vrot.lane.b32.xlu0 %v1478, 96
  %v1516 = vpop.permute.xlu0 %1515
  %1517 = vrot.lane.b32.xlu0 %v1488, 96
  %v1518 = vpop.permute.xlu0 %1517
  %1519 = vrot.lane.b32.xlu0 %v1498, 96
  %v1520 = vpop.permute.xlu0 %1519
  %1521 = vrot.lane.b32.xlu0 %v1508, 96
  %v1522 = vpop.permute.xlu0 %1521
  %1530 = vst.msk [vmem:[#allocation2 + $0x4] sm:$0xf] %vm231, %v1510
  %1531 = vst.msk [vmem:[#allocation2 + $0x10] sm:$0xf] %vm231, %v1512
  %1532 = vst.msk [vmem:[#allocation2 + $0x1c] sm:$0xf] %vm231, %v1514
  %1533 = vst.msk [vmem:[#allocation2 + $0x28] sm:$0xf] %vm231, %v1516
  %1534 = vst.msk [vmem:[#allocation2 + $0x34] sm:$0xf] %vm231, %v1518
  %1535 = vst.msk [vmem:[#allocation2 + $0x40] sm:$0xf] %vm231, %v1520
  %1536 = vst.msk [vmem:[#allocation2 + $0x4c] sm:$0xf] %vm231, %v1522
  %v1537 = vld [vmem:[%s0 + $0x4] sm:$0xf]
  %v1538 = vld [vmem:[%s0 + $0x8] sm:$0xf]
  %v1539 = vld [vmem:[%s0 + $0xc] sm:$0xf]
  %v1540 = vld [vmem:[%s0 + $0x10] sm:$0xf]
  %v1541 = vld [vmem:[%s0 + $0x14] sm:$0xf]
  %v1542 = vld [vmem:[%s0 + $0x18] sm:$0xf]
  %v1543 = vld [vmem:[%s0 + $0x1c] sm:$0xf]
  %v1544 = vld [vmem:[%s0 + $0x20] sm:$0x1]
  %v1546 = vshrl.u32 %v1537, 16
  %v1548 = vrot.slane %v1546, 4
  %v1549 = vshll.u32 %v1537, 16
  %v1551 = vrot.slane %v1549, 5
  %v1552 = vor.u32 %v1548, %v1551
  %v1553 = vrot.slane %v1552, 4
  %v1555 = vshll.u32 %v1538, 16
  %v1557 = vrot.slane %v1555, 5
  %v1558 = vsel %vm92, %v1553, %v1557
  %v1559 = vshrl.u32 %v1538, 16
  %v1561 = vrot.slane %v1559, 4
  %v1562 = vor.u32 %v1561, %v1557
  %v1563 = vrot.slane %v1562, 4
  %v1565 = vshll.u32 %v1539, 16
  %v1567 = vrot.slane %v1565, 5
  %v1568 = vsel %vm92, %v1563, %v1567
  %v1569 = vshrl.u32 %v1539, 16
  %v1571 = vrot.slane %v1569, 4
  %v1572 = vor.u32 %v1571, %v1567
  %v1573 = vrot.slane %v1572, 4
  %v1575 = vshll.u32 %v1540, 16
  %v1577 = vrot.slane %v1575, 5
  %v1578 = vsel %vm92, %v1573, %v1577
  %v1579 = vshrl.u32 %v1540, 16
  %v1581 = vrot.slane %v1579, 4
  %v1582 = vor.u32 %v1581, %v1577
  %v1583 = vrot.slane %v1582, 4
  %v1585 = vshll.u32 %v1541, 16
  %v1587 = vrot.slane %v1585, 5
  %v1588 = vsel %vm92, %v1583, %v1587
  %v1589 = vshrl.u32 %v1541, 16
  %v1591 = vrot.slane %v1589, 4
  %v1592 = vor.u32 %v1591, %v1587
  %v1593 = vrot.slane %v1592, 4
  %v1595 = vshll.u32 %v1542, 16
  %v1597 = vrot.slane %v1595, 5
  %v1598 = vsel %vm92, %v1593, %v1597
  %v1599 = vshrl.u32 %v1542, 16
  %v1601 = vrot.slane %v1599, 4
  %v1602 = vor.u32 %v1601, %v1597
  %v1603 = vrot.slane %v1602, 4
  %v1605 = vshll.u32 %v1543, 16
  %v1607 = vrot.slane %v1605, 5
  %v1608 = vsel %vm92, %v1603, %v1607
  %v1609 = vshrl.u32 %v1543, 16
  %v1611 = vrot.slane %v1609, 4
  %v1612 = vor.u32 %v1611, %v1607
  %v1613 = vrot.slane %v1612, 4
  %v1615 = vshll.u32 %v1544, 16
  %v1617 = vrot.slane %v1615, 5
  %v1618 = vsel %vm92, %v1613, %v1617
  %1619 = vrot.lane.b32.xlu0 %v1558, 96
  %v1620 = vpop.permute.xlu0 %1619
  %1621 = vrot.lane.b32.xlu0 %v1568, 96
  %v1622 = vpop.permute.xlu0 %1621
  %1623 = vrot.lane.b32.xlu0 %v1578, 96
  %v1624 = vpop.permute.xlu0 %1623
  %1625 = vrot.lane.b32.xlu0 %v1588, 96
  %v1626 = vpop.permute.xlu0 %1625
  %1627 = vrot.lane.b32.xlu0 %v1598, 96
  %v1628 = vpop.permute.xlu0 %1627
  %1629 = vrot.lane.b32.xlu0 %v1608, 96
  %v1630 = vpop.permute.xlu0 %1629
  %1631 = vrot.lane.b32.xlu0 %v1618, 96
  %v1632 = vpop.permute.xlu0 %1631
  %1640 = vst.msk [vmem:[#allocation2 + $0x8] sm:$0xf] %vm59, %v1620
  %1641 = vst.msk [vmem:[#allocation2 + $0x14] sm:$0xf] %vm59, %v1622
  %1642 = vst.msk [vmem:[#allocation2 + $0x20] sm:$0xf] %vm59, %v1624
  %1643 = vst.msk [vmem:[#allocation2 + $0x2c] sm:$0xf] %vm59, %v1626
  %1644 = vst.msk [vmem:[#allocation2 + $0x38] sm:$0xf] %vm59, %v1628
  %1645 = vst.msk [vmem:[#allocation2 + $0x44] sm:$0xf] %vm59, %v1630
  %1646 = vst.msk [vmem:[#allocation2 + $0x50] sm:$0xf] %vm59, %v1632
  %v1647 = vld [vmem:[#allocation2] sm:$0xff]
  %v1648 = vld [vmem:[#allocation2 + $0x8] sm:$0xf]
  %v1649 = vld [vmem:[#allocation2 + $0xc] sm:$0xff]
  %v1650 = vld [vmem:[#allocation2 + $0x14] sm:$0xf]
  %v1651 = vld [vmem:[#allocation2 + $0x18] sm:$0xff]
  %v1652 = vld [vmem:[#allocation2 + $0x20] sm:$0xf]
  %v1653 = vld [vmem:[#allocation2 + $0x24] sm:$0xff]
  %v1654 = vld [vmem:[#allocation2 + $0x2c] sm:$0xf]
  %v1655 = vld [vmem:[#allocation2 + $0x30] sm:$0xff]
  %v1656 = vld [vmem:[#allocation2 + $0x38] sm:$0xf]
  %v1657 = vld [vmem:[#allocation2 + $0x3c] sm:$0xff]
  %v1658 = vld [vmem:[#allocation2 + $0x44] sm:$0xf]
  %v1659 = vld [vmem:[#allocation2 + $0x48] sm:$0xff]
  %v1660 = vld [vmem:[#allocation2 + $0x50] sm:$0xf]
  %v1675 = vunpack.c.l.b16 %v1647
  %v1676 = vunpack.c.h.b16 %v1647
  %v1677 = vunpack.c.l.b16 %v1648
  %v1678 = vunpack.c.l.b16 %v1649
  %v1679 = vunpack.c.h.b16 %v1649
  %v1680 = vunpack.c.l.b16 %v1650
  %v1681 = vunpack.c.l.b16 %v1651
  %v1682 = vunpack.c.h.b16 %v1651
  %v1683 = vunpack.c.l.b16 %v1652
  %v1684 = vunpack.c.l.b16 %v1653
  %v1685 = vunpack.c.h.b16 %v1653
  %v1686 = vunpack.c.l.b16 %v1654
  %v1687 = vunpack.c.l.b16 %v1655
  %v1688 = vunpack.c.h.b16 %v1655
  %v1689 = vunpack.c.l.b16 %v1656
  %v1690 = vunpack.c.l.b16 %v1657
  %v1691 = vunpack.c.h.b16 %v1657
  %v1692 = vunpack.c.l.b16 %v1658
  %v1693 = vunpack.c.l.b16 %v1659
  %v1694 = vunpack.c.h.b16 %v1659
  %v1695 = vunpack.c.l.b16 %v1660
  %v1696 = vpack.c.b16 %v1678, %v1675
  %v1697 = vpack.c.b16 %v1679, %v1676
  %v1698 = vpack.c.b16 %v1680, %v1677
  %v1699 = vpack.c.b16 %v1684, %v1681
  %v1700 = vpack.c.b16 %v1685, %v1682
  %v1701 = vpack.c.b16 %v1686, %v1683
  %v1702 = vpack.c.b16 %v1690, %v1687
  %v1703 = vpack.c.b16 %v1691, %v1688
  %v1704 = vpack.c.b16 %v1692, %v1689
  %v1705 = vpack.c.b16 %v1693, %v1693
  %v1706 = vpack.c.b16 %v1694, %v1694
  %v1707 = vpack.c.b16 %v1695, %v1695
  %v1717 = vsel %vm748, %v1698, 0
  %v1720 = vsel %vm748, %v1701, 0
  %v1723 = vsel %vm748, %v1704, 0
  %v1726 = vsel %vm748, %v1707, 0
  %1728 = vmatprep.subr.bf16.mxu0 0
  %1729 = vmatpush1.bf16.msra.mxu0 %v712
  %1730 = vmatprep.subr.bf16.mxu0 0
  %1731 = vmatpush1.bf16.msra.mxu0 %v713
  %1732 = vmatprep.subr.bf16.mxu0 0
  %1733 = vmatpush1.bf16.msra.mxu0 %v714
  %1734 = vmatprep.subr.bf16.mxu0 0
  %1735 = vmatpush1.bf16.msra.mxu0 %v715
  %1736 = vmatprep.subr.bf16.mxu0 0
  %1737 = vmatpush1.bf16.msra.mxu0 %v716
  %1738 = vmatprep.subr.bf16.mxu0 0
  %1739 = vmatpush1.bf16.msra.mxu0 %v717
  %1740 = vmatprep.subr.bf16.mxu0 0
  %1741 = vmatpush1.bf16.msra.mxu0 %v718
  %1742 = vmatprep.subr.bf16.mxu0 0
  %1743 = vmatpush1.bf16.msra.mxu0 %v719
  %1744 = vmatprep.subr.bf16.mxu0 0
  %1745 = vmatpush1.bf16.msra.mxu0 %v720
  %1746 = vmatprep.subr.bf16.mxu0 0
  %1747 = vmatpush1.bf16.msra.mxu0 %v721
  %1748 = vmatprep.subr.bf16.mxu0 0
  %1749 = vmatpush1.bf16.msra.mxu0 %v722
  %1750 = vmatprep.subr.bf16.mxu0 0
  %1751 = vmatpush1.bf16.msra.mxu0 %v723
  %1752 = vmatprep.subr.bf16.mxu0 0
  %1753 = vmatpush1.bf16.msra.mxu0 %v724
  %1754 = vmatprep.subr.bf16.mxu0 0
  %1755 = vmatpush1.bf16.msra.mxu0 %v725
  %1756 = vmatprep.subr.bf16.mxu0 0
  %1757 = vmatpush1.bf16.msra.mxu0 %v726
  %1758 = vmatprep.subr.bf16.mxu0 0
  %1759 = vmatpush1.bf16.msra.mxu0 %v727
  %1760 = vmatprep.mubr.bf16.mxu0 %v1697
  %1761 = vmatmul.mubr.bf16.gmra.mrb[0].mxu0 %v1696
  %v1762 = vpop.f32.mrb[0].mxu0
  %v1763 = vadd.f32 0.0, %v1762
  %v1764 = vpop.f32.mrb[0].mxu0
  %v1765 = vpop.f32.mrb[0].mxu0
  %v1766 = vadd.f32 0.0, %v1765
  %v1767 = vpop.f32.mrb[0].mxu0
  %1768 = vmatprep.mubr.bf16.mxu0 %v1700
  %1769 = vmatmul.mubr.bf16.gmra.mrb[0].mxu0 %v1699
  %v1770 = vpop.f32.mrb[0].mxu0
  %v1771 = vadd.f32 0.0, %v1770
  %v1772 = vpop.f32.mrb[0].mxu0
  %v1773 = vpop.f32.mrb[0].mxu0
  %v1774 = vadd.f32 0.0, %v1773
  %v1775 = vpop.f32.mrb[0].mxu0
  %1776 = vmatprep.mubr.bf16.mxu0 %v1703
  %1777 = vmatmul.mubr.bf16.gmra.mrb[0].mxu0 %v1702
  %v1778 = vpop.f32.mrb[0].mxu0
  %v1779 = vadd.f32 0.0, %v1778
  %v1780 = vpop.f32.mrb[0].mxu0
  %v1781 = vpop.f32.mrb[0].mxu0
  %v1782 = vadd.f32 0.0, %v1781
  %v1783 = vpop.f32.mrb[0].mxu0
  %1784 = vmatprep.mubr.bf16.mxu0 %v1706
  %1785 = vmatmul.mubr.bf16.gmra.mrb[0].mxu0 %v1705
  %v1786 = vpop.f32.mrb[0].mxu0
  %v1787 = vadd.f32 0.0, %v1786
  %v1788 = vpop.f32.mrb[0].mxu0
  %v1789 = vpop.f32.mrb[0].mxu0
  %v1790 = vpop.f32.mrb[0].mxu0
  %1791 = vdwg.mxu0
  %1792 = vmatprep.subr.bf16.mxu0 0
  %1793 = vmatpush1.bf16.msra.mxu0 %v728
  %1794 = vmatprep.subr.bf16.mxu0 0
  %1795 = vmatpush1.bf16.msra.mxu0 %v729
  %1796 = vmatprep.subr.bf16.mxu0 0
  %1797 = vmatpush1.bf16.msra.mxu0 0
  %1798 = vmatprep.subr.bf16.mxu0 0
  %1799 = vmatpush1.bf16.msra.mxu0 0
  %1800 = vmatprep.subr.bf16.mxu0 0
  %1801 = vmatpush1.bf16.msra.mxu0 0
  %1802 = vmatprep.subr.bf16.mxu0 0
  %1803 = vmatpush1.bf16.msra.mxu0 0
  %1804 = vmatprep.subr.bf16.mxu0 0
  %1805 = vmatpush1.bf16.msra.mxu0 0
  %1806 = vmatprep.subr.bf16.mxu0 0
  %1807 = vmatpush1.bf16.msra.mxu0 0
  %1808 = vmatprep.subr.bf16.mxu0 0
  %1809 = vmatpush1.bf16.msra.mxu0 0
  %1810 = vmatprep.subr.bf16.mxu0 0
  %1811 = vmatpush1.bf16.msra.mxu0 0
  %1812 = vmatprep.subr.bf16.mxu0 0
  %1813 = vmatpush1.bf16.msra.mxu0 0
  %1814 = vmatprep.subr.bf16.mxu0 0
  %1815 = vmatpush1.bf16.msra.mxu0 0
  %1816 = vmatprep.subr.bf16.mxu0 0
  %1817 = vmatpush1.bf16.msra.mxu0 0
  %1818 = vmatprep.subr.bf16.mxu0 0
  %1819 = vmatpush1.bf16.msra.mxu0 0
  %1820 = vmatprep.subr.bf16.mxu0 0
  %1821 = vmatpush1.bf16.msra.mxu0 0
  %1822 = vmatprep.subr.bf16.mxu0 0
  %1823 = vmatpush1.bf16.msra.mxu0 0
  %1824 = vmatprep.mubr.bf16.mxu0 0
  %1825 = vmatmul.mubr.bf16.gmra.mrb[0].mxu0 %v1717
  %v1826 = vpop.f32.mrb[0].mxu0
  %v1827 = vadd.f32 %v1763, %v1826
  %v1828 = vpop.f32.mrb[0].mxu0
  %v1829 = vpop.f32.mrb[0].mxu0
  %v1830 = vadd.f32 %v1766, %v1829
  %v1831 = vpop.f32.mrb[0].mxu0
  %1832 = vmatprep.mubr.bf16.mxu0 0
  %1833 = vmatmul.mubr.bf16.gmra.mrb[0].mxu0 %v1720
  %v1834 = vpop.f32.mrb[0].mxu0
  %v1835 = vadd.f32 %v1771, %v1834
  %v1836 = vpop.f32.mrb[0].mxu0
  %v1837 = vpop.f32.mrb[0].mxu0
  %v1838 = vadd.f32 %v1774, %v1837
  %v1839 = vpop.f32.mrb[0].mxu0
  %1840 = vmatprep.mubr.bf16.mxu0 0
  %1841 = vmatmul.mubr.bf16.gmra.mrb[0].mxu0 %v1723
  %v1842 = vpop.f32.mrb[0].mxu0
  %v1843 = vadd.f32 %v1779, %v1842
  %v1844 = vpop.f32.mrb[0].mxu0
  %v1845 = vpop.f32.mrb[0].mxu0
  %v1846 = vadd.f32 %v1782, %v1845
  %v1847 = vpop.f32.mrb[0].mxu0
  %1848 = vmatprep.mubr.bf16.mxu0 0
  %1849 = vmatmul.mubr.bf16.gmra.mrb[0].mxu0 %v1726
  %v1850 = vpop.f32.mrb[0].mxu0
  %v1851 = vadd.f32 %v1787, %v1850
  %v1852 = vpop.f32.mrb[0].mxu0
  %v1853 = vpop.f32.mrb[0].mxu0
  %v1854 = vpop.f32.mrb[0].mxu0
  %1855 = vdwg.mxu0
  %v1856 = vmax.f32 %v860, %v1827
  %v1857 = vmax.f32 %v863, %v1830
  %v1858 = vmax.f32 %v868, %v1835
  %v1859 = vmax.f32 %v871, %v1838
  %v1860 = vmax.f32 %v876, %v1843
  %v1861 = vmax.f32 %v879, %v1846
  %v1862 = vmax.f32 %v884, %v1851
  %v1863 = vld [vmem:[%s0] sm:$0xf]
  %v1864 = vld [vmem:[%s0 + $0x4] sm:$0xf]
  %v1865 = vld [vmem:[%s0 + $0x8] sm:$0xf]
  %v1866 = vld [vmem:[%s0 + $0xc] sm:$0xf]
  %v1867 = vld [vmem:[%s0 + $0x10] sm:$0xf]
  %v1868 = vld [vmem:[%s0 + $0x14] sm:$0xf]
  %v1869 = vld [vmem:[%s0 + $0x18] sm:$0xf]
  %1877 = vrot.lane.b32.xlu0 %v1863, 64
  %v1878 = vpop.permute.xlu0 %1877
  %1879 = vrot.lane.b32.xlu0 %v1864, 64
  %v1880 = vpop.permute.xlu0 %1879
  %1881 = vrot.lane.b32.xlu0 %v1865, 64
  %v1882 = vpop.permute.xlu0 %1881
  %1883 = vrot.lane.b32.xlu0 %v1866, 64
  %v1884 = vpop.permute.xlu0 %1883
  %1885 = vrot.lane.b32.xlu0 %v1867, 64
  %v1886 = vpop.permute.xlu0 %1885
  %1887 = vrot.lane.b32.xlu0 %v1868, 64
  %v1888 = vpop.permute.xlu0 %1887
  %1889 = vrot.lane.b32.xlu0 %v1869, 64
  %v1890 = vpop.permute.xlu0 %1889
  %1898 = vst.msk [vmem:[#allocation2] sm:$0xf] %vm59, %v1878
  %1899 = vst.msk [vmem:[#allocation2 + $0xc] sm:$0xf] %vm59, %v1880
  %1900 = vst.msk [vmem:[#allocation2 + $0x18] sm:$0xf] %vm59, %v1882
  %1901 = vst.msk [vmem:[#allocation2 + $0x24] sm:$0xf] %vm59, %v1884
  %1902 = vst.msk [vmem:[#allocation2 + $0x30] sm:$0xf] %vm59, %v1886
  %1903 = vst.msk [vmem:[#allocation2 + $0x3c] sm:$0xf] %vm59, %v1888
  %1904 = vst.msk [vmem:[#allocation2 + $0x48] sm:$0xf] %vm59, %v1890
  %v1905 = vld [vmem:[%s0] sm:$0xf]
  %v1906 = vld [vmem:[%s0 + $0x4] sm:$0xf]
  %v1907 = vld [vmem:[%s0 + $0x8] sm:$0xf]
  %v1908 = vld [vmem:[%s0 + $0xc] sm:$0xf]
  %v1909 = vld [vmem:[%s0 + $0x10] sm:$0xf]
  %v1910 = vld [vmem:[%s0 + $0x14] sm:$0xf]
  %v1911 = vld [vmem:[%s0 + $0x18] sm:$0xf]
  %1919 = vrot.lane.b32.xlu0 %v1905, 64
  %v1920 = vpop.permute.xlu0 %1919
  %1921 = vrot.lane.b32.xlu0 %v1906, 64
  %v1922 = vpop.permute.xlu0 %1921
  %1923 = vrot.lane.b32.xlu0 %v1907, 64
  %v1924 = vpop.permute.xlu0 %1923
  %1925 = vrot.lane.b32.xlu0 %v1908, 64
  %v1926 = vpop.permute.xlu0 %1925
  %1927 = vrot.lane.b32.xlu0 %v1909, 64
  %v1928 = vpop.permute.xlu0 %1927
  %1929 = vrot.lane.b32.xlu0 %v1910, 64
  %v1930 = vpop.permute.xlu0 %1929
  %1931 = vrot.lane.b32.xlu0 %v1911, 64
  %v1932 = vpop.permute.xlu0 %1931
  %1940 = vst.msk [vmem:[#allocation2] sm:$0xf] %vm74, %v1920
  %1941 = vst.msk [vmem:[#allocation2 + $0xc] sm:$0xf] %vm74, %v1922
  %1942 = vst.msk [vmem:[#allocation2 + $0x18] sm:$0xf] %vm74, %v1924
  %1943 = vst.msk [vmem:[#allocation2 + $0x24] sm:$0xf] %vm74, %v1926
  %1944 = vst.msk [vmem:[#allocation2 + $0x30] sm:$0xf] %vm74, %v1928
  %1945 = vst.msk [vmem:[#allocation2 + $0x3c] sm:$0xf] %vm74, %v1930
  %1946 = vst.msk [vmem:[#allocation2 + $0x48] sm:$0xf] %vm74, %v1932
  %v1947 = vld [vmem:[%s0] sm:$0xf]
  %v1948 = vld [vmem:[%s0 + $0x4] sm:$0xf]
  %v1949 = vld [vmem:[%s0 + $0x8] sm:$0xf]
  %v1950 = vld [vmem:[%s0 + $0xc] sm:$0xf]
  %v1951 = vld [vmem:[%s0 + $0x10] sm:$0xf]
  %v1952 = vld [vmem:[%s0 + $0x14] sm:$0xf]
  %v1953 = vld [vmem:[%s0 + $0x18] sm:$0xf]
  %v1954 = vld [vmem:[%s0 + $0x1c] sm:$0x1]
  %v1956 = vshrl.u32 %v1947, 16
  %v1958 = vrot.slane %v1956, 4
  %v1959 = vshll.u32 %v1947, 16
  %v1961 = vrot.slane %v1959, 5
  %v1962 = vor.u32 %v1958, %v1961
  %v1963 = vrot.slane %v1962, 4
  %v1965 = vshll.u32 %v1948, 16
  %v1967 = vrot.slane %v1965, 5
  %v1968 = vsel %vm92, %v1963, %v1967
  %v1969 = vshrl.u32 %v1948, 16
  %v1971 = vrot.slane %v1969, 4
  %v1972 = vor.u32 %v1971, %v1967
  %v1973 = vrot.slane %v1972, 4
  %v1975 = vshll.u32 %v1949, 16
  %v1977 = vrot.slane %v1975, 5
  %v1978 = vsel %vm92, %v1973, %v1977
  %v1979 = vshrl.u32 %v1949, 16
  %v1981 = vrot.slane %v1979, 4
  %v1982 = vor.u32 %v1981, %v1977
  %v1983 = vrot.slane %v1982, 4
  %v1985 = vshll.u32 %v1950, 16
  %v1987 = vrot.slane %v1985, 5
  %v1988 = vsel %vm92, %v1983, %v1987
  %v1989 = vshrl.u32 %v1950, 16
  %v1991 = vrot.slane %v1989, 4
  %v1992 = vor.u32 %v1991, %v1987
  %v1993 = vrot.slane %v1992, 4
  %v1995 = vshll.u32 %v1951, 16
  %v1997 = vrot.slane %v1995, 5
  %v1998 = vsel %vm92, %v1993, %v1997
  %v1999 = vshrl.u32 %v1951, 16
  %v2001 = vrot.slane %v1999, 4
  %v2002 = vor.u32 %v2001, %v1997
  %v2003 = vrot.slane %v2002, 4
  %v2005 = vshll.u32 %v1952, 16
  %v2007 = vrot.slane %v2005, 5
  %v2008 = vsel %vm92, %v2003, %v2007
  %v2009 = vshrl.u32 %v1952, 16
  %v2011 = vrot.slane %v2009, 4
  %v2012 = vor.u32 %v2011, %v2007
  %v2013 = vrot.slane %v2012, 4
  %v2015 = vshll.u32 %v1953, 16
  %v2017 = vrot.slane %v2015, 5
  %v2018 = vsel %vm92, %v2013, %v2017
  %v2019 = vshrl.u32 %v1953, 16
  %v2021 = vrot.slane %v2019, 4
  %v2022 = vor.u32 %v2021, %v2017
  %v2023 = vrot.slane %v2022, 4
  %v2025 = vshll.u32 %v1954, 16
  %v2027 = vrot.slane %v2025, 5
  %v2028 = vsel %vm92, %v2023, %v2027
  %2036 = vst.msk [vmem:[#allocation2] sm:$0xf] %vm188, %v1968
  %2037 = vst.msk [vmem:[#allocation2 + $0xc] sm:$0xf] %vm188, %v1978
  %2038 = vst.msk [vmem:[#allocation2 + $0x18] sm:$0xf] %vm188, %v1988
  %2039 = vst.msk [vmem:[#allocation2 + $0x24] sm:$0xf] %vm188, %v1998
  %2040 = vst.msk [vmem:[#allocation2 + $0x30] sm:$0xf] %vm188, %v2008
  %2041 = vst.msk [vmem:[#allocation2 + $0x3c] sm:$0xf] %vm188, %v2018
  %2042 = vst.msk [vmem:[#allocation2 + $0x48] sm:$0xf] %vm188, %v2028
  %v2043 = vld [vmem:[%s0 + $0x4] sm:$0xf]
  %v2044 = vld [vmem:[%s0 + $0x8] sm:$0xf]
  %v2045 = vld [vmem:[%s0 + $0xc] sm:$0xf]
  %v2046 = vld [vmem:[%s0 + $0x10] sm:$0xf]
  %v2047 = vld [vmem:[%s0 + $0x14] sm:$0xf]
  %v2048 = vld [vmem:[%s0 + $0x18] sm:$0xf]
  %v2049 = vld [vmem:[%s0 + $0x1c] sm:$0xf]
  %2057 = vrot.lane.b32.xlu0 %v2043, 96
  %v2058 = vpop.permute.xlu0 %2057
  %2059 = vrot.lane.b32.xlu0 %v2044, 96
  %v2060 = vpop.permute.xlu0 %2059
  %2061 = vrot.lane.b32.xlu0 %v2045, 96
  %v2062 = vpop.permute.xlu0 %2061
  %2063 = vrot.lane.b32.xlu0 %v2046, 96
  %v2064 = vpop.permute.xlu0 %2063
  %2065 = vrot.lane.b32.xlu0 %v2047, 96
  %v2066 = vpop.permute.xlu0 %2065
  %2067 = vrot.lane.b32.xlu0 %v2048, 96
  %v2068 = vpop.permute.xlu0 %2067
  %2069 = vrot.lane.b32.xlu0 %v2049, 96
  %v2070 = vpop.permute.xlu0 %2069
  %2078 = vst.msk [vmem:[#allocation2] sm:$0xf] %vm231, %v2058
  %2079 = vst.msk [vmem:[#allocation2 + $0xc] sm:$0xf] %vm231, %v2060
  %2080 = vst.msk [vmem:[#allocation2 + $0x18] sm:$0xf] %vm231, %v2062
  %2081 = vst.msk [vmem:[#allocation2 + $0x24] sm:$0xf] %vm231, %v2064
  %2082 = vst.msk [vmem:[#allocation2 + $0x30] sm:$0xf] %vm231, %v2066
  %2083 = vst.msk [vmem:[#allocation2 + $0x3c] sm:$0xf] %vm231, %v2068
  %2084 = vst.msk [vmem:[#allocation2 + $0x48] sm:$0xf] %vm231, %v2070
  %v2085 = vld [vmem:[%s0 + $0x4] sm:$0xf]
  %v2086 = vld [vmem:[%s0 + $0x8] sm:$0xf]
  %v2087 = vld [vmem:[%s0 + $0xc] sm:$0xf]
  %v2088 = vld [vmem:[%s0 + $0x10] sm:$0xf]
  %v2089 = vld [vmem:[%s0 + $0x14] sm:$0xf]
  %v2090 = vld [vmem:[%s0 + $0x18] sm:$0xf]
  %v2091 = vld [vmem:[%s0 + $0x1c] sm:$0xf]
  %2099 = vrot.lane.b32.xlu0 %v2085, 96
  %v2100 = vpop.permute.xlu0 %2099
  %2101 = vrot.lane.b32.xlu0 %v2086, 96
  %v2102 = vpop.permute.xlu0 %2101
  %2103 = vrot.lane.b32.xlu0 %v2087, 96
  %v2104 = vpop.permute.xlu0 %2103
  %2105 = vrot.lane.b32.xlu0 %v2088, 96
  %v2106 = vpop.permute.xlu0 %2105
  %2107 = vrot.lane.b32.xlu0 %v2089, 96
  %v2108 = vpop.permute.xlu0 %2107
  %2109 = vrot.lane.b32.xlu0 %v2090, 96
  %v2110 = vpop.permute.xlu0 %2109
  %2111 = vrot.lane.b32.xlu0 %v2091, 96
  %v2112 = vpop.permute.xlu0 %2111
  %2120 = vst.msk [vmem:[#allocation2 + $0x4] sm:$0xf] %vm59, %v2100
  %2121 = vst.msk [vmem:[#allocation2 + $0x10] sm:$0xf] %vm59, %v2102
  %2122 = vst.msk [vmem:[#allocation2 + $0x1c] sm:$0xf] %vm59, %v2104
  %2123 = vst.msk [vmem:[#allocation2 + $0x28] sm:$0xf] %vm59, %v2106
  %2124 = vst.msk [vmem:[#allocation2 + $0x34] sm:$0xf] %vm59, %v2108
  %2125 = vst.msk [vmem:[#allocation2 + $0x40] sm:$0xf] %vm59, %v2110
  %2126 = vst.msk [vmem:[#allocation2 + $0x4c] sm:$0xf] %vm59, %v2112
  %v2127 = vld [vmem:[%s0 + $0x4] sm:$0xf]
  %v2128 = vld [vmem:[%s0 + $0x8] sm:$0xf]
  %v2129 = vld [vmem:[%s0 + $0xc] sm:$0xf]
  %v2130 = vld [vmem:[%s0 + $0x10] sm:$0xf]
  %v2131 = vld [vmem:[%s0 + $0x14] sm:$0xf]
  %v2132 = vld [vmem:[%s0 + $0x18] sm:$0xf]
  %v2133 = vld [vmem:[%s0 + $0x1c] sm:$0xf]
  %v2134 = vld [vmem:[%s0 + $0x20] sm:$0x1]
  %v2136 = vshrl.u32 %v2127, 16
  %v2138 = vrot.slane %v2136, 4
  %v2139 = vshll.u32 %v2127, 16
  %v2141 = vrot.slane %v2139, 5
  %v2142 = vor.u32 %v2138, %v2141
  %v2143 = vrot.slane %v2142, 4
  %v2145 = vshll.u32 %v2128, 16
  %v2147 = vrot.slane %v2145, 5
  %v2148 = vsel %vm92, %v2143, %v2147
  %v2149 = vshrl.u32 %v2128, 16
  %v2151 = vrot.slane %v2149, 4
  %v2152 = vor.u32 %v2151, %v2147
  %v2153 = vrot.slane %v2152, 4
  %v2155 = vshll.u32 %v2129, 16
  %v2157 = vrot.slane %v2155, 5
  %v2158 = vsel %vm92, %v2153, %v2157
  %v2159 = vshrl.u32 %v2129, 16
  %v2161 = vrot.slane %v2159, 4
  %v2162 = vor.u32 %v2161, %v2157
  %v2163 = vrot.slane %v2162, 4
  %v2165 = vshll.u32 %v2130, 16
  %v2167 = vrot.slane %v2165, 5
  %v2168 = vsel %vm92, %v2163, %v2167
  %v2169 = vshrl.u32 %v2130, 16
  %v2171 = vrot.slane %v2169, 4
  %v2172 = vor.u32 %v2171, %v2167
  %v2173 = vrot.slane %v2172, 4
  %v2175 = vshll.u32 %v2131, 16
  %v2177 = vrot.slane %v2175, 5
  %v2178 = vsel %vm92, %v2173, %v2177
  %v2179 = vshrl.u32 %v2131, 16
  %v2181 = vrot.slane %v2179, 4
  %v2182 = vor.u32 %v2181, %v2177
  %v2183 = vrot.slane %v2182, 4
  %v2185 = vshll.u32 %v2132, 16
  %v2187 = vrot.slane %v2185, 5
  %v2188 = vsel %vm92, %v2183, %v2187
  %v2189 = vshrl.u32 %v2132, 16
  %v2191 = vrot.slane %v2189, 4
  %v2192 = vor.u32 %v2191, %v2187
  %v2193 = vrot.slane %v2192, 4
  %v2195 = vshll.u32 %v2133, 16
  %v2197 = vrot.slane %v2195, 5
  %v2198 = vsel %vm92, %v2193, %v2197
  %v2199 = vshrl.u32 %v2133, 16
  %v2201 = vrot.slane %v2199, 4
  %v2202 = vor.u32 %v2201, %v2197
  %v2203 = vrot.slane %v2202, 4
  %v2205 = vshll.u32 %v2134, 16
  %v2207 = vrot.slane %v2205, 5
  %v2208 = vsel %vm92, %v2203, %v2207
  %2209 = vrot.lane.b32.xlu0 %v2148, 32
  %v2210 = vpop.permute.xlu0 %2209
  %2211 = vrot.lane.b32.xlu0 %v2158, 32
  %v2212 = vpop.permute.xlu0 %2211
  %2213 = vrot.lane.b32.xlu0 %v2168, 32
  %v2214 = vpop.permute.xlu0 %2213
  %2215 = vrot.lane.b32.xlu0 %v2178, 32
  %v2216 = vpop.permute.xlu0 %2215
  %2217 = vrot.lane.b32.xlu0 %v2188, 32
  %v2218 = vpop.permute.xlu0 %2217
  %2219 = vrot.lane.b32.xlu0 %v2198, 32
  %v2220 = vpop.permute.xlu0 %2219
  %2221 = vrot.lane.b32.xlu0 %v2208, 32
  %v2222 = vpop.permute.xlu0 %2221
  %2230 = vst.msk [vmem:[#allocation2 + $0x4] sm:$0xf] %vm74, %v2210
  %2231 = vst.msk [vmem:[#allocation2 + $0x10] sm:$0xf] %vm74, %v2212
  %2232 = vst.msk [vmem:[#allocation2 + $0x1c] sm:$0xf] %vm74, %v2214
  %2233 = vst.msk [vmem:[#allocation2 + $0x28] sm:$0xf] %vm74, %v2216
  %2234 = vst.msk [vmem:[#allocation2 + $0x34] sm:$0xf] %vm74, %v2218
  %2235 = vst.msk [vmem:[#allocation2 + $0x40] sm:$0xf] %vm74, %v2220
  %2236 = vst.msk [vmem:[#allocation2 + $0x4c] sm:$0xf] %vm74, %v2222
  %v2237 = vld [vmem:[%s0 + $0x4] sm:$0xf]
  %v2238 = vld [vmem:[%s0 + $0x8] sm:$0xf]
  %v2239 = vld [vmem:[%s0 + $0xc] sm:$0xf]
  %v2240 = vld [vmem:[%s0 + $0x10] sm:$0xf]
  %v2241 = vld [vmem:[%s0 + $0x14] sm:$0xf]
  %v2242 = vld [vmem:[%s0 + $0x18] sm:$0xf]
  %v2243 = vld [vmem:[%s0 + $0x1c] sm:$0xf]
  %2244 = vst.msk [vmem:[#allocation2 + $0x4] sm:$0xf] %vm188, %v2237
  %2245 = vst.msk [vmem:[#allocation2 + $0x10] sm:$0xf] %vm188, %v2238
  %2246 = vst.msk [vmem:[#allocation2 + $0x1c] sm:$0xf] %vm188, %v2239
  %2247 = vst.msk [vmem:[#allocation2 + $0x28] sm:$0xf] %vm188, %v2240
  %2248 = vst.msk [vmem:[#allocation2 + $0x34] sm:$0xf] %vm188, %v2241
  %2249 = vst.msk [vmem:[#allocation2 + $0x40] sm:$0xf] %vm188, %v2242
  %2250 = vst.msk [vmem:[#allocation2 + $0x4c] sm:$0xf] %vm188, %v2243
  %v2251 = vld [vmem:[%s0 + $0x4] sm:$0xf]
  %v2252 = vld [vmem:[%s0 + $0x8] sm:$0xf]
  %v2253 = vld [vmem:[%s0 + $0xc] sm:$0xf]
  %v2254 = vld [vmem:[%s0 + $0x10] sm:$0xf]
  %v2255 = vld [vmem:[%s0 + $0x14] sm:$0xf]
  %v2256 = vld [vmem:[%s0 + $0x18] sm:$0xf]
  %v2257 = vld [vmem:[%s0 + $0x1c] sm:$0xf]
  %2258 = vst.msk [vmem:[#allocation2 + $0x4] sm:$0xf] %vm231, %v2251
  %2259 = vst.msk [vmem:[#allocation2 + $0x10] sm:$0xf] %vm231, %v2252
  %2260 = vst.msk [vmem:[#allocation2 + $0x1c] sm:$0xf] %vm231, %v2253
  %2261 = vst.msk [vmem:[#allocation2 + $0x28] sm:$0xf] %vm231, %v2254
  %2262 = vst.msk [vmem:[#allocation2 + $0x34] sm:$0xf] %vm231, %v2255
  %2263 = vst.msk [vmem:[#allocation2 + $0x40] sm:$0xf] %vm231, %v2256
  %2264 = vst.msk [vmem:[#allocation2 + $0x4c] sm:$0xf] %vm231, %v2257
  %v2265 = vld [vmem:[%s0 + $0x4] sm:$0xf]
  %v2266 = vld [vmem:[%s0 + $0x8] sm:$0xf]
  %v2267 = vld [vmem:[%s0 + $0xc] sm:$0xf]
  %v2268 = vld [vmem:[%s0 + $0x10] sm:$0xf]
  %v2269 = vld [vmem:[%s0 + $0x14] sm:$0xf]
  %v2270 = vld [vmem:[%s0 + $0x18] sm:$0xf]
  %v2271 = vld [vmem:[%s0 + $0x1c] sm:$0xf]
  %v2272 = vld [vmem:[%s0 + $0x20] sm:$0x1]
  %v2274 = vshrl.u32 %v2265, 16
  %v2276 = vrot.slane %v2274, 4
  %v2277 = vshll.u32 %v2265, 16
  %v2279 = vrot.slane %v2277, 5
  %v2280 = vor.u32 %v2276, %v2279
  %v2281 = vrot.slane %v2280, 4
  %v2283 = vshll.u32 %v2266, 16
  %v2285 = vrot.slane %v2283, 5
  %v2286 = vsel %vm92, %v2281, %v2285
  %v2287 = vshrl.u32 %v2266, 16
  %v2289 = vrot.slane %v2287, 4
  %v2290 = vor.u32 %v2289, %v2285
  %v2291 = vrot.slane %v2290, 4
  %v2293 = vshll.u32 %v2267, 16
  %v2295 = vrot.slane %v2293, 5
  %v2296 = vsel %vm92, %v2291, %v2295
  %v2297 = vshrl.u32 %v2267, 16
  %v2299 = vrot.slane %v2297, 4
  %v2300 = vor.u32 %v2299, %v2295
  %v2301 = vrot.slane %v2300, 4
  %v2303 = vshll.u32 %v2268, 16
  %v2305 = vrot.slane %v2303, 5
  %v2306 = vsel %vm92, %v2301, %v2305
  %v2307 = vshrl.u32 %v2268, 16
  %v2309 = vrot.slane %v2307, 4
  %v2310 = vor.u32 %v2309, %v2305
  %v2311 = vrot.slane %v2310, 4
  %v2313 = vshll.u32 %v2269, 16
  %v2315 = vrot.slane %v2313, 5
  %v2316 = vsel %vm92, %v2311, %v2315
  %v2317 = vshrl.u32 %v2269, 16
  %v2319 = vrot.slane %v2317, 4
  %v2320 = vor.u32 %v2319, %v2315
  %v2321 = vrot.slane %v2320, 4
  %v2323 = vshll.u32 %v2270, 16
  %v2325 = vrot.slane %v2323, 5
  %v2326 = vsel %vm92, %v2321, %v2325
  %v2327 = vshrl.u32 %v2270, 16
  %v2329 = vrot.slane %v2327, 4
  %v2330 = vor.u32 %v2329, %v2325
  %v2331 = vrot.slane %v2330, 4
  %v2333 = vshll.u32 %v2271, 16
  %v2335 = vrot.slane %v2333, 5
  %v2336 = vsel %vm92, %v2331, %v2335
  %v2337 = vshrl.u32 %v2271, 16
  %v2339 = vrot.slane %v2337, 4
  %v2340 = vor.u32 %v2339, %v2335
  %v2341 = vrot.slane %v2340, 4
  %v2343 = vshll.u32 %v2272, 16
  %v2345 = vrot.slane %v2343, 5
  %v2346 = vsel %vm92, %v2341, %v2345
  %2347 = vrot.lane.b32.xlu0 %v2286, 64
  %v2348 = vpop.permute.xlu0 %2347
  %2349 = vrot.lane.b32.xlu0 %v2296, 64
  %v2350 = vpop.permute.xlu0 %2349
  %2351 = vrot.lane.b32.xlu0 %v2306, 64
  %v2352 = vpop.permute.xlu0 %2351
  %2353 = vrot.lane.b32.xlu0 %v2316, 64
  %v2354 = vpop.permute.xlu0 %2353
  %2355 = vrot.lane.b32.xlu0 %v2326, 64
  %v2356 = vpop.permute.xlu0 %2355
  %2357 = vrot.lane.b32.xlu0 %v2336, 64
  %v2358 = vpop.permute.xlu0 %2357
  %2359 = vrot.lane.b32.xlu0 %v2346, 64
  %v2360 = vpop.permute.xlu0 %2359
  %2368 = vst.msk [vmem:[#allocation2 + $0x8] sm:$0xf] %vm59, %v2348
  %2369 = vst.msk [vmem:[#allocation2 + $0x14] sm:$0xf] %vm59, %v2350
  %2370 = vst.msk [vmem:[#allocation2 + $0x20] sm:$0xf] %vm59, %v2352
  %2371 = vst.msk [vmem:[#allocation2 + $0x2c] sm:$0xf] %vm59, %v2354
  %2372 = vst.msk [vmem:[#allocation2 + $0x38] sm:$0xf] %vm59, %v2356
  %2373 = vst.msk [vmem:[#allocation2 + $0x44] sm:$0xf] %vm59, %v2358
  %2374 = vst.msk [vmem:[#allocation2 + $0x50] sm:$0xf] %vm59, %v2360
  %v2375 = vld [vmem:[#allocation2] sm:$0xff]
  %v2376 = vld [vmem:[#allocation2 + $0x8] sm:$0xf]
  %v2377 = vld [vmem:[#allocation2 + $0xc] sm:$0xff]
  %v2378 = vld [vmem:[#allocation2 + $0x14] sm:$0xf]
  %v2379 = vld [vmem:[#allocation2 + $0x18] sm:$0xff]
  %v2380 = vld [vmem:[#allocation2 + $0x20] sm:$0xf]
  %v2381 = vld [vmem:[#allocation2 + $0x24] sm:$0xff]
  %v2382 = vld [vmem:[#allocation2 + $0x2c] sm:$0xf]
  %v2383 = vld [vmem:[#allocation2 + $0x30] sm:$0xff]
  %v2384 = vld [vmem:[#allocation2 + $0x38] sm:$0xf]
  %v2385 = vld [vmem:[#allocation2 + $0x3c] sm:$0xff]
  %v2386 = vld [vmem:[#allocation2 + $0x44] sm:$0xf]
  %v2387 = vld [vmem:[#allocation2 + $0x48] sm:$0xff]
  %v2388 = vld [vmem:[#allocation2 + $0x50] sm:$0xf]
  %v2403 = vunpack.c.l.b16 %v2375
  %v2404 = vunpack.c.h.b16 %v2375
  %v2405 = vunpack.c.l.b16 %v2376
  %v2406 = vunpack.c.l.b16 %v2377
  %v2407 = vunpack.c.h.b16 %v2377
  %v2408 = vunpack.c.l.b16 %v2378
  %v2409 = vunpack.c.l.b16 %v2379
  %v2410 = vunpack.c.h.b16 %v2379
  %v2411 = vunpack.c.l.b16 %v2380
  %v2412 = vunpack.c.l.b16 %v2381
  %v2413 = vunpack.c.h.b16 %v2381
  %v2414 = vunpack.c.l.b16 %v2382
  %v2415 = vunpack.c.l.b16 %v2383
  %v2416 = vunpack.c.h.b16 %v2383
  %v2417 = vunpack.c.l.b16 %v2384
  %v2418 = vunpack.c.l.b16 %v2385
  %v2419 = vunpack.c.h.b16 %v2385
  %v2420 = vunpack.c.l.b16 %v2386
  %v2421 = vunpack.c.l.b16 %v2387
  %v2422 = vunpack.c.h.b16 %v2387
  %v2423 = vunpack.c.l.b16 %v2388
  %v2424 = vpack.c.b16 %v2406, %v2403
  %v2425 = vpack.c.b16 %v2407, %v2404
  %v2426 = vpack.c.b16 %v2408, %v2405
  %v2427 = vpack.c.b16 %v2412, %v2409
  %v2428 = vpack.c.b16 %v2413, %v2410
  %v2429 = vpack.c.b16 %v2414, %v2411
  %v2430 = vpack.c.b16 %v2418, %v2415
  %v2431 = vpack.c.b16 %v2419, %v2416
  %v2432 = vpack.c.b16 %v2420, %v2417
  %v2433 = vpack.c.b16 %v2421, %v2421
  %v2434 = vpack.c.b16 %v2422, %v2422
  %v2435 = vpack.c.b16 %v2423, %v2423
  %v2445 = vsel %vm748, %v2426, 0
  %v2448 = vsel %vm748, %v2429, 0
  %v2451 = vsel %vm748, %v2432, 0
  %v2454 = vsel %vm748, %v2435, 0
  %2456 = vmatprep.subr.bf16.mxu0 0
  %2457 = vmatpush1.bf16.msra.mxu0 %v712
  %2458 = vmatprep.subr.bf16.mxu0 0
  %2459 = vmatpush1.bf16.msra.mxu0 %v713
  %2460 = vmatprep.subr.bf16.mxu0 0
  %2461 = vmatpush1.bf16.msra.mxu0 %v714
  %2462 = vmatprep.subr.bf16.mxu0 0
  %2463 = vmatpush1.bf16.msra.mxu0 %v715
  %2464 = vmatprep.subr.bf16.mxu0 0
  %2465 = vmatpush1.bf16.msra.mxu0 %v716
  %2466 = vmatprep.subr.bf16.mxu0 0
  %2467 = vmatpush1.bf16.msra.mxu0 %v717
  %2468 = vmatprep.subr.bf16.mxu0 0
  %2469 = vmatpush1.bf16.msra.mxu0 %v718
  %2470 = vmatprep.subr.bf16.mxu0 0
  %2471 = vmatpush1.bf16.msra.mxu0 %v719
  %2472 = vmatprep.subr.bf16.mxu0 0
  %2473 = vmatpush1.bf16.msra.mxu0 %v720
  %2474 = vmatprep.subr.bf16.mxu0 0
  %2475 = vmatpush1.bf16.msra.mxu0 %v721
  %2476 = vmatprep.subr.bf16.mxu0 0
  %2477 = vmatpush1.bf16.msra.mxu0 %v722
  %2478 = vmatprep.subr.bf16.mxu0 0
  %2479 = vmatpush1.bf16.msra.mxu0 %v723
  %2480 = vmatprep.subr.bf16.mxu0 0
  %2481 = vmatpush1.bf16.msra.mxu0 %v724
  %2482 = vmatprep.subr.bf16.mxu0 0
  %2483 = vmatpush1.bf16.msra.mxu0 %v725
  %2484 = vmatprep.subr.bf16.mxu0 0
  %2485 = vmatpush1.bf16.msra.mxu0 %v726
  %2486 = vmatprep.subr.bf16.mxu0 0
  %2487 = vmatpush1.bf16.msra.mxu0 %v727
  %2488 = vmatprep.mubr.bf16.mxu0 %v2425
  %2489 = vmatmul.mubr.bf16.gmra.mrb[0].mxu0 %v2424
  %v2490 = vpop.f32.mrb[0].mxu0
  %v2491 = vadd.f32 0.0, %v2490
  %v2492 = vpop.f32.mrb[0].mxu0
  %v2493 = vpop.f32.mrb[0].mxu0
  %v2494 = vadd.f32 0.0, %v2493
  %v2495 = vpop.f32.mrb[0].mxu0
  %2496 = vmatprep.mubr.bf16.mxu0 %v2428
  %2497 = vmatmul.mubr.bf16.gmra.mrb[0].mxu0 %v2427
  %v2498 = vpop.f32.mrb[0].mxu0
  %v2499 = vadd.f32 0.0, %v2498
  %v2500 = vpop.f32.mrb[0].mxu0
  %v2501 = vpop.f32.mrb[0].mxu0
  %v2502 = vadd.f32 0.0, %v2501
  %v2503 = vpop.f32.mrb[0].mxu0
  %2504 = vmatprep.mubr.bf16.mxu0 %v2431
  %2505 = vmatmul.mubr.bf16.gmra.mrb[0].mxu0 %v2430
  %v2506 = vpop.f32.mrb[0].mxu0
  %v2507 = vadd.f32 0.0, %v2506
  %v2508 = vpop.f32.mrb[0].mxu0
  %v2509 = vpop.f32.mrb[0].mxu0
  %v2510 = vadd.f32 0.0, %v2509
  %v2511 = vpop.f32.mrb[0].mxu0
  %2512 = vmatprep.mubr.bf16.mxu0 %v2434
  %2513 = vmatmul.mubr.bf16.gmra.mrb[0].mxu0 %v2433
  %v2514 = vpop.f32.mrb[0].mxu0
  %v2515 = vadd.f32 0.0, %v2514
  %v2516 = vpop.f32.mrb[0].mxu0
  %v2517 = vpop.f32.mrb[0].mxu0
  %v2518 = vpop.f32.mrb[0].mxu0
  %2519 = vdwg.mxu0
  %2520 = vmatprep.subr.bf16.mxu0 0
  %2521 = vmatpush1.bf16.msra.mxu0 %v728
  %2522 = vmatprep.subr.bf16.mxu0 0
  %2523 = vmatpush1.bf16.msra.mxu0 %v729
  %2524 = vmatprep.subr.bf16.mxu0 0
  %2525 = vmatpush1.bf16.msra.mxu0 0
  %2526 = vmatprep.subr.bf16.mxu0 0
  %2527 = vmatpush1.bf16.msra.mxu0 0
  %2528 = vmatprep.subr.bf16.mxu0 0
  %2529 = vmatpush1.bf16.msra.mxu0 0
  %2530 = vmatprep.subr.bf16.mxu0 0
  %2531 = vmatpush1.bf16.msra.mxu0 0
  %2532 = vmatprep.subr.bf16.mxu0 0
  %2533 = vmatpush1.bf16.msra.mxu0 0
  %2534 = vmatprep.subr.bf16.mxu0 0
  %2535 = vmatpush1.bf16.msra.mxu0 0
  %2536 = vmatprep.subr.bf16.mxu0 0
  %2537 = vmatpush1.bf16.msra.mxu0 0
  %2538 = vmatprep.subr.bf16.mxu0 0
  %2539 = vmatpush1.bf16.msra.mxu0 0
  %2540 = vmatprep.subr.bf16.mxu0 0
  %2541 = vmatpush1.bf16.msra.mxu0 0
  %2542 = vmatprep.subr.bf16.mxu0 0
  %2543 = vmatpush1.bf16.msra.mxu0 0
  %2544 = vmatprep.subr.bf16.mxu0 0
  %2545 = vmatpush1.bf16.msra.mxu0 0
  %2546 = vmatprep.subr.bf16.mxu0 0
  %2547 = vmatpush1.bf16.msra.mxu0 0
  %2548 = vmatprep.subr.bf16.mxu0 0
  %2549 = vmatpush1.bf16.msra.mxu0 0
  %2550 = vmatprep.subr.bf16.mxu0 0
  %2551 = vmatpush1.bf16.msra.mxu0 0
  %2552 = vmatprep.mubr.bf16.mxu0 0
  %2553 = vmatmul.mubr.bf16.gmra.mrb[0].mxu0 %v2445
  %v2554 = vpop.f32.mrb[0].mxu0
  %v2555 = vadd.f32 %v2491, %v2554
  %v2556 = vpop.f32.mrb[0].mxu0
  %v2557 = vpop.f32.mrb[0].mxu0
  %v2558 = vadd.f32 %v2494, %v2557
  %v2559 = vpop.f32.mrb[0].mxu0
  %2560 = vmatprep.mubr.bf16.mxu0 0
  %2561 = vmatmul.mubr.bf16.gmra.mrb[0].mxu0 %v2448
  %v2562 = vpop.f32.mrb[0].mxu0
  %v2563 = vadd.f32 %v2499, %v2562
  %v2564 = vpop.f32.mrb[0].mxu0
  %v2565 = vpop.f32.mrb[0].mxu0
  %v2566 = vadd.f32 %v2502, %v2565
  %v2567 = vpop.f32.mrb[0].mxu0
  %2568 = vmatprep.mubr.bf16.mxu0 0
  %2569 = vmatmul.mubr.bf16.gmra.mrb[0].mxu0 %v2451
  %v2570 = vpop.f32.mrb[0].mxu0
  %v2571 = vadd.f32 %v2507, %v2570
  %v2572 = vpop.f32.mrb[0].mxu0
  %v2573 = vpop.f32.mrb[0].mxu0
  %v2574 = vadd.f32 %v2510, %v2573
  %v2575 = vpop.f32.mrb[0].mxu0
  %2576 = vmatprep.mubr.bf16.mxu0 0
  %2577 = vmatmul.mubr.bf16.gmra.mrb[0].mxu0 %v2454
  %v2578 = vpop.f32.mrb[0].mxu0
  %v2579 = vadd.f32 %v2515, %v2578
  %v2580 = vpop.f32.mrb[0].mxu0
  %v2581 = vpop.f32.mrb[0].mxu0
  %v2582 = vpop.f32.mrb[0].mxu0
  %2583 = vdwg.mxu0
  %v2584 = vmax.f32 %v1856, %v2555
  %v2585 = vmax.f32 %v1857, %v2558
  %v2586 = vmax.f32 %v1858, %v2563
  %v2587 = vmax.f32 %v1859, %v2566
  %v2588 = vmax.f32 %v1860, %v2571
  %v2589 = vmax.f32 %v1861, %v2574
  %v2590 = vmax.f32 %v1862, %v2579
  %v2591 = vld [vmem:[%s0] sm:$0xf]
  %v2592 = vld [vmem:[%s0 + $0x4] sm:$0xf]
  %v2593 = vld [vmem:[%s0 + $0x8] sm:$0xf]
  %v2594 = vld [vmem:[%s0 + $0xc] sm:$0xf]
  %v2595 = vld [vmem:[%s0 + $0x10] sm:$0xf]
  %v2596 = vld [vmem:[%s0 + $0x14] sm:$0xf]
  %v2597 = vld [vmem:[%s0 + $0x18] sm:$0xf]
  %2605 = vrot.lane.b32.xlu0 %v2591, 32
  %v2606 = vpop.permute.xlu0 %2605
  %2607 = vrot.lane.b32.xlu0 %v2592, 32
  %v2608 = vpop.permute.xlu0 %2607
  %2609 = vrot.lane.b32.xlu0 %v2593, 32
  %v2610 = vpop.permute.xlu0 %2609
  %2611 = vrot.lane.b32.xlu0 %v2594, 32
  %v2612 = vpop.permute.xlu0 %2611
  %2613 = vrot.lane.b32.xlu0 %v2595, 32
  %v2614 = vpop.permute.xlu0 %2613
  %2615 = vrot.lane.b32.xlu0 %v2596, 32
  %v2616 = vpop.permute.xlu0 %2615
  %2617 = vrot.lane.b32.xlu0 %v2597, 32
  %v2618 = vpop.permute.xlu0 %2617
  %2626 = vst.msk [vmem:[#allocation2] sm:$0xf] %vm59, %v2606
  %2627 = vst.msk [vmem:[#allocation2 + $0xc] sm:$0xf] %vm59, %v2608
  %2628 = vst.msk [vmem:[#allocation2 + $0x18] sm:$0xf] %vm59, %v2610
  %2629 = vst.msk [vmem:[#allocation2 + $0x24] sm:$0xf] %vm59, %v2612
  %2630 = vst.msk [vmem:[#allocation2 + $0x30] sm:$0xf] %vm59, %v2614
  %2631 = vst.msk [vmem:[#allocation2 + $0x3c] sm:$0xf] %vm59, %v2616
  %2632 = vst.msk [vmem:[#allocation2 + $0x48] sm:$0xf] %vm59, %v2618
  %v2633 = vld [vmem:[%s0] sm:$0xf]
  %v2634 = vld [vmem:[%s0 + $0x4] sm:$0xf]
  %v2635 = vld [vmem:[%s0 + $0x8] sm:$0xf]
  %v2636 = vld [vmem:[%s0 + $0xc] sm:$0xf]
  %v2637 = vld [vmem:[%s0 + $0x10] sm:$0xf]
  %v2638 = vld [vmem:[%s0 + $0x14] sm:$0xf]
  %v2639 = vld [vmem:[%s0 + $0x18] sm:$0xf]
  %v2640 = vld [vmem:[%s0 + $0x1c] sm:$0x1]
  %v2642 = vshrl.u32 %v2633, 16
  %v2644 = vrot.slane %v2642, 4
  %v2645 = vshll.u32 %v2633, 16
  %v2647 = vrot.slane %v2645, 5
  %v2648 = vor.u32 %v2644, %v2647
  %v2649 = vrot.slane %v2648, 4
  %v2651 = vshll.u32 %v2634, 16
  %v2653 = vrot.slane %v2651, 5
  %v2654 = vsel %vm92, %v2649, %v2653
  %v2655 = vshrl.u32 %v2634, 16
  %v2657 = vrot.slane %v2655, 4
  %v2658 = vor.u32 %v2657, %v2653
  %v2659 = vrot.slane %v2658, 4
  %v2661 = vshll.u32 %v2635, 16
  %v2663 = vrot.slane %v2661, 5
  %v2664 = vsel %vm92, %v2659, %v2663
  %v2665 = vshrl.u32 %v2635, 16
  %v2667 = vrot.slane %v2665, 4
  %v2668 = vor.u32 %v2667, %v2663
  %v2669 = vrot.slane %v2668, 4
  %v2671 = vshll.u32 %v2636, 16
  %v2673 = vrot.slane %v2671, 5
  %v2674 = vsel %vm92, %v2669, %v2673
  %v2675 = vshrl.u32 %v2636, 16
  %v2677 = vrot.slane %v2675, 4
  %v2678 = vor.u32 %v2677, %v2673
  %v2679 = vrot.slane %v2678, 4
  %v2681 = vshll.u32 %v2637, 16
  %v2683 = vrot.slane %v2681, 5
  %v2684 = vsel %vm92, %v2679, %v2683
  %v2685 = vshrl.u32 %v2637, 16
  %v2687 = vrot.slane %v2685, 4
  %v2688 = vor.u32 %v2687, %v2683
  %v2689 = vrot.slane %v2688, 4
  %v2691 = vshll.u32 %v2638, 16
  %v2693 = vrot.slane %v2691, 5
  %v2694 = vsel %vm92, %v2689, %v2693
  %v2695 = vshrl.u32 %v2638, 16
  %v2697 = vrot.slane %v2695, 4
  %v2698 = vor.u32 %v2697, %v2693
  %v2699 = vrot.slane %v2698, 4
  %v2701 = vshll.u32 %v2639, 16
  %v2703 = vrot.slane %v2701, 5
  %v2704 = vsel %vm92, %v2699, %v2703
  %v2705 = vshrl.u32 %v2639, 16
  %v2707 = vrot.slane %v2705, 4
  %v2708 = vor.u32 %v2707, %v2703
  %v2709 = vrot.slane %v2708, 4
  %v2711 = vshll.u32 %v2640, 16
  %v2713 = vrot.slane %v2711, 5
  %v2714 = vsel %vm92, %v2709, %v2713
  %2715 = vrot.lane.b32.xlu0 %v2654, 96
  %v2716 = vpop.permute.xlu0 %2715
  %2717 = vrot.lane.b32.xlu0 %v2664, 96
  %v2718 = vpop.permute.xlu0 %2717
  %2719 = vrot.lane.b32.xlu0 %v2674, 96
  %v2720 = vpop.permute.xlu0 %2719
  %2721 = vrot.lane.b32.xlu0 %v2684, 96
  %v2722 = vpop.permute.xlu0 %2721
  %2723 = vrot.lane.b32.xlu0 %v2694, 96
  %v2724 = vpop.permute.xlu0 %2723
  %2725 = vrot.lane.b32.xlu0 %v2704, 96
  %v2726 = vpop.permute.xlu0 %2725
  %2727 = vrot.lane.b32.xlu0 %v2714, 96
  %v2728 = vpop.permute.xlu0 %2727
  %2736 = vst.msk [vmem:[#allocation2] sm:$0xf] %vm74, %v2716
  %2737 = vst.msk [vmem:[#allocation2 + $0xc] sm:$0xf] %vm74, %v2718
  %2738 = vst.msk [vmem:[#allocation2 + $0x18] sm:$0xf] %vm74, %v2720
  %2739 = vst.msk [vmem:[#allocation2 + $0x24] sm:$0xf] %vm74, %v2722
  %2740 = vst.msk [vmem:[#allocation2 + $0x30] sm:$0xf] %vm74, %v2724
  %2741 = vst.msk [vmem:[#allocation2 + $0x3c] sm:$0xf] %vm74, %v2726
  %2742 = vst.msk [vmem:[#allocation2 + $0x48] sm:$0xf] %vm74, %v2728
  %v2743 = vld [vmem:[%s0] sm:$0xf]
  %v2744 = vld [vmem:[%s0 + $0x4] sm:$0xf]
  %v2745 = vld [vmem:[%s0 + $0x8] sm:$0xf]
  %v2746 = vld [vmem:[%s0 + $0xc] sm:$0xf]
  %v2747 = vld [vmem:[%s0 + $0x10] sm:$0xf]
  %v2748 = vld [vmem:[%s0 + $0x14] sm:$0xf]
  %v2749 = vld [vmem:[%s0 + $0x18] sm:$0xf]
  %v2750 = vld [vmem:[%s0 + $0x1c] sm:$0x1]
  %v2752 = vshrl.u32 %v2743, 16
  %v2754 = vrot.slane %v2752, 4
  %v2755 = vshll.u32 %v2743, 16
  %v2757 = vrot.slane %v2755, 5
  %v2758 = vor.u32 %v2754, %v2757
  %v2759 = vrot.slane %v2758, 4
  %v2761 = vshll.u32 %v2744, 16
  %v2763 = vrot.slane %v2761, 5
  %v2764 = vsel %vm92, %v2759, %v2763
  %v2765 = vshrl.u32 %v2744, 16
  %v2767 = vrot.slane %v2765, 4
  %v2768 = vor.u32 %v2767, %v2763
  %v2769 = vrot.slane %v2768, 4
  %v2771 = vshll.u32 %v2745, 16
  %v2773 = vrot.slane %v2771, 5
  %v2774 = vsel %vm92, %v2769, %v2773
  %v2775 = vshrl.u32 %v2745, 16
  %v2777 = vrot.slane %v2775, 4
  %v2778 = vor.u32 %v2777, %v2773
  %v2779 = vrot.slane %v2778, 4
  %v2781 = vshll.u32 %v2746, 16
  %v2783 = vrot.slane %v2781, 5
  %v2784 = vsel %vm92, %v2779, %v2783
  %v2785 = vshrl.u32 %v2746, 16
  %v2787 = vrot.slane %v2785, 4
  %v2788 = vor.u32 %v2787, %v2783
  %v2789 = vrot.slane %v2788, 4
  %v2791 = vshll.u32 %v2747, 16
  %v2793 = vrot.slane %v2791, 5
  %v2794 = vsel %vm92, %v2789, %v2793
  %v2795 = vshrl.u32 %v2747, 16
  %v2797 = vrot.slane %v2795, 4
  %v2798 = vor.u32 %v2797, %v2793
  %v2799 = vrot.slane %v2798, 4
  %v2801 = vshll.u32 %v2748, 16
  %v2803 = vrot.slane %v2801, 5
  %v2804 = vsel %vm92, %v2799, %v2803
  %v2805 = vshrl.u32 %v2748, 16
  %v2807 = vrot.slane %v2805, 4
  %v2808 = vor.u32 %v2807, %v2803
  %v2809 = vrot.slane %v2808, 4
  %v2811 = vshll.u32 %v2749, 16
  %v2813 = vrot.slane %v2811, 5
  %v2814 = vsel %vm92, %v2809, %v2813
  %v2815 = vshrl.u32 %v2749, 16
  %v2817 = vrot.slane %v2815, 4
  %v2818 = vor.u32 %v2817, %v2813
  %v2819 = vrot.slane %v2818, 4
  %v2821 = vshll.u32 %v2750, 16
  %v2823 = vrot.slane %v2821, 5
  %v2824 = vsel %vm92, %v2819, %v2823
  %2825 = vrot.lane.b32.xlu0 %v2764, 96
  %v2826 = vpop.permute.xlu0 %2825
  %2827 = vrot.lane.b32.xlu0 %v2774, 96
  %v2828 = vpop.permute.xlu0 %2827
  %2829 = vrot.lane.b32.xlu0 %v2784, 96
  %v2830 = vpop.permute.xlu0 %2829
  %2831 = vrot.lane.b32.xlu0 %v2794, 96
  %v2832 = vpop.permute.xlu0 %2831
  %2833 = vrot.lane.b32.xlu0 %v2804, 96
  %v2834 = vpop.permute.xlu0 %2833
  %2835 = vrot.lane.b32.xlu0 %v2814, 96
  %v2836 = vpop.permute.xlu0 %2835
  %2837 = vrot.lane.b32.xlu0 %v2824, 96
  %v2838 = vpop.permute.xlu0 %2837
  %2846 = vst.msk [vmem:[#allocation2] sm:$0xf] %vm188, %v2826
  %2847 = vst.msk [vmem:[#allocation2 + $0xc] sm:$0xf] %vm188, %v2828
  %2848 = vst.msk [vmem:[#allocation2 + $0x18] sm:$0xf] %vm188, %v2830
  %2849 = vst.msk [vmem:[#allocation2 + $0x24] sm:$0xf] %vm188, %v2832
  %2850 = vst.msk [vmem:[#allocation2 + $0x30] sm:$0xf] %vm188, %v2834
  %2851 = vst.msk [vmem:[#allocation2 + $0x3c] sm:$0xf] %vm188, %v2836
  %2852 = vst.msk [vmem:[#allocation2 + $0x48] sm:$0xf] %vm188, %v2838
  %v2853 = vld [vmem:[%s0 + $0x4] sm:$0xf]
  %v2854 = vld [vmem:[%s0 + $0x8] sm:$0xf]
  %v2855 = vld [vmem:[%s0 + $0xc] sm:$0xf]
  %v2856 = vld [vmem:[%s0 + $0x10] sm:$0xf]
  %v2857 = vld [vmem:[%s0 + $0x14] sm:$0xf]
  %v2858 = vld [vmem:[%s0 + $0x18] sm:$0xf]
  %v2859 = vld [vmem:[%s0 + $0x1c] sm:$0xf]
  %2867 = vrot.lane.b32.xlu0 %v2853, 64
  %v2868 = vpop.permute.xlu0 %2867
  %2869 = vrot.lane.b32.xlu0 %v2854, 64
  %v2870 = vpop.permute.xlu0 %2869
  %2871 = vrot.lane.b32.xlu0 %v2855, 64
  %v2872 = vpop.permute.xlu0 %2871
  %2873 = vrot.lane.b32.xlu0 %v2856, 64
  %v2874 = vpop.permute.xlu0 %2873
  %2875 = vrot.lane.b32.xlu0 %v2857, 64
  %v2876 = vpop.permute.xlu0 %2875
  %2877 = vrot.lane.b32.xlu0 %v2858, 64
  %v2878 = vpop.permute.xlu0 %2877
  %2879 = vrot.lane.b32.xlu0 %v2859, 64
  %v2880 = vpop.permute.xlu0 %2879
  %2888 = vst.msk [vmem:[#allocation2] sm:$0xf] %vm231, %v2868
  %2889 = vst.msk [vmem:[#allocation2 + $0xc] sm:$0xf] %vm231, %v2870
  %2890 = vst.msk [vmem:[#allocation2 + $0x18] sm:$0xf] %vm231, %v2872
  %2891 = vst.msk [vmem:[#allocation2 + $0x24] sm:$0xf] %vm231, %v2874
  %2892 = vst.msk [vmem:[#allocation2 + $0x30] sm:$0xf] %vm231, %v2876
  %2893 = vst.msk [vmem:[#allocation2 + $0x3c] sm:$0xf] %vm231, %v2878
  %2894 = vst.msk [vmem:[#allocation2 + $0x48] sm:$0xf] %vm231, %v2880
  %v2895 = vld [vmem:[%s0 + $0x4] sm:$0xf]
  %v2896 = vld [vmem:[%s0 + $0x8] sm:$0xf]
  %v2897 = vld [vmem:[%s0 + $0xc] sm:$0xf]
  %v2898 = vld [vmem:[%s0 + $0x10] sm:$0xf]
  %v2899 = vld [vmem:[%s0 + $0x14] sm:$0xf]
  %v2900 = vld [vmem:[%s0 + $0x18] sm:$0xf]
  %v2901 = vld [vmem:[%s0 + $0x1c] sm:$0xf]
  %v2902 = vld [vmem:[%s0 + $0x20] sm:$0x1]
  %v2904 = vshrl.u32 %v2895, 16
  %v2906 = vrot.slane %v2904, 4
  %v2907 = vshll.u32 %v2895, 16
  %v2909 = vrot.slane %v2907, 5
  %v2910 = vor.u32 %v2906, %v2909
  %v2911 = vrot.slane %v2910, 4
  %v2913 = vshll.u32 %v2896, 16
  %v2915 = vrot.slane %v2913, 5
  %v2916 = vsel %vm92, %v2911, %v2915
  %v2917 = vshrl.u32 %v2896, 16
  %v2919 = vrot.slane %v2917, 4
  %v2920 = vor.u32 %v2919, %v2915
  %v2921 = vrot.slane %v2920, 4
  %v2923 = vshll.u32 %v2897, 16
  %v2925 = vrot.slane %v2923, 5
  %v2926 = vsel %vm92, %v2921, %v2925
  %v2927 = vshrl.u32 %v2897, 16
  %v2929 = vrot.slane %v2927, 4
  %v2930 = vor.u32 %v2929, %v2925
  %v2931 = vrot.slane %v2930, 4
  %v2933 = vshll.u32 %v2898, 16
  %v2935 = vrot.slane %v2933, 5
  %v2936 = vsel %vm92, %v2931, %v2935
  %v2937 = vshrl.u32 %v2898, 16
  %v2939 = vrot.slane %v2937, 4
  %v2940 = vor.u32 %v2939, %v2935
  %v2941 = vrot.slane %v2940, 4
  %v2943 = vshll.u32 %v2899, 16
  %v2945 = vrot.slane %v2943, 5
  %v2946 = vsel %vm92, %v2941, %v2945
  %v2947 = vshrl.u32 %v2899, 16
  %v2949 = vrot.slane %v2947, 4
  %v2950 = vor.u32 %v2949, %v2945
  %v2951 = vrot.slane %v2950, 4
  %v2953 = vshll.u32 %v2900, 16
  %v2955 = vrot.slane %v2953, 5
  %v2956 = vsel %vm92, %v2951, %v2955
  %v2957 = vshrl.u32 %v2900, 16
  %v2959 = vrot.slane %v2957, 4
  %v2960 = vor.u32 %v2959, %v2955
  %v2961 = vrot.slane %v2960, 4
  %v2963 = vshll.u32 %v2901, 16
  %v2965 = vrot.slane %v2963, 5
  %v2966 = vsel %vm92, %v2961, %v2965
  %v2967 = vshrl.u32 %v2901, 16
  %v2969 = vrot.slane %v2967, 4
  %v2970 = vor.u32 %v2969, %v2965
  %v2971 = vrot.slane %v2970, 4
  %v2973 = vshll.u32 %v2902, 16
  %v2975 = vrot.slane %v2973, 5
  %v2976 = vsel %vm92, %v2971, %v2975
  %2984 = vst.msk [vmem:[#allocation2 + $0x4] sm:$0xf] %vm59, %v2916
  %2985 = vst.msk [vmem:[#allocation2 + $0x10] sm:$0xf] %vm59, %v2926
  %2986 = vst.msk [vmem:[#allocation2 + $0x1c] sm:$0xf] %vm59, %v2936
  %2987 = vst.msk [vmem:[#allocation2 + $0x28] sm:$0xf] %vm59, %v2946
  %2988 = vst.msk [vmem:[#allocation2 + $0x34] sm:$0xf] %vm59, %v2956
  %2989 = vst.msk [vmem:[#allocation2 + $0x40] sm:$0xf] %vm59, %v2966
  %2990 = vst.msk [vmem:[#allocation2 + $0x4c] sm:$0xf] %vm59, %v2976
  %v2991 = vld [vmem:[%s0 + $0x4] sm:$0xf]
  %v2992 = vld [vmem:[%s0 + $0x8] sm:$0xf]
  %v2993 = vld [vmem:[%s0 + $0xc] sm:$0xf]
  %v2994 = vld [vmem:[%s0 + $0x10] sm:$0xf]
  %v2995 = vld [vmem:[%s0 + $0x14] sm:$0xf]
  %v2996 = vld [vmem:[%s0 + $0x18] sm:$0xf]
  %v2997 = vld [vmem:[%s0 + $0x1c] sm:$0xf]
  %v2998 = vld [vmem:[%s0 + $0x20] sm:$0x1]
  %v3000 = vshrl.u32 %v2991, 16
  %v3002 = vrot.slane %v3000, 4
  %v3003 = vshll.u32 %v2991, 16
  %v3005 = vrot.slane %v3003, 5
  %v3006 = vor.u32 %v3002, %v3005
  %v3007 = vrot.slane %v3006, 4
  %v3009 = vshll.u32 %v2992, 16
  %v3011 = vrot.slane %v3009, 5
  %v3012 = vsel %vm92, %v3007, %v3011
  %v3013 = vshrl.u32 %v2992, 16
  %v3015 = vrot.slane %v3013, 4
  %v3016 = vor.u32 %v3015, %v3011
  %v3017 = vrot.slane %v3016, 4
  %v3019 = vshll.u32 %v2993, 16
  %v3021 = vrot.slane %v3019, 5
  %v3022 = vsel %vm92, %v3017, %v3021
  %v3023 = vshrl.u32 %v2993, 16
  %v3025 = vrot.slane %v3023, 4
  %v3026 = vor.u32 %v3025, %v3021
  %v3027 = vrot.slane %v3026, 4
  %v3029 = vshll.u32 %v2994, 16
  %v3031 = vrot.slane %v3029, 5
  %v3032 = vsel %vm92, %v3027, %v3031
  %v3033 = vshrl.u32 %v2994, 16
  %v3035 = vrot.slane %v3033, 4
  %v3036 = vor.u32 %v3035, %v3031
  %v3037 = vrot.slane %v3036, 4
  %v3039 = vshll.u32 %v2995, 16
  %v3041 = vrot.slane %v3039, 5
  %v3042 = vsel %vm92, %v3037, %v3041
  %v3043 = vshrl.u32 %v2995, 16
  %v3045 = vrot.slane %v3043, 4
  %v3046 = vor.u32 %v3045, %v3041
  %v3047 = vrot.slane %v3046, 4
  %v3049 = vshll.u32 %v2996, 16
  %v3051 = vrot.slane %v3049, 5
  %v3052 = vsel %vm92, %v3047, %v3051
  %v3053 = vshrl.u32 %v2996, 16
  %v3055 = vrot.slane %v3053, 4
  %v3056 = vor.u32 %v3055, %v3051
  %v3057 = vrot.slane %v3056, 4
  %v3059 = vshll.u32 %v2997, 16
  %v3061 = vrot.slane %v3059, 5
  %v3062 = vsel %vm92, %v3057, %v3061
  %v3063 = vshrl.u32 %v2997, 16
  %v3065 = vrot.slane %v3063, 4
  %v3066 = vor.u32 %v3065, %v3061
  %v3067 = vrot.slane %v3066, 4
  %v3069 = vshll.u32 %v2998, 16
  %v3071 = vrot.slane %v3069, 5
  %v3072 = vsel %vm92, %v3067, %v3071
  %3080 = vst.msk [vmem:[#allocation2 + $0x4] sm:$0xf] %vm74, %v3012
  %3081 = vst.msk [vmem:[#allocation2 + $0x10] sm:$0xf] %vm74, %v3022
  %3082 = vst.msk [vmem:[#allocation2 + $0x1c] sm:$0xf] %vm74, %v3032
  %3083 = vst.msk [vmem:[#allocation2 + $0x28] sm:$0xf] %vm74, %v3042
  %3084 = vst.msk [vmem:[#allocation2 + $0x34] sm:$0xf] %vm74, %v3052
  %3085 = vst.msk [vmem:[#allocation2 + $0x40] sm:$0xf] %vm74, %v3062
  %3086 = vst.msk [vmem:[#allocation2 + $0x4c] sm:$0xf] %vm74, %v3072
  %v3087 = vld [vmem:[%s0 + $0x4] sm:$0xf]
  %v3088 = vld [vmem:[%s0 + $0x8] sm:$0xf]
  %v3089 = vld [vmem:[%s0 + $0xc] sm:$0xf]
  %v3090 = vld [vmem:[%s0 + $0x10] sm:$0xf]
  %v3091 = vld [vmem:[%s0 + $0x14] sm:$0xf]
  %v3092 = vld [vmem:[%s0 + $0x18] sm:$0xf]
  %v3093 = vld [vmem:[%s0 + $0x1c] sm:$0xf]
  %3101 = vrot.lane.b32.xlu0 %v3087, 96
  %v3102 = vpop.permute.xlu0 %3101
  %3103 = vrot.lane.b32.xlu0 %v3088, 96
  %v3104 = vpop.permute.xlu0 %3103
  %3105 = vrot.lane.b32.xlu0 %v3089, 96
  %v3106 = vpop.permute.xlu0 %3105
  %3107 = vrot.lane.b32.xlu0 %v3090, 96
  %v3108 = vpop.permute.xlu0 %3107
  %3109 = vrot.lane.b32.xlu0 %v3091, 96
  %v3110 = vpop.permute.xlu0 %3109
  %3111 = vrot.lane.b32.xlu0 %v3092, 96
  %v3112 = vpop.permute.xlu0 %3111
  %3113 = vrot.lane.b32.xlu0 %v3093, 96
  %v3114 = vpop.permute.xlu0 %3113
  %3122 = vst.msk [vmem:[#allocation2 + $0x4] sm:$0xf] %vm188, %v3102
  %3123 = vst.msk [vmem:[#allocation2 + $0x10] sm:$0xf] %vm188, %v3104
  %3124 = vst.msk [vmem:[#allocation2 + $0x1c] sm:$0xf] %vm188, %v3106
  %3125 = vst.msk [vmem:[#allocation2 + $0x28] sm:$0xf] %vm188, %v3108
  %3126 = vst.msk [vmem:[#allocation2 + $0x34] sm:$0xf] %vm188, %v3110
  %3127 = vst.msk [vmem:[#allocation2 + $0x40] sm:$0xf] %vm188, %v3112
  %3128 = vst.msk [vmem:[#allocation2 + $0x4c] sm:$0xf] %vm188, %v3114
  %v3129 = vld [vmem:[%s0 + $0x4] sm:$0xf]
  %v3130 = vld [vmem:[%s0 + $0x8] sm:$0xf]
  %v3131 = vld [vmem:[%s0 + $0xc] sm:$0xf]
  %v3132 = vld [vmem:[%s0 + $0x10] sm:$0xf]
  %v3133 = vld [vmem:[%s0 + $0x14] sm:$0xf]
  %v3134 = vld [vmem:[%s0 + $0x18] sm:$0xf]
  %v3135 = vld [vmem:[%s0 + $0x1c] sm:$0xf]
  %v3136 = vld [vmem:[%s0 + $0x20] sm:$0x1]
  %v3138 = vshrl.u32 %v3129, 16
  %v3140 = vrot.slane %v3138, 4
  %v3141 = vshll.u32 %v3129, 16
  %v3143 = vrot.slane %v3141, 5
  %v3144 = vor.u32 %v3140, %v3143
  %v3145 = vrot.slane %v3144, 4
  %v3147 = vshll.u32 %v3130, 16
  %v3149 = vrot.slane %v3147, 5
  %v3150 = vsel %vm92, %v3145, %v3149
  %v3151 = vshrl.u32 %v3130, 16
  %v3153 = vrot.slane %v3151, 4
  %v3154 = vor.u32 %v3153, %v3149
  %v3155 = vrot.slane %v3154, 4
  %v3157 = vshll.u32 %v3131, 16
  %v3159 = vrot.slane %v3157, 5
  %v3160 = vsel %vm92, %v3155, %v3159
  %v3161 = vshrl.u32 %v3131, 16
  %v3163 = vrot.slane %v3161, 4
  %v3164 = vor.u32 %v3163, %v3159
  %v3165 = vrot.slane %v3164, 4
  %v3167 = vshll.u32 %v3132, 16
  %v3169 = vrot.slane %v3167, 5
  %v3170 = vsel %vm92, %v3165, %v3169
  %v3171 = vshrl.u32 %v3132, 16
  %v3173 = vrot.slane %v3171, 4
  %v3174 = vor.u32 %v3173, %v3169
  %v3175 = vrot.slane %v3174, 4
  %v3177 = vshll.u32 %v3133, 16
  %v3179 = vrot.slane %v3177, 5
  %v3180 = vsel %vm92, %v3175, %v3179
  %v3181 = vshrl.u32 %v3133, 16
  %v3183 = vrot.slane %v3181, 4
  %v3184 = vor.u32 %v3183, %v3179
  %v3185 = vrot.slane %v3184, 4
  %v3187 = vshll.u32 %v3134, 16
  %v3189 = vrot.slane %v3187, 5
  %v3190 = vsel %vm92, %v3185, %v3189
  %v3191 = vshrl.u32 %v3134, 16
  %v3193 = vrot.slane %v3191, 4
  %v3194 = vor.u32 %v3193, %v3189
  %v3195 = vrot.slane %v3194, 4
  %v3197 = vshll.u32 %v3135, 16
  %v3199 = vrot.slane %v3197, 5
  %v3200 = vsel %vm92, %v3195, %v3199
  %v3201 = vshrl.u32 %v3135, 16
  %v3203 = vrot.slane %v3201, 4
  %v3204 = vor.u32 %v3203, %v3199
  %v3205 = vrot.slane %v3204, 4
  %v3207 = vshll.u32 %v3136, 16
  %v3209 = vrot.slane %v3207, 5
  %v3210 = vsel %vm92, %v3205, %v3209
  %3211 = vrot.lane.b32.xlu0 %v3150, 32
  %v3212 = vpop.permute.xlu0 %3211
  %3213 = vrot.lane.b32.xlu0 %v3160, 32
  %v3214 = vpop.permute.xlu0 %3213
  %3215 = vrot.lane.b32.xlu0 %v3170, 32
  %v3216 = vpop.permute.xlu0 %3215
  %3217 = vrot.lane.b32.xlu0 %v3180, 32
  %v3218 = vpop.permute.xlu0 %3217
  %3219 = vrot.lane.b32.xlu0 %v3190, 32
  %v3220 = vpop.permute.xlu0 %3219
  %3221 = vrot.lane.b32.xlu0 %v3200, 32
  %v3222 = vpop.permute.xlu0 %3221
  %3223 = vrot.lane.b32.xlu0 %v3210, 32
  %v3224 = vpop.permute.xlu0 %3223
  %3232 = vst.msk [vmem:[#allocation2 + $0x4] sm:$0xf] %vm231, %v3212
  %3233 = vst.msk [vmem:[#allocation2 + $0x10] sm:$0xf] %vm231, %v3214
  %3234 = vst.msk [vmem:[#allocation2 + $0x1c] sm:$0xf] %vm231, %v3216
  %3235 = vst.msk [vmem:[#allocation2 + $0x28] sm:$0xf] %vm231, %v3218
  %3236 = vst.msk [vmem:[#allocation2 + $0x34] sm:$0xf] %vm231, %v3220
  %3237 = vst.msk [vmem:[#allocation2 + $0x40] sm:$0xf] %vm231, %v3222
  %3238 = vst.msk [vmem:[#allocation2 + $0x4c] sm:$0xf] %vm231, %v3224
  %v3239 = vld [vmem:[%s0 + $0x4] sm:$0xf]
  %v3240 = vld [vmem:[%s0 + $0x8] sm:$0xf]
  %v3241 = vld [vmem:[%s0 + $0xc] sm:$0xf]
  %v3242 = vld [vmem:[%s0 + $0x10] sm:$0xf]
  %v3243 = vld [vmem:[%s0 + $0x14] sm:$0xf]
  %v3244 = vld [vmem:[%s0 + $0x18] sm:$0xf]
  %v3245 = vld [vmem:[%s0 + $0x1c] sm:$0xf]
  %v3246 = vld [vmem:[%s0 + $0x20] sm:$0x1]
  %v3248 = vshrl.u32 %v3239, 16
  %v3250 = vrot.slane %v3248, 4
  %v3251 = vshll.u32 %v3239, 16
  %v3253 = vrot.slane %v3251, 5
  %v3254 = vor.u32 %v3250, %v3253
  %v3255 = vrot.slane %v3254, 4
  %v3257 = vshll.u32 %v3240, 16
  %v3259 = vrot.slane %v3257, 5
  %v3260 = vsel %vm92, %v3255, %v3259
  %v3261 = vshrl.u32 %v3240, 16
  %v3263 = vrot.slane %v3261, 4
  %v3264 = vor.u32 %v3263, %v3259
  %v3265 = vrot.slane %v3264, 4
  %v3267 = vshll.u32 %v3241, 16
  %v3269 = vrot.slane %v3267, 5
  %v3270 = vsel %vm92, %v3265, %v3269
  %v3271 = vshrl.u32 %v3241, 16
  %v3273 = vrot.slane %v3271, 4
  %v3274 = vor.u32 %v3273, %v3269
  %v3275 = vrot.slane %v3274, 4
  %v3277 = vshll.u32 %v3242, 16
  %v3279 = vrot.slane %v3277, 5
  %v3280 = vsel %vm92, %v3275, %v3279
  %v3281 = vshrl.u32 %v3242, 16
  %v3283 = vrot.slane %v3281, 4
  %v3284 = vor.u32 %v3283, %v3279
  %v3285 = vrot.slane %v3284, 4
  %v3287 = vshll.u32 %v3243, 16
  %v3289 = vrot.slane %v3287, 5
  %v3290 = vsel %vm92, %v3285, %v3289
  %v3291 = vshrl.u32 %v3243, 16
  %v3293 = vrot.slane %v3291, 4
  %v3294 = vor.u32 %v3293, %v3289
  %v3295 = vrot.slane %v3294, 4
  %v3297 = vshll.u32 %v3244, 16
  %v3299 = vrot.slane %v3297, 5
  %v3300 = vsel %vm92, %v3295, %v3299
  %v3301 = vshrl.u32 %v3244, 16
  %v3303 = vrot.slane %v3301, 4
  %v3304 = vor.u32 %v3303, %v3299
  %v3305 = vrot.slane %v3304, 4
  %v3307 = vshll.u32 %v3245, 16
  %v3309 = vrot.slane %v3307, 5
  %v3310 = vsel %vm92, %v3305, %v3309
  %v3311 = vshrl.u32 %v3245, 16
  %v3313 = vrot.slane %v3311, 4
  %v3314 = vor.u32 %v3313, %v3309
  %v3315 = vrot.slane %v3314, 4
  %v3317 = vshll.u32 %v3246, 16
  %v3319 = vrot.slane %v3317, 5
  %v3320 = vsel %vm92, %v3315, %v3319
  %3321 = vrot.lane.b32.xlu0 %v3260, 32
  %v3322 = vpop.permute.xlu0 %3321
  %3323 = vrot.lane.b32.xlu0 %v3270, 32
  %v3324 = vpop.permute.xlu0 %3323
  %3325 = vrot.lane.b32.xlu0 %v3280, 32
  %v3326 = vpop.permute.xlu0 %3325
  %3327 = vrot.lane.b32.xlu0 %v3290, 32
  %v3328 = vpop.permute.xlu0 %3327
  %3329 = vrot.lane.b32.xlu0 %v3300, 32
  %v3330 = vpop.permute.xlu0 %3329
  %3331 = vrot.lane.b32.xlu0 %v3310, 32
  %v3332 = vpop.permute.xlu0 %3331
  %3333 = vrot.lane.b32.xlu0 %v3320, 32
  %v3334 = vpop.permute.xlu0 %3333
  %3342 = vst.msk [vmem:[#allocation2 + $0x8] sm:$0xf] %vm59, %v3322
  %3343 = vst.msk [vmem:[#allocation2 + $0x14] sm:$0xf] %vm59, %v3324
  %3344 = vst.msk [vmem:[#allocation2 + $0x20] sm:$0xf] %vm59, %v3326
  %3345 = vst.msk [vmem:[#allocation2 + $0x2c] sm:$0xf] %vm59, %v3328
  %3346 = vst.msk [vmem:[#allocation2 + $0x38] sm:$0xf] %vm59, %v3330
  %3347 = vst.msk [vmem:[#allocation2 + $0x44] sm:$0xf] %vm59, %v3332
  %3348 = vst.msk [vmem:[#allocation2 + $0x50] sm:$0xf] %vm59, %v3334
  %v3349 = vld [vmem:[#allocation2] sm:$0xff]
  %v3350 = vld [vmem:[#allocation2 + $0x8] sm:$0xf]
  %v3351 = vld [vmem:[#allocation2 + $0xc] sm:$0xff]
  %v3352 = vld [vmem:[#allocation2 + $0x14] sm:$0xf]
  %v3353 = vld [vmem:[#allocation2 + $0x18] sm:$0xff]
  %v3354 = vld [vmem:[#allocation2 + $0x20] sm:$0xf]
  %v3355 = vld [vmem:[#allocation2 + $0x24] sm:$0xff]
  %v3356 = vld [vmem:[#allocation2 + $0x2c] sm:$0xf]
  %v3357 = vld [vmem:[#allocation2 + $0x30] sm:$0xff]
  %v3358 = vld [vmem:[#allocation2 + $0x38] sm:$0xf]
  %v3359 = vld [vmem:[#allocation2 + $0x3c] sm:$0xff]
  %v3360 = vld [vmem:[#allocation2 + $0x44] sm:$0xf]
  %v3361 = vld [vmem:[#allocation2 + $0x48] sm:$0xff]
  %v3362 = vld [vmem:[#allocation2 + $0x50] sm:$0xf]
  %v3377 = vunpack.c.l.b16 %v3349
  %v3378 = vunpack.c.h.b16 %v3349
  %v3379 = vunpack.c.l.b16 %v3350
  %v3380 = vunpack.c.l.b16 %v3351
  %v3381 = vunpack.c.h.b16 %v3351
  %v3382 = vunpack.c.l.b16 %v3352
  %v3383 = vunpack.c.l.b16 %v3353
  %v3384 = vunpack.c.h.b16 %v3353
  %v3385 = vunpack.c.l.b16 %v3354
  %v3386 = vunpack.c.l.b16 %v3355
  %v3387 = vunpack.c.h.b16 %v3355
  %v3388 = vunpack.c.l.b16 %v3356
  %v3389 = vunpack.c.l.b16 %v3357
  %v3390 = vunpack.c.h.b16 %v3357
  %v3391 = vunpack.c.l.b16 %v3358
  %v3392 = vunpack.c.l.b16 %v3359
  %v3393 = vunpack.c.h.b16 %v3359
  %v3394 = vunpack.c.l.b16 %v3360
  %v3395 = vunpack.c.l.b16 %v3361
  %v3396 = vunpack.c.h.b16 %v3361
  %v3397 = vunpack.c.l.b16 %v3362
  %v3398 = vpack.c.b16 %v3380, %v3377
  %v3399 = vpack.c.b16 %v3381, %v3378
  %v3400 = vpack.c.b16 %v3382, %v3379
  %v3401 = vpack.c.b16 %v3386, %v3383
  %v3402 = vpack.c.b16 %v3387, %v3384
  %v3403 = vpack.c.b16 %v3388, %v3385
  %v3404 = vpack.c.b16 %v3392, %v3389
  %v3405 = vpack.c.b16 %v3393, %v3390
  %v3406 = vpack.c.b16 %v3394, %v3391
  %v3407 = vpack.c.b16 %v3395, %v3395
  %v3408 = vpack.c.b16 %v3396, %v3396
  %v3409 = vpack.c.b16 %v3397, %v3397
  %v3419 = vsel %vm748, %v3400, 0
  %v3422 = vsel %vm748, %v3403, 0
  %v3425 = vsel %vm748, %v3406, 0
  %v3428 = vsel %vm748, %v3409, 0
  %3430 = vmatprep.subr.bf16.mxu0 0
  %3431 = vmatpush1.bf16.msra.mxu0 %v712
  %3432 = vmatprep.subr.bf16.mxu0 0
  %3433 = vmatpush1.bf16.msra.mxu0 %v713
  %3434 = vmatprep.subr.bf16.mxu0 0
  %3435 = vmatpush1.bf16.msra.mxu0 %v714
  %3436 = vmatprep.subr.bf16.mxu0 0
  %3437 = vmatpush1.bf16.msra.mxu0 %v715
  %3438 = vmatprep.subr.bf16.mxu0 0
  %3439 = vmatpush1.bf16.msra.mxu0 %v716
  %3440 = vmatprep.subr.bf16.mxu0 0
  %3441 = vmatpush1.bf16.msra.mxu0 %v717
  %3442 = vmatprep.subr.bf16.mxu0 0
  %3443 = vmatpush1.bf16.msra.mxu0 %v718
  %3444 = vmatprep.subr.bf16.mxu0 0
  %3445 = vmatpush1.bf16.msra.mxu0 %v719
  %3446 = vmatprep.subr.bf16.mxu0 0
  %3447 = vmatpush1.bf16.msra.mxu0 %v720
  %3448 = vmatprep.subr.bf16.mxu0 0
  %3449 = vmatpush1.bf16.msra.mxu0 %v721
  %3450 = vmatprep.subr.bf16.mxu0 0
  %3451 = vmatpush1.bf16.msra.mxu0 %v722
  %3452 = vmatprep.subr.bf16.mxu0 0
  %3453 = vmatpush1.bf16.msra.mxu0 %v723
  %3454 = vmatprep.subr.bf16.mxu0 0
  %3455 = vmatpush1.bf16.msra.mxu0 %v724
  %3456 = vmatprep.subr.bf16.mxu0 0
  %3457 = vmatpush1.bf16.msra.mxu0 %v725
  %3458 = vmatprep.subr.bf16.mxu0 0
  %3459 = vmatpush1.bf16.msra.mxu0 %v726
  %3460 = vmatprep.subr.bf16.mxu0 0
  %3461 = vmatpush1.bf16.msra.mxu0 %v727
  %3462 = vmatprep.mubr.bf16.mxu0 %v3399
  %3463 = vmatmul.mubr.bf16.gmra.mrb[0].mxu0 %v3398
  %v3464 = vpop.f32.mrb[0].mxu0
  %v3465 = vadd.f32 0.0, %v3464
  %v3466 = vpop.f32.mrb[0].mxu0
  %v3467 = vpop.f32.mrb[0].mxu0
  %v3468 = vadd.f32 0.0, %v3467
  %v3469 = vpop.f32.mrb[0].mxu0
  %3470 = vmatprep.mubr.bf16.mxu0 %v3402
  %3471 = vmatmul.mubr.bf16.gmra.mrb[0].mxu0 %v3401
  %v3472 = vpop.f32.mrb[0].mxu0
  %v3473 = vadd.f32 0.0, %v3472
  %v3474 = vpop.f32.mrb[0].mxu0
  %v3475 = vpop.f32.mrb[0].mxu0
  %v3476 = vadd.f32 0.0, %v3475
  %v3477 = vpop.f32.mrb[0].mxu0
  %3478 = vmatprep.mubr.bf16.mxu0 %v3405
  %3479 = vmatmul.mubr.bf16.gmra.mrb[0].mxu0 %v3404
  %v3480 = vpop.f32.mrb[0].mxu0
  %v3481 = vadd.f32 0.0, %v3480
  %v3482 = vpop.f32.mrb[0].mxu0
  %v3483 = vpop.f32.mrb[0].mxu0
  %v3484 = vadd.f32 0.0, %v3483
  %v3485 = vpop.f32.mrb[0].mxu0
  %3486 = vmatprep.mubr.bf16.mxu0 %v3408
  %3487 = vmatmul.mubr.bf16.gmra.mrb[0].mxu0 %v3407
  %v3488 = vpop.f32.mrb[0].mxu0
  %v3489 = vadd.f32 0.0, %v3488
  %v3490 = vpop.f32.mrb[0].mxu0
  %v3491 = vpop.f32.mrb[0].mxu0
  %v3492 = vpop.f32.mrb[0].mxu0
  %3493 = vdwg.mxu0
  %3494 = vmatprep.subr.bf16.mxu0 0
  %3495 = vmatpush1.bf16.msra.mxu0 %v728
  %3496 = vmatprep.subr.bf16.mxu0 0
  %3497 = vmatpush1.bf16.msra.mxu0 %v729
  %3498 = vmatprep.subr.bf16.mxu0 0
  %3499 = vmatpush1.bf16.msra.mxu0 0
  %3500 = vmatprep.subr.bf16.mxu0 0
  %3501 = vmatpush1.bf16.msra.mxu0 0
  %3502 = vmatprep.subr.bf16.mxu0 0
  %3503 = vmatpush1.bf16.msra.mxu0 0
  %3504 = vmatprep.subr.bf16.mxu0 0
  %3505 = vmatpush1.bf16.msra.mxu0 0
  %3506 = vmatprep.subr.bf16.mxu0 0
  %3507 = vmatpush1.bf16.msra.mxu0 0
  %3508 = vmatprep.subr.bf16.mxu0 0
  %3509 = vmatpush1.bf16.msra.mxu0 0
  %3510 = vmatprep.subr.bf16.mxu0 0
  %3511 = vmatpush1.bf16.msra.mxu0 0
  %3512 = vmatprep.subr.bf16.mxu0 0
  %3513 = vmatpush1.bf16.msra.mxu0 0
  %3514 = vmatprep.subr.bf16.mxu0 0
  %3515 = vmatpush1.bf16.msra.mxu0 0
  %3516 = vmatprep.subr.bf16.mxu0 0
  %3517 = vmatpush1.bf16.msra.mxu0 0
  %3518 = vmatprep.subr.bf16.mxu0 0
  %3519 = vmatpush1.bf16.msra.mxu0 0
  %3520 = vmatprep.subr.bf16.mxu0 0
  %3521 = vmatpush1.bf16.msra.mxu0 0
  %3522 = vmatprep.subr.bf16.mxu0 0
  %3523 = vmatpush1.bf16.msra.mxu0 0
  %3524 = vmatprep.subr.bf16.mxu0 0
  %3525 = vmatpush1.bf16.msra.mxu0 0
  %3526 = vmatprep.mubr.bf16.mxu0 0
  %3527 = vmatmul.mubr.bf16.gmra.mrb[0].mxu0 %v3419
  %v3528 = vpop.f32.mrb[0].mxu0
  %v3529 = vadd.f32 %v3465, %v3528
  %v3530 = vpop.f32.mrb[0].mxu0
  %v3531 = vpop.f32.mrb[0].mxu0
  %v3532 = vadd.f32 %v3468, %v3531
  %v3533 = vpop.f32.mrb[0].mxu0
  %3534 = vmatprep.mubr.bf16.mxu0 0
  %3535 = vmatmul.mubr.bf16.gmra.mrb[0].mxu0 %v3422
  %v3536 = vpop.f32.mrb[0].mxu0
  %v3537 = vadd.f32 %v3473, %v3536
  %v3538 = vpop.f32.mrb[0].mxu0
  %v3539 = vpop.f32.mrb[0].mxu0
  %v3540 = vadd.f32 %v3476, %v3539
  %v3541 = vpop.f32.mrb[0].mxu0
  %3542 = vmatprep.mubr.bf16.mxu0 0
  %3543 = vmatmul.mubr.bf16.gmra.mrb[0].mxu0 %v3425
  %v3544 = vpop.f32.mrb[0].mxu0
  %v3545 = vadd.f32 %v3481, %v3544
  %v3546 = vpop.f32.mrb[0].mxu0
  %v3547 = vpop.f32.mrb[0].mxu0
  %v3548 = vadd.f32 %v3484, %v3547
  %v3549 = vpop.f32.mrb[0].mxu0
  %3550 = vmatprep.mubr.bf16.mxu0 0
  %3551 = vmatmul.mubr.bf16.gmra.mrb[0].mxu0 %v3428
  %v3552 = vpop.f32.mrb[0].mxu0
  %v3553 = vadd.f32 %v3489, %v3552
  %v3554 = vpop.f32.mrb[0].mxu0
  %v3555 = vpop.f32.mrb[0].mxu0
  %v3556 = vpop.f32.mrb[0].mxu0
  %3557 = vdwg.mxu0
  %v3558 = vmax.f32 %v2584, %v3529
  %v3559 = vmax.f32 %v2585, %v3532
  %v3560 = vmax.f32 %v2586, %v3537
  %v3561 = vmax.f32 %v2587, %v3540
  %v3562 = vmax.f32 %v2588, %v3545
  %v3563 = vmax.f32 %v2589, %v3548
  %v3564 = vmax.f32 %v2590, %v3553
  %v3566 = vlaneseq
  %v3567 = vshrl.u32 %v3566, 7
  %v3568 = vsub.s32 0, %v3567
  %v3569 = vrot.slane %v51, %v3568
  %v3571 = vadd.f32 %v3558, %v3569
  %v3572 = vadd.f32 %v3559, %v3569
  %v3573 = vadd.f32 %v3560, %v3569
  %v3574 = vadd.f32 %v3561, %v3569
  %v3575 = vadd.f32 %v3562, %v3569
  %v3576 = vadd.f32 %v3563, %v3569
  %v3577 = vadd.f32 %v3564, %v3569
  %v3578 = vmax.f32 %v3571, 0.0
  %v3579 = vmax.f32 %v3572, 0.0
  %v3580 = vmax.f32 %v3573, 0.0
  %v3581 = vmax.f32 %v3574, 0.0
  %v3582 = vmax.f32 %v3575, 0.0
  %v3583 = vmax.f32 %v3576, 0.0
  %v3584 = vmax.f32 %v3577, 0.0
  %v3585 = vpack.c.bf16 %v3579, %v3578
  %v3586 = vpack.c.bf16 %v3581, %v3580
  %v3587 = vpack.c.bf16 %v3583, %v3582
  %v3588 = vpack.c.bf16 %v3584, %v3584
  %v3593 = vunpack.c.l.b16 %v3585
  %v3594 = vunpack.c.h.b16 %v3585
  %v3595 = vunpack.c.l.b16 %v3586
  %v3596 = vunpack.c.h.b16 %v3586
  %v3597 = vunpack.c.l.b16 %v3587
  %v3598 = vunpack.c.h.b16 %v3587
  %v3599 = vunpack.c.l.b16 %v3588
  %v3600 = vpack.c.b16 %v3593, %v3593
  %v3601 = vpack.c.b16 %v3594, %v3594
  %v3602 = vpack.c.b16 %v3595, %v3595
  %v3603 = vpack.c.b16 %v3596, %v3596
  %v3604 = vpack.c.b16 %v3597, %v3597
  %v3605 = vpack.c.b16 %v3598, %v3598
  %v3606 = vpack.c.b16 %v3599, %v3599
  %vm3614 = vcmask 519168
  %3615 = vst.msk [vmem:[%s3] sm:$0xf] %vm3614, %v3600
  %3616 = vst.msk [vmem:[%s3 + $0x4] sm:$0xf] %vm3614, %v3601
  %3617 = vst.msk [vmem:[%s3 + $0x8] sm:$0xf] %vm3614, %v3602
  %3618 = vst.msk [vmem:[%s3 + $0xc] sm:$0xf] %vm3614, %v3603
  %3619 = vst.msk [vmem:[%s3 + $0x10] sm:$0xf] %vm3614, %v3604
  %3620 = vst.msk [vmem:[%s3 + $0x14] sm:$0xf] %vm3614, %v3605
  %3621 = vst.msk [vmem:[%s3 + $0x18] sm:$0xf] %vm3614, %v3606
  %s3622 = scalar_lea.vmem %s0, 36
  %v3623 = vld [vmem:[%s3622] sm:$0xf]
  %v3624 = vld [vmem:[%s3622 + $0x4] sm:$0xf]
  %v3625 = vld [vmem:[%s3622 + $0x8] sm:$0xf]
  %v3626 = vld [vmem:[%s3622 + $0xc] sm:$0xf]
  %v3627 = vld [vmem:[%s3622 + $0x10] sm:$0xf]
  %v3628 = vld [vmem:[%s3622 + $0x14] sm:$0xf]
  %v3629 = vld [vmem:[%s3622 + $0x18] sm:$0xf]
  %3630 = vst.msk [vmem:[#allocation2] sm:$0xf] %vm59, %v3623
  %3631 = vst.msk [vmem:[#allocation2 + $0xc] sm:$0xf] %vm59, %v3624
  %3632 = vst.msk [vmem:[#allocation2 + $0x18] sm:$0xf] %vm59, %v3625
  %3633 = vst.msk [vmem:[#allocation2 + $0x24] sm:$0xf] %vm59, %v3626
  %3634 = vst.msk [vmem:[#allocation2 + $0x30] sm:$0xf] %vm59, %v3627
  %3635 = vst.msk [vmem:[#allocation2 + $0x3c] sm:$0xf] %vm59, %v3628
  %3636 = vst.msk [vmem:[#allocation2 + $0x48] sm:$0xf] %vm59, %v3629
  %v3637 = vld [vmem:[%s3622] sm:$0xf]
  %v3638 = vld [vmem:[%s3622 + $0x4] sm:$0xf]
  %v3639 = vld [vmem:[%s3622 + $0x8] sm:$0xf]
  %v3640 = vld [vmem:[%s3622 + $0xc] sm:$0xf]
  %v3641 = vld [vmem:[%s3622 + $0x10] sm:$0xf]
  %v3642 = vld [vmem:[%s3622 + $0x14] sm:$0xf]
  %v3643 = vld [vmem:[%s3622 + $0x18] sm:$0xf]
  %3644 = vst.msk [vmem:[#allocation2] sm:$0xf] %vm74, %v3637
  %3645 = vst.msk [vmem:[#allocation2 + $0xc] sm:$0xf] %vm74, %v3638
  %3646 = vst.msk [vmem:[#allocation2 + $0x18] sm:$0xf] %vm74, %v3639
  %3647 = vst.msk [vmem:[#allocation2 + $0x24] sm:$0xf] %vm74, %v3640
  %3648 = vst.msk [vmem:[#allocation2 + $0x30] sm:$0xf] %vm74, %v3641
  %3649 = vst.msk [vmem:[#allocation2 + $0x3c] sm:$0xf] %vm74, %v3642
  %3650 = vst.msk [vmem:[#allocation2 + $0x48] sm:$0xf] %vm74, %v3643
  %v3651 = vld [vmem:[%s3622] sm:$0xf]
  %v3652 = vld [vmem:[%s3622 + $0x4] sm:$0xf]
  %v3653 = vld [vmem:[%s3622 + $0x8] sm:$0xf]
  %v3654 = vld [vmem:[%s3622 + $0xc] sm:$0xf]
  %v3655 = vld [vmem:[%s3622 + $0x10] sm:$0xf]
  %v3656 = vld [vmem:[%s3622 + $0x14] sm:$0xf]
  %v3657 = vld [vmem:[%s3622 + $0x18] sm:$0xf]
  %v3658 = vld [vmem:[%s3622 + $0x1c] sm:$0x1]
  %v3660 = vshrl.u32 %v3651, 16
  %v3662 = vrot.slane %v3660, 4
  %v3663 = vshll.u32 %v3651, 16
  %v3665 = vrot.slane %v3663, 5
  %v3666 = vor.u32 %v3662, %v3665
  %v3667 = vrot.slane %v3666, 4
  %v3669 = vshll.u32 %v3652, 16
  %v3671 = vrot.slane %v3669, 5
  %v3672 = vsel %vm92, %v3667, %v3671
  %v3673 = vshrl.u32 %v3652, 16
  %v3675 = vrot.slane %v3673, 4
  %v3676 = vor.u32 %v3675, %v3671
  %v3677 = vrot.slane %v3676, 4
  %v3679 = vshll.u32 %v3653, 16
  %v3681 = vrot.slane %v3679, 5
  %v3682 = vsel %vm92, %v3677, %v3681
  %v3683 = vshrl.u32 %v3653, 16
  %v3685 = vrot.slane %v3683, 4
  %v3686 = vor.u32 %v3685, %v3681
  %v3687 = vrot.slane %v3686, 4
  %v3689 = vshll.u32 %v3654, 16
  %v3691 = vrot.slane %v3689, 5
  %v3692 = vsel %vm92, %v3687, %v3691
  %v3693 = vshrl.u32 %v3654, 16
  %v3695 = vrot.slane %v3693, 4
  %v3696 = vor.u32 %v3695, %v3691
  %v3697 = vrot.slane %v3696, 4
  %v3699 = vshll.u32 %v3655, 16
  %v3701 = vrot.slane %v3699, 5
  %v3702 = vsel %vm92, %v3697, %v3701
  %v3703 = vshrl.u32 %v3655, 16
  %v3705 = vrot.slane %v3703, 4
  %v3706 = vor.u32 %v3705, %v3701
  %v3707 = vrot.slane %v3706, 4
  %v3709 = vshll.u32 %v3656, 16
  %v3711 = vrot.slane %v3709, 5
  %v3712 = vsel %vm92, %v3707, %v3711
  %v3713 = vshrl.u32 %v3656, 16
  %v3715 = vrot.slane %v3713, 4
  %v3716 = vor.u32 %v3715, %v3711
  %v3717 = vrot.slane %v3716, 4
  %v3719 = vshll.u32 %v3657, 16
  %v3721 = vrot.slane %v3719, 5
  %v3722 = vsel %vm92, %v3717, %v3721
  %v3723 = vshrl.u32 %v3657, 16
  %v3725 = vrot.slane %v3723, 4
  %v3726 = vor.u32 %v3725, %v3721
  %v3727 = vrot.slane %v3726, 4
  %v3729 = vshll.u32 %v3658, 16
  %v3731 = vrot.slane %v3729, 5
  %v3732 = vsel %vm92, %v3727, %v3731
  %3733 = vrot.lane.b32.xlu0 %v3672, 64
  %v3734 = vpop.permute.xlu0 %3733
  %3735 = vrot.lane.b32.xlu0 %v3682, 64
  %v3736 = vpop.permute.xlu0 %3735
  %3737 = vrot.lane.b32.xlu0 %v3692, 64
  %v3738 = vpop.permute.xlu0 %3737
  %3739 = vrot.lane.b32.xlu0 %v3702, 64
  %v3740 = vpop.permute.xlu0 %3739
  %3741 = vrot.lane.b32.xlu0 %v3712, 64
  %v3742 = vpop.permute.xlu0 %3741
  %3743 = vrot.lane.b32.xlu0 %v3722, 64
  %v3744 = vpop.permute.xlu0 %3743
  %3745 = vrot.lane.b32.xlu0 %v3732, 64
  %v3746 = vpop.permute.xlu0 %3745
  %3754 = vst.msk [vmem:[#allocation2] sm:$0xf] %vm188, %v3734
  %3755 = vst.msk [vmem:[#allocation2 + $0xc] sm:$0xf] %vm188, %v3736
  %3756 = vst.msk [vmem:[#allocation2 + $0x18] sm:$0xf] %vm188, %v3738
  %3757 = vst.msk [vmem:[#allocation2 + $0x24] sm:$0xf] %vm188, %v3740
  %3758 = vst.msk [vmem:[#allocation2 + $0x30] sm:$0xf] %vm188, %v3742
  %3759 = vst.msk [vmem:[#allocation2 + $0x3c] sm:$0xf] %vm188, %v3744
  %3760 = vst.msk [vmem:[#allocation2 + $0x48] sm:$0xf] %vm188, %v3746
  %v3761 = vld [vmem:[%s3622] sm:$0xf]
  %v3762 = vld [vmem:[%s3622 + $0x4] sm:$0xf]
  %v3763 = vld [vmem:[%s3622 + $0x8] sm:$0xf]
  %v3764 = vld [vmem:[%s3622 + $0xc] sm:$0xf]
  %v3765 = vld [vmem:[%s3622 + $0x10] sm:$0xf]
  %v3766 = vld [vmem:[%s3622 + $0x14] sm:$0xf]
  %v3767 = vld [vmem:[%s3622 + $0x18] sm:$0xf]
  %3775 = vrot.lane.b32.xlu0 %v3761, 32
  %v3776 = vpop.permute.xlu0 %3775
  %3777 = vrot.lane.b32.xlu0 %v3762, 32
  %v3778 = vpop.permute.xlu0 %3777
  %3779 = vrot.lane.b32.xlu0 %v3763, 32
  %v3780 = vpop.permute.xlu0 %3779
  %3781 = vrot.lane.b32.xlu0 %v3764, 32
  %v3782 = vpop.permute.xlu0 %3781
  %3783 = vrot.lane.b32.xlu0 %v3765, 32
  %v3784 = vpop.permute.xlu0 %3783
  %3785 = vrot.lane.b32.xlu0 %v3766, 32
  %v3786 = vpop.permute.xlu0 %3785
  %3787 = vrot.lane.b32.xlu0 %v3767, 32
  %v3788 = vpop.permute.xlu0 %3787
  %3796 = vst.msk [vmem:[#allocation2] sm:$0xf] %vm231, %v3776
  %3797 = vst.msk [vmem:[#allocation2 + $0xc] sm:$0xf] %vm231, %v3778
  %3798 = vst.msk [vmem:[#allocation2 + $0x18] sm:$0xf] %vm231, %v3780
  %3799 = vst.msk [vmem:[#allocation2 + $0x24] sm:$0xf] %vm231, %v3782
  %3800 = vst.msk [vmem:[#allocation2 + $0x30] sm:$0xf] %vm231, %v3784
  %3801 = vst.msk [vmem:[#allocation2 + $0x3c] sm:$0xf] %vm231, %v3786
  %3802 = vst.msk [vmem:[#allocation2 + $0x48] sm:$0xf] %vm231, %v3788
  %v3803 = vld [vmem:[%s3622] sm:$0xf]
  %v3804 = vld [vmem:[%s3622 + $0x4] sm:$0xf]
  %v3805 = vld [vmem:[%s3622 + $0x8] sm:$0xf]
  %v3806 = vld [vmem:[%s3622 + $0xc] sm:$0xf]
  %v3807 = vld [vmem:[%s3622 + $0x10] sm:$0xf]
  %v3808 = vld [vmem:[%s3622 + $0x14] sm:$0xf]
  %v3809 = vld [vmem:[%s3622 + $0x18] sm:$0xf]
  %3817 = vrot.lane.b32.xlu0 %v3803, 32
  %v3818 = vpop.permute.xlu0 %3817
  %3819 = vrot.lane.b32.xlu0 %v3804, 32
  %v3820 = vpop.permute.xlu0 %3819
  %3821 = vrot.lane.b32.xlu0 %v3805, 32
  %v3822 = vpop.permute.xlu0 %3821
  %3823 = vrot.lane.b32.xlu0 %v3806, 32
  %v3824 = vpop.permute.xlu0 %3823
  %3825 = vrot.lane.b32.xlu0 %v3807, 32
  %v3826 = vpop.permute.xlu0 %3825
  %3827 = vrot.lane.b32.xlu0 %v3808, 32
  %v3828 = vpop.permute.xlu0 %3827
  %3829 = vrot.lane.b32.xlu0 %v3809, 32
  %v3830 = vpop.permute.xlu0 %3829
  %3838 = vst.msk [vmem:[#allocation2 + $0x4] sm:$0xf] %vm59, %v3818
  %3839 = vst.msk [vmem:[#allocation2 + $0x10] sm:$0xf] %vm59, %v3820
  %3840 = vst.msk [vmem:[#allocation2 + $0x1c] sm:$0xf] %vm59, %v3822
  %3841 = vst.msk [vmem:[#allocation2 + $0x28] sm:$0xf] %vm59, %v3824
  %3842 = vst.msk [vmem:[#allocation2 + $0x34] sm:$0xf] %vm59, %v3826
  %3843 = vst.msk [vmem:[#allocation2 + $0x40] sm:$0xf] %vm59, %v3828
  %3844 = vst.msk [vmem:[#allocation2 + $0x4c] sm:$0xf] %vm59, %v3830
  %v3845 = vld [vmem:[%s3622] sm:$0xf]
  %v3846 = vld [vmem:[%s3622 + $0x4] sm:$0xf]
  %v3847 = vld [vmem:[%s3622 + $0x8] sm:$0xf]
  %v3848 = vld [vmem:[%s3622 + $0xc] sm:$0xf]
  %v3849 = vld [vmem:[%s3622 + $0x10] sm:$0xf]
  %v3850 = vld [vmem:[%s3622 + $0x14] sm:$0xf]
  %v3851 = vld [vmem:[%s3622 + $0x18] sm:$0xf]
  %v3852 = vld [vmem:[%s3622 + $0x1c] sm:$0x1]
  %v3854 = vshrl.u32 %v3845, 16
  %v3856 = vrot.slane %v3854, 4
  %v3857 = vshll.u32 %v3845, 16
  %v3859 = vrot.slane %v3857, 5
  %v3860 = vor.u32 %v3856, %v3859
  %v3861 = vrot.slane %v3860, 4
  %v3863 = vshll.u32 %v3846, 16
  %v3865 = vrot.slane %v3863, 5
  %v3866 = vsel %vm92, %v3861, %v3865
  %v3867 = vshrl.u32 %v3846, 16
  %v3869 = vrot.slane %v3867, 4
  %v3870 = vor.u32 %v3869, %v3865
  %v3871 = vrot.slane %v3870, 4
  %v3873 = vshll.u32 %v3847, 16
  %v3875 = vrot.slane %v3873, 5
  %v3876 = vsel %vm92, %v3871, %v3875
  %v3877 = vshrl.u32 %v3847, 16
  %v3879 = vrot.slane %v3877, 4
  %v3880 = vor.u32 %v3879, %v3875
  %v3881 = vrot.slane %v3880, 4
  %v3883 = vshll.u32 %v3848, 16
  %v3885 = vrot.slane %v3883, 5
  %v3886 = vsel %vm92, %v3881, %v3885
  %v3887 = vshrl.u32 %v3848, 16
  %v3889 = vrot.slane %v3887, 4
  %v3890 = vor.u32 %v3889, %v3885
  %v3891 = vrot.slane %v3890, 4
  %v3893 = vshll.u32 %v3849, 16
  %v3895 = vrot.slane %v3893, 5
  %v3896 = vsel %vm92, %v3891, %v3895
  %v3897 = vshrl.u32 %v3849, 16
  %v3899 = vrot.slane %v3897, 4
  %v3900 = vor.u32 %v3899, %v3895
  %v3901 = vrot.slane %v3900, 4
  %v3903 = vshll.u32 %v3850, 16
  %v3905 = vrot.slane %v3903, 5
  %v3906 = vsel %vm92, %v3901, %v3905
  %v3907 = vshrl.u32 %v3850, 16
  %v3909 = vrot.slane %v3907, 4
  %v3910 = vor.u32 %v3909, %v3905
  %v3911 = vrot.slane %v3910, 4
  %v3913 = vshll.u32 %v3851, 16
  %v3915 = vrot.slane %v3913, 5
  %v3916 = vsel %vm92, %v3911, %v3915
  %v3917 = vshrl.u32 %v3851, 16
  %v3919 = vrot.slane %v3917, 4
  %v3920 = vor.u32 %v3919, %v3915
  %v3921 = vrot.slane %v3920, 4
  %v3923 = vshll.u32 %v3852, 16
  %v3925 = vrot.slane %v3923, 5
  %v3926 = vsel %vm92, %v3921, %v3925
  %3927 = vrot.lane.b32.xlu0 %v3866, 96
  %v3928 = vpop.permute.xlu0 %3927
  %3929 = vrot.lane.b32.xlu0 %v3876, 96
  %v3930 = vpop.permute.xlu0 %3929
  %3931 = vrot.lane.b32.xlu0 %v3886, 96
  %v3932 = vpop.permute.xlu0 %3931
  %3933 = vrot.lane.b32.xlu0 %v3896, 96
  %v3934 = vpop.permute.xlu0 %3933
  %3935 = vrot.lane.b32.xlu0 %v3906, 96
  %v3936 = vpop.permute.xlu0 %3935
  %3937 = vrot.lane.b32.xlu0 %v3916, 96
  %v3938 = vpop.permute.xlu0 %3937
  %3939 = vrot.lane.b32.xlu0 %v3926, 96
  %v3940 = vpop.permute.xlu0 %3939
  %3948 = vst.msk [vmem:[#allocation2 + $0x4] sm:$0xf] %vm74, %v3928
  %3949 = vst.msk [vmem:[#allocation2 + $0x10] sm:$0xf] %vm74, %v3930
  %3950 = vst.msk [vmem:[#allocation2 + $0x1c] sm:$0xf] %vm74, %v3932
  %3951 = vst.msk [vmem:[#allocation2 + $0x28] sm:$0xf] %vm74, %v3934
  %3952 = vst.msk [vmem:[#allocation2 + $0x34] sm:$0xf] %vm74, %v3936
  %3953 = vst.msk [vmem:[#allocation2 + $0x40] sm:$0xf] %vm74, %v3938
  %3954 = vst.msk [vmem:[#allocation2 + $0x4c] sm:$0xf] %vm74, %v3940
  %v3955 = vld [vmem:[%s3622 + $0x4] sm:$0xf]
  %v3956 = vld [vmem:[%s3622 + $0x8] sm:$0xf]
  %v3957 = vld [vmem:[%s3622 + $0xc] sm:$0xf]
  %v3958 = vld [vmem:[%s3622 + $0x10] sm:$0xf]
  %v3959 = vld [vmem:[%s3622 + $0x14] sm:$0xf]
  %v3960 = vld [vmem:[%s3622 + $0x18] sm:$0xf]
  %v3961 = vld [vmem:[%s3622 + $0x1c] sm:$0xf]
  %3969 = vrot.lane.b32.xlu0 %v3955, 64
  %v3970 = vpop.permute.xlu0 %3969
  %3971 = vrot.lane.b32.xlu0 %v3956, 64
  %v3972 = vpop.permute.xlu0 %3971
  %3973 = vrot.lane.b32.xlu0 %v3957, 64
  %v3974 = vpop.permute.xlu0 %3973
  %3975 = vrot.lane.b32.xlu0 %v3958, 64
  %v3976 = vpop.permute.xlu0 %3975
  %3977 = vrot.lane.b32.xlu0 %v3959, 64
  %v3978 = vpop.permute.xlu0 %3977
  %3979 = vrot.lane.b32.xlu0 %v3960, 64
  %v3980 = vpop.permute.xlu0 %3979
  %3981 = vrot.lane.b32.xlu0 %v3961, 64
  %v3982 = vpop.permute.xlu0 %3981
  %3990 = vst.msk [vmem:[#allocation2 + $0x4] sm:$0xf] %vm188, %v3970
  %3991 = vst.msk [vmem:[#allocation2 + $0x10] sm:$0xf] %vm188, %v3972
  %3992 = vst.msk [vmem:[#allocation2 + $0x1c] sm:$0xf] %vm188, %v3974
  %3993 = vst.msk [vmem:[#allocation2 + $0x28] sm:$0xf] %vm188, %v3976
  %3994 = vst.msk [vmem:[#allocation2 + $0x34] sm:$0xf] %vm188, %v3978
  %3995 = vst.msk [vmem:[#allocation2 + $0x40] sm:$0xf] %vm188, %v3980
  %3996 = vst.msk [vmem:[#allocation2 + $0x4c] sm:$0xf] %vm188, %v3982
  %v3997 = vld [vmem:[%s3622 + $0x4] sm:$0xf]
  %v3998 = vld [vmem:[%s3622 + $0x8] sm:$0xf]
  %v3999 = vld [vmem:[%s3622 + $0xc] sm:$0xf]
  %v4000 = vld [vmem:[%s3622 + $0x10] sm:$0xf]
  %v4001 = vld [vmem:[%s3622 + $0x14] sm:$0xf]
  %v4002 = vld [vmem:[%s3622 + $0x18] sm:$0xf]
  %v4003 = vld [vmem:[%s3622 + $0x1c] sm:$0xf]
  %4011 = vrot.lane.b32.xlu0 %v3997, 64
  %v4012 = vpop.permute.xlu0 %4011
  %4013 = vrot.lane.b32.xlu0 %v3998, 64
  %v4014 = vpop.permute.xlu0 %4013
  %4015 = vrot.lane.b32.xlu0 %v3999, 64
  %v4016 = vpop.permute.xlu0 %4015
  %4017 = vrot.lane.b32.xlu0 %v4000, 64
  %v4018 = vpop.permute.xlu0 %4017
  %4019 = vrot.lane.b32.xlu0 %v4001, 64
  %v4020 = vpop.permute.xlu0 %4019
  %4021 = vrot.lane.b32.xlu0 %v4002, 64
  %v4022 = vpop.permute.xlu0 %4021
  %4023 = vrot.lane.b32.xlu0 %v4003, 64
  %v4024 = vpop.permute.xlu0 %4023
  %4032 = vst.msk [vmem:[#allocation2 + $0x4] sm:$0xf] %vm231, %v4012
  %4033 = vst.msk [vmem:[#allocation2 + $0x10] sm:$0xf] %vm231, %v4014
  %4034 = vst.msk [vmem:[#allocation2 + $0x1c] sm:$0xf] %vm231, %v4016
  %4035 = vst.msk [vmem:[#allocation2 + $0x28] sm:$0xf] %vm231, %v4018
  %4036 = vst.msk [vmem:[#allocation2 + $0x34] sm:$0xf] %vm231, %v4020
  %4037 = vst.msk [vmem:[#allocation2 + $0x40] sm:$0xf] %vm231, %v4022
  %4038 = vst.msk [vmem:[#allocation2 + $0x4c] sm:$0xf] %vm231, %v4024
  %v4039 = vld [vmem:[%s3622 + $0x4] sm:$0xf]
  %v4040 = vld [vmem:[%s3622 + $0x8] sm:$0xf]
  %v4041 = vld [vmem:[%s3622 + $0xc] sm:$0xf]
  %v4042 = vld [vmem:[%s3622 + $0x10] sm:$0xf]
  %v4043 = vld [vmem:[%s3622 + $0x14] sm:$0xf]
  %v4044 = vld [vmem:[%s3622 + $0x18] sm:$0xf]
  %v4045 = vld [vmem:[%s3622 + $0x1c] sm:$0xf]
  %v4046 = vld [vmem:[%s3622 + $0x20] sm:$0x1]
  %v4048 = vshrl.u32 %v4039, 16
  %v4050 = vrot.slane %v4048, 4
  %v4051 = vshll.u32 %v4039, 16
  %v4053 = vrot.slane %v4051, 5
  %v4054 = vor.u32 %v4050, %v4053
  %v4055 = vrot.slane %v4054, 4
  %v4057 = vshll.u32 %v4040, 16
  %v4059 = vrot.slane %v4057, 5
  %v4060 = vsel %vm92, %v4055, %v4059
  %v4061 = vshrl.u32 %v4040, 16
  %v4063 = vrot.slane %v4061, 4
  %v4064 = vor.u32 %v4063, %v4059
  %v4065 = vrot.slane %v4064, 4
  %v4067 = vshll.u32 %v4041, 16
  %v4069 = vrot.slane %v4067, 5
  %v4070 = vsel %vm92, %v4065, %v4069
  %v4071 = vshrl.u32 %v4041, 16
  %v4073 = vrot.slane %v4071, 4
  %v4074 = vor.u32 %v4073, %v4069
  %v4075 = vrot.slane %v4074, 4
  %v4077 = vshll.u32 %v4042, 16
  %v4079 = vrot.slane %v4077, 5
  %v4080 = vsel %vm92, %v4075, %v4079
  %v4081 = vshrl.u32 %v4042, 16
  %v4083 = vrot.slane %v4081, 4
  %v4084 = vor.u32 %v4083, %v4079
  %v4085 = vrot.slane %v4084, 4
  %v4087 = vshll.u32 %v4043, 16
  %v4089 = vrot.slane %v4087, 5
  %v4090 = vsel %vm92, %v4085, %v4089
  %v4091 = vshrl.u32 %v4043, 16
  %v4093 = vrot.slane %v4091, 4
  %v4094 = vor.u32 %v4093, %v4089
  %v4095 = vrot.slane %v4094, 4
  %v4097 = vshll.u32 %v4044, 16
  %v4099 = vrot.slane %v4097, 5
  %v4100 = vsel %vm92, %v4095, %v4099
  %v4101 = vshrl.u32 %v4044, 16
  %v4103 = vrot.slane %v4101, 4
  %v4104 = vor.u32 %v4103, %v4099
  %v4105 = vrot.slane %v4104, 4
  %v4107 = vshll.u32 %v4045, 16
  %v4109 = vrot.slane %v4107, 5
  %v4110 = vsel %vm92, %v4105, %v4109
  %v4111 = vshrl.u32 %v4045, 16
  %v4113 = vrot.slane %v4111, 4
  %v4114 = vor.u32 %v4113, %v4109
  %v4115 = vrot.slane %v4114, 4
  %v4117 = vshll.u32 %v4046, 16
  %v4119 = vrot.slane %v4117, 5
  %v4120 = vsel %vm92, %v4115, %v4119
  %4128 = vst.msk [vmem:[#allocation2 + $0x8] sm:$0xf] %vm59, %v4060
  %4129 = vst.msk [vmem:[#allocation2 + $0x14] sm:$0xf] %vm59, %v4070
  %4130 = vst.msk [vmem:[#allocation2 + $0x20] sm:$0xf] %vm59, %v4080
  %4131 = vst.msk [vmem:[#allocation2 + $0x2c] sm:$0xf] %vm59, %v4090
  %4132 = vst.msk [vmem:[#allocation2 + $0x38] sm:$0xf] %vm59, %v4100
  %4133 = vst.msk [vmem:[#allocation2 + $0x44] sm:$0xf] %vm59, %v4110
  %4134 = vst.msk [vmem:[#allocation2 + $0x50] sm:$0xf] %vm59, %v4120
  %v4135 = vld [vmem:[#allocation2] sm:$0xff]
  %v4136 = vld [vmem:[#allocation2 + $0x8] sm:$0xf]
  %v4137 = vld [vmem:[#allocation2 + $0xc] sm:$0xff]
  %v4138 = vld [vmem:[#allocation2 + $0x14] sm:$0xf]
  %v4139 = vld [vmem:[#allocation2 + $0x18] sm:$0xff]
  %v4140 = vld [vmem:[#allocation2 + $0x20] sm:$0xf]
  %v4141 = vld [vmem:[#allocation2 + $0x24] sm:$0xff]
  %v4142 = vld [vmem:[#allocation2 + $0x2c] sm:$0xf]
  %v4143 = vld [vmem:[#allocation2 + $0x30] sm:$0xff]
  %v4144 = vld [vmem:[#allocation2 + $0x38] sm:$0xf]
  %v4145 = vld [vmem:[#allocation2 + $0x3c] sm:$0xff]
  %v4146 = vld [vmem:[#allocation2 + $0x44] sm:$0xf]
  %v4147 = vld [vmem:[#allocation2 + $0x48] sm:$0xff]
  %v4148 = vld [vmem:[#allocation2 + $0x50] sm:$0xf]
  %v4163 = vunpack.c.l.b16 %v4135
  %v4164 = vunpack.c.h.b16 %v4135
  %v4165 = vunpack.c.l.b16 %v4136
  %v4166 = vunpack.c.l.b16 %v4137
  %v4167 = vunpack.c.h.b16 %v4137
  %v4168 = vunpack.c.l.b16 %v4138
  %v4169 = vunpack.c.l.b16 %v4139
  %v4170 = vunpack.c.h.b16 %v4139
  %v4171 = vunpack.c.l.b16 %v4140
  %v4172 = vunpack.c.l.b16 %v4141
  %v4173 = vunpack.c.h.b16 %v4141
  %v4174 = vunpack.c.l.b16 %v4142
  %v4175 = vunpack.c.l.b16 %v4143
  %v4176 = vunpack.c.h.b16 %v4143
  %v4177 = vunpack.c.l.b16 %v4144
  %v4178 = vunpack.c.l.b16 %v4145
  %v4179 = vunpack.c.h.b16 %v4145
  %v4180 = vunpack.c.l.b16 %v4146
  %v4181 = vunpack.c.l.b16 %v4147
  %v4182 = vunpack.c.h.b16 %v4147
  %v4183 = vunpack.c.l.b16 %v4148
  %v4184 = vpack.c.b16 %v4166, %v4163
  %v4185 = vpack.c.b16 %v4167, %v4164
  %v4186 = vpack.c.b16 %v4168, %v4165
  %v4187 = vpack.c.b16 %v4172, %v4169
  %v4188 = vpack.c.b16 %v4173, %v4170
  %v4189 = vpack.c.b16 %v4174, %v4171
  %v4190 = vpack.c.b16 %v4178, %v4175
  %v4191 = vpack.c.b16 %v4179, %v4176
  %v4192 = vpack.c.b16 %v4180, %v4177
  %v4193 = vpack.c.b16 %v4181, %v4181
  %v4194 = vpack.c.b16 %v4182, %v4182
  %v4195 = vpack.c.b16 %v4183, %v4183
  %v4205 = vsel %vm748, %v4186, 0
  %v4208 = vsel %vm748, %v4189, 0
  %v4211 = vsel %vm748, %v4192, 0
  %v4214 = vsel %vm748, %v4195, 0
  %4216 = vmatprep.subr.bf16.mxu0 0
  %4217 = vmatpush1.bf16.msra.mxu0 %v712
  %4218 = vmatprep.subr.bf16.mxu0 0
  %4219 = vmatpush1.bf16.msra.mxu0 %v713
  %4220 = vmatprep.subr.bf16.mxu0 0
  %4221 = vmatpush1.bf16.msra.mxu0 %v714
  %4222 = vmatprep.subr.bf16.mxu0 0
  %4223 = vmatpush1.bf16.msra.mxu0 %v715
  %4224 = vmatprep.subr.bf16.mxu0 0
  %4225 = vmatpush1.bf16.msra.mxu0 %v716
  %4226 = vmatprep.subr.bf16.mxu0 0
  %4227 = vmatpush1.bf16.msra.mxu0 %v717
  %4228 = vmatprep.subr.bf16.mxu0 0
  %4229 = vmatpush1.bf16.msra.mxu0 %v718
  %4230 = vmatprep.subr.bf16.mxu0 0
  %4231 = vmatpush1.bf16.msra.mxu0 %v719
  %4232 = vmatprep.subr.bf16.mxu0 0
  %4233 = vmatpush1.bf16.msra.mxu0 %v720
  %4234 = vmatprep.subr.bf16.mxu0 0
  %4235 = vmatpush1.bf16.msra.mxu0 %v721
  %4236 = vmatprep.subr.bf16.mxu0 0
  %4237 = vmatpush1.bf16.msra.mxu0 %v722
  %4238 = vmatprep.subr.bf16.mxu0 0
  %4239 = vmatpush1.bf16.msra.mxu0 %v723
  %4240 = vmatprep.subr.bf16.mxu0 0
  %4241 = vmatpush1.bf16.msra.mxu0 %v724
  %4242 = vmatprep.subr.bf16.mxu0 0
  %4243 = vmatpush1.bf16.msra.mxu0 %v725
  %4244 = vmatprep.subr.bf16.mxu0 0
  %4245 = vmatpush1.bf16.msra.mxu0 %v726
  %4246 = vmatprep.subr.bf16.mxu0 0
  %4247 = vmatpush1.bf16.msra.mxu0 %v727
  %4248 = vmatprep.mubr.bf16.mxu0 %v4185
  %4249 = vmatmul.mubr.bf16.gmra.mrb[0].mxu0 %v4184
  %v4250 = vpop.f32.mrb[0].mxu0
  %v4251 = vadd.f32 0.0, %v4250
  %v4252 = vpop.f32.mrb[0].mxu0
  %v4253 = vpop.f32.mrb[0].mxu0
  %v4254 = vadd.f32 0.0, %v4253
  %v4255 = vpop.f32.mrb[0].mxu0
  %4256 = vmatprep.mubr.bf16.mxu0 %v4188
  %4257 = vmatmul.mubr.bf16.gmra.mrb[0].mxu0 %v4187
  %v4258 = vpop.f32.mrb[0].mxu0
  %v4259 = vadd.f32 0.0, %v4258
  %v4260 = vpop.f32.mrb[0].mxu0
  %v4261 = vpop.f32.mrb[0].mxu0
  %v4262 = vadd.f32 0.0, %v4261
  %v4263 = vpop.f32.mrb[0].mxu0
  %4264 = vmatprep.mubr.bf16.mxu0 %v4191
  %4265 = vmatmul.mubr.bf16.gmra.mrb[0].mxu0 %v4190
  %v4266 = vpop.f32.mrb[0].mxu0
  %v4267 = vadd.f32 0.0, %v4266
  %v4268 = vpop.f32.mrb[0].mxu0
  %v4269 = vpop.f32.mrb[0].mxu0
  %v4270 = vadd.f32 0.0, %v4269
  %v4271 = vpop.f32.mrb[0].mxu0
  %4272 = vmatprep.mubr.bf16.mxu0 %v4194
  %4273 = vmatmul.mubr.bf16.gmra.mrb[0].mxu0 %v4193
  %v4274 = vpop.f32.mrb[0].mxu0
  %v4275 = vadd.f32 0.0, %v4274
  %v4276 = vpop.f32.mrb[0].mxu0
  %v4277 = vpop.f32.mrb[0].mxu0
  %v4278 = vpop.f32.mrb[0].mxu0
  %4279 = vdwg.mxu0
  %4280 = vmatprep.subr.bf16.mxu0 0
  %4281 = vmatpush1.bf16.msra.mxu0 %v728
  %4282 = vmatprep.subr.bf16.mxu0 0
  %4283 = vmatpush1.bf16.msra.mxu0 %v729
  %4284 = vmatprep.subr.bf16.mxu0 0
  %4285 = vmatpush1.bf16.msra.mxu0 0
  %4286 = vmatprep.subr.bf16.mxu0 0
  %4287 = vmatpush1.bf16.msra.mxu0 0
  %4288 = vmatprep.subr.bf16.mxu0 0
  %4289 = vmatpush1.bf16.msra.mxu0 0
  %4290 = vmatprep.subr.bf16.mxu0 0
  %4291 = vmatpush1.bf16.msra.mxu0 0
  %4292 = vmatprep.subr.bf16.mxu0 0
  %4293 = vmatpush1.bf16.msra.mxu0 0
  %4294 = vmatprep.subr.bf16.mxu0 0
  %4295 = vmatpush1.bf16.msra.mxu0 0
  %4296 = vmatprep.subr.bf16.mxu0 0
  %4297 = vmatpush1.bf16.msra.mxu0 0
  %4298 = vmatprep.subr.bf16.mxu0 0
  %4299 = vmatpush1.bf16.msra.mxu0 0
  %4300 = vmatprep.subr.bf16.mxu0 0
  %4301 = vmatpush1.bf16.msra.mxu0 0
  %4302 = vmatprep.subr.bf16.mxu0 0
  %4303 = vmatpush1.bf16.msra.mxu0 0
  %4304 = vmatprep.subr.bf16.mxu0 0
  %4305 = vmatpush1.bf16.msra.mxu0 0
  %4306 = vmatprep.subr.bf16.mxu0 0
  %4307 = vmatpush1.bf16.msra.mxu0 0
  %4308 = vmatprep.subr.bf16.mxu0 0
  %4309 = vmatpush1.bf16.msra.mxu0 0
  %4310 = vmatprep.subr.bf16.mxu0 0
  %4311 = vmatpush1.bf16.msra.mxu0 0
  %4312 = vmatprep.mubr.bf16.mxu0 0
  %4313 = vmatmul.mubr.bf16.gmra.mrb[0].mxu0 %v4205
  %v4314 = vpop.f32.mrb[0].mxu0
  %v4315 = vadd.f32 %v4251, %v4314
  %v4316 = vpop.f32.mrb[0].mxu0
  %v4317 = vpop.f32.mrb[0].mxu0
  %v4318 = vadd.f32 %v4254, %v4317
  %v4319 = vpop.f32.mrb[0].mxu0
  %4320 = vmatprep.mubr.bf16.mxu0 0
  %4321 = vmatmul.mubr.bf16.gmra.mrb[0].mxu0 %v4208
  %v4322 = vpop.f32.mrb[0].mxu0
  %v4323 = vadd.f32 %v4259, %v4322
  %v4324 = vpop.f32.mrb[0].mxu0
  %v4325 = vpop.f32.mrb[0].mxu0
  %v4326 = vadd.f32 %v4262, %v4325
  %v4327 = vpop.f32.mrb[0].mxu0
  %4328 = vmatprep.mubr.bf16.mxu0 0
  %4329 = vmatmul.mubr.bf16.gmra.mrb[0].mxu0 %v4211
  %v4330 = vpop.f32.mrb[0].mxu0
  %v4331 = vadd.f32 %v4267, %v4330
  %v4332 = vpop.f32.mrb[0].mxu0
  %v4333 = vpop.f32.mrb[0].mxu0
  %v4334 = vadd.f32 %v4270, %v4333
  %v4335 = vpop.f32.mrb[0].mxu0
  %4336 = vmatprep.mubr.bf16.mxu0 0
  %4337 = vmatmul.mubr.bf16.gmra.mrb[0].mxu0 %v4214
  %v4338 = vpop.f32.mrb[0].mxu0
  %v4339 = vadd.f32 %v4275, %v4338
  %v4340 = vpop.f32.mrb[0].mxu0
  %v4341 = vpop.f32.mrb[0].mxu0
  %v4342 = vpop.f32.mrb[0].mxu0
  %4343 = vdwg.mxu0
  %v4344 = vld [vmem:[%s3622] sm:$0xf]
  %v4345 = vld [vmem:[%s3622 + $0x4] sm:$0xf]
  %v4346 = vld [vmem:[%s3622 + $0x8] sm:$0xf]
  %v4347 = vld [vmem:[%s3622 + $0xc] sm:$0xf]
  %v4348 = vld [vmem:[%s3622 + $0x10] sm:$0xf]
  %v4349 = vld [vmem:[%s3622 + $0x14] sm:$0xf]
  %v4350 = vld [vmem:[%s3622 + $0x18] sm:$0xf]
  %4358 = vrot.lane.b32.xlu0 %v4344, 96
  %v4359 = vpop.permute.xlu0 %4358
  %4360 = vrot.lane.b32.xlu0 %v4345, 96
  %v4361 = vpop.permute.xlu0 %4360
  %4362 = vrot.lane.b32.xlu0 %v4346, 96
  %v4363 = vpop.permute.xlu0 %4362
  %4364 = vrot.lane.b32.xlu0 %v4347, 96
  %v4365 = vpop.permute.xlu0 %4364
  %4366 = vrot.lane.b32.xlu0 %v4348, 96
  %v4367 = vpop.permute.xlu0 %4366
  %4368 = vrot.lane.b32.xlu0 %v4349, 96
  %v4369 = vpop.permute.xlu0 %4368
  %4370 = vrot.lane.b32.xlu0 %v4350, 96
  %v4371 = vpop.permute.xlu0 %4370
  %4379 = vst.msk [vmem:[#allocation2] sm:$0xf] %vm59, %v4359
  %4380 = vst.msk [vmem:[#allocation2 + $0xc] sm:$0xf] %vm59, %v4361
  %4381 = vst.msk [vmem:[#allocation2 + $0x18] sm:$0xf] %vm59, %v4363
  %4382 = vst.msk [vmem:[#allocation2 + $0x24] sm:$0xf] %vm59, %v4365
  %4383 = vst.msk [vmem:[#allocation2 + $0x30] sm:$0xf] %vm59, %v4367
  %4384 = vst.msk [vmem:[#allocation2 + $0x3c] sm:$0xf] %vm59, %v4369
  %4385 = vst.msk [vmem:[#allocation2 + $0x48] sm:$0xf] %vm59, %v4371
  %v4386 = vld [vmem:[%s3622] sm:$0xf]
  %v4387 = vld [vmem:[%s3622 + $0x4] sm:$0xf]
  %v4388 = vld [vmem:[%s3622 + $0x8] sm:$0xf]
  %v4389 = vld [vmem:[%s3622 + $0xc] sm:$0xf]
  %v4390 = vld [vmem:[%s3622 + $0x10] sm:$0xf]
  %v4391 = vld [vmem:[%s3622 + $0x14] sm:$0xf]
  %v4392 = vld [vmem:[%s3622 + $0x18] sm:$0xf]
  %v4393 = vld [vmem:[%s3622 + $0x1c] sm:$0x1]
  %v4395 = vshrl.u32 %v4386, 16
  %v4397 = vrot.slane %v4395, 4
  %v4398 = vshll.u32 %v4386, 16
  %v4400 = vrot.slane %v4398, 5
  %v4401 = vor.u32 %v4397, %v4400
  %v4402 = vrot.slane %v4401, 4
  %v4404 = vshll.u32 %v4387, 16
  %v4406 = vrot.slane %v4404, 5
  %v4407 = vsel %vm92, %v4402, %v4406
  %v4408 = vshrl.u32 %v4387, 16
  %v4410 = vrot.slane %v4408, 4
  %v4411 = vor.u32 %v4410, %v4406
  %v4412 = vrot.slane %v4411, 4
  %v4414 = vshll.u32 %v4388, 16
  %v4416 = vrot.slane %v4414, 5
  %v4417 = vsel %vm92, %v4412, %v4416
  %v4418 = vshrl.u32 %v4388, 16
  %v4420 = vrot.slane %v4418, 4
  %v4421 = vor.u32 %v4420, %v4416
  %v4422 = vrot.slane %v4421, 4
  %v4424 = vshll.u32 %v4389, 16
  %v4426 = vrot.slane %v4424, 5
  %v4427 = vsel %vm92, %v4422, %v4426
  %v4428 = vshrl.u32 %v4389, 16
  %v4430 = vrot.slane %v4428, 4
  %v4431 = vor.u32 %v4430, %v4426
  %v4432 = vrot.slane %v4431, 4
  %v4434 = vshll.u32 %v4390, 16
  %v4436 = vrot.slane %v4434, 5
  %v4437 = vsel %vm92, %v4432, %v4436
  %v4438 = vshrl.u32 %v4390, 16
  %v4440 = vrot.slane %v4438, 4
  %v4441 = vor.u32 %v4440, %v4436
  %v4442 = vrot.slane %v4441, 4
  %v4444 = vshll.u32 %v4391, 16
  %v4446 = vrot.slane %v4444, 5
  %v4447 = vsel %vm92, %v4442, %v4446
  %v4448 = vshrl.u32 %v4391, 16
  %v4450 = vrot.slane %v4448, 4
  %v4451 = vor.u32 %v4450, %v4446
  %v4452 = vrot.slane %v4451, 4
  %v4454 = vshll.u32 %v4392, 16
  %v4456 = vrot.slane %v4454, 5
  %v4457 = vsel %vm92, %v4452, %v4456
  %v4458 = vshrl.u32 %v4392, 16
  %v4460 = vrot.slane %v4458, 4
  %v4461 = vor.u32 %v4460, %v4456
  %v4462 = vrot.slane %v4461, 4
  %v4464 = vshll.u32 %v4393, 16
  %v4466 = vrot.slane %v4464, 5
  %v4467 = vsel %vm92, %v4462, %v4466
  %4468 = vrot.lane.b32.xlu0 %v4407, 32
  %v4469 = vpop.permute.xlu0 %4468
  %4470 = vrot.lane.b32.xlu0 %v4417, 32
  %v4471 = vpop.permute.xlu0 %4470
  %4472 = vrot.lane.b32.xlu0 %v4427, 32
  %v4473 = vpop.permute.xlu0 %4472
  %4474 = vrot.lane.b32.xlu0 %v4437, 32
  %v4475 = vpop.permute.xlu0 %4474
  %4476 = vrot.lane.b32.xlu0 %v4447, 32
  %v4477 = vpop.permute.xlu0 %4476
  %4478 = vrot.lane.b32.xlu0 %v4457, 32
  %v4479 = vpop.permute.xlu0 %4478
  %4480 = vrot.lane.b32.xlu0 %v4467, 32
  %v4481 = vpop.permute.xlu0 %4480
  %4489 = vst.msk [vmem:[#allocation2] sm:$0xf] %vm74, %v4469
  %4490 = vst.msk [vmem:[#allocation2 + $0xc] sm:$0xf] %vm74, %v4471
  %4491 = vst.msk [vmem:[#allocation2 + $0x18] sm:$0xf] %vm74, %v4473
  %4492 = vst.msk [vmem:[#allocation2 + $0x24] sm:$0xf] %vm74, %v4475
  %4493 = vst.msk [vmem:[#allocation2 + $0x30] sm:$0xf] %vm74, %v4477
  %4494 = vst.msk [vmem:[#allocation2 + $0x3c] sm:$0xf] %vm74, %v4479
  %4495 = vst.msk [vmem:[#allocation2 + $0x48] sm:$0xf] %vm74, %v4481
  %v4496 = vld [vmem:[%s3622] sm:$0xf]
  %v4497 = vld [vmem:[%s3622 + $0x4] sm:$0xf]
  %v4498 = vld [vmem:[%s3622 + $0x8] sm:$0xf]
  %v4499 = vld [vmem:[%s3622 + $0xc] sm:$0xf]
  %v4500 = vld [vmem:[%s3622 + $0x10] sm:$0xf]
  %v4501 = vld [vmem:[%s3622 + $0x14] sm:$0xf]
  %v4502 = vld [vmem:[%s3622 + $0x18] sm:$0xf]
  %v4503 = vld [vmem:[%s3622 + $0x1c] sm:$0x1]
  %v4505 = vshrl.u32 %v4496, 16
  %v4507 = vrot.slane %v4505, 4
  %v4508 = vshll.u32 %v4496, 16
  %v4510 = vrot.slane %v4508, 5
  %v4511 = vor.u32 %v4507, %v4510
  %v4512 = vrot.slane %v4511, 4
  %v4514 = vshll.u32 %v4497, 16
  %v4516 = vrot.slane %v4514, 5
  %v4517 = vsel %vm92, %v4512, %v4516
  %v4518 = vshrl.u32 %v4497, 16
  %v4520 = vrot.slane %v4518, 4
  %v4521 = vor.u32 %v4520, %v4516
  %v4522 = vrot.slane %v4521, 4
  %v4524 = vshll.u32 %v4498, 16
  %v4526 = vrot.slane %v4524, 5
  %v4527 = vsel %vm92, %v4522, %v4526
  %v4528 = vshrl.u32 %v4498, 16
  %v4530 = vrot.slane %v4528, 4
  %v4531 = vor.u32 %v4530, %v4526
  %v4532 = vrot.slane %v4531, 4
  %v4534 = vshll.u32 %v4499, 16
  %v4536 = vrot.slane %v4534, 5
  %v4537 = vsel %vm92, %v4532, %v4536
  %v4538 = vshrl.u32 %v4499, 16
  %v4540 = vrot.slane %v4538, 4
  %v4541 = vor.u32 %v4540, %v4536
  %v4542 = vrot.slane %v4541, 4
  %v4544 = vshll.u32 %v4500, 16
  %v4546 = vrot.slane %v4544, 5
  %v4547 = vsel %vm92, %v4542, %v4546
  %v4548 = vshrl.u32 %v4500, 16
  %v4550 = vrot.slane %v4548, 4
  %v4551 = vor.u32 %v4550, %v4546
  %v4552 = vrot.slane %v4551, 4
  %v4554 = vshll.u32 %v4501, 16
  %v4556 = vrot.slane %v4554, 5
  %v4557 = vsel %vm92, %v4552, %v4556
  %v4558 = vshrl.u32 %v4501, 16
  %v4560 = vrot.slane %v4558, 4
  %v4561 = vor.u32 %v4560, %v4556
  %v4562 = vrot.slane %v4561, 4
  %v4564 = vshll.u32 %v4502, 16
  %v4566 = vrot.slane %v4564, 5
  %v4567 = vsel %vm92, %v4562, %v4566
  %v4568 = vshrl.u32 %v4502, 16
  %v4570 = vrot.slane %v4568, 4
  %v4571 = vor.u32 %v4570, %v4566
  %v4572 = vrot.slane %v4571, 4
  %v4574 = vshll.u32 %v4503, 16
  %v4576 = vrot.slane %v4574, 5
  %v4577 = vsel %vm92, %v4572, %v4576
  %4578 = vrot.lane.b32.xlu0 %v4517, 32
  %v4579 = vpop.permute.xlu0 %4578
  %4580 = vrot.lane.b32.xlu0 %v4527, 32
  %v4581 = vpop.permute.xlu0 %4580
  %4582 = vrot.lane.b32.xlu0 %v4537, 32
  %v4583 = vpop.permute.xlu0 %4582
  %4584 = vrot.lane.b32.xlu0 %v4547, 32
  %v4585 = vpop.permute.xlu0 %4584
  %4586 = vrot.lane.b32.xlu0 %v4557, 32
  %v4587 = vpop.permute.xlu0 %4586
  %4588 = vrot.lane.b32.xlu0 %v4567, 32
  %v4589 = vpop.permute.xlu0 %4588
  %4590 = vrot.lane.b32.xlu0 %v4577, 32
  %v4591 = vpop.permute.xlu0 %4590
  %4599 = vst.msk [vmem:[#allocation2] sm:$0xf] %vm188, %v4579
  %4600 = vst.msk [vmem:[#allocation2 + $0xc] sm:$0xf] %vm188, %v4581
  %4601 = vst.msk [vmem:[#allocation2 + $0x18] sm:$0xf] %vm188, %v4583
  %4602 = vst.msk [vmem:[#allocation2 + $0x24] sm:$0xf] %vm188, %v4585
  %4603 = vst.msk [vmem:[#allocation2 + $0x30] sm:$0xf] %vm188, %v4587
  %4604 = vst.msk [vmem:[#allocation2 + $0x3c] sm:$0xf] %vm188, %v4589
  %4605 = vst.msk [vmem:[#allocation2 + $0x48] sm:$0xf] %vm188, %v4591
  %v4606 = vld [vmem:[%s3622] sm:$0xf]
  %v4607 = vld [vmem:[%s3622 + $0x4] sm:$0xf]
  %v4608 = vld [vmem:[%s3622 + $0x8] sm:$0xf]
  %v4609 = vld [vmem:[%s3622 + $0xc] sm:$0xf]
  %v4610 = vld [vmem:[%s3622 + $0x10] sm:$0xf]
  %v4611 = vld [vmem:[%s3622 + $0x14] sm:$0xf]
  %v4612 = vld [vmem:[%s3622 + $0x18] sm:$0xf]
  %4613 = vst.msk [vmem:[#allocation2] sm:$0xf] %vm231, %v4606
  %4614 = vst.msk [vmem:[#allocation2 + $0xc] sm:$0xf] %vm231, %v4607
  %4615 = vst.msk [vmem:[#allocation2 + $0x18] sm:$0xf] %vm231, %v4608
  %4616 = vst.msk [vmem:[#allocation2 + $0x24] sm:$0xf] %vm231, %v4609
  %4617 = vst.msk [vmem:[#allocation2 + $0x30] sm:$0xf] %vm231, %v4610
  %4618 = vst.msk [vmem:[#allocation2 + $0x3c] sm:$0xf] %vm231, %v4611
  %4619 = vst.msk [vmem:[#allocation2 + $0x48] sm:$0xf] %vm231, %v4612
  %v4620 = vld [vmem:[%s3622] sm:$0xf]
  %v4621 = vld [vmem:[%s3622 + $0x4] sm:$0xf]
  %v4622 = vld [vmem:[%s3622 + $0x8] sm:$0xf]
  %v4623 = vld [vmem:[%s3622 + $0xc] sm:$0xf]
  %v4624 = vld [vmem:[%s3622 + $0x10] sm:$0xf]
  %v4625 = vld [vmem:[%s3622 + $0x14] sm:$0xf]
  %v4626 = vld [vmem:[%s3622 + $0x18] sm:$0xf]
  %v4627 = vld [vmem:[%s3622 + $0x1c] sm:$0x1]
  %v4629 = vshrl.u32 %v4620, 16
  %v4631 = vrot.slane %v4629, 4
  %v4632 = vshll.u32 %v4620, 16
  %v4634 = vrot.slane %v4632, 5
  %v4635 = vor.u32 %v4631, %v4634
  %v4636 = vrot.slane %v4635, 4
  %v4638 = vshll.u32 %v4621, 16
  %v4640 = vrot.slane %v4638, 5
  %v4641 = vsel %vm92, %v4636, %v4640
  %v4642 = vshrl.u32 %v4621, 16
  %v4644 = vrot.slane %v4642, 4
  %v4645 = vor.u32 %v4644, %v4640
  %v4646 = vrot.slane %v4645, 4
  %v4648 = vshll.u32 %v4622, 16
  %v4650 = vrot.slane %v4648, 5
  %v4651 = vsel %vm92, %v4646, %v4650
  %v4652 = vshrl.u32 %v4622, 16
  %v4654 = vrot.slane %v4652, 4
  %v4655 = vor.u32 %v4654, %v4650
  %v4656 = vrot.slane %v4655, 4
  %v4658 = vshll.u32 %v4623, 16
  %v4660 = vrot.slane %v4658, 5
  %v4661 = vsel %vm92, %v4656, %v4660
  %v4662 = vshrl.u32 %v4623, 16
  %v4664 = vrot.slane %v4662, 4
  %v4665 = vor.u32 %v4664, %v4660
  %v4666 = vrot.slane %v4665, 4
  %v4668 = vshll.u32 %v4624, 16
  %v4670 = vrot.slane %v4668, 5
  %v4671 = vsel %vm92, %v4666, %v4670
  %v4672 = vshrl.u32 %v4624, 16
  %v4674 = vrot.slane %v4672, 4
  %v4675 = vor.u32 %v4674, %v4670
  %v4676 = vrot.slane %v4675, 4
  %v4678 = vshll.u32 %v4625, 16
  %v4680 = vrot.slane %v4678, 5
  %v4681 = vsel %vm92, %v4676, %v4680
  %v4682 = vshrl.u32 %v4625, 16
  %v4684 = vrot.slane %v4682, 4
  %v4685 = vor.u32 %v4684, %v4680
  %v4686 = vrot.slane %v4685, 4
  %v4688 = vshll.u32 %v4626, 16
  %v4690 = vrot.slane %v4688, 5
  %v4691 = vsel %vm92, %v4686, %v4690
  %v4692 = vshrl.u32 %v4626, 16
  %v4694 = vrot.slane %v4692, 4
  %v4695 = vor.u32 %v4694, %v4690
  %v4696 = vrot.slane %v4695, 4
  %v4698 = vshll.u32 %v4627, 16
  %v4700 = vrot.slane %v4698, 5
  %v4701 = vsel %vm92, %v4696, %v4700
  %4702 = vrot.lane.b32.xlu0 %v4641, 64
  %v4703 = vpop.permute.xlu0 %4702
  %4704 = vrot.lane.b32.xlu0 %v4651, 64
  %v4705 = vpop.permute.xlu0 %4704
  %4706 = vrot.lane.b32.xlu0 %v4661, 64
  %v4707 = vpop.permute.xlu0 %4706
  %4708 = vrot.lane.b32.xlu0 %v4671, 64
  %v4709 = vpop.permute.xlu0 %4708
  %4710 = vrot.lane.b32.xlu0 %v4681, 64
  %v4711 = vpop.permute.xlu0 %4710
  %4712 = vrot.lane.b32.xlu0 %v4691, 64
  %v4713 = vpop.permute.xlu0 %4712
  %4714 = vrot.lane.b32.xlu0 %v4701, 64
  %v4715 = vpop.permute.xlu0 %4714
  %4723 = vst.msk [vmem:[#allocation2 + $0x4] sm:$0xf] %vm59, %v4703
  %4724 = vst.msk [vmem:[#allocation2 + $0x10] sm:$0xf] %vm59, %v4705
  %4725 = vst.msk [vmem:[#allocation2 + $0x1c] sm:$0xf] %vm59, %v4707
  %4726 = vst.msk [vmem:[#allocation2 + $0x28] sm:$0xf] %vm59, %v4709
  %4727 = vst.msk [vmem:[#allocation2 + $0x34] sm:$0xf] %vm59, %v4711
  %4728 = vst.msk [vmem:[#allocation2 + $0x40] sm:$0xf] %vm59, %v4713
  %4729 = vst.msk [vmem:[#allocation2 + $0x4c] sm:$0xf] %vm59, %v4715
  %v4730 = vld [vmem:[%s3622] sm:$0xf]
  %v4731 = vld [vmem:[%s3622 + $0x4] sm:$0xf]
  %v4732 = vld [vmem:[%s3622 + $0x8] sm:$0xf]
  %v4733 = vld [vmem:[%s3622 + $0xc] sm:$0xf]
  %v4734 = vld [vmem:[%s3622 + $0x10] sm:$0xf]
  %v4735 = vld [vmem:[%s3622 + $0x14] sm:$0xf]
  %v4736 = vld [vmem:[%s3622 + $0x18] sm:$0xf]
  %v4737 = vld [vmem:[%s3622 + $0x1c] sm:$0x1]
  %v4739 = vshrl.u32 %v4730, 16
  %v4741 = vrot.slane %v4739, 4
  %v4742 = vshll.u32 %v4730, 16
  %v4744 = vrot.slane %v4742, 5
  %v4745 = vor.u32 %v4741, %v4744
  %v4746 = vrot.slane %v4745, 4
  %v4748 = vshll.u32 %v4731, 16
  %v4750 = vrot.slane %v4748, 5
  %v4751 = vsel %vm92, %v4746, %v4750
  %v4752 = vshrl.u32 %v4731, 16
  %v4754 = vrot.slane %v4752, 4
  %v4755 = vor.u32 %v4754, %v4750
  %v4756 = vrot.slane %v4755, 4
  %v4758 = vshll.u32 %v4732, 16
  %v4760 = vrot.slane %v4758, 5
  %v4761 = vsel %vm92, %v4756, %v4760
  %v4762 = vshrl.u32 %v4732, 16
  %v4764 = vrot.slane %v4762, 4
  %v4765 = vor.u32 %v4764, %v4760
  %v4766 = vrot.slane %v4765, 4
  %v4768 = vshll.u32 %v4733, 16
  %v4770 = vrot.slane %v4768, 5
  %v4771 = vsel %vm92, %v4766, %v4770
  %v4772 = vshrl.u32 %v4733, 16
  %v4774 = vrot.slane %v4772, 4
  %v4775 = vor.u32 %v4774, %v4770
  %v4776 = vrot.slane %v4775, 4
  %v4778 = vshll.u32 %v4734, 16
  %v4780 = vrot.slane %v4778, 5
  %v4781 = vsel %vm92, %v4776, %v4780
  %v4782 = vshrl.u32 %v4734, 16
  %v4784 = vrot.slane %v4782, 4
  %v4785 = vor.u32 %v4784, %v4780
  %v4786 = vrot.slane %v4785, 4
  %v4788 = vshll.u32 %v4735, 16
  %v4790 = vrot.slane %v4788, 5
  %v4791 = vsel %vm92, %v4786, %v4790
  %v4792 = vshrl.u32 %v4735, 16
  %v4794 = vrot.slane %v4792, 4
  %v4795 = vor.u32 %v4794, %v4790
  %v4796 = vrot.slane %v4795, 4
  %v4798 = vshll.u32 %v4736, 16
  %v4800 = vrot.slane %v4798, 5
  %v4801 = vsel %vm92, %v4796, %v4800
  %v4802 = vshrl.u32 %v4736, 16
  %v4804 = vrot.slane %v4802, 4
  %v4805 = vor.u32 %v4804, %v4800
  %v4806 = vrot.slane %v4805, 4
  %v4808 = vshll.u32 %v4737, 16
  %v4810 = vrot.slane %v4808, 5
  %v4811 = vsel %vm92, %v4806, %v4810
  %4812 = vrot.lane.b32.xlu0 %v4751, 64
  %v4813 = vpop.permute.xlu0 %4812
  %4814 = vrot.lane.b32.xlu0 %v4761, 64
  %v4815 = vpop.permute.xlu0 %4814
  %4816 = vrot.lane.b32.xlu0 %v4771, 64
  %v4817 = vpop.permute.xlu0 %4816
  %4818 = vrot.lane.b32.xlu0 %v4781, 64
  %v4819 = vpop.permute.xlu0 %4818
  %4820 = vrot.lane.b32.xlu0 %v4791, 64
  %v4821 = vpop.permute.xlu0 %4820
  %4822 = vrot.lane.b32.xlu0 %v4801, 64
  %v4823 = vpop.permute.xlu0 %4822
  %4824 = vrot.lane.b32.xlu0 %v4811, 64
  %v4825 = vpop.permute.xlu0 %4824
  %4833 = vst.msk [vmem:[#allocation2 + $0x4] sm:$0xf] %vm74, %v4813
  %4834 = vst.msk [vmem:[#allocation2 + $0x10] sm:$0xf] %vm74, %v4815
  %4835 = vst.msk [vmem:[#allocation2 + $0x1c] sm:$0xf] %vm74, %v4817
  %4836 = vst.msk [vmem:[#allocation2 + $0x28] sm:$0xf] %vm74, %v4819
  %4837 = vst.msk [vmem:[#allocation2 + $0x34] sm:$0xf] %vm74, %v4821
  %4838 = vst.msk [vmem:[#allocation2 + $0x40] sm:$0xf] %vm74, %v4823
  %4839 = vst.msk [vmem:[#allocation2 + $0x4c] sm:$0xf] %vm74, %v4825
  %v4840 = vld [vmem:[%s3622 + $0x4] sm:$0xf]
  %v4841 = vld [vmem:[%s3622 + $0x8] sm:$0xf]
  %v4842 = vld [vmem:[%s3622 + $0xc] sm:$0xf]
  %v4843 = vld [vmem:[%s3622 + $0x10] sm:$0xf]
  %v4844 = vld [vmem:[%s3622 + $0x14] sm:$0xf]
  %v4845 = vld [vmem:[%s3622 + $0x18] sm:$0xf]
  %v4846 = vld [vmem:[%s3622 + $0x1c] sm:$0xf]
  %4854 = vrot.lane.b32.xlu0 %v4840, 32
  %v4855 = vpop.permute.xlu0 %4854
  %4856 = vrot.lane.b32.xlu0 %v4841, 32
  %v4857 = vpop.permute.xlu0 %4856
  %4858 = vrot.lane.b32.xlu0 %v4842, 32
  %v4859 = vpop.permute.xlu0 %4858
  %4860 = vrot.lane.b32.xlu0 %v4843, 32
  %v4861 = vpop.permute.xlu0 %4860
  %4862 = vrot.lane.b32.xlu0 %v4844, 32
  %v4863 = vpop.permute.xlu0 %4862
  %4864 = vrot.lane.b32.xlu0 %v4845, 32
  %v4865 = vpop.permute.xlu0 %4864
  %4866 = vrot.lane.b32.xlu0 %v4846, 32
  %v4867 = vpop.permute.xlu0 %4866
  %4875 = vst.msk [vmem:[#allocation2 + $0x4] sm:$0xf] %vm188, %v4855
  %4876 = vst.msk [vmem:[#allocation2 + $0x10] sm:$0xf] %vm188, %v4857
  %4877 = vst.msk [vmem:[#allocation2 + $0x1c] sm:$0xf] %vm188, %v4859
  %4878 = vst.msk [vmem:[#allocation2 + $0x28] sm:$0xf] %vm188, %v4861
  %4879 = vst.msk [vmem:[#allocation2 + $0x34] sm:$0xf] %vm188, %v4863
  %4880 = vst.msk [vmem:[#allocation2 + $0x40] sm:$0xf] %vm188, %v4865
  %4881 = vst.msk [vmem:[#allocation2 + $0x4c] sm:$0xf] %vm188, %v4867
  %v4882 = vld [vmem:[%s3622 + $0x4] sm:$0xf]
  %v4883 = vld [vmem:[%s3622 + $0x8] sm:$0xf]
  %v4884 = vld [vmem:[%s3622 + $0xc] sm:$0xf]
  %v4885 = vld [vmem:[%s3622 + $0x10] sm:$0xf]
  %v4886 = vld [vmem:[%s3622 + $0x14] sm:$0xf]
  %v4887 = vld [vmem:[%s3622 + $0x18] sm:$0xf]
  %v4888 = vld [vmem:[%s3622 + $0x1c] sm:$0xf]
  %v4889 = vld [vmem:[%s3622 + $0x20] sm:$0x1]
  %v4891 = vshrl.u32 %v4882, 16
  %v4893 = vrot.slane %v4891, 4
  %v4894 = vshll.u32 %v4882, 16
  %v4896 = vrot.slane %v4894, 5
  %v4897 = vor.u32 %v4893, %v4896
  %v4898 = vrot.slane %v4897, 4
  %v4900 = vshll.u32 %v4883, 16
  %v4902 = vrot.slane %v4900, 5
  %v4903 = vsel %vm92, %v4898, %v4902
  %v4904 = vshrl.u32 %v4883, 16
  %v4906 = vrot.slane %v4904, 4
  %v4907 = vor.u32 %v4906, %v4902
  %v4908 = vrot.slane %v4907, 4
  %v4910 = vshll.u32 %v4884, 16
  %v4912 = vrot.slane %v4910, 5
  %v4913 = vsel %vm92, %v4908, %v4912
  %v4914 = vshrl.u32 %v4884, 16
  %v4916 = vrot.slane %v4914, 4
  %v4917 = vor.u32 %v4916, %v4912
  %v4918 = vrot.slane %v4917, 4
  %v4920 = vshll.u32 %v4885, 16
  %v4922 = vrot.slane %v4920, 5
  %v4923 = vsel %vm92, %v4918, %v4922
  %v4924 = vshrl.u32 %v4885, 16
  %v4926 = vrot.slane %v4924, 4
  %v4927 = vor.u32 %v4926, %v4922
  %v4928 = vrot.slane %v4927, 4
  %v4930 = vshll.u32 %v4886, 16
  %v4932 = vrot.slane %v4930, 5
  %v4933 = vsel %vm92, %v4928, %v4932
  %v4934 = vshrl.u32 %v4886, 16
  %v4936 = vrot.slane %v4934, 4
  %v4937 = vor.u32 %v4936, %v4932
  %v4938 = vrot.slane %v4937, 4
  %v4940 = vshll.u32 %v4887, 16
  %v4942 = vrot.slane %v4940, 5
  %v4943 = vsel %vm92, %v4938, %v4942
  %v4944 = vshrl.u32 %v4887, 16
  %v4946 = vrot.slane %v4944, 4
  %v4947 = vor.u32 %v4946, %v4942
  %v4948 = vrot.slane %v4947, 4
  %v4950 = vshll.u32 %v4888, 16
  %v4952 = vrot.slane %v4950, 5
  %v4953 = vsel %vm92, %v4948, %v4952
  %v4954 = vshrl.u32 %v4888, 16
  %v4956 = vrot.slane %v4954, 4
  %v4957 = vor.u32 %v4956, %v4952
  %v4958 = vrot.slane %v4957, 4
  %v4960 = vshll.u32 %v4889, 16
  %v4962 = vrot.slane %v4960, 5
  %v4963 = vsel %vm92, %v4958, %v4962
  %4964 = vrot.lane.b32.xlu0 %v4903, 96
  %v4965 = vpop.permute.xlu0 %4964
  %4966 = vrot.lane.b32.xlu0 %v4913, 96
  %v4967 = vpop.permute.xlu0 %4966
  %4968 = vrot.lane.b32.xlu0 %v4923, 96
  %v4969 = vpop.permute.xlu0 %4968
  %4970 = vrot.lane.b32.xlu0 %v4933, 96
  %v4971 = vpop.permute.xlu0 %4970
  %4972 = vrot.lane.b32.xlu0 %v4943, 96
  %v4973 = vpop.permute.xlu0 %4972
  %4974 = vrot.lane.b32.xlu0 %v4953, 96
  %v4975 = vpop.permute.xlu0 %4974
  %4976 = vrot.lane.b32.xlu0 %v4963, 96
  %v4977 = vpop.permute.xlu0 %4976
  %4985 = vst.msk [vmem:[#allocation2 + $0x4] sm:$0xf] %vm231, %v4965
  %4986 = vst.msk [vmem:[#allocation2 + $0x10] sm:$0xf] %vm231, %v4967
  %4987 = vst.msk [vmem:[#allocation2 + $0x1c] sm:$0xf] %vm231, %v4969
  %4988 = vst.msk [vmem:[#allocation2 + $0x28] sm:$0xf] %vm231, %v4971
  %4989 = vst.msk [vmem:[#allocation2 + $0x34] sm:$0xf] %vm231, %v4973
  %4990 = vst.msk [vmem:[#allocation2 + $0x40] sm:$0xf] %vm231, %v4975
  %4991 = vst.msk [vmem:[#allocation2 + $0x4c] sm:$0xf] %vm231, %v4977
  %v4992 = vld [vmem:[%s3622 + $0x4] sm:$0xf]
  %v4993 = vld [vmem:[%s3622 + $0x8] sm:$0xf]
  %v4994 = vld [vmem:[%s3622 + $0xc] sm:$0xf]
  %v4995 = vld [vmem:[%s3622 + $0x10] sm:$0xf]
  %v4996 = vld [vmem:[%s3622 + $0x14] sm:$0xf]
  %v4997 = vld [vmem:[%s3622 + $0x18] sm:$0xf]
  %v4998 = vld [vmem:[%s3622 + $0x1c] sm:$0xf]
  %v4999 = vld [vmem:[%s3622 + $0x20] sm:$0x1]
  %v5001 = vshrl.u32 %v4992, 16
  %v5003 = vrot.slane %v5001, 4
  %v5004 = vshll.u32 %v4992, 16
  %v5006 = vrot.slane %v5004, 5
  %v5007 = vor.u32 %v5003, %v5006
  %v5008 = vrot.slane %v5007, 4
  %v5010 = vshll.u32 %v4993, 16
  %v5012 = vrot.slane %v5010, 5
  %v5013 = vsel %vm92, %v5008, %v5012
  %v5014 = vshrl.u32 %v4993, 16
  %v5016 = vrot.slane %v5014, 4
  %v5017 = vor.u32 %v5016, %v5012
  %v5018 = vrot.slane %v5017, 4
  %v5020 = vshll.u32 %v4994, 16
  %v5022 = vrot.slane %v5020, 5
  %v5023 = vsel %vm92, %v5018, %v5022
  %v5024 = vshrl.u32 %v4994, 16
  %v5026 = vrot.slane %v5024, 4
  %v5027 = vor.u32 %v5026, %v5022
  %v5028 = vrot.slane %v5027, 4
  %v5030 = vshll.u32 %v4995, 16
  %v5032 = vrot.slane %v5030, 5
  %v5033 = vsel %vm92, %v5028, %v5032
  %v5034 = vshrl.u32 %v4995, 16
  %v5036 = vrot.slane %v5034, 4
  %v5037 = vor.u32 %v5036, %v5032
  %v5038 = vrot.slane %v5037, 4
  %v5040 = vshll.u32 %v4996, 16
  %v5042 = vrot.slane %v5040, 5
  %v5043 = vsel %vm92, %v5038, %v5042
  %v5044 = vshrl.u32 %v4996, 16
  %v5046 = vrot.slane %v5044, 4
  %v5047 = vor.u32 %v5046, %v5042
  %v5048 = vrot.slane %v5047, 4
  %v5050 = vshll.u32 %v4997, 16
  %v5052 = vrot.slane %v5050, 5
  %v5053 = vsel %vm92, %v5048, %v5052
  %v5054 = vshrl.u32 %v4997, 16
  %v5056 = vrot.slane %v5054, 4
  %v5057 = vor.u32 %v5056, %v5052
  %v5058 = vrot.slane %v5057, 4
  %v5060 = vshll.u32 %v4998, 16
  %v5062 = vrot.slane %v5060, 5
  %v5063 = vsel %vm92, %v5058, %v5062
  %v5064 = vshrl.u32 %v4998, 16
  %v5066 = vrot.slane %v5064, 4
  %v5067 = vor.u32 %v5066, %v5062
  %v5068 = vrot.slane %v5067, 4
  %v5070 = vshll.u32 %v4999, 16
  %v5072 = vrot.slane %v5070, 5
  %v5073 = vsel %vm92, %v5068, %v5072
  %5074 = vrot.lane.b32.xlu0 %v5013, 96
  %v5075 = vpop.permute.xlu0 %5074
  %5076 = vrot.lane.b32.xlu0 %v5023, 96
  %v5077 = vpop.permute.xlu0 %5076
  %5078 = vrot.lane.b32.xlu0 %v5033, 96
  %v5079 = vpop.permute.xlu0 %5078
  %5080 = vrot.lane.b32.xlu0 %v5043, 96
  %v5081 = vpop.permute.xlu0 %5080
  %5082 = vrot.lane.b32.xlu0 %v5053, 96
  %v5083 = vpop.permute.xlu0 %5082
  %5084 = vrot.lane.b32.xlu0 %v5063, 96
  %v5085 = vpop.permute.xlu0 %5084
  %5086 = vrot.lane.b32.xlu0 %v5073, 96
  %v5087 = vpop.permute.xlu0 %5086
  %5095 = vst.msk [vmem:[#allocation2 + $0x8] sm:$0xf] %vm59, %v5075
  %5096 = vst.msk [vmem:[#allocation2 + $0x14] sm:$0xf] %vm59, %v5077
  %5097 = vst.msk [vmem:[#allocation2 + $0x20] sm:$0xf] %vm59, %v5079
  %5098 = vst.msk [vmem:[#allocation2 + $0x2c] sm:$0xf] %vm59, %v5081
  %5099 = vst.msk [vmem:[#allocation2 + $0x38] sm:$0xf] %vm59, %v5083
  %5100 = vst.msk [vmem:[#allocation2 + $0x44] sm:$0xf] %vm59, %v5085
  %5101 = vst.msk [vmem:[#allocation2 + $0x50] sm:$0xf] %vm59, %v5087
  %v5102 = vld [vmem:[#allocation2] sm:$0xff]
  %v5103 = vld [vmem:[#allocation2 + $0x8] sm:$0xf]
  %v5104 = vld [vmem:[#allocation2 + $0xc] sm:$0xff]
  %v5105 = vld [vmem:[#allocation2 + $0x14] sm:$0xf]
  %v5106 = vld [vmem:[#allocation2 + $0x18] sm:$0xff]
  %v5107 = vld [vmem:[#allocation2 + $0x20] sm:$0xf]
  %v5108 = vld [vmem:[#allocation2 + $0x24] sm:$0xff]
  %v5109 = vld [vmem:[#allocation2 + $0x2c] sm:$0xf]
  %v5110 = vld [vmem:[#allocation2 + $0x30] sm:$0xff]
  %v5111 = vld [vmem:[#allocation2 + $0x38] sm:$0xf]
  %v5112 = vld [vmem:[#allocation2 + $0x3c] sm:$0xff]
  %v5113 = vld [vmem:[#allocation2 + $0x44] sm:$0xf]
  %v5114 = vld [vmem:[#allocation2 + $0x48] sm:$0xff]
  %v5115 = vld [vmem:[#allocation2 + $0x50] sm:$0xf]
  %v5130 = vunpack.c.l.b16 %v5102
  %v5131 = vunpack.c.h.b16 %v5102
  %v5132 = vunpack.c.l.b16 %v5103
  %v5133 = vunpack.c.l.b16 %v5104
  %v5134 = vunpack.c.h.b16 %v5104
  %v5135 = vunpack.c.l.b16 %v5105
  %v5136 = vunpack.c.l.b16 %v5106
  %v5137 = vunpack.c.h.b16 %v5106
  %v5138 = vunpack.c.l.b16 %v5107
  %v5139 = vunpack.c.l.b16 %v5108
  %v5140 = vunpack.c.h.b16 %v5108
  %v5141 = vunpack.c.l.b16 %v5109
  %v5142 = vunpack.c.l.b16 %v5110
  %v5143 = vunpack.c.h.b16 %v5110
  %v5144 = vunpack.c.l.b16 %v5111
  %v5145 = vunpack.c.l.b16 %v5112
  %v5146 = vunpack.c.h.b16 %v5112
  %v5147 = vunpack.c.l.b16 %v5113
  %v5148 = vunpack.c.l.b16 %v5114
  %v5149 = vunpack.c.h.b16 %v5114
  %v5150 = vunpack.c.l.b16 %v5115
  %v5151 = vpack.c.b16 %v5133, %v5130
  %v5152 = vpack.c.b16 %v5134, %v5131
  %v5153 = vpack.c.b16 %v5135, %v5132
  %v5154 = vpack.c.b16 %v5139, %v5136
  %v5155 = vpack.c.b16 %v5140, %v5137
  %v5156 = vpack.c.b16 %v5141, %v5138
  %v5157 = vpack.c.b16 %v5145, %v5142
  %v5158 = vpack.c.b16 %v5146, %v5143
  %v5159 = vpack.c.b16 %v5147, %v5144
  %v5160 = vpack.c.b16 %v5148, %v5148
  %v5161 = vpack.c.b16 %v5149, %v5149
  %v5162 = vpack.c.b16 %v5150, %v5150
  %v5172 = vsel %vm748, %v5153, 0
  %v5175 = vsel %vm748, %v5156, 0
  %v5178 = vsel %vm748, %v5159, 0
  %v5181 = vsel %vm748, %v5162, 0
  %5183 = vmatprep.subr.bf16.mxu0 0
  %5184 = vmatpush1.bf16.msra.mxu0 %v712
  %5185 = vmatprep.subr.bf16.mxu0 0
  %5186 = vmatpush1.bf16.msra.mxu0 %v713
  %5187 = vmatprep.subr.bf16.mxu0 0
  %5188 = vmatpush1.bf16.msra.mxu0 %v714
  %5189 = vmatprep.subr.bf16.mxu0 0
  %5190 = vmatpush1.bf16.msra.mxu0 %v715
  %5191 = vmatprep.subr.bf16.mxu0 0
  %5192 = vmatpush1.bf16.msra.mxu0 %v716
  %5193 = vmatprep.subr.bf16.mxu0 0
  %5194 = vmatpush1.bf16.msra.mxu0 %v717
  %5195 = vmatprep.subr.bf16.mxu0 0
  %5196 = vmatpush1.bf16.msra.mxu0 %v718
  %5197 = vmatprep.subr.bf16.mxu0 0
  %5198 = vmatpush1.bf16.msra.mxu0 %v719
  %5199 = vmatprep.subr.bf16.mxu0 0
  %5200 = vmatpush1.bf16.msra.mxu0 %v720
  %5201 = vmatprep.subr.bf16.mxu0 0
  %5202 = vmatpush1.bf16.msra.mxu0 %v721
  %5203 = vmatprep.subr.bf16.mxu0 0
  %5204 = vmatpush1.bf16.msra.mxu0 %v722
  %5205 = vmatprep.subr.bf16.mxu0 0
  %5206 = vmatpush1.bf16.msra.mxu0 %v723
  %5207 = vmatprep.subr.bf16.mxu0 0
  %5208 = vmatpush1.bf16.msra.mxu0 %v724
  %5209 = vmatprep.subr.bf16.mxu0 0
  %5210 = vmatpush1.bf16.msra.mxu0 %v725
  %5211 = vmatprep.subr.bf16.mxu0 0
  %5212 = vmatpush1.bf16.msra.mxu0 %v726
  %5213 = vmatprep.subr.bf16.mxu0 0
  %5214 = vmatpush1.bf16.msra.mxu0 %v727
  %5215 = vmatprep.mubr.bf16.mxu0 %v5152
  %5216 = vmatmul.mubr.bf16.gmra.mrb[0].mxu0 %v5151
  %v5217 = vpop.f32.mrb[0].mxu0
  %v5218 = vadd.f32 0.0, %v5217
  %v5219 = vpop.f32.mrb[0].mxu0
  %v5220 = vpop.f32.mrb[0].mxu0
  %v5221 = vadd.f32 0.0, %v5220
  %v5222 = vpop.f32.mrb[0].mxu0
  %5223 = vmatprep.mubr.bf16.mxu0 %v5155
  %5224 = vmatmul.mubr.bf16.gmra.mrb[0].mxu0 %v5154
  %v5225 = vpop.f32.mrb[0].mxu0
  %v5226 = vadd.f32 0.0, %v5225
  %v5227 = vpop.f32.mrb[0].mxu0
  %v5228 = vpop.f32.mrb[0].mxu0
  %v5229 = vadd.f32 0.0, %v5228
  %v5230 = vpop.f32.mrb[0].mxu0
  %5231 = vmatprep.mubr.bf16.mxu0 %v5158
  %5232 = vmatmul.mubr.bf16.gmra.mrb[0].mxu0 %v5157
  %v5233 = vpop.f32.mrb[0].mxu0
  %v5234 = vadd.f32 0.0, %v5233
  %v5235 = vpop.f32.mrb[0].mxu0
  %v5236 = vpop.f32.mrb[0].mxu0
  %v5237 = vadd.f32 0.0, %v5236
  %v5238 = vpop.f32.mrb[0].mxu0
  %5239 = vmatprep.mubr.bf16.mxu0 %v5161
  %5240 = vmatmul.mubr.bf16.gmra.mrb[0].mxu0 %v5160
  %v5241 = vpop.f32.mrb[0].mxu0
  %v5242 = vadd.f32 0.0, %v5241
  %v5243 = vpop.f32.mrb[0].mxu0
  %v5244 = vpop.f32.mrb[0].mxu0
  %v5245 = vpop.f32.mrb[0].mxu0
  %5246 = vdwg.mxu0
  %5247 = vmatprep.subr.bf16.mxu0 0
  %5248 = vmatpush1.bf16.msra.mxu0 %v728
  %5249 = vmatprep.subr.bf16.mxu0 0
  %5250 = vmatpush1.bf16.msra.mxu0 %v729
  %5251 = vmatprep.subr.bf16.mxu0 0
  %5252 = vmatpush1.bf16.msra.mxu0 0
  %5253 = vmatprep.subr.bf16.mxu0 0
  %5254 = vmatpush1.bf16.msra.mxu0 0
  %5255 = vmatprep.subr.bf16.mxu0 0
  %5256 = vmatpush1.bf16.msra.mxu0 0
  %5257 = vmatprep.subr.bf16.mxu0 0
  %5258 = vmatpush1.bf16.msra.mxu0 0
  %5259 = vmatprep.subr.bf16.mxu0 0
  %5260 = vmatpush1.bf16.msra.mxu0 0
  %5261 = vmatprep.subr.bf16.mxu0 0
  %5262 = vmatpush1.bf16.msra.mxu0 0
  %5263 = vmatprep.subr.bf16.mxu0 0
  %5264 = vmatpush1.bf16.msra.mxu0 0
  %5265 = vmatprep.subr.bf16.mxu0 0
  %5266 = vmatpush1.bf16.msra.mxu0 0
  %5267 = vmatprep.subr.bf16.mxu0 0
  %5268 = vmatpush1.bf16.msra.mxu0 0
  %5269 = vmatprep.subr.bf16.mxu0 0
  %5270 = vmatpush1.bf16.msra.mxu0 0
  %5271 = vmatprep.subr.bf16.mxu0 0
  %5272 = vmatpush1.bf16.msra.mxu0 0
  %5273 = vmatprep.subr.bf16.mxu0 0
  %5274 = vmatpush1.bf16.msra.mxu0 0
  %5275 = vmatprep.subr.bf16.mxu0 0
  %5276 = vmatpush1.bf16.msra.mxu0 0
  %5277 = vmatprep.subr.bf16.mxu0 0
  %5278 = vmatpush1.bf16.msra.mxu0 0
  %5279 = vmatprep.mubr.bf16.mxu0 0
  %5280 = vmatmul.mubr.bf16.gmra.mrb[0].mxu0 %v5172
  %v5281 = vpop.f32.mrb[0].mxu0
  %v5282 = vadd.f32 %v5218, %v5281
  %v5283 = vpop.f32.mrb[0].mxu0
  %v5284 = vpop.f32.mrb[0].mxu0
  %v5285 = vadd.f32 %v5221, %v5284
  %v5286 = vpop.f32.mrb[0].mxu0
  %5287 = vmatprep.mubr.bf16.mxu0 0
  %5288 = vmatmul.mubr.bf16.gmra.mrb[0].mxu0 %v5175
  %v5289 = vpop.f32.mrb[0].mxu0
  %v5290 = vadd.f32 %v5226, %v5289
  %v5291 = vpop.f32.mrb[0].mxu0
  %v5292 = vpop.f32.mrb[0].mxu0
  %v5293 = vadd.f32 %v5229, %v5292
  %v5294 = vpop.f32.mrb[0].mxu0
  %5295 = vmatprep.mubr.bf16.mxu0 0
  %5296 = vmatmul.mubr.bf16.gmra.mrb[0].mxu0 %v5178
  %v5297 = vpop.f32.mrb[0].mxu0
  %v5298 = vadd.f32 %v5234, %v5297
  %v5299 = vpop.f32.mrb[0].mxu0
  %v5300 = vpop.f32.mrb[0].mxu0
  %v5301 = vadd.f32 %v5237, %v5300
  %v5302 = vpop.f32.mrb[0].mxu0
  %5303 = vmatprep.mubr.bf16.mxu0 0
  %5304 = vmatmul.mubr.bf16.gmra.mrb[0].mxu0 %v5181
  %v5305 = vpop.f32.mrb[0].mxu0
  %v5306 = vadd.f32 %v5242, %v5305
  %v5307 = vpop.f32.mrb[0].mxu0
  %v5308 = vpop.f32.mrb[0].mxu0
  %v5309 = vpop.f32.mrb[0].mxu0
  %5310 = vdwg.mxu0
  %v5311 = vmax.f32 %v4315, %v5282
  %v5312 = vmax.f32 %v4318, %v5285
  %v5313 = vmax.f32 %v4323, %v5290
  %v5314 = vmax.f32 %v4326, %v5293
  %v5315 = vmax.f32 %v4331, %v5298
  %v5316 = vmax.f32 %v4334, %v5301
  %v5317 = vmax.f32 %v4339, %v5306
  %v5318 = vld [vmem:[%s3622] sm:$0xf]
  %v5319 = vld [vmem:[%s3622 + $0x4] sm:$0xf]
  %v5320 = vld [vmem:[%s3622 + $0x8] sm:$0xf]
  %v5321 = vld [vmem:[%s3622 + $0xc] sm:$0xf]
  %v5322 = vld [vmem:[%s3622 + $0x10] sm:$0xf]
  %v5323 = vld [vmem:[%s3622 + $0x14] sm:$0xf]
  %v5324 = vld [vmem:[%s3622 + $0x18] sm:$0xf]
  %5332 = vrot.lane.b32.xlu0 %v5318, 64
  %v5333 = vpop.permute.xlu0 %5332
  %5334 = vrot.lane.b32.xlu0 %v5319, 64
  %v5335 = vpop.permute.xlu0 %5334
  %5336 = vrot.lane.b32.xlu0 %v5320, 64
  %v5337 = vpop.permute.xlu0 %5336
  %5338 = vrot.lane.b32.xlu0 %v5321, 64
  %v5339 = vpop.permute.xlu0 %5338
  %5340 = vrot.lane.b32.xlu0 %v5322, 64
  %v5341 = vpop.permute.xlu0 %5340
  %5342 = vrot.lane.b32.xlu0 %v5323, 64
  %v5343 = vpop.permute.xlu0 %5342
  %5344 = vrot.lane.b32.xlu0 %v5324, 64
  %v5345 = vpop.permute.xlu0 %5344
  %5353 = vst.msk [vmem:[#allocation2] sm:$0xf] %vm59, %v5333
  %5354 = vst.msk [vmem:[#allocation2 + $0xc] sm:$0xf] %vm59, %v5335
  %5355 = vst.msk [vmem:[#allocation2 + $0x18] sm:$0xf] %vm59, %v5337
  %5356 = vst.msk [vmem:[#allocation2 + $0x24] sm:$0xf] %vm59, %v5339
  %5357 = vst.msk [vmem:[#allocation2 + $0x30] sm:$0xf] %vm59, %v5341
  %5358 = vst.msk [vmem:[#allocation2 + $0x3c] sm:$0xf] %vm59, %v5343
  %5359 = vst.msk [vmem:[#allocation2 + $0x48] sm:$0xf] %vm59, %v5345
  %v5360 = vld [vmem:[%s3622] sm:$0xf]
  %v5361 = vld [vmem:[%s3622 + $0x4] sm:$0xf]
  %v5362 = vld [vmem:[%s3622 + $0x8] sm:$0xf]
  %v5363 = vld [vmem:[%s3622 + $0xc] sm:$0xf]
  %v5364 = vld [vmem:[%s3622 + $0x10] sm:$0xf]
  %v5365 = vld [vmem:[%s3622 + $0x14] sm:$0xf]
  %v5366 = vld [vmem:[%s3622 + $0x18] sm:$0xf]
  %5374 = vrot.lane.b32.xlu0 %v5360, 64
  %v5375 = vpop.permute.xlu0 %5374
  %5376 = vrot.lane.b32.xlu0 %v5361, 64
  %v5377 = vpop.permute.xlu0 %5376
  %5378 = vrot.lane.b32.xlu0 %v5362, 64
  %v5379 = vpop.permute.xlu0 %5378
  %5380 = vrot.lane.b32.xlu0 %v5363, 64
  %v5381 = vpop.permute.xlu0 %5380
  %5382 = vrot.lane.b32.xlu0 %v5364, 64
  %v5383 = vpop.permute.xlu0 %5382
  %5384 = vrot.lane.b32.xlu0 %v5365, 64
  %v5385 = vpop.permute.xlu0 %5384
  %5386 = vrot.lane.b32.xlu0 %v5366, 64
  %v5387 = vpop.permute.xlu0 %5386
  %5395 = vst.msk [vmem:[#allocation2] sm:$0xf] %vm74, %v5375
  %5396 = vst.msk [vmem:[#allocation2 + $0xc] sm:$0xf] %vm74, %v5377
  %5397 = vst.msk [vmem:[#allocation2 + $0x18] sm:$0xf] %vm74, %v5379
  %5398 = vst.msk [vmem:[#allocation2 + $0x24] sm:$0xf] %vm74, %v5381
  %5399 = vst.msk [vmem:[#allocation2 + $0x30] sm:$0xf] %vm74, %v5383
  %5400 = vst.msk [vmem:[#allocation2 + $0x3c] sm:$0xf] %vm74, %v5385
  %5401 = vst.msk [vmem:[#allocation2 + $0x48] sm:$0xf] %vm74, %v5387
  %v5402 = vld [vmem:[%s3622] sm:$0xf]
  %v5403 = vld [vmem:[%s3622 + $0x4] sm:$0xf]
  %v5404 = vld [vmem:[%s3622 + $0x8] sm:$0xf]
  %v5405 = vld [vmem:[%s3622 + $0xc] sm:$0xf]
  %v5406 = vld [vmem:[%s3622 + $0x10] sm:$0xf]
  %v5407 = vld [vmem:[%s3622 + $0x14] sm:$0xf]
  %v5408 = vld [vmem:[%s3622 + $0x18] sm:$0xf]
  %v5409 = vld [vmem:[%s3622 + $0x1c] sm:$0x1]
  %v5411 = vshrl.u32 %v5402, 16
  %v5413 = vrot.slane %v5411, 4
  %v5414 = vshll.u32 %v5402, 16
  %v5416 = vrot.slane %v5414, 5
  %v5417 = vor.u32 %v5413, %v5416
  %v5418 = vrot.slane %v5417, 4
  %v5420 = vshll.u32 %v5403, 16
  %v5422 = vrot.slane %v5420, 5
  %v5423 = vsel %vm92, %v5418, %v5422
  %v5424 = vshrl.u32 %v5403, 16
  %v5426 = vrot.slane %v5424, 4
  %v5427 = vor.u32 %v5426, %v5422
  %v5428 = vrot.slane %v5427, 4
  %v5430 = vshll.u32 %v5404, 16
  %v5432 = vrot.slane %v5430, 5
  %v5433 = vsel %vm92, %v5428, %v5432
  %v5434 = vshrl.u32 %v5404, 16
  %v5436 = vrot.slane %v5434, 4
  %v5437 = vor.u32 %v5436, %v5432
  %v5438 = vrot.slane %v5437, 4
  %v5440 = vshll.u32 %v5405, 16
  %v5442 = vrot.slane %v5440, 5
  %v5443 = vsel %vm92, %v5438, %v5442
  %v5444 = vshrl.u32 %v5405, 16
  %v5446 = vrot.slane %v5444, 4
  %v5447 = vor.u32 %v5446, %v5442
  %v5448 = vrot.slane %v5447, 4
  %v5450 = vshll.u32 %v5406, 16
  %v5452 = vrot.slane %v5450, 5
  %v5453 = vsel %vm92, %v5448, %v5452
  %v5454 = vshrl.u32 %v5406, 16
  %v5456 = vrot.slane %v5454, 4
  %v5457 = vor.u32 %v5456, %v5452
  %v5458 = vrot.slane %v5457, 4
  %v5460 = vshll.u32 %v5407, 16
  %v5462 = vrot.slane %v5460, 5
  %v5463 = vsel %vm92, %v5458, %v5462
  %v5464 = vshrl.u32 %v5407, 16
  %v5466 = vrot.slane %v5464, 4
  %v5467 = vor.u32 %v5466, %v5462
  %v5468 = vrot.slane %v5467, 4
  %v5470 = vshll.u32 %v5408, 16
  %v5472 = vrot.slane %v5470, 5
  %v5473 = vsel %vm92, %v5468, %v5472
  %v5474 = vshrl.u32 %v5408, 16
  %v5476 = vrot.slane %v5474, 4
  %v5477 = vor.u32 %v5476, %v5472
  %v5478 = vrot.slane %v5477, 4
  %v5480 = vshll.u32 %v5409, 16
  %v5482 = vrot.slane %v5480, 5
  %v5483 = vsel %vm92, %v5478, %v5482
  %5491 = vst.msk [vmem:[#allocation2] sm:$0xf] %vm188, %v5423
  %5492 = vst.msk [vmem:[#allocation2 + $0xc] sm:$0xf] %vm188, %v5433
  %5493 = vst.msk [vmem:[#allocation2 + $0x18] sm:$0xf] %vm188, %v5443
  %5494 = vst.msk [vmem:[#allocation2 + $0x24] sm:$0xf] %vm188, %v5453
  %5495 = vst.msk [vmem:[#allocation2 + $0x30] sm:$0xf] %vm188, %v5463
  %5496 = vst.msk [vmem:[#allocation2 + $0x3c] sm:$0xf] %vm188, %v5473
  %5497 = vst.msk [vmem:[#allocation2 + $0x48] sm:$0xf] %vm188, %v5483
  %v5498 = vld [vmem:[%s3622 + $0x4] sm:$0xf]
  %v5499 = vld [vmem:[%s3622 + $0x8] sm:$0xf]
  %v5500 = vld [vmem:[%s3622 + $0xc] sm:$0xf]
  %v5501 = vld [vmem:[%s3622 + $0x10] sm:$0xf]
  %v5502 = vld [vmem:[%s3622 + $0x14] sm:$0xf]
  %v5503 = vld [vmem:[%s3622 + $0x18] sm:$0xf]
  %v5504 = vld [vmem:[%s3622 + $0x1c] sm:$0xf]
  %5512 = vrot.lane.b32.xlu0 %v5498, 96
  %v5513 = vpop.permute.xlu0 %5512
  %5514 = vrot.lane.b32.xlu0 %v5499, 96
  %v5515 = vpop.permute.xlu0 %5514
  %5516 = vrot.lane.b32.xlu0 %v5500, 96
  %v5517 = vpop.permute.xlu0 %5516
  %5518 = vrot.lane.b32.xlu0 %v5501, 96
  %v5519 = vpop.permute.xlu0 %5518
  %5520 = vrot.lane.b32.xlu0 %v5502, 96
  %v5521 = vpop.permute.xlu0 %5520
  %5522 = vrot.lane.b32.xlu0 %v5503, 96
  %v5523 = vpop.permute.xlu0 %5522
  %5524 = vrot.lane.b32.xlu0 %v5504, 96
  %v5525 = vpop.permute.xlu0 %5524
  %5533 = vst.msk [vmem:[#allocation2] sm:$0xf] %vm231, %v5513
  %5534 = vst.msk [vmem:[#allocation2 + $0xc] sm:$0xf] %vm231, %v5515
  %5535 = vst.msk [vmem:[#allocation2 + $0x18] sm:$0xf] %vm231, %v5517
  %5536 = vst.msk [vmem:[#allocation2 + $0x24] sm:$0xf] %vm231, %v5519
  %5537 = vst.msk [vmem:[#allocation2 + $0x30] sm:$0xf] %vm231, %v5521
  %5538 = vst.msk [vmem:[#allocation2 + $0x3c] sm:$0xf] %vm231, %v5523
  %5539 = vst.msk [vmem:[#allocation2 + $0x48] sm:$0xf] %vm231, %v5525
  %v5540 = vld [vmem:[%s3622 + $0x4] sm:$0xf]
  %v5541 = vld [vmem:[%s3622 + $0x8] sm:$0xf]
  %v5542 = vld [vmem:[%s3622 + $0xc] sm:$0xf]
  %v5543 = vld [vmem:[%s3622 + $0x10] sm:$0xf]
  %v5544 = vld [vmem:[%s3622 + $0x14] sm:$0xf]
  %v5545 = vld [vmem:[%s3622 + $0x18] sm:$0xf]
  %v5546 = vld [vmem:[%s3622 + $0x1c] sm:$0xf]
  %5554 = vrot.lane.b32.xlu0 %v5540, 96
  %v5555 = vpop.permute.xlu0 %5554
  %5556 = vrot.lane.b32.xlu0 %v5541, 96
  %v5557 = vpop.permute.xlu0 %5556
  %5558 = vrot.lane.b32.xlu0 %v5542, 96
  %v5559 = vpop.permute.xlu0 %5558
  %5560 = vrot.lane.b32.xlu0 %v5543, 96
  %v5561 = vpop.permute.xlu0 %5560
  %5562 = vrot.lane.b32.xlu0 %v5544, 96
  %v5563 = vpop.permute.xlu0 %5562
  %5564 = vrot.lane.b32.xlu0 %v5545, 96
  %v5565 = vpop.permute.xlu0 %5564
  %5566 = vrot.lane.b32.xlu0 %v5546, 96
  %v5567 = vpop.permute.xlu0 %5566
  %5575 = vst.msk [vmem:[#allocation2 + $0x4] sm:$0xf] %vm59, %v5555
  %5576 = vst.msk [vmem:[#allocation2 + $0x10] sm:$0xf] %vm59, %v5557
  %5577 = vst.msk [vmem:[#allocation2 + $0x1c] sm:$0xf] %vm59, %v5559
  %5578 = vst.msk [vmem:[#allocation2 + $0x28] sm:$0xf] %vm59, %v5561
  %5579 = vst.msk [vmem:[#allocation2 + $0x34] sm:$0xf] %vm59, %v5563
  %5580 = vst.msk [vmem:[#allocation2 + $0x40] sm:$0xf] %vm59, %v5565
  %5581 = vst.msk [vmem:[#allocation2 + $0x4c] sm:$0xf] %vm59, %v5567
  %v5582 = vld [vmem:[%s3622 + $0x4] sm:$0xf]
  %v5583 = vld [vmem:[%s3622 + $0x8] sm:$0xf]
  %v5584 = vld [vmem:[%s3622 + $0xc] sm:$0xf]
  %v5585 = vld [vmem:[%s3622 + $0x10] sm:$0xf]
  %v5586 = vld [vmem:[%s3622 + $0x14] sm:$0xf]
  %v5587 = vld [vmem:[%s3622 + $0x18] sm:$0xf]
  %v5588 = vld [vmem:[%s3622 + $0x1c] sm:$0xf]
  %v5589 = vld [vmem:[%s3622 + $0x20] sm:$0x1]
  %v5591 = vshrl.u32 %v5582, 16
  %v5593 = vrot.slane %v5591, 4
  %v5594 = vshll.u32 %v5582, 16
  %v5596 = vrot.slane %v5594, 5
  %v5597 = vor.u32 %v5593, %v5596
  %v5598 = vrot.slane %v5597, 4
  %v5600 = vshll.u32 %v5583, 16
  %v5602 = vrot.slane %v5600, 5
  %v5603 = vsel %vm92, %v5598, %v5602
  %v5604 = vshrl.u32 %v5583, 16
  %v5606 = vrot.slane %v5604, 4
  %v5607 = vor.u32 %v5606, %v5602
  %v5608 = vrot.slane %v5607, 4
  %v5610 = vshll.u32 %v5584, 16
  %v5612 = vrot.slane %v5610, 5
  %v5613 = vsel %vm92, %v5608, %v5612
  %v5614 = vshrl.u32 %v5584, 16
  %v5616 = vrot.slane %v5614, 4
  %v5617 = vor.u32 %v5616, %v5612
  %v5618 = vrot.slane %v5617, 4
  %v5620 = vshll.u32 %v5585, 16
  %v5622 = vrot.slane %v5620, 5
  %v5623 = vsel %vm92, %v5618, %v5622
  %v5624 = vshrl.u32 %v5585, 16
  %v5626 = vrot.slane %v5624, 4
  %v5627 = vor.u32 %v5626, %v5622
  %v5628 = vrot.slane %v5627, 4
  %v5630 = vshll.u32 %v5586, 16
  %v5632 = vrot.slane %v5630, 5
  %v5633 = vsel %vm92, %v5628, %v5632
  %v5634 = vshrl.u32 %v5586, 16
  %v5636 = vrot.slane %v5634, 4
  %v5637 = vor.u32 %v5636, %v5632
  %v5638 = vrot.slane %v5637, 4
  %v5640 = vshll.u32 %v5587, 16
  %v5642 = vrot.slane %v5640, 5
  %v5643 = vsel %vm92, %v5638, %v5642
  %v5644 = vshrl.u32 %v5587, 16
  %v5646 = vrot.slane %v5644, 4
  %v5647 = vor.u32 %v5646, %v5642
  %v5648 = vrot.slane %v5647, 4
  %v5650 = vshll.u32 %v5588, 16
  %v5652 = vrot.slane %v5650, 5
  %v5653 = vsel %vm92, %v5648, %v5652
  %v5654 = vshrl.u32 %v5588, 16
  %v5656 = vrot.slane %v5654, 4
  %v5657 = vor.u32 %v5656, %v5652
  %v5658 = vrot.slane %v5657, 4
  %v5660 = vshll.u32 %v5589, 16
  %v5662 = vrot.slane %v5660, 5
  %v5663 = vsel %vm92, %v5658, %v5662
  %5664 = vrot.lane.b32.xlu0 %v5603, 32
  %v5665 = vpop.permute.xlu0 %5664
  %5666 = vrot.lane.b32.xlu0 %v5613, 32
  %v5667 = vpop.permute.xlu0 %5666
  %5668 = vrot.lane.b32.xlu0 %v5623, 32
  %v5669 = vpop.permute.xlu0 %5668
  %5670 = vrot.lane.b32.xlu0 %v5633, 32
  %v5671 = vpop.permute.xlu0 %5670
  %5672 = vrot.lane.b32.xlu0 %v5643, 32
  %v5673 = vpop.permute.xlu0 %5672
  %5674 = vrot.lane.b32.xlu0 %v5653, 32
  %v5675 = vpop.permute.xlu0 %5674
  %5676 = vrot.lane.b32.xlu0 %v5663, 32
  %v5677 = vpop.permute.xlu0 %5676
  %5685 = vst.msk [vmem:[#allocation2 + $0x4] sm:$0xf] %vm74, %v5665
  %5686 = vst.msk [vmem:[#allocation2 + $0x10] sm:$0xf] %vm74, %v5667
  %5687 = vst.msk [vmem:[#allocation2 + $0x1c] sm:$0xf] %vm74, %v5669
  %5688 = vst.msk [vmem:[#allocation2 + $0x28] sm:$0xf] %vm74, %v5671
  %5689 = vst.msk [vmem:[#allocation2 + $0x34] sm:$0xf] %vm74, %v5673
  %5690 = vst.msk [vmem:[#allocation2 + $0x40] sm:$0xf] %vm74, %v5675
  %5691 = vst.msk [vmem:[#allocation2 + $0x4c] sm:$0xf] %vm74, %v5677
  %v5692 = vld [vmem:[%s3622 + $0x4] sm:$0xf]
  %v5693 = vld [vmem:[%s3622 + $0x8] sm:$0xf]
  %v5694 = vld [vmem:[%s3622 + $0xc] sm:$0xf]
  %v5695 = vld [vmem:[%s3622 + $0x10] sm:$0xf]
  %v5696 = vld [vmem:[%s3622 + $0x14] sm:$0xf]
  %v5697 = vld [vmem:[%s3622 + $0x18] sm:$0xf]
  %v5698 = vld [vmem:[%s3622 + $0x1c] sm:$0xf]
  %5699 = vst.msk [vmem:[#allocation2 + $0x4] sm:$0xf] %vm188, %v5692
  %5700 = vst.msk [vmem:[#allocation2 + $0x10] sm:$0xf] %vm188, %v5693
  %5701 = vst.msk [vmem:[#allocation2 + $0x1c] sm:$0xf] %vm188, %v5694
  %5702 = vst.msk [vmem:[#allocation2 + $0x28] sm:$0xf] %vm188, %v5695
  %5703 = vst.msk [vmem:[#allocation2 + $0x34] sm:$0xf] %vm188, %v5696
  %5704 = vst.msk [vmem:[#allocation2 + $0x40] sm:$0xf] %vm188, %v5697
  %5705 = vst.msk [vmem:[#allocation2 + $0x4c] sm:$0xf] %vm188, %v5698
  %v5706 = vld [vmem:[%s3622 + $0x4] sm:$0xf]
  %v5707 = vld [vmem:[%s3622 + $0x8] sm:$0xf]
  %v5708 = vld [vmem:[%s3622 + $0xc] sm:$0xf]
  %v5709 = vld [vmem:[%s3622 + $0x10] sm:$0xf]
  %v5710 = vld [vmem:[%s3622 + $0x14] sm:$0xf]
  %v5711 = vld [vmem:[%s3622 + $0x18] sm:$0xf]
  %v5712 = vld [vmem:[%s3622 + $0x1c] sm:$0xf]
  %5713 = vst.msk [vmem:[#allocation2 + $0x4] sm:$0xf] %vm231, %v5706
  %5714 = vst.msk [vmem:[#allocation2 + $0x10] sm:$0xf] %vm231, %v5707
  %5715 = vst.msk [vmem:[#allocation2 + $0x1c] sm:$0xf] %vm231, %v5708
  %5716 = vst.msk [vmem:[#allocation2 + $0x28] sm:$0xf] %vm231, %v5709
  %5717 = vst.msk [vmem:[#allocation2 + $0x34] sm:$0xf] %vm231, %v5710
  %5718 = vst.msk [vmem:[#allocation2 + $0x40] sm:$0xf] %vm231, %v5711
  %5719 = vst.msk [vmem:[#allocation2 + $0x4c] sm:$0xf] %vm231, %v5712
  %v5720 = vld [vmem:[%s3622 + $0x4] sm:$0xf]
  %v5721 = vld [vmem:[%s3622 + $0x8] sm:$0xf]
  %v5722 = vld [vmem:[%s3622 + $0xc] sm:$0xf]
  %v5723 = vld [vmem:[%s3622 + $0x10] sm:$0xf]
  %v5724 = vld [vmem:[%s3622 + $0x14] sm:$0xf]
  %v5725 = vld [vmem:[%s3622 + $0x18] sm:$0xf]
  %v5726 = vld [vmem:[%s3622 + $0x1c] sm:$0xf]
  %v5727 = vld [vmem:[%s3622 + $0x20] sm:$0x1]
  %v5729 = vshrl.u32 %v5720, 16
  %v5731 = vrot.slane %v5729, 4
  %v5732 = vshll.u32 %v5720, 16
  %v5734 = vrot.slane %v5732, 5
  %v5735 = vor.u32 %v5731, %v5734
  %v5736 = vrot.slane %v5735, 4
  %v5738 = vshll.u32 %v5721, 16
  %v5740 = vrot.slane %v5738, 5
  %v5741 = vsel %vm92, %v5736, %v5740
  %v5742 = vshrl.u32 %v5721, 16
  %v5744 = vrot.slane %v5742, 4
  %v5745 = vor.u32 %v5744, %v5740
  %v5746 = vrot.slane %v5745, 4
  %v5748 = vshll.u32 %v5722, 16
  %v5750 = vrot.slane %v5748, 5
  %v5751 = vsel %vm92, %v5746, %v5750
  %v5752 = vshrl.u32 %v5722, 16
  %v5754 = vrot.slane %v5752, 4
  %v5755 = vor.u32 %v5754, %v5750
  %v5756 = vrot.slane %v5755, 4
  %v5758 = vshll.u32 %v5723, 16
  %v5760 = vrot.slane %v5758, 5
  %v5761 = vsel %vm92, %v5756, %v5760
  %v5762 = vshrl.u32 %v5723, 16
  %v5764 = vrot.slane %v5762, 4
  %v5765 = vor.u32 %v5764, %v5760
  %v5766 = vrot.slane %v5765, 4
  %v5768 = vshll.u32 %v5724, 16
  %v5770 = vrot.slane %v5768, 5
  %v5771 = vsel %vm92, %v5766, %v5770
  %v5772 = vshrl.u32 %v5724, 16
  %v5774 = vrot.slane %v5772, 4
  %v5775 = vor.u32 %v5774, %v5770
  %v5776 = vrot.slane %v5775, 4
  %v5778 = vshll.u32 %v5725, 16
  %v5780 = vrot.slane %v5778, 5
  %v5781 = vsel %vm92, %v5776, %v5780
  %v5782 = vshrl.u32 %v5725, 16
  %v5784 = vrot.slane %v5782, 4
  %v5785 = vor.u32 %v5784, %v5780
  %v5786 = vrot.slane %v5785, 4
  %v5788 = vshll.u32 %v5726, 16
  %v5790 = vrot.slane %v5788, 5
  %v5791 = vsel %vm92, %v5786, %v5790
  %v5792 = vshrl.u32 %v5726, 16
  %v5794 = vrot.slane %v5792, 4
  %v5795 = vor.u32 %v5794, %v5790
  %v5796 = vrot.slane %v5795, 4
  %v5798 = vshll.u32 %v5727, 16
  %v5800 = vrot.slane %v5798, 5
  %v5801 = vsel %vm92, %v5796, %v5800
  %5802 = vrot.lane.b32.xlu0 %v5741, 64
  %v5803 = vpop.permute.xlu0 %5802
  %5804 = vrot.lane.b32.xlu0 %v5751, 64
  %v5805 = vpop.permute.xlu0 %5804
  %5806 = vrot.lane.b32.xlu0 %v5761, 64
  %v5807 = vpop.permute.xlu0 %5806
  %5808 = vrot.lane.b32.xlu0 %v5771, 64
  %v5809 = vpop.permute.xlu0 %5808
  %5810 = vrot.lane.b32.xlu0 %v5781, 64
  %v5811 = vpop.permute.xlu0 %5810
  %5812 = vrot.lane.b32.xlu0 %v5791, 64
  %v5813 = vpop.permute.xlu0 %5812
  %5814 = vrot.lane.b32.xlu0 %v5801, 64
  %v5815 = vpop.permute.xlu0 %5814
  %5823 = vst.msk [vmem:[#allocation2 + $0x8] sm:$0xf] %vm59, %v5803
  %5824 = vst.msk [vmem:[#allocation2 + $0x14] sm:$0xf] %vm59, %v5805
  %5825 = vst.msk [vmem:[#allocation2 + $0x20] sm:$0xf] %vm59, %v5807
  %5826 = vst.msk [vmem:[#allocation2 + $0x2c] sm:$0xf] %vm59, %v5809
  %5827 = vst.msk [vmem:[#allocation2 + $0x38] sm:$0xf] %vm59, %v5811
  %5828 = vst.msk [vmem:[#allocation2 + $0x44] sm:$0xf] %vm59, %v5813
  %5829 = vst.msk [vmem:[#allocation2 + $0x50] sm:$0xf] %vm59, %v5815
  %v5830 = vld [vmem:[#allocation2] sm:$0xff]
  %v5831 = vld [vmem:[#allocation2 + $0x8] sm:$0xf]
  %v5832 = vld [vmem:[#allocation2 + $0xc] sm:$0xff]
  %v5833 = vld [vmem:[#allocation2 + $0x14] sm:$0xf]
  %v5834 = vld [vmem:[#allocation2 + $0x18] sm:$0xff]
  %v5835 = vld [vmem:[#allocation2 + $0x20] sm:$0xf]
  %v5836 = vld [vmem:[#allocation2 + $0x24] sm:$0xff]
  %v5837 = vld [vmem:[#allocation2 + $0x2c] sm:$0xf]
  %v5838 = vld [vmem:[#allocation2 + $0x30] sm:$0xff]
  %v5839 = vld [vmem:[#allocation2 + $0x38] sm:$0xf]
  %v5840 = vld [vmem:[#allocation2 + $0x3c] sm:$0xff]
  %v5841 = vld [vmem:[#allocation2 + $0x44] sm:$0xf]
  %v5842 = vld [vmem:[#allocation2 + $0x48] sm:$0xff]
  %v5843 = vld [vmem:[#allocation2 + $0x50] sm:$0xf]
  %v5858 = vunpack.c.l.b16 %v5830
  %v5859 = vunpack.c.h.b16 %v5830
  %v5860 = vunpack.c.l.b16 %v5831
  %v5861 = vunpack.c.l.b16 %v5832
  %v5862 = vunpack.c.h.b16 %v5832
  %v5863 = vunpack.c.l.b16 %v5833
  %v5864 = vunpack.c.l.b16 %v5834
  %v5865 = vunpack.c.h.b16 %v5834
  %v5866 = vunpack.c.l.b16 %v5835
  %v5867 = vunpack.c.l.b16 %v5836
  %v5868 = vunpack.c.h.b16 %v5836
  %v5869 = vunpack.c.l.b16 %v5837
  %v5870 = vunpack.c.l.b16 %v5838
  %v5871 = vunpack.c.h.b16 %v5838
  %v5872 = vunpack.c.l.b16 %v5839
  %v5873 = vunpack.c.l.b16 %v5840
  %v5874 = vunpack.c.h.b16 %v5840
  %v5875 = vunpack.c.l.b16 %v5841
  %v5876 = vunpack.c.l.b16 %v5842
  %v5877 = vunpack.c.h.b16 %v5842
  %v5878 = vunpack.c.l.b16 %v5843
  %v5879 = vpack.c.b16 %v5861, %v5858
  %v5880 = vpack.c.b16 %v5862, %v5859
  %v5881 = vpack.c.b16 %v5863, %v5860
  %v5882 = vpack.c.b16 %v5867, %v5864
  %v5883 = vpack.c.b16 %v5868, %v5865
  %v5884 = vpack.c.b16 %v5869, %v5866
  %v5885 = vpack.c.b16 %v5873, %v5870
  %v5886 = vpack.c.b16 %v5874, %v5871
  %v5887 = vpack.c.b16 %v5875, %v5872
  %v5888 = vpack.c.b16 %v5876, %v5876
  %v5889 = vpack.c.b16 %v5877, %v5877
  %v5890 = vpack.c.b16 %v5878, %v5878
  %v5900 = vsel %vm748, %v5881, 0
  %v5903 = vsel %vm748, %v5884, 0
  %v5906 = vsel %vm748, %v5887, 0
  %v5909 = vsel %vm748, %v5890, 0
  %5911 = vmatprep.subr.bf16.mxu0 0
  %5912 = vmatpush1.bf16.msra.mxu0 %v712
  %5913 = vmatprep.subr.bf16.mxu0 0
  %5914 = vmatpush1.bf16.msra.mxu0 %v713
  %5915 = vmatprep.subr.bf16.mxu0 0
  %5916 = vmatpush1.bf16.msra.mxu0 %v714
  %5917 = vmatprep.subr.bf16.mxu0 0
  %5918 = vmatpush1.bf16.msra.mxu0 %v715
  %5919 = vmatprep.subr.bf16.mxu0 0
  %5920 = vmatpush1.bf16.msra.mxu0 %v716
  %5921 = vmatprep.subr.bf16.mxu0 0
  %5922 = vmatpush1.bf16.msra.mxu0 %v717
  %5923 = vmatprep.subr.bf16.mxu0 0
  %5924 = vmatpush1.bf16.msra.mxu0 %v718
  %5925 = vmatprep.subr.bf16.mxu0 0
  %5926 = vmatpush1.bf16.msra.mxu0 %v719
  %5927 = vmatprep.subr.bf16.mxu0 0
  %5928 = vmatpush1.bf16.msra.mxu0 %v720
  %5929 = vmatprep.subr.bf16.mxu0 0
  %5930 = vmatpush1.bf16.msra.mxu0 %v721
  %5931 = vmatprep.subr.bf16.mxu0 0
  %5932 = vmatpush1.bf16.msra.mxu0 %v722
  %5933 = vmatprep.subr.bf16.mxu0 0
  %5934 = vmatpush1.bf16.msra.mxu0 %v723
  %5935 = vmatprep.subr.bf16.mxu0 0
  %5936 = vmatpush1.bf16.msra.mxu0 %v724
  %5937 = vmatprep.subr.bf16.mxu0 0
  %5938 = vmatpush1.bf16.msra.mxu0 %v725
  %5939 = vmatprep.subr.bf16.mxu0 0
  %5940 = vmatpush1.bf16.msra.mxu0 %v726
  %5941 = vmatprep.subr.bf16.mxu0 0
  %5942 = vmatpush1.bf16.msra.mxu0 %v727
  %5943 = vmatprep.mubr.bf16.mxu0 %v5880
  %5944 = vmatmul.mubr.bf16.gmra.mrb[0].mxu0 %v5879
  %v5945 = vpop.f32.mrb[0].mxu0
  %v5946 = vadd.f32 0.0, %v5945
  %v5947 = vpop.f32.mrb[0].mxu0
  %v5948 = vpop.f32.mrb[0].mxu0
  %v5949 = vadd.f32 0.0, %v5948
  %v5950 = vpop.f32.mrb[0].mxu0
  %5951 = vmatprep.mubr.bf16.mxu0 %v5883
  %5952 = vmatmul.mubr.bf16.gmra.mrb[0].mxu0 %v5882
  %v5953 = vpop.f32.mrb[0].mxu0
  %v5954 = vadd.f32 0.0, %v5953
  %v5955 = vpop.f32.mrb[0].mxu0
  %v5956 = vpop.f32.mrb[0].mxu0
  %v5957 = vadd.f32 0.0, %v5956
  %v5958 = vpop.f32.mrb[0].mxu0
  %5959 = vmatprep.mubr.bf16.mxu0 %v5886
  %5960 = vmatmul.mubr.bf16.gmra.mrb[0].mxu0 %v5885
  %v5961 = vpop.f32.mrb[0].mxu0
  %v5962 = vadd.f32 0.0, %v5961
  %v5963 = vpop.f32.mrb[0].mxu0
  %v5964 = vpop.f32.mrb[0].mxu0
  %v5965 = vadd.f32 0.0, %v5964
  %v5966 = vpop.f32.mrb[0].mxu0
  %5967 = vmatprep.mubr.bf16.mxu0 %v5889
  %5968 = vmatmul.mubr.bf16.gmra.mrb[0].mxu0 %v5888
  %v5969 = vpop.f32.mrb[0].mxu0
  %v5970 = vadd.f32 0.0, %v5969
  %v5971 = vpop.f32.mrb[0].mxu0
  %v5972 = vpop.f32.mrb[0].mxu0
  %v5973 = vpop.f32.mrb[0].mxu0
  %5974 = vdwg.mxu0
  %5975 = vmatprep.subr.bf16.mxu0 0
  %5976 = vmatpush1.bf16.msra.mxu0 %v728
  %5977 = vmatprep.subr.bf16.mxu0 0
  %5978 = vmatpush1.bf16.msra.mxu0 %v729
  %5979 = vmatprep.subr.bf16.mxu0 0
  %5980 = vmatpush1.bf16.msra.mxu0 0
  %5981 = vmatprep.subr.bf16.mxu0 0
  %5982 = vmatpush1.bf16.msra.mxu0 0
  %5983 = vmatprep.subr.bf16.mxu0 0
  %5984 = vmatpush1.bf16.msra.mxu0 0
  %5985 = vmatprep.subr.bf16.mxu0 0
  %5986 = vmatpush1.bf16.msra.mxu0 0
  %5987 = vmatprep.subr.bf16.mxu0 0
  %5988 = vmatpush1.bf16.msra.mxu0 0
  %5989 = vmatprep.subr.bf16.mxu0 0
  %5990 = vmatpush1.bf16.msra.mxu0 0
  %5991 = vmatprep.subr.bf16.mxu0 0
  %5992 = vmatpush1.bf16.msra.mxu0 0
  %5993 = vmatprep.subr.bf16.mxu0 0
  %5994 = vmatpush1.bf16.msra.mxu0 0
  %5995 = vmatprep.subr.bf16.mxu0 0
  %5996 = vmatpush1.bf16.msra.mxu0 0
  %5997 = vmatprep.subr.bf16.mxu0 0
  %5998 = vmatpush1.bf16.msra.mxu0 0
  %5999 = vmatprep.subr.bf16.mxu0 0
  %6000 = vmatpush1.bf16.msra.mxu0 0
  %6001 = vmatprep.subr.bf16.mxu0 0
  %6002 = vmatpush1.bf16.msra.mxu0 0
  %6003 = vmatprep.subr.bf16.mxu0 0
  %6004 = vmatpush1.bf16.msra.mxu0 0
  %6005 = vmatprep.subr.bf16.mxu0 0
  %6006 = vmatpush1.bf16.msra.mxu0 0
  %6007 = vmatprep.mubr.bf16.mxu0 0
  %6008 = vmatmul.mubr.bf16.gmra.mrb[0].mxu0 %v5900
  %v6009 = vpop.f32.mrb[0].mxu0
  %v6010 = vadd.f32 %v5946, %v6009
  %v6011 = vpop.f32.mrb[0].mxu0
  %v6012 = vpop.f32.mrb[0].mxu0
  %v6013 = vadd.f32 %v5949, %v6012
  %v6014 = vpop.f32.mrb[0].mxu0
  %6015 = vmatprep.mubr.bf16.mxu0 0
  %6016 = vmatmul.mubr.bf16.gmra.mrb[0].mxu0 %v5903
  %v6017 = vpop.f32.mrb[0].mxu0
  %v6018 = vadd.f32 %v5954, %v6017
  %v6019 = vpop.f32.mrb[0].mxu0
  %v6020 = vpop.f32.mrb[0].mxu0
  %v6021 = vadd.f32 %v5957, %v6020
  %v6022 = vpop.f32.mrb[0].mxu0
  %6023 = vmatprep.mubr.bf16.mxu0 0
  %6024 = vmatmul.mubr.bf16.gmra.mrb[0].mxu0 %v5906
  %v6025 = vpop.f32.mrb[0].mxu0
  %v6026 = vadd.f32 %v5962, %v6025
  %v6027 = vpop.f32.mrb[0].mxu0
  %v6028 = vpop.f32.mrb[0].mxu0
  %v6029 = vadd.f32 %v5965, %v6028
  %v6030 = vpop.f32.mrb[0].mxu0
  %6031 = vmatprep.mubr.bf16.mxu0 0
  %6032 = vmatmul.mubr.bf16.gmra.mrb[0].mxu0 %v5909
  %v6033 = vpop.f32.mrb[0].mxu0
  %v6034 = vadd.f32 %v5970, %v6033
  %v6035 = vpop.f32.mrb[0].mxu0
  %v6036 = vpop.f32.mrb[0].mxu0
  %v6037 = vpop.f32.mrb[0].mxu0
  %6038 = vdwg.mxu0
  %v6039 = vmax.f32 %v5311, %v6010
  %v6040 = vmax.f32 %v5312, %v6013
  %v6041 = vmax.f32 %v5313, %v6018
  %v6042 = vmax.f32 %v5314, %v6021
  %v6043 = vmax.f32 %v5315, %v6026
  %v6044 = vmax.f32 %v5316, %v6029
  %v6045 = vmax.f32 %v5317, %v6034
  %v6046 = vld [vmem:[%s3622] sm:$0xf]
  %v6047 = vld [vmem:[%s3622 + $0x4] sm:$0xf]
  %v6048 = vld [vmem:[%s3622 + $0x8] sm:$0xf]
  %v6049 = vld [vmem:[%s3622 + $0xc] sm:$0xf]
  %v6050 = vld [vmem:[%s3622 + $0x10] sm:$0xf]
  %v6051 = vld [vmem:[%s3622 + $0x14] sm:$0xf]
  %v6052 = vld [vmem:[%s3622 + $0x18] sm:$0xf]
  %6060 = vrot.lane.b32.xlu0 %v6046, 32
  %v6061 = vpop.permute.xlu0 %6060
  %6062 = vrot.lane.b32.xlu0 %v6047, 32
  %v6063 = vpop.permute.xlu0 %6062
  %6064 = vrot.lane.b32.xlu0 %v6048, 32
  %v6065 = vpop.permute.xlu0 %6064
  %6066 = vrot.lane.b32.xlu0 %v6049, 32
  %v6067 = vpop.permute.xlu0 %6066
  %6068 = vrot.lane.b32.xlu0 %v6050, 32
  %v6069 = vpop.permute.xlu0 %6068
  %6070 = vrot.lane.b32.xlu0 %v6051, 32
  %v6071 = vpop.permute.xlu0 %6070
  %6072 = vrot.lane.b32.xlu0 %v6052, 32
  %v6073 = vpop.permute.xlu0 %6072
  %6081 = vst.msk [vmem:[#allocation2] sm:$0xf] %vm59, %v6061
  %6082 = vst.msk [vmem:[#allocation2 + $0xc] sm:$0xf] %vm59, %v6063
  %6083 = vst.msk [vmem:[#allocation2 + $0x18] sm:$0xf] %vm59, %v6065
  %6084 = vst.msk [vmem:[#allocation2 + $0x24] sm:$0xf] %vm59, %v6067
  %6085 = vst.msk [vmem:[#allocation2 + $0x30] sm:$0xf] %vm59, %v6069
  %6086 = vst.msk [vmem:[#allocation2 + $0x3c] sm:$0xf] %vm59, %v6071
  %6087 = vst.msk [vmem:[#allocation2 + $0x48] sm:$0xf] %vm59, %v6073
  %v6088 = vld [vmem:[%s3622] sm:$0xf]
  %v6089 = vld [vmem:[%s3622 + $0x4] sm:$0xf]
  %v6090 = vld [vmem:[%s3622 + $0x8] sm:$0xf]
  %v6091 = vld [vmem:[%s3622 + $0xc] sm:$0xf]
  %v6092 = vld [vmem:[%s3622 + $0x10] sm:$0xf]
  %v6093 = vld [vmem:[%s3622 + $0x14] sm:$0xf]
  %v6094 = vld [vmem:[%s3622 + $0x18] sm:$0xf]
  %v6095 = vld [vmem:[%s3622 + $0x1c] sm:$0x1]
  %v6097 = vshrl.u32 %v6088, 16
  %v6099 = vrot.slane %v6097, 4
  %v6100 = vshll.u32 %v6088, 16
  %v6102 = vrot.slane %v6100, 5
  %v6103 = vor.u32 %v6099, %v6102
  %v6104 = vrot.slane %v6103, 4
  %v6106 = vshll.u32 %v6089, 16
  %v6108 = vrot.slane %v6106, 5
  %v6109 = vsel %vm92, %v6104, %v6108
  %v6110 = vshrl.u32 %v6089, 16
  %v6112 = vrot.slane %v6110, 4
  %v6113 = vor.u32 %v6112, %v6108
  %v6114 = vrot.slane %v6113, 4
  %v6116 = vshll.u32 %v6090, 16
  %v6118 = vrot.slane %v6116, 5
  %v6119 = vsel %vm92, %v6114, %v6118
  %v6120 = vshrl.u32 %v6090, 16
  %v6122 = vrot.slane %v6120, 4
  %v6123 = vor.u32 %v6122, %v6118
  %v6124 = vrot.slane %v6123, 4
  %v6126 = vshll.u32 %v6091, 16
  %v6128 = vrot.slane %v6126, 5
  %v6129 = vsel %vm92, %v6124, %v6128
  %v6130 = vshrl.u32 %v6091, 16
  %v6132 = vrot.slane %v6130, 4
  %v6133 = vor.u32 %v6132, %v6128
  %v6134 = vrot.slane %v6133, 4
  %v6136 = vshll.u32 %v6092, 16
  %v6138 = vrot.slane %v6136, 5
  %v6139 = vsel %vm92, %v6134, %v6138
  %v6140 = vshrl.u32 %v6092, 16
  %v6142 = vrot.slane %v6140, 4
  %v6143 = vor.u32 %v6142, %v6138
  %v6144 = vrot.slane %v6143, 4
  %v6146 = vshll.u32 %v6093, 16
  %v6148 = vrot.slane %v6146, 5
  %v6149 = vsel %vm92, %v6144, %v6148
  %v6150 = vshrl.u32 %v6093, 16
  %v6152 = vrot.slane %v6150, 4
  %v6153 = vor.u32 %v6152, %v6148
  %v6154 = vrot.slane %v6153, 4
  %v6156 = vshll.u32 %v6094, 16
  %v6158 = vrot.slane %v6156, 5
  %v6159 = vsel %vm92, %v6154, %v6158
  %v6160 = vshrl.u32 %v6094, 16
  %v6162 = vrot.slane %v6160, 4
  %v6163 = vor.u32 %v6162, %v6158
  %v6164 = vrot.slane %v6163, 4
  %v6166 = vshll.u32 %v6095, 16
  %v6168 = vrot.slane %v6166, 5
  %v6169 = vsel %vm92, %v6164, %v6168
  %6170 = vrot.lane.b32.xlu0 %v6109, 96
  %v6171 = vpop.permute.xlu0 %6170
  %6172 = vrot.lane.b32.xlu0 %v6119, 96
  %v6173 = vpop.permute.xlu0 %6172
  %6174 = vrot.lane.b32.xlu0 %v6129, 96
  %v6175 = vpop.permute.xlu0 %6174
  %6176 = vrot.lane.b32.xlu0 %v6139, 96
  %v6177 = vpop.permute.xlu0 %6176
  %6178 = vrot.lane.b32.xlu0 %v6149, 96
  %v6179 = vpop.permute.xlu0 %6178
  %6180 = vrot.lane.b32.xlu0 %v6159, 96
  %v6181 = vpop.permute.xlu0 %6180
  %6182 = vrot.lane.b32.xlu0 %v6169, 96
  %v6183 = vpop.permute.xlu0 %6182
  %6191 = vst.msk [vmem:[#allocation2] sm:$0xf] %vm74, %v6171
  %6192 = vst.msk [vmem:[#allocation2 + $0xc] sm:$0xf] %vm74, %v6173
  %6193 = vst.msk [vmem:[#allocation2 + $0x18] sm:$0xf] %vm74, %v6175
  %6194 = vst.msk [vmem:[#allocation2 + $0x24] sm:$0xf] %vm74, %v6177
  %6195 = vst.msk [vmem:[#allocation2 + $0x30] sm:$0xf] %vm74, %v6179
  %6196 = vst.msk [vmem:[#allocation2 + $0x3c] sm:$0xf] %vm74, %v6181
  %6197 = vst.msk [vmem:[#allocation2 + $0x48] sm:$0xf] %vm74, %v6183
  %v6198 = vld [vmem:[%s3622] sm:$0xf]
  %v6199 = vld [vmem:[%s3622 + $0x4] sm:$0xf]
  %v6200 = vld [vmem:[%s3622 + $0x8] sm:$0xf]
  %v6201 = vld [vmem:[%s3622 + $0xc] sm:$0xf]
  %v6202 = vld [vmem:[%s3622 + $0x10] sm:$0xf]
  %v6203 = vld [vmem:[%s3622 + $0x14] sm:$0xf]
  %v6204 = vld [vmem:[%s3622 + $0x18] sm:$0xf]
  %v6205 = vld [vmem:[%s3622 + $0x1c] sm:$0x1]
  %v6207 = vshrl.u32 %v6198, 16
  %v6209 = vrot.slane %v6207, 4
  %v6210 = vshll.u32 %v6198, 16
  %v6212 = vrot.slane %v6210, 5
  %v6213 = vor.u32 %v6209, %v6212
  %v6214 = vrot.slane %v6213, 4
  %v6216 = vshll.u32 %v6199, 16
  %v6218 = vrot.slane %v6216, 5
  %v6219 = vsel %vm92, %v6214, %v6218
  %v6220 = vshrl.u32 %v6199, 16
  %v6222 = vrot.slane %v6220, 4
  %v6223 = vor.u32 %v6222, %v6218
  %v6224 = vrot.slane %v6223, 4
  %v6226 = vshll.u32 %v6200, 16
  %v6228 = vrot.slane %v6226, 5
  %v6229 = vsel %vm92, %v6224, %v6228
  %v6230 = vshrl.u32 %v6200, 16
  %v6232 = vrot.slane %v6230, 4
  %v6233 = vor.u32 %v6232, %v6228
  %v6234 = vrot.slane %v6233, 4
  %v6236 = vshll.u32 %v6201, 16
  %v6238 = vrot.slane %v6236, 5
  %v6239 = vsel %vm92, %v6234, %v6238
  %v6240 = vshrl.u32 %v6201, 16
  %v6242 = vrot.slane %v6240, 4
  %v6243 = vor.u32 %v6242, %v6238
  %v6244 = vrot.slane %v6243, 4
  %v6246 = vshll.u32 %v6202, 16
  %v6248 = vrot.slane %v6246, 5
  %v6249 = vsel %vm92, %v6244, %v6248
  %v6250 = vshrl.u32 %v6202, 16
  %v6252 = vrot.slane %v6250, 4
  %v6253 = vor.u32 %v6252, %v6248
  %v6254 = vrot.slane %v6253, 4
  %v6256 = vshll.u32 %v6203, 16
  %v6258 = vrot.slane %v6256, 5
  %v6259 = vsel %vm92, %v6254, %v6258
  %v6260 = vshrl.u32 %v6203, 16
  %v6262 = vrot.slane %v6260, 4
  %v6263 = vor.u32 %v6262, %v6258
  %v6264 = vrot.slane %v6263, 4
  %v6266 = vshll.u32 %v6204, 16
  %v6268 = vrot.slane %v6266, 5
  %v6269 = vsel %vm92, %v6264, %v6268
  %v6270 = vshrl.u32 %v6204, 16
  %v6272 = vrot.slane %v6270, 4
  %v6273 = vor.u32 %v6272, %v6268
  %v6274 = vrot.slane %v6273, 4
  %v6276 = vshll.u32 %v6205, 16
  %v6278 = vrot.slane %v6276, 5
  %v6279 = vsel %vm92, %v6274, %v6278
  %6280 = vrot.lane.b32.xlu0 %v6219, 96
  %v6281 = vpop.permute.xlu0 %6280
  %6282 = vrot.lane.b32.xlu0 %v6229, 96
  %v6283 = vpop.permute.xlu0 %6282
  %6284 = vrot.lane.b32.xlu0 %v6239, 96
  %v6285 = vpop.permute.xlu0 %6284
  %6286 = vrot.lane.b32.xlu0 %v6249, 96
  %v6287 = vpop.permute.xlu0 %6286
  %6288 = vrot.lane.b32.xlu0 %v6259, 96
  %v6289 = vpop.permute.xlu0 %6288
  %6290 = vrot.lane.b32.xlu0 %v6269, 96
  %v6291 = vpop.permute.xlu0 %6290
  %6292 = vrot.lane.b32.xlu0 %v6279, 96
  %v6293 = vpop.permute.xlu0 %6292
  %6301 = vst.msk [vmem:[#allocation2] sm:$0xf] %vm188, %v6281
  %6302 = vst.msk [vmem:[#allocation2 + $0xc] sm:$0xf] %vm188, %v6283
  %6303 = vst.msk [vmem:[#allocation2 + $0x18] sm:$0xf] %vm188, %v6285
  %6304 = vst.msk [vmem:[#allocation2 + $0x24] sm:$0xf] %vm188, %v6287
  %6305 = vst.msk [vmem:[#allocation2 + $0x30] sm:$0xf] %vm188, %v6289
  %6306 = vst.msk [vmem:[#allocation2 + $0x3c] sm:$0xf] %vm188, %v6291
  %6307 = vst.msk [vmem:[#allocation2 + $0x48] sm:$0xf] %vm188, %v6293
  %v6308 = vld [vmem:[%s3622 + $0x4] sm:$0xf]
  %v6309 = vld [vmem:[%s3622 + $0x8] sm:$0xf]
  %v6310 = vld [vmem:[%s3622 + $0xc] sm:$0xf]
  %v6311 = vld [vmem:[%s3622 + $0x10] sm:$0xf]
  %v6312 = vld [vmem:[%s3622 + $0x14] sm:$0xf]
  %v6313 = vld [vmem:[%s3622 + $0x18] sm:$0xf]
  %v6314 = vld [vmem:[%s3622 + $0x1c] sm:$0xf]
  %6322 = vrot.lane.b32.xlu0 %v6308, 64
  %v6323 = vpop.permute.xlu0 %6322
  %6324 = vrot.lane.b32.xlu0 %v6309, 64
  %v6325 = vpop.permute.xlu0 %6324
  %6326 = vrot.lane.b32.xlu0 %v6310, 64
  %v6327 = vpop.permute.xlu0 %6326
  %6328 = vrot.lane.b32.xlu0 %v6311, 64
  %v6329 = vpop.permute.xlu0 %6328
  %6330 = vrot.lane.b32.xlu0 %v6312, 64
  %v6331 = vpop.permute.xlu0 %6330
  %6332 = vrot.lane.b32.xlu0 %v6313, 64
  %v6333 = vpop.permute.xlu0 %6332
  %6334 = vrot.lane.b32.xlu0 %v6314, 64
  %v6335 = vpop.permute.xlu0 %6334
  %6343 = vst.msk [vmem:[#allocation2] sm:$0xf] %vm231, %v6323
  %6344 = vst.msk [vmem:[#allocation2 + $0xc] sm:$0xf] %vm231, %v6325
  %6345 = vst.msk [vmem:[#allocation2 + $0x18] sm:$0xf] %vm231, %v6327
  %6346 = vst.msk [vmem:[#allocation2 + $0x24] sm:$0xf] %vm231, %v6329
  %6347 = vst.msk [vmem:[#allocation2 + $0x30] sm:$0xf] %vm231, %v6331
  %6348 = vst.msk [vmem:[#allocation2 + $0x3c] sm:$0xf] %vm231, %v6333
  %6349 = vst.msk [vmem:[#allocation2 + $0x48] sm:$0xf] %vm231, %v6335
  %v6350 = vld [vmem:[%s3622 + $0x4] sm:$0xf]
  %v6351 = vld [vmem:[%s3622 + $0x8] sm:$0xf]
  %v6352 = vld [vmem:[%s3622 + $0xc] sm:$0xf]
  %v6353 = vld [vmem:[%s3622 + $0x10] sm:$0xf]
  %v6354 = vld [vmem:[%s3622 + $0x14] sm:$0xf]
  %v6355 = vld [vmem:[%s3622 + $0x18] sm:$0xf]
  %v6356 = vld [vmem:[%s3622 + $0x1c] sm:$0xf]
  %v6357 = vld [vmem:[%s3622 + $0x20] sm:$0x1]
  %v6359 = vshrl.u32 %v6350, 16
  %v6361 = vrot.slane %v6359, 4
  %v6362 = vshll.u32 %v6350, 16
  %v6364 = vrot.slane %v6362, 5
  %v6365 = vor.u32 %v6361, %v6364
  %v6366 = vrot.slane %v6365, 4
  %v6368 = vshll.u32 %v6351, 16
  %v6370 = vrot.slane %v6368, 5
  %v6371 = vsel %vm92, %v6366, %v6370
  %v6372 = vshrl.u32 %v6351, 16
  %v6374 = vrot.slane %v6372, 4
  %v6375 = vor.u32 %v6374, %v6370
  %v6376 = vrot.slane %v6375, 4
  %v6378 = vshll.u32 %v6352, 16
  %v6380 = vrot.slane %v6378, 5
  %v6381 = vsel %vm92, %v6376, %v6380
  %v6382 = vshrl.u32 %v6352, 16
  %v6384 = vrot.slane %v6382, 4
  %v6385 = vor.u32 %v6384, %v6380
  %v6386 = vrot.slane %v6385, 4
  %v6388 = vshll.u32 %v6353, 16
  %v6390 = vrot.slane %v6388, 5
  %v6391 = vsel %vm92, %v6386, %v6390
  %v6392 = vshrl.u32 %v6353, 16
  %v6394 = vrot.slane %v6392, 4
  %v6395 = vor.u32 %v6394, %v6390
  %v6396 = vrot.slane %v6395, 4
  %v6398 = vshll.u32 %v6354, 16
  %v6400 = vrot.slane %v6398, 5
  %v6401 = vsel %vm92, %v6396, %v6400
  %v6402 = vshrl.u32 %v6354, 16
  %v6404 = vrot.slane %v6402, 4
  %v6405 = vor.u32 %v6404, %v6400
  %v6406 = vrot.slane %v6405, 4
  %v6408 = vshll.u32 %v6355, 16
  %v6410 = vrot.slane %v6408, 5
  %v6411 = vsel %vm92, %v6406, %v6410
  %v6412 = vshrl.u32 %v6355, 16
  %v6414 = vrot.slane %v6412, 4
  %v6415 = vor.u32 %v6414, %v6410
  %v6416 = vrot.slane %v6415, 4
  %v6418 = vshll.u32 %v6356, 16
  %v6420 = vrot.slane %v6418, 5
  %v6421 = vsel %vm92, %v6416, %v6420
  %v6422 = vshrl.u32 %v6356, 16
  %v6424 = vrot.slane %v6422, 4
  %v6425 = vor.u32 %v6424, %v6420
  %v6426 = vrot.slane %v6425, 4
  %v6428 = vshll.u32 %v6357, 16
  %v6430 = vrot.slane %v6428, 5
  %v6431 = vsel %vm92, %v6426, %v6430
  %6439 = vst.msk [vmem:[#allocation2 + $0x4] sm:$0xf] %vm59, %v6371
  %6440 = vst.msk [vmem:[#allocation2 + $0x10] sm:$0xf] %vm59, %v6381
  %6441 = vst.msk [vmem:[#allocation2 + $0x1c] sm:$0xf] %vm59, %v6391
  %6442 = vst.msk [vmem:[#allocation2 + $0x28] sm:$0xf] %vm59, %v6401
  %6443 = vst.msk [vmem:[#allocation2 + $0x34] sm:$0xf] %vm59, %v6411
  %6444 = vst.msk [vmem:[#allocation2 + $0x40] sm:$0xf] %vm59, %v6421
  %6445 = vst.msk [vmem:[#allocation2 + $0x4c] sm:$0xf] %vm59, %v6431
  %v6446 = vld [vmem:[%s3622 + $0x4] sm:$0xf]
  %v6447 = vld [vmem:[%s3622 + $0x8] sm:$0xf]
  %v6448 = vld [vmem:[%s3622 + $0xc] sm:$0xf]
  %v6449 = vld [vmem:[%s3622 + $0x10] sm:$0xf]
  %v6450 = vld [vmem:[%s3622 + $0x14] sm:$0xf]
  %v6451 = vld [vmem:[%s3622 + $0x18] sm:$0xf]
  %v6452 = vld [vmem:[%s3622 + $0x1c] sm:$0xf]
  %v6453 = vld [vmem:[%s3622 + $0x20] sm:$0x1]
  %v6455 = vshrl.u32 %v6446, 16
  %v6457 = vrot.slane %v6455, 4
  %v6458 = vshll.u32 %v6446, 16
  %v6460 = vrot.slane %v6458, 5
  %v6461 = vor.u32 %v6457, %v6460
  %v6462 = vrot.slane %v6461, 4
  %v6464 = vshll.u32 %v6447, 16
  %v6466 = vrot.slane %v6464, 5
  %v6467 = vsel %vm92, %v6462, %v6466
  %v6468 = vshrl.u32 %v6447, 16
  %v6470 = vrot.slane %v6468, 4
  %v6471 = vor.u32 %v6470, %v6466
  %v6472 = vrot.slane %v6471, 4
  %v6474 = vshll.u32 %v6448, 16
  %v6476 = vrot.slane %v6474, 5
  %v6477 = vsel %vm92, %v6472, %v6476
  %v6478 = vshrl.u32 %v6448, 16
  %v6480 = vrot.slane %v6478, 4
  %v6481 = vor.u32 %v6480, %v6476
  %v6482 = vrot.slane %v6481, 4
  %v6484 = vshll.u32 %v6449, 16
  %v6486 = vrot.slane %v6484, 5
  %v6487 = vsel %vm92, %v6482, %v6486
  %v6488 = vshrl.u32 %v6449, 16
  %v6490 = vrot.slane %v6488, 4
  %v6491 = vor.u32 %v6490, %v6486
  %v6492 = vrot.slane %v6491, 4
  %v6494 = vshll.u32 %v6450, 16
  %v6496 = vrot.slane %v6494, 5
  %v6497 = vsel %vm92, %v6492, %v6496
  %v6498 = vshrl.u32 %v6450, 16
  %v6500 = vrot.slane %v6498, 4
  %v6501 = vor.u32 %v6500, %v6496
  %v6502 = vrot.slane %v6501, 4
  %v6504 = vshll.u32 %v6451, 16
  %v6506 = vrot.slane %v6504, 5
  %v6507 = vsel %vm92, %v6502, %v6506
  %v6508 = vshrl.u32 %v6451, 16
  %v6510 = vrot.slane %v6508, 4
  %v6511 = vor.u32 %v6510, %v6506
  %v6512 = vrot.slane %v6511, 4
  %v6514 = vshll.u32 %v6452, 16
  %v6516 = vrot.slane %v6514, 5
  %v6517 = vsel %vm92, %v6512, %v6516
  %v6518 = vshrl.u32 %v6452, 16
  %v6520 = vrot.slane %v6518, 4
  %v6521 = vor.u32 %v6520, %v6516
  %v6522 = vrot.slane %v6521, 4
  %v6524 = vshll.u32 %v6453, 16
  %v6526 = vrot.slane %v6524, 5
  %v6527 = vsel %vm92, %v6522, %v6526
  %6535 = vst.msk [vmem:[#allocation2 + $0x4] sm:$0xf] %vm74, %v6467
  %6536 = vst.msk [vmem:[#allocation2 + $0x10] sm:$0xf] %vm74, %v6477
  %6537 = vst.msk [vmem:[#allocation2 + $0x1c] sm:$0xf] %vm74, %v6487
  %6538 = vst.msk [vmem:[#allocation2 + $0x28] sm:$0xf] %vm74, %v6497
  %6539 = vst.msk [vmem:[#allocation2 + $0x34] sm:$0xf] %vm74, %v6507
  %6540 = vst.msk [vmem:[#allocation2 + $0x40] sm:$0xf] %vm74, %v6517
  %6541 = vst.msk [vmem:[#allocation2 + $0x4c] sm:$0xf] %vm74, %v6527
  %v6542 = vld [vmem:[%s3622 + $0x4] sm:$0xf]
  %v6543 = vld [vmem:[%s3622 + $0x8] sm:$0xf]
  %v6544 = vld [vmem:[%s3622 + $0xc] sm:$0xf]
  %v6545 = vld [vmem:[%s3622 + $0x10] sm:$0xf]
  %v6546 = vld [vmem:[%s3622 + $0x14] sm:$0xf]
  %v6547 = vld [vmem:[%s3622 + $0x18] sm:$0xf]
  %v6548 = vld [vmem:[%s3622 + $0x1c] sm:$0xf]
  %6556 = vrot.lane.b32.xlu0 %v6542, 96
  %v6557 = vpop.permute.xlu0 %6556
  %6558 = vrot.lane.b32.xlu0 %v6543, 96
  %v6559 = vpop.permute.xlu0 %6558
  %6560 = vrot.lane.b32.xlu0 %v6544, 96
  %v6561 = vpop.permute.xlu0 %6560
  %6562 = vrot.lane.b32.xlu0 %v6545, 96
  %v6563 = vpop.permute.xlu0 %6562
  %6564 = vrot.lane.b32.xlu0 %v6546, 96
  %v6565 = vpop.permute.xlu0 %6564
  %6566 = vrot.lane.b32.xlu0 %v6547, 96
  %v6567 = vpop.permute.xlu0 %6566
  %6568 = vrot.lane.b32.xlu0 %v6548, 96
  %v6569 = vpop.permute.xlu0 %6568
  %6577 = vst.msk [vmem:[#allocation2 + $0x4] sm:$0xf] %vm188, %v6557
  %6578 = vst.msk [vmem:[#allocation2 + $0x10] sm:$0xf] %vm188, %v6559
  %6579 = vst.msk [vmem:[#allocation2 + $0x1c] sm:$0xf] %vm188, %v6561
  %6580 = vst.msk [vmem:[#allocation2 + $0x28] sm:$0xf] %vm188, %v6563
  %6581 = vst.msk [vmem:[#allocation2 + $0x34] sm:$0xf] %vm188, %v6565
  %6582 = vst.msk [vmem:[#allocation2 + $0x40] sm:$0xf] %vm188, %v6567
  %6583 = vst.msk [vmem:[#allocation2 + $0x4c] sm:$0xf] %vm188, %v6569
  %v6584 = vld [vmem:[%s3622 + $0x4] sm:$0xf]
  %v6585 = vld [vmem:[%s3622 + $0x8] sm:$0xf]
  %v6586 = vld [vmem:[%s3622 + $0xc] sm:$0xf]
  %v6587 = vld [vmem:[%s3622 + $0x10] sm:$0xf]
  %v6588 = vld [vmem:[%s3622 + $0x14] sm:$0xf]
  %v6589 = vld [vmem:[%s3622 + $0x18] sm:$0xf]
  %v6590 = vld [vmem:[%s3622 + $0x1c] sm:$0xf]
  %v6591 = vld [vmem:[%s3622 + $0x20] sm:$0x1]
  %v6593 = vshrl.u32 %v6584, 16
  %v6595 = vrot.slane %v6593, 4
  %v6596 = vshll.u32 %v6584, 16
  %v6598 = vrot.slane %v6596, 5
  %v6599 = vor.u32 %v6595, %v6598
  %v6600 = vrot.slane %v6599, 4
  %v6602 = vshll.u32 %v6585, 16
  %v6604 = vrot.slane %v6602, 5
  %v6605 = vsel %vm92, %v6600, %v6604
  %v6606 = vshrl.u32 %v6585, 16
  %v6608 = vrot.slane %v6606, 4
  %v6609 = vor.u32 %v6608, %v6604
  %v6610 = vrot.slane %v6609, 4
  %v6612 = vshll.u32 %v6586, 16
  %v6614 = vrot.slane %v6612, 5
  %v6615 = vsel %vm92, %v6610, %v6614
  %v6616 = vshrl.u32 %v6586, 16
  %v6618 = vrot.slane %v6616, 4
  %v6619 = vor.u32 %v6618, %v6614
  %v6620 = vrot.slane %v6619, 4
  %v6622 = vshll.u32 %v6587, 16
  %v6624 = vrot.slane %v6622, 5
  %v6625 = vsel %vm92, %v6620, %v6624
  %v6626 = vshrl.u32 %v6587, 16
  %v6628 = vrot.slane %v6626, 4
  %v6629 = vor.u32 %v6628, %v6624
  %v6630 = vrot.slane %v6629, 4
  %v6632 = vshll.u32 %v6588, 16
  %v6634 = vrot.slane %v6632, 5
  %v6635 = vsel %vm92, %v6630, %v6634
  %v6636 = vshrl.u32 %v6588, 16
  %v6638 = vrot.slane %v6636, 4
  %v6639 = vor.u32 %v6638, %v6634
  %v6640 = vrot.slane %v6639, 4
  %v6642 = vshll.u32 %v6589, 16
  %v6644 = vrot.slane %v6642, 5
  %v6645 = vsel %vm92, %v6640, %v6644
  %v6646 = vshrl.u32 %v6589, 16
  %v6648 = vrot.slane %v6646, 4
  %v6649 = vor.u32 %v6648, %v6644
  %v6650 = vrot.slane %v6649, 4
  %v6652 = vshll.u32 %v6590, 16
  %v6654 = vrot.slane %v6652, 5
  %v6655 = vsel %vm92, %v6650, %v6654
  %v6656 = vshrl.u32 %v6590, 16
  %v6658 = vrot.slane %v6656, 4
  %v6659 = vor.u32 %v6658, %v6654
  %v6660 = vrot.slane %v6659, 4
  %v6662 = vshll.u32 %v6591, 16
  %v6664 = vrot.slane %v6662, 5
  %v6665 = vsel %vm92, %v6660, %v6664
  %6666 = vrot.lane.b32.xlu0 %v6605, 32
  %v6667 = vpop.permute.xlu0 %6666
  %6668 = vrot.lane.b32.xlu0 %v6615, 32
  %v6669 = vpop.permute.xlu0 %6668
  %6670 = vrot.lane.b32.xlu0 %v6625, 32
  %v6671 = vpop.permute.xlu0 %6670
  %6672 = vrot.lane.b32.xlu0 %v6635, 32
  %v6673 = vpop.permute.xlu0 %6672
  %6674 = vrot.lane.b32.xlu0 %v6645, 32
  %v6675 = vpop.permute.xlu0 %6674
  %6676 = vrot.lane.b32.xlu0 %v6655, 32
  %v6677 = vpop.permute.xlu0 %6676
  %6678 = vrot.lane.b32.xlu0 %v6665, 32
  %v6679 = vpop.permute.xlu0 %6678
  %6687 = vst.msk [vmem:[#allocation2 + $0x4] sm:$0xf] %vm231, %v6667
  %6688 = vst.msk [vmem:[#allocation2 + $0x10] sm:$0xf] %vm231, %v6669
  %6689 = vst.msk [vmem:[#allocation2 + $0x1c] sm:$0xf] %vm231, %v6671
  %6690 = vst.msk [vmem:[#allocation2 + $0x28] sm:$0xf] %vm231, %v6673
  %6691 = vst.msk [vmem:[#allocation2 + $0x34] sm:$0xf] %vm231, %v6675
  %6692 = vst.msk [vmem:[#allocation2 + $0x40] sm:$0xf] %vm231, %v6677
  %6693 = vst.msk [vmem:[#allocation2 + $0x4c] sm:$0xf] %vm231, %v6679
  %v6694 = vld [vmem:[%s3622 + $0x4] sm:$0xf]
  %v6695 = vld [vmem:[%s3622 + $0x8] sm:$0xf]
  %v6696 = vld [vmem:[%s3622 + $0xc] sm:$0xf]
  %v6697 = vld [vmem:[%s3622 + $0x10] sm:$0xf]
  %v6698 = vld [vmem:[%s3622 + $0x14] sm:$0xf]
  %v6699 = vld [vmem:[%s3622 + $0x18] sm:$0xf]
  %v6700 = vld [vmem:[%s3622 + $0x1c] sm:$0xf]
  %v6701 = vld [vmem:[%s3622 + $0x20] sm:$0x1]
  %v6703 = vshrl.u32 %v6694, 16
  %v6705 = vrot.slane %v6703, 4
  %v6706 = vshll.u32 %v6694, 16
  %v6708 = vrot.slane %v6706, 5
  %v6709 = vor.u32 %v6705, %v6708
  %v6710 = vrot.slane %v6709, 4
  %v6712 = vshll.u32 %v6695, 16
  %v6714 = vrot.slane %v6712, 5
  %v6715 = vsel %vm92, %v6710, %v6714
  %v6716 = vshrl.u32 %v6695, 16
  %v6718 = vrot.slane %v6716, 4
  %v6719 = vor.u32 %v6718, %v6714
  %v6720 = vrot.slane %v6719, 4
  %v6722 = vshll.u32 %v6696, 16
  %v6724 = vrot.slane %v6722, 5
  %v6725 = vsel %vm92, %v6720, %v6724
  %v6726 = vshrl.u32 %v6696, 16
  %v6728 = vrot.slane %v6726, 4
  %v6729 = vor.u32 %v6728, %v6724
  %v6730 = vrot.slane %v6729, 4
  %v6732 = vshll.u32 %v6697, 16
  %v6734 = vrot.slane %v6732, 5
  %v6735 = vsel %vm92, %v6730, %v6734
  %v6736 = vshrl.u32 %v6697, 16
  %v6738 = vrot.slane %v6736, 4
  %v6739 = vor.u32 %v6738, %v6734
  %v6740 = vrot.slane %v6739, 4
  %v6742 = vshll.u32 %v6698, 16
  %v6744 = vrot.slane %v6742, 5
  %v6745 = vsel %vm92, %v6740, %v6744
  %v6746 = vshrl.u32 %v6698, 16
  %v6748 = vrot.slane %v6746, 4
  %v6749 = vor.u32 %v6748, %v6744
  %v6750 = vrot.slane %v6749, 4
  %v6752 = vshll.u32 %v6699, 16
  %v6754 = vrot.slane %v6752, 5
  %v6755 = vsel %vm92, %v6750, %v6754
  %v6756 = vshrl.u32 %v6699, 16
  %v6758 = vrot.slane %v6756, 4
  %v6759 = vor.u32 %v6758, %v6754
  %v6760 = vrot.slane %v6759, 4
  %v6762 = vshll.u32 %v6700, 16
  %v6764 = vrot.slane %v6762, 5
  %v6765 = vsel %vm92, %v6760, %v6764
  %v6766 = vshrl.u32 %v6700, 16
  %v6768 = vrot.slane %v6766, 4
  %v6769 = vor.u32 %v6768, %v6764
  %v6770 = vrot.slane %v6769, 4
  %v6772 = vshll.u32 %v6701, 16
  %v6774 = vrot.slane %v6772, 5
  %v6775 = vsel %vm92, %v6770, %v6774
  %6776 = vrot.lane.b32.xlu0 %v6715, 32
  %v6777 = vpop.permute.xlu0 %6776
  %6778 = vrot.lane.b32.xlu0 %v6725, 32
  %v6779 = vpop.permute.xlu0 %6778
  %6780 = vrot.lane.b32.xlu0 %v6735, 32
  %v6781 = vpop.permute.xlu0 %6780
  %6782 = vrot.lane.b32.xlu0 %v6745, 32
  %v6783 = vpop.permute.xlu0 %6782
  %6784 = vrot.lane.b32.xlu0 %v6755, 32
  %v6785 = vpop.permute.xlu0 %6784
  %6786 = vrot.lane.b32.xlu0 %v6765, 32
  %v6787 = vpop.permute.xlu0 %6786
  %6788 = vrot.lane.b32.xlu0 %v6775, 32
  %v6789 = vpop.permute.xlu0 %6788
  %6797 = vst.msk [vmem:[#allocation2 + $0x8] sm:$0xf] %vm59, %v6777
  %6798 = vst.msk [vmem:[#allocation2 + $0x14] sm:$0xf] %vm59, %v6779
  %6799 = vst.msk [vmem:[#allocation2 + $0x20] sm:$0xf] %vm59, %v6781
  %6800 = vst.msk [vmem:[#allocation2 + $0x2c] sm:$0xf] %vm59, %v6783
  %6801 = vst.msk [vmem:[#allocation2 + $0x38] sm:$0xf] %vm59, %v6785
  %6802 = vst.msk [vmem:[#allocation2 + $0x44] sm:$0xf] %vm59, %v6787
  %6803 = vst.msk [vmem:[#allocation2 + $0x50] sm:$0xf] %vm59, %v6789
  %v6804 = vld [vmem:[#allocation2] sm:$0xff]
  %v6805 = vld [vmem:[#allocation2 + $0x8] sm:$0xf]
  %v6806 = vld [vmem:[#allocation2 + $0xc] sm:$0xff]
  %v6807 = vld [vmem:[#allocation2 + $0x14] sm:$0xf]
  %v6808 = vld [vmem:[#allocation2 + $0x18] sm:$0xff]
  %v6809 = vld [vmem:[#allocation2 + $0x20] sm:$0xf]
  %v6810 = vld [vmem:[#allocation2 + $0x24] sm:$0xff]
  %v6811 = vld [vmem:[#allocation2 + $0x2c] sm:$0xf]
  %v6812 = vld [vmem:[#allocation2 + $0x30] sm:$0xff]
  %v6813 = vld [vmem:[#allocation2 + $0x38] sm:$0xf]
  %v6814 = vld [vmem:[#allocation2 + $0x3c] sm:$0xff]
  %v6815 = vld [vmem:[#allocation2 + $0x44] sm:$0xf]
  %v6816 = vld [vmem:[#allocation2 + $0x48] sm:$0xff]
  %v6817 = vld [vmem:[#allocation2 + $0x50] sm:$0xf]
  %v6832 = vunpack.c.l.b16 %v6804
  %v6833 = vunpack.c.h.b16 %v6804
  %v6834 = vunpack.c.l.b16 %v6805
  %v6835 = vunpack.c.l.b16 %v6806
  %v6836 = vunpack.c.h.b16 %v6806
  %v6837 = vunpack.c.l.b16 %v6807
  %v6838 = vunpack.c.l.b16 %v6808
  %v6839 = vunpack.c.h.b16 %v6808
  %v6840 = vunpack.c.l.b16 %v6809
  %v6841 = vunpack.c.l.b16 %v6810
  %v6842 = vunpack.c.h.b16 %v6810
  %v6843 = vunpack.c.l.b16 %v6811
  %v6844 = vunpack.c.l.b16 %v6812
  %v6845 = vunpack.c.h.b16 %v6812
  %v6846 = vunpack.c.l.b16 %v6813
  %v6847 = vunpack.c.l.b16 %v6814
  %v6848 = vunpack.c.h.b16 %v6814
  %v6849 = vunpack.c.l.b16 %v6815
  %v6850 = vunpack.c.l.b16 %v6816
  %v6851 = vunpack.c.h.b16 %v6816
  %v6852 = vunpack.c.l.b16 %v6817
  %v6853 = vpack.c.b16 %v6835, %v6832
  %v6854 = vpack.c.b16 %v6836, %v6833
  %v6855 = vpack.c.b16 %v6837, %v6834
  %v6856 = vpack.c.b16 %v6841, %v6838
  %v6857 = vpack.c.b16 %v6842, %v6839
  %v6858 = vpack.c.b16 %v6843, %v6840
  %v6859 = vpack.c.b16 %v6847, %v6844
  %v6860 = vpack.c.b16 %v6848, %v6845
  %v6861 = vpack.c.b16 %v6849, %v6846
  %v6862 = vpack.c.b16 %v6850, %v6850
  %v6863 = vpack.c.b16 %v6851, %v6851
  %v6864 = vpack.c.b16 %v6852, %v6852
  %v6874 = vsel %vm748, %v6855, 0
  %v6877 = vsel %vm748, %v6858, 0
  %v6880 = vsel %vm748, %v6861, 0
  %v6883 = vsel %vm748, %v6864, 0
  %6885 = vmatprep.subr.bf16.mxu0 0
  %6886 = vmatpush1.bf16.msra.mxu0 %v712
  %6887 = vmatprep.subr.bf16.mxu0 0
  %6888 = vmatpush1.bf16.msra.mxu0 %v713
  %6889 = vmatprep.subr.bf16.mxu0 0
  %6890 = vmatpush1.bf16.msra.mxu0 %v714
  %6891 = vmatprep.subr.bf16.mxu0 0
  %6892 = vmatpush1.bf16.msra.mxu0 %v715
  %6893 = vmatprep.subr.bf16.mxu0 0
  %6894 = vmatpush1.bf16.msra.mxu0 %v716
  %6895 = vmatprep.subr.bf16.mxu0 0
  %6896 = vmatpush1.bf16.msra.mxu0 %v717
  %6897 = vmatprep.subr.bf16.mxu0 0
  %6898 = vmatpush1.bf16.msra.mxu0 %v718
  %6899 = vmatprep.subr.bf16.mxu0 0
  %6900 = vmatpush1.bf16.msra.mxu0 %v719
  %6901 = vmatprep.subr.bf16.mxu0 0
  %6902 = vmatpush1.bf16.msra.mxu0 %v720
  %6903 = vmatprep.subr.bf16.mxu0 0
  %6904 = vmatpush1.bf16.msra.mxu0 %v721
  %6905 = vmatprep.subr.bf16.mxu0 0
  %6906 = vmatpush1.bf16.msra.mxu0 %v722
  %6907 = vmatprep.subr.bf16.mxu0 0
  %6908 = vmatpush1.bf16.msra.mxu0 %v723
  %6909 = vmatprep.subr.bf16.mxu0 0
  %6910 = vmatpush1.bf16.msra.mxu0 %v724
  %6911 = vmatprep.subr.bf16.mxu0 0
  %6912 = vmatpush1.bf16.msra.mxu0 %v725
  %6913 = vmatprep.subr.bf16.mxu0 0
  %6914 = vmatpush1.bf16.msra.mxu0 %v726
  %6915 = vmatprep.subr.bf16.mxu0 0
  %6916 = vmatpush1.bf16.msra.mxu0 %v727
  %6917 = vmatprep.mubr.bf16.mxu0 %v6854
  %6918 = vmatmul.mubr.bf16.gmra.mrb[0].mxu0 %v6853
  %v6919 = vpop.f32.mrb[0].mxu0
  %v6920 = vadd.f32 0.0, %v6919
  %v6921 = vpop.f32.mrb[0].mxu0
  %v6922 = vpop.f32.mrb[0].mxu0
  %v6923 = vadd.f32 0.0, %v6922
  %v6924 = vpop.f32.mrb[0].mxu0
  %6925 = vmatprep.mubr.bf16.mxu0 %v6857
  %6926 = vmatmul.mubr.bf16.gmra.mrb[0].mxu0 %v6856
  %v6927 = vpop.f32.mrb[0].mxu0
  %v6928 = vadd.f32 0.0, %v6927
  %v6929 = vpop.f32.mrb[0].mxu0
  %v6930 = vpop.f32.mrb[0].mxu0
  %v6931 = vadd.f32 0.0, %v6930
  %v6932 = vpop.f32.mrb[0].mxu0
  %6933 = vmatprep.mubr.bf16.mxu0 %v6860
  %6934 = vmatmul.mubr.bf16.gmra.mrb[0].mxu0 %v6859
  %v6935 = vpop.f32.mrb[0].mxu0
  %v6936 = vadd.f32 0.0, %v6935
  %v6937 = vpop.f32.mrb[0].mxu0
  %v6938 = vpop.f32.mrb[0].mxu0
  %v6939 = vadd.f32 0.0, %v6938
  %v6940 = vpop.f32.mrb[0].mxu0
  %6941 = vmatprep.mubr.bf16.mxu0 %v6863
  %6942 = vmatmul.mubr.bf16.gmra.mrb[0].mxu0 %v6862
  %v6943 = vpop.f32.mrb[0].mxu0
  %v6944 = vadd.f32 0.0, %v6943
  %v6945 = vpop.f32.mrb[0].mxu0
  %v6946 = vpop.f32.mrb[0].mxu0
  %v6947 = vpop.f32.mrb[0].mxu0
  %6948 = vdwg.mxu0
  %6949 = vmatprep.subr.bf16.mxu0 0
  %6950 = vmatpush1.bf16.msra.mxu0 %v728
  %6951 = vmatprep.subr.bf16.mxu0 0
  %6952 = vmatpush1.bf16.msra.mxu0 %v729
  %6953 = vmatprep.subr.bf16.mxu0 0
  %6954 = vmatpush1.bf16.msra.mxu0 0
  %6955 = vmatprep.subr.bf16.mxu0 0
  %6956 = vmatpush1.bf16.msra.mxu0 0
  %6957 = vmatprep.subr.bf16.mxu0 0
  %6958 = vmatpush1.bf16.msra.mxu0 0
  %6959 = vmatprep.subr.bf16.mxu0 0
  %6960 = vmatpush1.bf16.msra.mxu0 0
  %6961 = vmatprep.subr.bf16.mxu0 0
  %6962 = vmatpush1.bf16.msra.mxu0 0
  %6963 = vmatprep.subr.bf16.mxu0 0
  %6964 = vmatpush1.bf16.msra.mxu0 0
  %6965 = vmatprep.subr.bf16.mxu0 0
  %6966 = vmatpush1.bf16.msra.mxu0 0
  %6967 = vmatprep.subr.bf16.mxu0 0
  %6968 = vmatpush1.bf16.msra.mxu0 0
  %6969 = vmatprep.subr.bf16.mxu0 0
  %6970 = vmatpush1.bf16.msra.mxu0 0
  %6971 = vmatprep.subr.bf16.mxu0 0
  %6972 = vmatpush1.bf16.msra.mxu0 0
  %6973 = vmatprep.subr.bf16.mxu0 0
  %6974 = vmatpush1.bf16.msra.mxu0 0
  %6975 = vmatprep.subr.bf16.mxu0 0
  %6976 = vmatpush1.bf16.msra.mxu0 0
  %6977 = vmatprep.subr.bf16.mxu0 0
  %6978 = vmatpush1.bf16.msra.mxu0 0
  %6979 = vmatprep.subr.bf16.mxu0 0
  %6980 = vmatpush1.bf16.msra.mxu0 0
  %6981 = vmatprep.mubr.bf16.mxu0 0
  %6982 = vmatmul.mubr.bf16.gmra.mrb[0].mxu0 %v6874
  %v6983 = vpop.f32.mrb[0].mxu0
  %v6984 = vadd.f32 %v6920, %v6983
  %v6985 = vpop.f32.mrb[0].mxu0
  %v6986 = vpop.f32.mrb[0].mxu0
  %v6987 = vadd.f32 %v6923, %v6986
  %v6988 = vpop.f32.mrb[0].mxu0
  %6989 = vmatprep.mubr.bf16.mxu0 0
  %6990 = vmatmul.mubr.bf16.gmra.mrb[0].mxu0 %v6877
  %v6991 = vpop.f32.mrb[0].mxu0
  %v6992 = vadd.f32 %v6928, %v6991
  %v6993 = vpop.f32.mrb[0].mxu0
  %v6994 = vpop.f32.mrb[0].mxu0
  %v6995 = vadd.f32 %v6931, %v6994
  %v6996 = vpop.f32.mrb[0].mxu0
  %6997 = vmatprep.mubr.bf16.mxu0 0
  %6998 = vmatmul.mubr.bf16.gmra.mrb[0].mxu0 %v6880
  %v6999 = vpop.f32.mrb[0].mxu0
  %v7000 = vadd.f32 %v6936, %v6999
  %v7001 = vpop.f32.mrb[0].mxu0
  %v7002 = vpop.f32.mrb[0].mxu0
  %v7003 = vadd.f32 %v6939, %v7002
  %v7004 = vpop.f32.mrb[0].mxu0
  %7005 = vmatprep.mubr.bf16.mxu0 0
  %7006 = vmatmul.mubr.bf16.gmra.mrb[0].mxu0 %v6883
  %v7007 = vpop.f32.mrb[0].mxu0
  %v7008 = vadd.f32 %v6944, %v7007
  %v7009 = vpop.f32.mrb[0].mxu0
  %v7010 = vpop.f32.mrb[0].mxu0
  %v7011 = vpop.f32.mrb[0].mxu0
  %7012 = vdwg.mxu0
  %v7013 = vmax.f32 %v6039, %v6984
  %v7014 = vmax.f32 %v6040, %v6987
  %v7015 = vmax.f32 %v6041, %v6992
  %v7016 = vmax.f32 %v6042, %v6995
  %v7017 = vmax.f32 %v6043, %v7000
  %v7018 = vmax.f32 %v6044, %v7003
  %v7019 = vmax.f32 %v6045, %v7008
  %v7020 = vadd.f32 %v7013, %v3569
  %v7021 = vadd.f32 %v7014, %v3569
  %v7022 = vadd.f32 %v7015, %v3569
  %v7023 = vadd.f32 %v7016, %v3569
  %v7024 = vadd.f32 %v7017, %v3569
  %v7025 = vadd.f32 %v7018, %v3569
  %v7026 = vadd.f32 %v7019, %v3569
  %v7027 = vmax.f32 %v7020, 0.0
  %v7028 = vmax.f32 %v7021, 0.0
  %v7029 = vmax.f32 %v7022, 0.0
  %v7030 = vmax.f32 %v7023, 0.0
  %v7031 = vmax.f32 %v7024, 0.0
  %v7032 = vmax.f32 %v7025, 0.0
  %v7033 = vmax.f32 %v7026, 0.0
  %v7034 = vpack.c.bf16 %v7028, %v7027
  %v7035 = vpack.c.bf16 %v7030, %v7029
  %v7036 = vpack.c.bf16 %v7032, %v7031
  %v7037 = vpack.c.bf16 %v7033, %v7033
  %v7042 = vunpack.c.l.b16 %v7034
  %v7043 = vunpack.c.h.b16 %v7034
  %v7044 = vunpack.c.l.b16 %v7035
  %v7045 = vunpack.c.h.b16 %v7035
  %v7046 = vunpack.c.l.b16 %v7036
  %v7047 = vunpack.c.h.b16 %v7036
  %v7048 = vunpack.c.l.b16 %v7037
  %v7049 = vpack.c.b16 %v7042, %v7042
  %v7050 = vpack.c.b16 %v7043, %v7043
  %v7051 = vpack.c.b16 %v7044, %v7044
  %v7052 = vpack.c.b16 %v7045, %v7045
  %v7053 = vpack.c.b16 %v7046, %v7046
  %v7054 = vpack.c.b16 %v7047, %v7047
  %v7055 = vpack.c.b16 %v7048, %v7048
  %s7063 = scalar_lea.vmem %s3, 28
  %7064 = vst.msk [vmem:[%s7063] sm:$0xf] %vm3614, %v7049
  %7065 = vst.msk [vmem:[%s7063 + $0x4] sm:$0xf] %vm3614, %v7050
  %7066 = vst.msk [vmem:[%s7063 + $0x8] sm:$0xf] %vm3614, %v7051
  %7067 = vst.msk [vmem:[%s7063 + $0xc] sm:$0xf] %vm3614, %v7052
  %7068 = vst.msk [vmem:[%s7063 + $0x10] sm:$0xf] %vm3614, %v7053
  %7069 = vst.msk [vmem:[%s7063 + $0x14] sm:$0xf] %vm3614, %v7054
  %7070 = vst.msk [vmem:[%s7063 + $0x18] sm:$0xf] %vm3614, %v7055
  // Predicated region
  $region14: #{cnn_forward.4} parent=0 // pred_check
    _
  $region15: #{cnn_forward.4} parent=0 // pred_check_branch
    %7072 = sbr.rel (0) target = $region17
  $region16: #{cnn_forward.4} parent=0 // pred_region
    _
  $region17: #{cnn_forward.4} parent=0 // pred_fallthru
    _
  // Predicated region
  $region18: #{cnn_forward.4} parent=0 // pred_check
    _
  $region19: #{cnn_forward.4} parent=0 // pred_check_branch
    %7074 = sbr.rel (0) target = $region21
  $region20: #{cnn_forward.4} parent=0 // pred_region
    _
  $region21: #{cnn_forward.4} parent=0 // pred_fallthru
    _

</llo_original>
